<compile_context>
chip_gen: v6e
topology: v6e:2x2x1
jax: 0.10.0
libtpu: 0.0.40
codegen_flags: <defaults>
</compile_context>

<pallas_src>
import functools

import jax
import jax.numpy as jnp
import numpy as np
from jax import lax
from jax.experimental import pallas as pl
from jax.experimental.pallas import tpu as pltpu

# ----------------------------- tag vocabulary --------------------------------
N_REAL_TAGS = 5
PAD_IDX = 5
ROOT_IDX = 6
END_IDX = 7
TAGSET_SIZE = 8          # n_tags (T): maps exactly onto the 8 f32 sublanes
HIDDEN_DIM = 32

NEG_INF_FWD = -1000.0    # init for the log-space forward algorithm
NEG_INF_VIT = -10000.0   # init for viterbi

BATCH_TILE = 128         # lane dimension of every vreg
TIME_CHUNK = 8           # timesteps per grid step


# ---------------- Linear kernel: hidden2tag, time-major output ----------------
def _linear_tm_kernel(x_ref, w_ref, b_ref, o_ref):
    """x_ref: (BT, C, H); w_ref: (T, H); b_ref: (T, 1); o_ref: (C, T, BT)."""
    C, T, BT = o_ref.shape
    w = w_ref[...]
    bcol = jnp.broadcast_to(b_ref[...], (T, BT))
    for c in range(C):                                    # static unroll, C small
        xc = x_ref[:, c, :]                               # (BT, H)
        # (T,H) x (BT,H)^T -> (T, BT): batch lands directly on the lane axis.
        ft = lax.dot_general(w, xc, (((1,), (1,)), ((), ())),
                             preferred_element_type=jnp.float32)
        o_ref[c] = ft + bcol


def hidden2tag_time_major(x_p, W, b):
    """x_p: (bsz_p, mt_p, H) -> feats (mt_p, T, bsz_p) float32 (time-major)."""
    bsz_p, mt_p, H = x_p.shape
    T = W.shape[0]
    grid = (bsz_p // BATCH_TILE, mt_p // TIME_CHUNK)
    return pl.pallas_call(
        _linear_tm_kernel,
        out_shape=jax.ShapeDtypeStruct((mt_p, T, bsz_p), jnp.float32),
        grid=grid,
        in_specs=[
            pl.BlockSpec((BATCH_TILE, TIME_CHUNK, H), lambda i, k: (i, k, 0)),
            pl.BlockSpec((T, H), lambda i, k: (0, 0)),
            pl.BlockSpec((T, 1), lambda i, k: (0, 0)),
        ],
        out_specs=pl.BlockSpec((TIME_CHUNK, T, BATCH_TILE),
                               lambda i, k: (k, 0, i)),
        compiler_params=pltpu.CompilerParams(
            dimension_semantics=("parallel", "parallel")),
    )(x_p.astype(jnp.float32), W.astype(jnp.float32),
      b.reshape(T, 1).astype(jnp.float32))


# ------------------------------ CRF kernel ------------------------------------
def _crf_kernel(feats_ref, lens_ref, expT_ref, trans_ref, endcol_ref,
                fwd_ref, blt_ref, bls_ref, bp_ref,
                fv_sc, vv_sc):
    """Everything is (T sublanes, BATCH_TILE lanes) inside this kernel."""
    C, T, BT = feats_ref.shape
    k = pl.program_id(1)                                  # time-chunk index

    row_iota = lax.broadcasted_iota(jnp.int32, (T, BT), 0)

    @pl.when(k == 0)
    def _init():
        fv_sc[...] = jnp.where(row_iota == ROOT_IDX, 0.0,
                               NEG_INF_FWD).astype(jnp.float32)
        vv_sc[...] = jnp.where(row_iota == ROOT_IDX, 0.0,
                               NEG_INF_VIT).astype(jnp.float32)
        fwd_ref[...] = jnp.zeros_like(fwd_ref)
        blt_ref[...] = jnp.zeros_like(blt_ref)
        bls_ref[...] = jnp.zeros_like(bls_ref)

    lens = lens_ref[...]                                   # (1, BT) int32
    end_colb = jnp.broadcast_to(endcol_ref[...], (T, BT))  # trans[END, i]
    expT = expT_ref[...]                                   # exp(trans), (T, T)
    trans = trans_ref[...]                                 # (T, T)
    # loop-invariant lane broadcasts of the transition columns (hoisted).
    expT_cols = [jnp.broadcast_to(expT[:, j:j + 1], (T, BT)) for j in range(T)]
    trans_cols = [jnp.broadcast_to(trans[:, j:j + 1], (T, BT)) for j in range(T)]

    t0 = k * C

    def step(c, carry):
        fv, vv, fwd, bls, blt = carry
        is_end = lens == (t0 + c + 1)                      # t == length - 1

        # ---- forward-algorithm terminal (BEFORE this step's update) ----------
        term = fv + end_colb                               # (T, BT)
        mterm = term[0:1, :]
        for i in range(1, T):
            mterm = jnp.maximum(mterm, term[i:i + 1, :])
        e = jnp.exp(term - mterm)
        ssum = e[0:1, :]
        for i in range(1, T):
            ssum = ssum + e[i:i + 1, :]
        fwd = jnp.where(is_end, mterm + jnp.log(ssum), fwd)

        # ---- viterbi terminal (BEFORE this step's update) ---------------------
        termv = vv + end_colb
        vbest = termv[0:1, :]
        varg = jnp.zeros((1, BT), jnp.int32)
        for i in range(1, T):
            row = termv[i:i + 1, :]
            gt = row > vbest                               # strict > keeps first argmax
            vbest = jnp.where(gt, row, vbest)
            varg = jnp.where(gt, i, varg)
        bls = jnp.where(is_end, vbest, bls)
        blt = jnp.where(is_end, varg, blt)

        feat = feats_ref[c]                                # (T, BT)

        # ---- forward recursion (exp trick):
        #   fv[i] += m + log(sum_j exp(feat[j] - m) * exp(trans[i, j])) --------
        m = feat[0:1, :]
        for i in range(1, T):
            m = jnp.maximum(m, feat[i:i + 1, :])
        p = jnp.exp(feat - m)                              # (T, BT)
        s = expT_cols[0] * p[0:1, :]
        for j in range(1, T):
            s = s + expT_cols[j] * p[j:j + 1, :]
        fv = fv + m + jnp.log(s)

        # ---- viterbi recursion (max-plus, unrolled over previous tag j):
        #   vv_new[i] = max_j(vv[j] + trans[i, j]) + feat[i];  bp = argmax_j ---
        best = trans_cols[0] + vv[0:1, :]
        bestj = jnp.zeros((T, BT), jnp.int32)
        for j in range(1, T):
            cand = trans_cols[j] + vv[j:j + 1, :]
            better = cand > best
            best = jnp.where(better, cand, best)
            bestj = jnp.where(better, j, bestj)
        bp_ref[c] = bestj
        vv = best + feat

        return fv, vv, fwd, bls, blt

    carry0 = (fv_sc[...], vv_sc[...], fwd_ref[...], bls_ref[...], blt_ref[...])
    fv, vv, fwd, bls, blt = lax.fori_loop(0, C, step, carry0, unroll=True)
    fv_sc[...] = fv
    vv_sc[...] = vv
    fwd_ref[...] = fwd
    bls_ref[...] = bls
    blt_ref[...] = blt


def crf_core(feats_t, log_T, lens_row):
    """feats_t: (mt_p, T, bsz_p) f32; lens_row: (1, bsz_p) int32."""
    mt_p, T, bsz_p = feats_t.shape
    grid = (bsz_p // BATCH_TILE, mt_p // TIME_CHUNK)
    trans = log_T.astype(jnp.float32)
    expT = jnp.exp(trans)
    end_col = trans[END_IDX, :].reshape(T, 1)

    out_shapes = (
        jax.ShapeDtypeStruct((1, bsz_p), jnp.float32),        # forward score
        jax.ShapeDtypeStruct((1, bsz_p), jnp.int32),          # best last tag
        jax.ShapeDtypeStruct((1, bsz_p), jnp.float32),        # best path score
        jax.ShapeDtypeStruct((mt_p, T, bsz_p), jnp.int32),    # backpointers
    )
    grid_spec = pltpu.PrefetchScalarGridSpec(
        num_scalar_prefetch=0,
        grid=grid,
        in_specs=[
            pl.BlockSpec((TIME_CHUNK, T, BATCH_TILE), lambda i, k: (k, 0, i)),
            pl.BlockSpec((1, BATCH_TILE), lambda i, k: (0, i)),
            pl.BlockSpec((T, T), lambda i, k: (0, 0)),
            pl.BlockSpec((T, T), lambda i, k: (0, 0)),
            pl.BlockSpec((T, 1), lambda i, k: (0, 0)),
        ],
        out_specs=[
            pl.BlockSpec((1, BATCH_TILE), lambda i, k: (0, i)),
            pl.BlockSpec((1, BATCH_TILE), lambda i, k: (0, i)),
            pl.BlockSpec((1, BATCH_TILE), lambda i, k: (0, i)),
            pl.BlockSpec((TIME_CHUNK, T, BATCH_TILE), lambda i, k: (k, 0, i)),
        ],
        scratch_shapes=[pltpu.VMEM((T, BATCH_TILE), jnp.float32),
                        pltpu.VMEM((T, BATCH_TILE), jnp.float32)],
    )
    return pl.pallas_call(
        _crf_kernel,
        out_shape=out_shapes,
        grid_spec=grid_spec,
        compiler_params=pltpu.CompilerParams(
            dimension_semantics=("parallel", "arbitrary")),
    )(feats_t, lens_row, expT, trans, end_col)


# ------------------------- full module forward (glue) -------------------------
def chain_crf_forward(params, x, tags, lengths, training=True):
    W, b, log_T = params
    bsz, max_time, H = x.shape
    T = W.shape[0]
    lengths = lengths.astype(jnp.int32)

    bsz_p = ((bsz + BATCH_TILE - 1) // BATCH_TILE) * BATCH_TILE
    mt_p = ((max_time + TIME_CHUNK - 1) // TIME_CHUNK) * TIME_CHUNK

    x_p = jnp.zeros((bsz_p, mt_p, H), jnp.float32)
    x_p = x_p.at[:bsz, :max_time, :].set(x.astype(jnp.float32))
    lens_row = jnp.ones((bsz_p,), jnp.int32).at[:bsz].set(lengths).reshape(1, bsz_p)

    feats_t = hidden2tag_time_major(x_p, W, b)            # (mt_p, T, bsz_p)
    fwd, blt, bls, bp = crf_core(feats_t, log_T, lens_row)

    fwd_v = fwd[0, :bsz]
    blt_v = blt[0, :bsz]
    bls_v = bls[0, :bsz]

    # ---- gold (sentence) score: no recurrence -> plain-JAX gather + mask ----
    if training:
        tags_i = tags.astype(jnp.int32)
        tags_ext = jnp.concatenate(
            [jnp.full((bsz, 1), ROOT_IDX, jnp.int32), tags_i], axis=1)
        cur = tags_ext[:, :-1]                             # (bsz, mt)
        nxt = tags_ext[:, 1:]                              # (bsz, mt)
        ft = feats_t[:max_time, :, :bsz]                   # (mt, T, bsz)
        emis = jnp.take_along_axis(ft, jnp.transpose(nxt)[:, None, :],
                                   axis=1)[:, 0, :]        # (mt, bsz)
        emis = jnp.transpose(emis)                         # (bsz, mt)
        trv = log_T.astype(jnp.float32)[cur, nxt]          # (bsz, mt)
        is_end = (lengths[:, None] - 1) == jnp.arange(max_time)[None, :]
        step = jnp.where(is_end, trv, emis + trv)          # emis dropped at end
        gold = jnp.sum(step * (nxt != PAD_IDX).astype(jnp.float32), axis=1)
        loss = jnp.sum(fwd_v - gold) / bsz
    else:
        loss = None

    # ---- Viterbi backtrace (sequential pointer chasing; lax.scan glue) ----
    if max_time > 1:
        ts = jnp.arange(max_time - 1, 0, -1)
        bp_slices = bp[:max_time - 1, :, :bsz][::-1]       # bp[t-1] for t = mt-1..1

        def bt_step(cur_tag, inp):
            t, bpt = inp
            cur_tag = jnp.where(lengths - 1 == t, blt_v, cur_tag)
            prev = jnp.take_along_axis(bpt, cur_tag[None, :], axis=0)[0]
            active = (lengths - 1) >= t
            out_row = jnp.where(active, prev, 0)
            cur_tag = jnp.where(active, prev, cur_tag)
            return cur_tag, out_row

        _, rows = lax.scan(bt_step, jnp.zeros((bsz,), jnp.int32),
                           (ts, bp_slices))
        body = jnp.flip(rows, axis=0).T                    # (bsz, mt-1)
    else:
        body = jnp.zeros((bsz, 0), jnp.int32)
    best_paths = jnp.concatenate([body, jnp.zeros((bsz, 2), jnp.int32)], axis=1)
    best_paths = best_paths.at[jnp.arange(bsz), lengths - 1].set(blt_v)
    best_paths = best_paths.at[jnp.arange(bsz), lengths].set(END_IDX)

    score = bls_v.astype(jnp.int32)   # torch.LongTensor truncation toward zero
    return loss, score, best_paths


# ----------------------- pure references for checking --------------------------
def _ref_loss(params, x, tags, lengths):
    W, b, log_T = params
    feats = jnp.einsum("bth,oh->bto", x, W) + b
    bsz, max_time, T = feats.shape
    tags_ext = jnp.concatenate(
        [jnp.full((bsz, 1), ROOT_IDX, jnp.int32), tags.astype(jnp.int32)], axis=1)
    fv = jnp.broadcast_to(
        jnp.where(jnp.arange(T)[None, :] == ROOT_IDX, 0.0, NEG_INF_FWD), (bsz, T))
    fwd = jnp.zeros((bsz,))
    gold = jnp.zeros((bsz,))
    for t in range(max_time):
        is_end = (lengths - 1) == t
        fwd = jnp.where(is_end,
                        jax.scipy.special.logsumexp(fv + log_T[END_IDX][None, :],
                                                    axis=1),
                        fwd)
        feat = feats[:, t, :]
        nxt, cur = tags_ext[:, t + 1], tags_ext[:, t]
        emis = feat[jnp.arange(bsz), nxt]
        trv = log_T[cur, nxt]
        step = jnp.where(is_end, trv, emis + trv)
        gold = gold + step * (nxt != PAD_IDX)
        fv = fv + jax.scipy.special.logsumexp(feat[:, None, :] + log_T[None, :, :],
                                              axis=2)
    return jnp.sum(fwd - gold) / bsz


def _ref_viterbi(feats, log_T, lengths):
    feats = np.asarray(feats, np.float32)
    A = np.asarray(log_T, np.float32)
    lengths = np.asarray(lengths)
    bsz, mt, T = feats.shape
    vv = np.full((bsz, T), NEG_INF_VIT, np.float32)
    vv[:, ROOT_IDX] = 0.0
    bp = np.zeros((bsz, mt, T), np.int64) - 1
    best_last = np.zeros(bsz, np.int64)
    best_score = np.zeros(bsz, np.float32)
    for t in range(mt):
        end_rows = np.nonzero(lengths - 1 == t)[0]
        if len(end_rows) > 0:
            term = vv[end_rows] + A[END_IDX][None, :]
            best_score[end_rows] = term.max(axis=1)
            best_last[end_rows] = term.argmax(axis=1)
        if t < mt - 1:
            nxt = vv[:, None, :] + A[None, :, :]           # [b, i, j]
            bp[:, t, :] = nxt.argmax(axis=2)
            vv = nxt.max(axis=2) + feats[:, t, :]
    best_paths = np.zeros((bsz, mt), np.int64)
    best_paths[np.arange(bsz), lengths - 1] = best_last
    for t in range(mt - 1, 0, -1):
        active = (lengths - 1) >= t
        cur = best_paths[np.arange(bsz), t]
        prev = bp[np.arange(bsz), t - 1, cur]
        best_paths[active, t - 1] = prev[active]
    best_paths = np.concatenate([best_paths, np.zeros((bsz, 1), np.int64)], axis=1)
    best_paths[np.arange(bsz), lengths] = END_IDX
    return best_score.astype(np.int64), best_paths


# ------------------------------------ main ------------------------------------
if __name__ == "__main__":
    key = jax.random.PRNGKey(0)
    k1, k2, k3, k4 = jax.random.split(key, 4)

    bsz, max_time = 4, 10
    H, T = HIDDEN_DIM, TAGSET_SIZE

    # Parameter init matching the module's __init__ scheme:
    #   hidden2tag.weight: xavier_uniform, bias: zeros
    #   log_transitions: xavier_normal (the -10000 ROOT/END rows of the real
    #   module are an init detail; numerics here are checked against the same
    #   pure-JAX/numpy references either way).
    bound = (6.0 / (H + T)) ** 0.5
    W = jax.random.uniform(k1, (T, H), jnp.float32, -bound, bound)
    b = jnp.zeros((T,), jnp.float32)
    std = (2.0 / (T + T)) ** 0.5
    log_T = jax.random.normal(k2, (T, T), jnp.float32) * std
    params = (W, b, log_T)

    # Inputs: lengths sorted descending (the CRF implementation assumes this).
    x = jax.random.normal(k3, (bsz, max_time, H), jnp.float32)
    lengths = jnp.array([10, 7, 5, 2], jnp.int32)
    rand_tags = jax.random.randint(k4, (bsz, max_time), 0, N_REAL_TAGS, jnp.int32)
    pos = jnp.arange(max_time)[None, :]
    tags = jnp.where(pos < lengths[:, None], rand_tags, PAD_IDX)

    fwd_fn = jax.jit(functools.partial(chain_crf_forward, training=True))
    loss, score, tag_seq = fwd_fn(params, x, tags, lengths)
    jax.block_until_ready((loss, score, tag_seq))

    # --- checks against pure references ---
    ref = _ref_loss(params, x, tags, lengths)
    assert jnp.allclose(loss, ref, atol=1e-3, rtol=1e-3), (loss, ref)

    feats_full = jnp.einsum("bth,oh->bto", x, W) + b
    ref_score, ref_paths = _ref_viterbi(feats_full, log_T, lengths)
    assert np.array_equal(np.asarray(tag_seq), ref_paths), (tag_seq, ref_paths)
    assert np.array_equal(np.asarray(score), ref_score), (score, ref_score)
    assert tag_seq.shape == (bsz, max_time + 1)
    assert score.shape == (bsz,)

    print("KERNEL_OK")
</pallas_src>

<mosaic_0001>
module attributes {stable_mosaic.version = 11 : i64} {
  func.func @_linear_tm_kernel(%arg0: i32, %arg1: i32, %arg2: memref<128x8x32xf32, #tpu.memory_space<vmem>>, %arg3: memref<8x32xf32, #tpu.memory_space<vmem>>, %arg4: memref<8x1xf32, #tpu.memory_space<vmem>>, %arg5: memref<8x8x128xf32, #tpu.memory_space<vmem>>) attributes {dimension_semantics = [#tpu.dimension_semantics<parallel>, #tpu.dimension_semantics<parallel>], iteration_bounds = array<i64: 1, 2>, scalar_prefetch = 0 : i64, scratch_operands = 0 : i64, tpu.core_type = #tpu.core_type<tc>, window_params = [{transform_indices = @transform_0, window_bounds = array<i64: 128, 8, 32>}, {pipeline_mode = #tpu.pipeline_mode<synchronous>, transform_indices = @transform_1, window_bounds = array<i64: 8, 32>}, {pipeline_mode = #tpu.pipeline_mode<synchronous>, transform_indices = @transform_2, window_bounds = array<i64: 8, 1>}, {transform_indices = @transform_3, window_bounds = array<i64: 8, 8, 128>}]} {
    %c0 = arith.constant 0 : index
    %c0_0 = arith.constant 0 : index
    %0 = vector.load %arg3[%c0, %c0_0] : memref<8x32xf32, #tpu.memory_space<vmem>>, vector<8x32xf32>
    %c0_1 = arith.constant 0 : index
    %c0_2 = arith.constant 0 : index
    %1 = vector.load %arg4[%c0_1, %c0_2] : memref<8x1xf32, #tpu.memory_space<vmem>>, vector<8x1xf32>
    %2 = vector.shape_cast %1 : vector<8x1xf32> to vector<8x1xf32>
    %3 = vector.broadcast %2 : vector<8x1xf32> to vector<8x128xf32>
    %c0_3 = arith.constant 0 : index
    %c0_4 = arith.constant 0 : index
    %c0_5 = arith.constant 0 : index
    %4 = vector.load %arg2[%c0_3, %c0_4, %c0_5] : memref<128x8x32xf32, #tpu.memory_space<vmem>>, vector<128x1x32xf32>
    %5 = vector.shape_cast %4 : vector<128x1x32xf32> to vector<128x32xf32>
    %cst = arith.constant dense<0.000000e+00> : vector<8x128xf32>
    %6 = tpu.matmul %0, %5, %cst {dimension_numbers = #tpu.dot_dimension_numbers<[1], [1], [0], [0], [0, 0, 1, 0], [], []>} : vector<8x32xf32>, vector<128x32xf32>, vector<8x128xf32> -> vector<8x128xf32>
    %7 = arith.addf %6, %3 : vector<8x128xf32>
    %c0_6 = arith.constant 0 : index
    %c0_7 = arith.constant 0 : index
    %c0_8 = arith.constant 0 : index
    %8 = vector.load %arg5[%c0_6, %c0_7, %c0_8] : memref<8x8x128xf32, #tpu.memory_space<vmem>>, vector<1x8x128xf32>
    %9 = vector.shape_cast %8 : vector<1x8x128xf32> to vector<8x128xf32>
    %10 = vector.shape_cast %7 : vector<8x128xf32> to vector<1x8x128xf32>
    tpu.vector_store %arg5[%c0_6, %c0_7, %c0_8], %10 {strides = array<i32>} : memref<8x8x128xf32, #tpu.memory_space<vmem>>, vector<1x8x128xf32>,
    %c0_9 = arith.constant 0 : index
    %c1 = arith.constant 1 : index
    %c0_10 = arith.constant 0 : index
    %11 = vector.load %arg2[%c0_9, %c1, %c0_10] : memref<128x8x32xf32, #tpu.memory_space<vmem>>, vector<128x1x32xf32>
    %12 = vector.shape_cast %11 : vector<128x1x32xf32> to vector<128x32xf32>
    %cst_11 = arith.constant dense<0.000000e+00> : vector<8x128xf32>
    %13 = tpu.matmul %0, %12, %cst_11 {dimension_numbers = #tpu.dot_dimension_numbers<[1], [1], [0], [0], [0, 0, 1, 0], [], []>} : vector<8x32xf32>, vector<128x32xf32>, vector<8x128xf32> -> vector<8x128xf32>
    %14 = arith.addf %13, %3 : vector<8x128xf32>
    %c1_12 = arith.constant 1 : index
    %c0_13 = arith.constant 0 : index
    %c0_14 = arith.constant 0 : index
    %15 = vector.load %arg5[%c1_12, %c0_13, %c0_14] : memref<8x8x128xf32, #tpu.memory_space<vmem>>, vector<1x8x128xf32>
    %16 = vector.shape_cast %15 : vector<1x8x128xf32> to vector<8x128xf32>
    %17 = vector.shape_cast %14 : vector<8x128xf32> to vector<1x8x128xf32>
    tpu.vector_store %arg5[%c1_12, %c0_13, %c0_14], %17 {strides = array<i32>} : memref<8x8x128xf32, #tpu.memory_space<vmem>>, vector<1x8x128xf32>,
    %c0_15 = arith.constant 0 : index
    %c2 = arith.constant 2 : index
    %c0_16 = arith.constant 0 : index
    %18 = vector.load %arg2[%c0_15, %c2, %c0_16] : memref<128x8x32xf32, #tpu.memory_space<vmem>>, vector<128x1x32xf32>
    %19 = vector.shape_cast %18 : vector<128x1x32xf32> to vector<128x32xf32>
    %cst_17 = arith.constant dense<0.000000e+00> : vector<8x128xf32>
    %20 = tpu.matmul %0, %19, %cst_17 {dimension_numbers = #tpu.dot_dimension_numbers<[1], [1], [0], [0], [0, 0, 1, 0], [], []>} : vector<8x32xf32>, vector<128x32xf32>, vector<8x128xf32> -> vector<8x128xf32>
    %21 = arith.addf %20, %3 : vector<8x128xf32>
    %c2_18 = arith.constant 2 : index
    %c0_19 = arith.constant 0 : index
    %c0_20 = arith.constant 0 : index
    %22 = vector.load %arg5[%c2_18, %c0_19, %c0_20] : memref<8x8x128xf32, #tpu.memory_space<vmem>>, vector<1x8x128xf32>
    %23 = vector.shape_cast %22 : vector<1x8x128xf32> to vector<8x128xf32>
    %24 = vector.shape_cast %21 : vector<8x128xf32> to vector<1x8x128xf32>
    tpu.vector_store %arg5[%c2_18, %c0_19, %c0_20], %24 {strides = array<i32>} : memref<8x8x128xf32, #tpu.memory_space<vmem>>, vector<1x8x128xf32>,
    %c0_21 = arith.constant 0 : index
    %c3 = arith.constant 3 : index
    %c0_22 = arith.constant 0 : index
    %25 = vector.load %arg2[%c0_21, %c3, %c0_22] : memref<128x8x32xf32, #tpu.memory_space<vmem>>, vector<128x1x32xf32>
    %26 = vector.shape_cast %25 : vector<128x1x32xf32> to vector<128x32xf32>
    %cst_23 = arith.constant dense<0.000000e+00> : vector<8x128xf32>
    %27 = tpu.matmul %0, %26, %cst_23 {dimension_numbers = #tpu.dot_dimension_numbers<[1], [1], [0], [0], [0, 0, 1, 0], [], []>} : vector<8x32xf32>, vector<128x32xf32>, vector<8x128xf32> -> vector<8x128xf32>
    %28 = arith.addf %27, %3 : vector<8x128xf32>
    %c3_24 = arith.constant 3 : index
    %c0_25 = arith.constant 0 : index
    %c0_26 = arith.constant 0 : index
    %29 = vector.load %arg5[%c3_24, %c0_25, %c0_26] : memref<8x8x128xf32, #tpu.memory_space<vmem>>, vector<1x8x128xf32>
    %30 = vector.shape_cast %29 : vector<1x8x128xf32> to vector<8x128xf32>
    %31 = vector.shape_cast %28 : vector<8x128xf32> to vector<1x8x128xf32>
    tpu.vector_store %arg5[%c3_24, %c0_25, %c0_26], %31 {strides = array<i32>} : memref<8x8x128xf32, #tpu.memory_space<vmem>>, vector<1x8x128xf32>,
    %c0_27 = arith.constant 0 : index
    %c4 = arith.constant 4 : index
    %c0_28 = arith.constant 0 : index
    %32 = vector.load %arg2[%c0_27, %c4, %c0_28] : memref<128x8x32xf32, #tpu.memory_space<vmem>>, vector<128x1x32xf32>
    %33 = vector.shape_cast %32 : vector<128x1x32xf32> to vector<128x32xf32>
    %cst_29 = arith.constant dense<0.000000e+00> : vector<8x128xf32>
    %34 = tpu.matmul %0, %33, %cst_29 {dimension_numbers = #tpu.dot_dimension_numbers<[1], [1], [0], [0], [0, 0, 1, 0], [], []>} : vector<8x32xf32>, vector<128x32xf32>, vector<8x128xf32> -> vector<8x128xf32>
    %35 = arith.addf %34, %3 : vector<8x128xf32>
    %c4_30 = arith.constant 4 : index
    %c0_31 = arith.constant 0 : index
    %c0_32 = arith.constant 0 : index
    %36 = vector.load %arg5[%c4_30, %c0_31, %c0_32] : memref<8x8x128xf32, #tpu.memory_space<vmem>>, vector<1x8x128xf32>
    %37 = vector.shape_cast %36 : vector<1x8x128xf32> to vector<8x128xf32>
    %38 = vector.shape_cast %35 : vector<8x128xf32> to vector<1x8x128xf32>
    tpu.vector_store %arg5[%c4_30, %c0_31, %c0_32], %38 {strides = array<i32>} : memref<8x8x128xf32, #tpu.memory_space<vmem>>, vector<1x8x128xf32>,
    %c0_33 = arith.constant 0 : index
    %c5 = arith.constant 5 : index
    %c0_34 = arith.constant 0 : index
    %39 = vector.load %arg2[%c0_33, %c5, %c0_34] : memref<128x8x32xf32, #tpu.memory_space<vmem>>, vector<128x1x32xf32>
    %40 = vector.shape_cast %39 : vector<128x1x32xf32> to vector<128x32xf32>
    %cst_35 = arith.constant dense<0.000000e+00> : vector<8x128xf32>
    %41 = tpu.matmul %0, %40, %cst_35 {dimension_numbers = #tpu.dot_dimension_numbers<[1], [1], [0], [0], [0, 0, 1, 0], [], []>} : vector<8x32xf32>, vector<128x32xf32>, vector<8x128xf32> -> vector<8x128xf32>
    %42 = arith.addf %41, %3 : vector<8x128xf32>
    %c5_36 = arith.constant 5 : index
    %c0_37 = arith.constant 0 : index
    %c0_38 = arith.constant 0 : index
    %43 = vector.load %arg5[%c5_36, %c0_37, %c0_38] : memref<8x8x128xf32, #tpu.memory_space<vmem>>, vector<1x8x128xf32>
    %44 = vector.shape_cast %43 : vector<1x8x128xf32> to vector<8x128xf32>
    %45 = vector.shape_cast %42 : vector<8x128xf32> to vector<1x8x128xf32>
    tpu.vector_store %arg5[%c5_36, %c0_37, %c0_38], %45 {strides = array<i32>} : memref<8x8x128xf32, #tpu.memory_space<vmem>>, vector<1x8x128xf32>,
    %c0_39 = arith.constant 0 : index
    %c6 = arith.constant 6 : index
    %c0_40 = arith.constant 0 : index
    %46 = vector.load %arg2[%c0_39, %c6, %c0_40] : memref<128x8x32xf32, #tpu.memory_space<vmem>>, vector<128x1x32xf32>
    %47 = vector.shape_cast %46 : vector<128x1x32xf32> to vector<128x32xf32>
    %cst_41 = arith.constant dense<0.000000e+00> : vector<8x128xf32>
    %48 = tpu.matmul %0, %47, %cst_41 {dimension_numbers = #tpu.dot_dimension_numbers<[1], [1], [0], [0], [0, 0, 1, 0], [], []>} : vector<8x32xf32>, vector<128x32xf32>, vector<8x128xf32> -> vector<8x128xf32>
    %49 = arith.addf %48, %3 : vector<8x128xf32>
    %c6_42 = arith.constant 6 : index
    %c0_43 = arith.constant 0 : index
    %c0_44 = arith.constant 0 : index
    %50 = vector.load %arg5[%c6_42, %c0_43, %c0_44] : memref<8x8x128xf32, #tpu.memory_space<vmem>>, vector<1x8x128xf32>
    %51 = vector.shape_cast %50 : vector<1x8x128xf32> to vector<8x128xf32>
    %52 = vector.shape_cast %49 : vector<8x128xf32> to vector<1x8x128xf32>
    tpu.vector_store %arg5[%c6_42, %c0_43, %c0_44], %52 {strides = array<i32>} : memref<8x8x128xf32, #tpu.memory_space<vmem>>, vector<1x8x128xf32>,
    %c0_45 = arith.constant 0 : index
    %c7 = arith.constant 7 : index
    %c0_46 = arith.constant 0 : index
    %53 = vector.load %arg2[%c0_45, %c7, %c0_46] : memref<128x8x32xf32, #tpu.memory_space<vmem>>, vector<128x1x32xf32>
    %54 = vector.shape_cast %53 : vector<128x1x32xf32> to vector<128x32xf32>
    %cst_47 = arith.constant dense<0.000000e+00> : vector<8x128xf32>
    %55 = tpu.matmul %0, %54, %cst_47 {dimension_numbers = #tpu.dot_dimension_numbers<[1], [1], [0], [0], [0, 0, 1, 0], [], []>} : vector<8x32xf32>, vector<128x32xf32>, vector<8x128xf32> -> vector<8x128xf32>
    %56 = arith.addf %55, %3 : vector<8x128xf32>
    %c7_48 = arith.constant 7 : index
    %c0_49 = arith.constant 0 : index
    %c0_50 = arith.constant 0 : index
    %57 = vector.load %arg5[%c7_48, %c0_49, %c0_50] : memref<8x8x128xf32, #tpu.memory_space<vmem>>, vector<1x8x128xf32>
    %58 = vector.shape_cast %57 : vector<1x8x128xf32> to vector<8x128xf32>
    %59 = vector.shape_cast %56 : vector<8x128xf32> to vector<1x8x128xf32>
    tpu.vector_store %arg5[%c7_48, %c0_49, %c0_50], %59 {strides = array<i32>} : memref<8x8x128xf32, #tpu.memory_space<vmem>>, vector<1x8x128xf32>,
    return
  }
  func.func @transform_0(%arg0: i32, %arg1: i32) -> (i32, i32, i32) {
    %c0_i32 = arith.constant 0 : i32
    %c0_i32_0 = arith.constant 0 : i32
    return %arg0, %arg1, %c0_i32 : i32, i32, i32
  }
  func.func @transform_1(%arg0: i32, %arg1: i32) -> (i32, i32) {
    %c0_i32 = arith.constant 0 : i32
    %c0_i32_0 = arith.constant 0 : i32
    %c0_i32_1 = arith.constant 0 : i32
    return %c0_i32, %c0_i32_0 : i32, i32
  }
  func.func @transform_2(%arg0: i32, %arg1: i32) -> (i32, i32) {
    %c0_i32 = arith.constant 0 : i32
    %c0_i32_0 = arith.constant 0 : i32
    %c0_i32_1 = arith.constant 0 : i32
    return %c0_i32, %c0_i32_0 : i32, i32
  }
  func.func @transform_3(%arg0: i32, %arg1: i32) -> (i32, i32, i32) {
    %c0_i32 = arith.constant 0 : i32
    %c0_i32_0 = arith.constant 0 : i32
    return %arg1, %c0_i32, %arg0 : i32, i32, i32
  }
}

module attributes {stable_mosaic.version = 11 : i64} {
  func.func @_crf_kernel(%arg0: i32, %arg1: i32, %arg2: memref<8x8x128xf32, #tpu.memory_space<vmem>>, %arg3: memref<1x128xi32, #tpu.memory_space<vmem>>, %arg4: memref<8x8xf32, #tpu.memory_space<vmem>>, %arg5: memref<8x8xf32, #tpu.memory_space<vmem>>, %arg6: memref<8x1xf32, #tpu.memory_space<vmem>>, %arg7: memref<1x128xf32, #tpu.memory_space<vmem>>, %arg8: memref<1x128xi32, #tpu.memory_space<vmem>>, %arg9: memref<1x128xf32, #tpu.memory_space<vmem>>, %arg10: memref<8x8x128xi32, #tpu.memory_space<vmem>>, %arg11: memref<8x128xf32, #tpu.memory_space<vmem>>, %arg12: memref<8x128xf32, #tpu.memory_space<vmem>>) attributes {dimension_semantics = [#tpu.dimension_semantics<parallel>, #tpu.dimension_semantics<arbitrary>], iteration_bounds = array<i64: 1, 2>, scalar_prefetch = 0 : i64, scratch_operands = 2 : i64, tpu.core_type = #tpu.core_type<tc>, window_params = [{transform_indices = @transform_0, window_bounds = array<i64: 8, 8, 128>}, {transform_indices = @transform_1, window_bounds = array<i64: 1, 128>}, {pipeline_mode = #tpu.pipeline_mode<synchronous>, transform_indices = @transform_2, window_bounds = array<i64: 8, 8>}, {pipeline_mode = #tpu.pipeline_mode<synchronous>, transform_indices = @transform_3, window_bounds = array<i64: 8, 8>}, {pipeline_mode = #tpu.pipeline_mode<synchronous>, transform_indices = @transform_4, window_bounds = array<i64: 8, 1>}, {transform_indices = @transform_5, window_bounds = array<i64: 1, 128>}, {transform_indices = @transform_6, window_bounds = array<i64: 1, 128>}, {transform_indices = @transform_7, window_bounds = array<i64: 1, 128>}, {transform_indices = @transform_8, window_bounds = array<i64: 8, 8, 128>}]} {
    %0 = tpu.iota {dimensions = array<i32: 0>} : vector<8x128xi32>
    %c0_i32 = arith.constant 0 : i32
    %1 = arith.cmpi eq, %arg1, %c0_i32 : i32
    %2 = arith.extui %1 : i1 to i32
    %c0_i32_0 = arith.constant 0 : i32
    %3 = arith.cmpi ne, %2, %c0_i32_0 : i32
    scf.if %3 {
      %c6_i32_198 = arith.constant 6 : i32
      %1629 = vector.broadcast %c6_i32_198 : i32 to vector<8x128xi32>
      %1630 = arith.cmpi eq, %0, %1629 : vector<8x128xi32>
      %cst = arith.constant 0.000000e+00 : f32
      %cst_199 = arith.constant -1.000000e+03 : f32
      %1631 = vector.broadcast %cst : f32 to vector<8x128xf32>
      %1632 = vector.broadcast %cst_199 : f32 to vector<8x128xf32>
      %1633 = arith.select %1630, %1631, %1632 : vector<8x128xi1>, vector<8x128xf32>
      %c0_200 = arith.constant 0 : index
      %c0_201 = arith.constant 0 : index
      %1634 = vector.load %arg11[%c0_200, %c0_201] : memref<8x128xf32, #tpu.memory_space<vmem>>, vector<8x128xf32>
      tpu.vector_store %arg11[%c0_200, %c0_201], %1633 {strides = array<i32>} : memref<8x128xf32, #tpu.memory_space<vmem>>, vector<8x128xf32>,
      %c6_i32_202 = arith.constant 6 : i32
      %1635 = vector.broadcast %c6_i32_202 : i32 to vector<8x128xi32>
      %1636 = arith.cmpi eq, %0, %1635 : vector<8x128xi32>
      %cst_203 = arith.constant 0.000000e+00 : f32
      %cst_204 = arith.constant -1.000000e+04 : f32
      %1637 = vector.broadcast %cst_203 : f32 to vector<8x128xf32>
      %1638 = vector.broadcast %cst_204 : f32 to vector<8x128xf32>
      %1639 = arith.select %1636, %1637, %1638 : vector<8x128xi1>, vector<8x128xf32>
      %c0_205 = arith.constant 0 : index
      %c0_206 = arith.constant 0 : index
      %1640 = vector.load %arg12[%c0_205, %c0_206] : memref<8x128xf32, #tpu.memory_space<vmem>>, vector<8x128xf32>
      tpu.vector_store %arg12[%c0_205, %c0_206], %1639 {strides = array<i32>} : memref<8x128xf32, #tpu.memory_space<vmem>>, vector<8x128xf32>,
      %cst_207 = arith.constant 0.000000e+00 : f32
      %1641 = vector.broadcast %cst_207 : f32 to vector<1x128xf32>
      %c0_208 = arith.constant 0 : index
      %c0_209 = arith.constant 0 : index
      %1642 = vector.load %arg7[%c0_208, %c0_209] : memref<1x128xf32, #tpu.memory_space<vmem>>, vector<1x128xf32>
      tpu.vector_store %arg7[%c0_208, %c0_209], %1641 {strides = array<i32>} : memref<1x128xf32, #tpu.memory_space<vmem>>, vector<1x128xf32>,
      %c0_i32_210 = arith.constant 0 : i32
      %1643 = vector.broadcast %c0_i32_210 : i32 to vector<1x128xi32>
      %c0_211 = arith.constant 0 : index
      %c0_212 = arith.constant 0 : index
      %1644 = vector.load %arg8[%c0_211, %c0_212] : memref<1x128xi32, #tpu.memory_space<vmem>>, vector<1x128xi32>
      tpu.vector_store %arg8[%c0_211, %c0_212], %1643 {strides = array<i32>} : memref<1x128xi32, #tpu.memory_space<vmem>>, vector<1x128xi32>,
      %cst_213 = arith.constant 0.000000e+00 : f32
      %1645 = vector.broadcast %cst_213 : f32 to vector<1x128xf32>
      %c0_214 = arith.constant 0 : index
      %c0_215 = arith.constant 0 : index
      %1646 = vector.load %arg9[%c0_214, %c0_215] : memref<1x128xf32, #tpu.memory_space<vmem>>, vector<1x128xf32>
      tpu.vector_store %arg9[%c0_214, %c0_215], %1645 {strides = array<i32>} : memref<1x128xf32, #tpu.memory_space<vmem>>, vector<1x128xf32>,
    } else {
    }
    %c0 = arith.constant 0 : index
    %c0_1 = arith.constant 0 : index
    %4 = vector.load %arg3[%c0, %c0_1] : memref<1x128xi32, #tpu.memory_space<vmem>>, vector<1x128xi32>
    %c0_2 = arith.constant 0 : index
    %c0_3 = arith.constant 0 : index
    %5 = vector.load %arg6[%c0_2, %c0_3] : memref<8x1xf32, #tpu.memory_space<vmem>>, vector<8x1xf32>
    %6 = vector.shape_cast %5 : vector<8x1xf32> to vector<8x1xf32>
    %7 = vector.broadcast %6 : vector<8x1xf32> to vector<8x128xf32>
    %c0_4 = arith.constant 0 : index
    %c0_5 = arith.constant 0 : index
    %8 = vector.load %arg4[%c0_4, %c0_5] : memref<8x8xf32, #tpu.memory_space<vmem>>, vector<8x8xf32>
    %c0_6 = arith.constant 0 : index
    %c0_7 = arith.constant 0 : index
    %9 = vector.load %arg5[%c0_6, %c0_7] : memref<8x8xf32, #tpu.memory_space<vmem>>, vector<8x8xf32>
    %10 = vector.extract_strided_slice %8 {offsets = [0, 0], sizes = [8, 1], strides = [1, 1]} : vector<8x8xf32> to vector<8x1xf32>
    %11 = vector.shape_cast %10 : vector<8x1xf32> to vector<8x1xf32>
    %12 = vector.broadcast %11 : vector<8x1xf32> to vector<8x128xf32>
    %13 = vector.extract_strided_slice %8 {offsets = [0, 1], sizes = [8, 1], strides = [1, 1]} : vector<8x8xf32> to vector<8x1xf32>
    %14 = vector.shape_cast %13 : vector<8x1xf32> to vector<8x1xf32>
    %15 = vector.broadcast %14 : vector<8x1xf32> to vector<8x128xf32>
    %16 = vector.extract_strided_slice %8 {offsets = [0, 2], sizes = [8, 1], strides = [1, 1]} : vector<8x8xf32> to vector<8x1xf32>
    %17 = vector.shape_cast %16 : vector<8x1xf32> to vector<8x1xf32>
    %18 = vector.broadcast %17 : vector<8x1xf32> to vector<8x128xf32>
    %19 = vector.extract_strided_slice %8 {offsets = [0, 3], sizes = [8, 1], strides = [1, 1]} : vector<8x8xf32> to vector<8x1xf32>
    %20 = vector.shape_cast %19 : vector<8x1xf32> to vector<8x1xf32>
    %21 = vector.broadcast %20 : vector<8x1xf32> to vector<8x128xf32>
    %22 = vector.extract_strided_slice %8 {offsets = [0, 4], sizes = [8, 1], strides = [1, 1]} : vector<8x8xf32> to vector<8x1xf32>
    %23 = vector.shape_cast %22 : vector<8x1xf32> to vector<8x1xf32>
    %24 = vector.broadcast %23 : vector<8x1xf32> to vector<8x128xf32>
    %25 = vector.extract_strided_slice %8 {offsets = [0, 5], sizes = [8, 1], strides = [1, 1]} : vector<8x8xf32> to vector<8x1xf32>
    %26 = vector.shape_cast %25 : vector<8x1xf32> to vector<8x1xf32>
    %27 = vector.broadcast %26 : vector<8x1xf32> to vector<8x128xf32>
    %28 = vector.extract_strided_slice %8 {offsets = [0, 6], sizes = [8, 1], strides = [1, 1]} : vector<8x8xf32> to vector<8x1xf32>
    %29 = vector.shape_cast %28 : vector<8x1xf32> to vector<8x1xf32>
    %30 = vector.broadcast %29 : vector<8x1xf32> to vector<8x128xf32>
    %31 = vector.extract_strided_slice %8 {offsets = [0, 7], sizes = [8, 1], strides = [1, 1]} : vector<8x8xf32> to vector<8x1xf32>
    %32 = vector.shape_cast %31 : vector<8x1xf32> to vector<8x1xf32>
    %33 = vector.broadcast %32 : vector<8x1xf32> to vector<8x128xf32>
    %34 = vector.extract_strided_slice %9 {offsets = [0, 0], sizes = [8, 1], strides = [1, 1]} : vector<8x8xf32> to vector<8x1xf32>
    %35 = vector.shape_cast %34 : vector<8x1xf32> to vector<8x1xf32>
    %36 = vector.broadcast %35 : vector<8x1xf32> to vector<8x128xf32>
    %37 = vector.extract_strided_slice %9 {offsets = [0, 1], sizes = [8, 1], strides = [1, 1]} : vector<8x8xf32> to vector<8x1xf32>
    %38 = vector.shape_cast %37 : vector<8x1xf32> to vector<8x1xf32>
    %39 = vector.broadcast %38 : vector<8x1xf32> to vector<8x128xf32>
    %40 = vector.extract_strided_slice %9 {offsets = [0, 2], sizes = [8, 1], strides = [1, 1]} : vector<8x8xf32> to vector<8x1xf32>
    %41 = vector.shape_cast %40 : vector<8x1xf32> to vector<8x1xf32>
    %42 = vector.broadcast %41 : vector<8x1xf32> to vector<8x128xf32>
    %43 = vector.extract_strided_slice %9 {offsets = [0, 3], sizes = [8, 1], strides = [1, 1]} : vector<8x8xf32> to vector<8x1xf32>
    %44 = vector.shape_cast %43 : vector<8x1xf32> to vector<8x1xf32>
    %45 = vector.broadcast %44 : vector<8x1xf32> to vector<8x128xf32>
    %46 = vector.extract_strided_slice %9 {offsets = [0, 4], sizes = [8, 1], strides = [1, 1]} : vector<8x8xf32> to vector<8x1xf32>
    %47 = vector.shape_cast %46 : vector<8x1xf32> to vector<8x1xf32>
    %48 = vector.broadcast %47 : vector<8x1xf32> to vector<8x128xf32>
    %49 = vector.extract_strided_slice %9 {offsets = [0, 5], sizes = [8, 1], strides = [1, 1]} : vector<8x8xf32> to vector<8x1xf32>
    %50 = vector.shape_cast %49 : vector<8x1xf32> to vector<8x1xf32>
    %51 = vector.broadcast %50 : vector<8x1xf32> to vector<8x128xf32>
    %52 = vector.extract_strided_slice %9 {offsets = [0, 6], sizes = [8, 1], strides = [1, 1]} : vector<8x8xf32> to vector<8x1xf32>
    %53 = vector.shape_cast %52 : vector<8x1xf32> to vector<8x1xf32>
    %54 = vector.broadcast %53 : vector<8x1xf32> to vector<8x128xf32>
    %55 = vector.extract_strided_slice %9 {offsets = [0, 7], sizes = [8, 1], strides = [1, 1]} : vector<8x8xf32> to vector<8x1xf32>
    %56 = vector.shape_cast %55 : vector<8x1xf32> to vector<8x1xf32>
    %57 = vector.broadcast %56 : vector<8x1xf32> to vector<8x128xf32>
    %c8_i32 = arith.constant 8 : i32
    %58 = arith.muli %arg1, %c8_i32 : i32
    %c0_8 = arith.constant 0 : index
    %c0_9 = arith.constant 0 : index
    %59 = vector.load %arg11[%c0_8, %c0_9] : memref<8x128xf32, #tpu.memory_space<vmem>>, vector<8x128xf32>
    %c0_10 = arith.constant 0 : index
    %c0_11 = arith.constant 0 : index
    %60 = vector.load %arg12[%c0_10, %c0_11] : memref<8x128xf32, #tpu.memory_space<vmem>>, vector<8x128xf32>
    %c0_12 = arith.constant 0 : index
    %c0_13 = arith.constant 0 : index
    %61 = vector.load %arg7[%c0_12, %c0_13] : memref<1x128xf32, #tpu.memory_space<vmem>>, vector<1x128xf32>
    %c0_14 = arith.constant 0 : index
    %c0_15 = arith.constant 0 : index
    %62 = vector.load %arg9[%c0_14, %c0_15] : memref<1x128xf32, #tpu.memory_space<vmem>>, vector<1x128xf32>
    %c0_16 = arith.constant 0 : index
    %c0_17 = arith.constant 0 : index
    %63 = vector.load %arg8[%c0_16, %c0_17] : memref<1x128xi32, #tpu.memory_space<vmem>>, vector<1x128xi32>
    %c0_i32_18 = arith.constant 0 : i32
    %64 = arith.addi %58, %c0_i32_18 : i32
    %c1_i32 = arith.constant 1 : i32
    %65 = arith.addi %64, %c1_i32 : i32
    %66 = vector.broadcast %65 : i32 to vector<1x128xi32>
    %67 = arith.cmpi eq, %4, %66 : vector<1x128xi32>
    %68 = arith.addf %59, %7 : vector<8x128xf32>
    %69 = vector.extract_strided_slice %68 {offsets = [0, 0], sizes = [1, 128], strides = [1, 1]} : vector<8x128xf32> to vector<1x128xf32>
    %70 = vector.extract_strided_slice %68 {offsets = [1, 0], sizes = [1, 128], strides = [1, 1]} : vector<8x128xf32> to vector<1x128xf32>
    %71 = arith.maximumf %69, %70 : vector<1x128xf32>
    %72 = vector.extract_strided_slice %68 {offsets = [2, 0], sizes = [1, 128], strides = [1, 1]} : vector<8x128xf32> to vector<1x128xf32>
    %73 = arith.maximumf %71, %72 : vector<1x128xf32>
    %74 = vector.extract_strided_slice %68 {offsets = [3, 0], sizes = [1, 128], strides = [1, 1]} : vector<8x128xf32> to vector<1x128xf32>
    %75 = arith.maximumf %73, %74 : vector<1x128xf32>
    %76 = vector.extract_strided_slice %68 {offsets = [4, 0], sizes = [1, 128], strides = [1, 1]} : vector<8x128xf32> to vector<1x128xf32>
    %77 = arith.maximumf %75, %76 : vector<1x128xf32>
    %78 = vector.extract_strided_slice %68 {offsets = [5, 0], sizes = [1, 128], strides = [1, 1]} : vector<8x128xf32> to vector<1x128xf32>
    %79 = arith.maximumf %77, %78 : vector<1x128xf32>
    %80 = vector.extract_strided_slice %68 {offsets = [6, 0], sizes = [1, 128], strides = [1, 1]} : vector<8x128xf32> to vector<1x128xf32>
    %81 = arith.maximumf %79, %80 : vector<1x128xf32>
    %82 = vector.extract_strided_slice %68 {offsets = [7, 0], sizes = [1, 128], strides = [1, 1]} : vector<8x128xf32> to vector<1x128xf32>
    %83 = arith.maximumf %81, %82 : vector<1x128xf32>
    %84 = vector.broadcast %83 : vector<1x128xf32> to vector<8x128xf32>
    %85 = arith.subf %68, %84 : vector<8x128xf32>
    %86 = math.exp %85 : vector<8x128xf32>
    %87 = vector.extract_strided_slice %86 {offsets = [0, 0], sizes = [1, 128], strides = [1, 1]} : vector<8x128xf32> to vector<1x128xf32>
    %88 = vector.extract_strided_slice %86 {offsets = [1, 0], sizes = [1, 128], strides = [1, 1]} : vector<8x128xf32> to vector<1x128xf32>
    %89 = arith.addf %87, %88 : vector<1x128xf32>
    %90 = vector.extract_strided_slice %86 {offsets = [2, 0], sizes = [1, 128], strides = [1, 1]} : vector<8x128xf32> to vector<1x128xf32>
    %91 = arith.addf %89, %90 : vector<1x128xf32>
    %92 = vector.extract_strided_slice %86 {offsets = [3, 0], sizes = [1, 128], strides = [1, 1]} : vector<8x128xf32> to vector<1x128xf32>
    %93 = arith.addf %91, %92 : vector<1x128xf32>
    %94 = vector.extract_strided_slice %86 {offsets = [4, 0], sizes = [1, 128], strides = [1, 1]} : vector<8x128xf32> to vector<1x128xf32>
    %95 = arith.addf %93, %94 : vector<1x128xf32>
    %96 = vector.extract_strided_slice %86 {offsets = [5, 0], sizes = [1, 128], strides = [1, 1]} : vector<8x128xf32> to vector<1x128xf32>
    %97 = arith.addf %95, %96 : vector<1x128xf32>
    %98 = vector.extract_strided_slice %86 {offsets = [6, 0], sizes = [1, 128], strides = [1, 1]} : vector<8x128xf32> to vector<1x128xf32>
    %99 = arith.addf %97, %98 : vector<1x128xf32>
    %100 = vector.extract_strided_slice %86 {offsets = [7, 0], sizes = [1, 128], strides = [1, 1]} : vector<8x128xf32> to vector<1x128xf32>
    %101 = arith.addf %99, %100 : vector<1x128xf32>
    %102 = math.log %101 : vector<1x128xf32>
    %103 = arith.addf %83, %102 : vector<1x128xf32>
    %104 = arith.select %67, %103, %61 : vector<1x128xi1>, vector<1x128xf32>
    %105 = arith.addf %60, %7 : vector<8x128xf32>
    %106 = vector.extract_strided_slice %105 {offsets = [0, 0], sizes = [1, 128], strides = [1, 1]} : vector<8x128xf32> to vector<1x128xf32>
    %c0_i32_19 = arith.constant 0 : i32
    %107 = vector.broadcast %c0_i32_19 : i32 to vector<1x128xi32>
    %108 = vector.extract_strided_slice %105 {offsets = [1, 0], sizes = [1, 128], strides = [1, 1]} : vector<8x128xf32> to vector<1x128xf32>
    %109 = arith.cmpf ogt, %108, %106 : vector<1x128xf32>
    %110 = arith.select %109, %108, %106 : vector<1x128xi1>, vector<1x128xf32>
    %c1_i32_20 = arith.constant 1 : i32
    %111 = vector.broadcast %c1_i32_20 : i32 to vector<1x128xi32>
    %112 = arith.select %109, %111, %107 : vector<1x128xi1>, vector<1x128xi32>
    %113 = vector.extract_strided_slice %105 {offsets = [2, 0], sizes = [1, 128], strides = [1, 1]} : vector<8x128xf32> to vector<1x128xf32>
    %114 = arith.cmpf ogt, %113, %110 : vector<1x128xf32>
    %115 = arith.select %114, %113, %110 : vector<1x128xi1>, vector<1x128xf32>
    %c2_i32 = arith.constant 2 : i32
    %116 = vector.broadcast %c2_i32 : i32 to vector<1x128xi32>
    %117 = arith.select %114, %116, %112 : vector<1x128xi1>, vector<1x128xi32>
    %118 = vector.extract_strided_slice %105 {offsets = [3, 0], sizes = [1, 128], strides = [1, 1]} : vector<8x128xf32> to vector<1x128xf32>
    %119 = arith.cmpf ogt, %118, %115 : vector<1x128xf32>
    %120 = arith.select %119, %118, %115 : vector<1x128xi1>, vector<1x128xf32>
    %c3_i32 = arith.constant 3 : i32
    %121 = vector.broadcast %c3_i32 : i32 to vector<1x128xi32>
    %122 = arith.select %119, %121, %117 : vector<1x128xi1>, vector<1x128xi32>
    %123 = vector.extract_strided_slice %105 {offsets = [4, 0], sizes = [1, 128], strides = [1, 1]} : vector<8x128xf32> to vector<1x128xf32>
    %124 = arith.cmpf ogt, %123, %120 : vector<1x128xf32>
    %125 = arith.select %124, %123, %120 : vector<1x128xi1>, vector<1x128xf32>
    %c4_i32 = arith.constant 4 : i32
    %126 = vector.broadcast %c4_i32 : i32 to vector<1x128xi32>
    %127 = arith.select %124, %126, %122 : vector<1x128xi1>, vector<1x128xi32>
    %128 = vector.extract_strided_slice %105 {offsets = [5, 0], sizes = [1, 128], strides = [1, 1]} : vector<8x128xf32> to vector<1x128xf32>
    %129 = arith.cmpf ogt, %128, %125 : vector<1x128xf32>
    %130 = arith.select %129, %128, %125 : vector<1x128xi1>, vector<1x128xf32>
    %c5_i32 = arith.constant 5 : i32
    %131 = vector.broadcast %c5_i32 : i32 to vector<1x128xi32>
    %132 = arith.select %129, %131, %127 : vector<1x128xi1>, vector<1x128xi32>
    %133 = vector.extract_strided_slice %105 {offsets = [6, 0], sizes = [1, 128], strides = [1, 1]} : vector<8x128xf32> to vector<1x128xf32>
    %134 = arith.cmpf ogt, %133, %130 : vector<1x128xf32>
    %135 = arith.select %134, %133, %130 : vector<1x128xi1>, vector<1x128xf32>
    %c6_i32 = arith.constant 6 : i32
    %136 = vector.broadcast %c6_i32 : i32 to vector<1x128xi32>
    %137 = arith.select %134, %136, %132 : vector<1x128xi1>, vector<1x128xi32>
    %138 = vector.extract_strided_slice %105 {offsets = [7, 0], sizes = [1, 128], strides = [1, 1]} : vector<8x128xf32> to vector<1x128xf32>
    %139 = arith.cmpf ogt, %138, %135 : vector<1x128xf32>
    %140 = arith.select %139, %138, %135 : vector<1x128xi1>, vector<1x128xf32>
    %c7_i32 = arith.constant 7 : i32
    %141 = vector.broadcast %c7_i32 : i32 to vector<1x128xi32>
    %142 = arith.select %139, %141, %137 : vector<1x128xi1>, vector<1x128xi32>
    %143 = arith.select %67, %140, %62 : vector<1x128xi1>, vector<1x128xf32>
    %144 = arith.select %67, %142, %63 : vector<1x128xi1>, vector<1x128xi32>
    %145 = arith.index_cast %c0_i32_18 : i32 to index
    %c0_21 = arith.constant 0 : index
    %c0_22 = arith.constant 0 : index
    %146 = vector.load %arg2[%145, %c0_21, %c0_22] : memref<8x8x128xf32, #tpu.memory_space<vmem>>, vector<1x8x128xf32>
    %147 = vector.shape_cast %146 : vector<1x8x128xf32> to vector<8x128xf32>
    %148 = vector.extract_strided_slice %147 {offsets = [0, 0], sizes = [1, 128], strides = [1, 1]} : vector<8x128xf32> to vector<1x128xf32>
    %149 = vector.extract_strided_slice %147 {offsets = [1, 0], sizes = [1, 128], strides = [1, 1]} : vector<8x128xf32> to vector<1x128xf32>
    %150 = arith.maximumf %148, %149 : vector<1x128xf32>
    %151 = vector.extract_strided_slice %147 {offsets = [2, 0], sizes = [1, 128], strides = [1, 1]} : vector<8x128xf32> to vector<1x128xf32>
    %152 = arith.maximumf %150, %151 : vector<1x128xf32>
    %153 = vector.extract_strided_slice %147 {offsets = [3, 0], sizes = [1, 128], strides = [1, 1]} : vector<8x128xf32> to vector<1x128xf32>
    %154 = arith.maximumf %152, %153 : vector<1x128xf32>
    %155 = vector.extract_strided_slice %147 {offsets = [4, 0], sizes = [1, 128], strides = [1, 1]} : vector<8x128xf32> to vector<1x128xf32>
    %156 = arith.maximumf %154, %155 : vector<1x128xf32>
    %157 = vector.extract_strided_slice %147 {offsets = [5, 0], sizes = [1, 128], strides = [1, 1]} : vector<8x128xf32> to vector<1x128xf32>
    %158 = arith.maximumf %156, %157 : vector<1x128xf32>
    %159 = vector.extract_strided_slice %147 {offsets = [6, 0], sizes = [1, 128], strides = [1, 1]} : vector<8x128xf32> to vector<1x128xf32>
    %160 = arith.maximumf %158, %159 : vector<1x128xf32>
    %161 = vector.extract_strided_slice %147 {offsets = [7, 0], sizes = [1, 128], strides = [1, 1]} : vector<8x128xf32> to vector<1x128xf32>
    %162 = arith.maximumf %160, %161 : vector<1x128xf32>
    %163 = vector.broadcast %162 : vector<1x128xf32> to vector<8x128xf32>
    %164 = arith.subf %147, %163 : vector<8x128xf32>
    %165 = math.exp %164 : vector<8x128xf32>
    %166 = vector.extract_strided_slice %165 {offsets = [0, 0], sizes = [1, 128], strides = [1, 1]} : vector<8x128xf32> to vector<1x128xf32>
    %167 = vector.broadcast %166 : vector<1x128xf32> to vector<8x128xf32>
    %168 = arith.mulf %12, %167 : vector<8x128xf32>
    %169 = vector.extract_strided_slice %165 {offsets = [1, 0], sizes = [1, 128], strides = [1, 1]} : vector<8x128xf32> to vector<1x128xf32>
    %170 = vector.broadcast %169 : vector<1x128xf32> to vector<8x128xf32>
    %171 = arith.mulf %15, %170 : vector<8x128xf32>
    %172 = arith.addf %168, %171 : vector<8x128xf32>
    %173 = vector.extract_strided_slice %165 {offsets = [2, 0], sizes = [1, 128], strides = [1, 1]} : vector<8x128xf32> to vector<1x128xf32>
    %174 = vector.broadcast %173 : vector<1x128xf32> to vector<8x128xf32>
    %175 = arith.mulf %18, %174 : vector<8x128xf32>
    %176 = arith.addf %172, %175 : vector<8x128xf32>
    %177 = vector.extract_strided_slice %165 {offsets = [3, 0], sizes = [1, 128], strides = [1, 1]} : vector<8x128xf32> to vector<1x128xf32>
    %178 = vector.broadcast %177 : vector<1x128xf32> to vector<8x128xf32>
    %179 = arith.mulf %21, %178 : vector<8x128xf32>
    %180 = arith.addf %176, %179 : vector<8x128xf32>
    %181 = vector.extract_strided_slice %165 {offsets = [4, 0], sizes = [1, 128], strides = [1, 1]} : vector<8x128xf32> to vector<1x128xf32>
    %182 = vector.broadcast %181 : vector<1x128xf32> to vector<8x128xf32>
    %183 = arith.mulf %24, %182 : vector<8x128xf32>
    %184 = arith.addf %180, %183 : vector<8x128xf32>
    %185 = vector.extract_strided_slice %165 {offsets = [5, 0], sizes = [1, 128], strides = [1, 1]} : vector<8x128xf32> to vector<1x128xf32>
    %186 = vector.broadcast %185 : vector<1x128xf32> to vector<8x128xf32>
    %187 = arith.mulf %27, %186 : vector<8x128xf32>
    %188 = arith.addf %184, %187 : vector<8x128xf32>
    %189 = vector.extract_strided_slice %165 {offsets = [6, 0], sizes = [1, 128], strides = [1, 1]} : vector<8x128xf32> to vector<1x128xf32>
    %190 = vector.broadcast %189 : vector<1x128xf32> to vector<8x128xf32>
    %191 = arith.mulf %30, %190 : vector<8x128xf32>
    %192 = arith.addf %188, %191 : vector<8x128xf32>
    %193 = vector.extract_strided_slice %165 {offsets = [7, 0], sizes = [1, 128], strides = [1, 1]} : vector<8x128xf32> to vector<1x128xf32>
    %194 = vector.broadcast %193 : vector<1x128xf32> to vector<8x128xf32>
    %195 = arith.mulf %33, %194 : vector<8x128xf32>
    %196 = arith.addf %192, %195 : vector<8x128xf32>
    %197 = vector.broadcast %162 : vector<1x128xf32> to vector<8x128xf32>
    %198 = arith.addf %59, %197 : vector<8x128xf32>
    %199 = math.log %196 : vector<8x128xf32>
    %200 = arith.addf %198, %199 : vector<8x128xf32>
    %201 = vector.extract_strided_slice %60 {offsets = [0, 0], sizes = [1, 128], strides = [1, 1]} : vector<8x128xf32> to vector<1x128xf32>
    %202 = vector.broadcast %201 : vector<1x128xf32> to vector<8x128xf32>
    %203 = arith.addf %36, %202 : vector<8x128xf32>
    %c0_i32_23 = arith.constant 0 : i32
    %204 = vector.broadcast %c0_i32_23 : i32 to vector<8x128xi32>
    %205 = vector.extract_strided_slice %60 {offsets = [1, 0], sizes = [1, 128], strides = [1, 1]} : vector<8x128xf32> to vector<1x128xf32>
    %206 = vector.broadcast %205 : vector<1x128xf32> to vector<8x128xf32>
    %207 = arith.addf %39, %206 : vector<8x128xf32>
    %208 = arith.cmpf ogt, %207, %203 : vector<8x128xf32>
    %209 = arith.select %208, %207, %203 : vector<8x128xi1>, vector<8x128xf32>
    %c1_i32_24 = arith.constant 1 : i32
    %210 = vector.broadcast %c1_i32_24 : i32 to vector<8x128xi32>
    %211 = arith.select %208, %210, %204 : vector<8x128xi1>, vector<8x128xi32>
    %212 = vector.extract_strided_slice %60 {offsets = [2, 0], sizes = [1, 128], strides = [1, 1]} : vector<8x128xf32> to vector<1x128xf32>
    %213 = vector.broadcast %212 : vector<1x128xf32> to vector<8x128xf32>
    %214 = arith.addf %42, %213 : vector<8x128xf32>
    %215 = arith.cmpf ogt, %214, %209 : vector<8x128xf32>
    %216 = arith.select %215, %214, %209 : vector<8x128xi1>, vector<8x128xf32>
    %c2_i32_25 = arith.constant 2 : i32
    %217 = vector.broadcast %c2_i32_25 : i32 to vector<8x128xi32>
    %218 = arith.select %215, %217, %211 : vector<8x128xi1>, vector<8x128xi32>
    %219 = vector.extract_strided_slice %60 {offsets = [3, 0], sizes = [1, 128], strides = [1, 1]} : vector<8x128xf32> to vector<1x128xf32>
    %220 = vector.broadcast %219 : vector<1x128xf32> to vector<8x128xf32>
    %221 = arith.addf %45, %220 : vector<8x128xf32>
    %222 = arith.cmpf ogt, %221, %216 : vector<8x128xf32>
    %223 = arith.select %222, %221, %216 : vector<8x128xi1>, vector<8x128xf32>
    %c3_i32_26 = arith.constant 3 : i32
    %224 = vector.broadcast %c3_i32_26 : i32 to vector<8x128xi32>
    %225 = arith.select %222, %224, %218 : vector<8x128xi1>, vector<8x128xi32>
    %226 = vector.extract_strided_slice %60 {offsets = [4, 0], sizes = [1, 128], strides = [1, 1]} : vector<8x128xf32> to vector<1x128xf32>
    %227 = vector.broadcast %226 : vector<1x128xf32> to vector<8x128xf32>
    %228 = arith.addf %48, %227 : vector<8x128xf32>
    %229 = arith.cmpf ogt, %228, %223 : vector<8x128xf32>
    %230 = arith.select %229, %228, %223 : vector<8x128xi1>, vector<8x128xf32>
    %c4_i32_27 = arith.constant 4 : i32
    %231 = vector.broadcast %c4_i32_27 : i32 to vector<8x128xi32>
    %232 = arith.select %229, %231, %225 : vector<8x128xi1>, vector<8x128xi32>
    %233 = vector.extract_strided_slice %60 {offsets = [5, 0], sizes = [1, 128], strides = [1, 1]} : vector<8x128xf32> to vector<1x128xf32>
    %234 = vector.broadcast %233 : vector<1x128xf32> to vector<8x128xf32>
    %235 = arith.addf %51, %234 : vector<8x128xf32>
    %236 = arith.cmpf ogt, %235, %230 : vector<8x128xf32>
    %237 = arith.select %236, %235, %230 : vector<8x128xi1>, vector<8x128xf32>
    %c5_i32_28 = arith.constant 5 : i32
    %238 = vector.broadcast %c5_i32_28 : i32 to vector<8x128xi32>
    %239 = arith.select %236, %238, %232 : vector<8x128xi1>, vector<8x128xi32>
    %240 = vector.extract_strided_slice %60 {offsets = [6, 0], sizes = [1, 128], strides = [1, 1]} : vector<8x128xf32> to vector<1x128xf32>
    %241 = vector.broadcast %240 : vector<1x128xf32> to vector<8x128xf32>
    %242 = arith.addf %54, %241 : vector<8x128xf32>
    %243 = arith.cmpf ogt, %242, %237 : vector<8x128xf32>
    %244 = arith.select %243, %242, %237 : vector<8x128xi1>, vector<8x128xf32>
    %c6_i32_29 = arith.constant 6 : i32
    %245 = vector.broadcast %c6_i32_29 : i32 to vector<8x128xi32>
    %246 = arith.select %243, %245, %239 : vector<8x128xi1>, vector<8x128xi32>
    %247 = vector.extract_strided_slice %60 {offsets = [7, 0], sizes = [1, 128], strides = [1, 1]} : vector<8x128xf32> to vector<1x128xf32>
    %248 = vector.broadcast %247 : vector<1x128xf32> to vector<8x128xf32>
    %249 = arith.addf %57, %248 : vector<8x128xf32>
    %250 = arith.cmpf ogt, %249, %244 : vector<8x128xf32>
    %251 = arith.select %250, %249, %244 : vector<8x128xi1>, vector<8x128xf32>
    %c7_i32_30 = arith.constant 7 : i32
    %252 = vector.broadcast %c7_i32_30 : i32 to vector<8x128xi32>
    %253 = arith.select %250, %252, %246 : vector<8x128xi1>, vector<8x128xi32>
    %254 = arith.index_cast %c0_i32_18 : i32 to index
    %c0_31 = arith.constant 0 : index
    %c0_32 = arith.constant 0 : index
    %255 = vector.load %arg10[%254, %c0_31, %c0_32] : memref<8x8x128xi32, #tpu.memory_space<vmem>>, vector<1x8x128xi32>
    %256 = vector.shape_cast %255 : vector<1x8x128xi32> to vector<8x128xi32>
    %257 = vector.shape_cast %253 : vector<8x128xi32> to vector<1x8x128xi32>
    tpu.vector_store %arg10[%254, %c0_31, %c0_32], %257 {strides = array<i32>} : memref<8x8x128xi32, #tpu.memory_space<vmem>>, vector<1x8x128xi32>,
    %258 = arith.addf %251, %147 : vector<8x128xf32>
    %c1_i32_33 = arith.constant 1 : i32
    %259 = arith.addi %58, %c1_i32_33 : i32
    %c1_i32_34 = arith.constant 1 : i32
    %260 = arith.addi %259, %c1_i32_34 : i32
    %261 = vector.broadcast %260 : i32 to vector<1x128xi32>
    %262 = arith.cmpi eq, %4, %261 : vector<1x128xi32>
    %263 = arith.addf %200, %7 : vector<8x128xf32>
    %264 = vector.extract_strided_slice %263 {offsets = [0, 0], sizes = [1, 128], strides = [1, 1]} : vector<8x128xf32> to vector<1x128xf32>
    %265 = vector.extract_strided_slice %263 {offsets = [1, 0], sizes = [1, 128], strides = [1, 1]} : vector<8x128xf32> to vector<1x128xf32>
    %266 = arith.maximumf %264, %265 : vector<1x128xf32>
    %267 = vector.extract_strided_slice %263 {offsets = [2, 0], sizes = [1, 128], strides = [1, 1]} : vector<8x128xf32> to vector<1x128xf32>
    %268 = arith.maximumf %266, %267 : vector<1x128xf32>
    %269 = vector.extract_strided_slice %263 {offsets = [3, 0], sizes = [1, 128], strides = [1, 1]} : vector<8x128xf32> to vector<1x128xf32>
    %270 = arith.maximumf %268, %269 : vector<1x128xf32>
    %271 = vector.extract_strided_slice %263 {offsets = [4, 0], sizes = [1, 128], strides = [1, 1]} : vector<8x128xf32> to vector<1x128xf32>
    %272 = arith.maximumf %270, %271 : vector<1x128xf32>
    %273 = vector.extract_strided_slice %263 {offsets = [5, 0], sizes = [1, 128], strides = [1, 1]} : vector<8x128xf32> to vector<1x128xf32>
    %274 = arith.maximumf %272, %273 : vector<1x128xf32>
    %275 = vector.extract_strided_slice %263 {offsets = [6, 0], sizes = [1, 128], strides = [1, 1]} : vector<8x128xf32> to vector<1x128xf32>
    %276 = arith.maximumf %274, %275 : vector<1x128xf32>
    %277 = vector.extract_strided_slice %263 {offsets = [7, 0], sizes = [1, 128], strides = [1, 1]} : vector<8x128xf32> to vector<1x128xf32>
    %278 = arith.maximumf %276, %277 : vector<1x128xf32>
    %279 = vector.broadcast %278 : vector<1x128xf32> to vector<8x128xf32>
    %280 = arith.subf %263, %279 : vector<8x128xf32>
    %281 = math.exp %280 : vector<8x128xf32>
    %282 = vector.extract_strided_slice %281 {offsets = [0, 0], sizes = [1, 128], strides = [1, 1]} : vector<8x128xf32> to vector<1x128xf32>
    %283 = vector.extract_strided_slice %281 {offsets = [1, 0], sizes = [1, 128], strides = [1, 1]} : vector<8x128xf32> to vector<1x128xf32>
    %284 = arith.addf %282, %283 : vector<1x128xf32>
    %285 = vector.extract_strided_slice %281 {offsets = [2, 0], sizes = [1, 128], strides = [1, 1]} : vector<8x128xf32> to vector<1x128xf32>
    %286 = arith.addf %284, %285 : vector<1x128xf32>
    %287 = vector.extract_strided_slice %281 {offsets = [3, 0], sizes = [1, 128], strides = [1, 1]} : vector<8x128xf32> to vector<1x128xf32>
    %288 = arith.addf %286, %287 : vector<1x128xf32>
    %289 = vector.extract_strided_slice %281 {offsets = [4, 0], sizes = [1, 128], strides = [1, 1]} : vector<8x128xf32> to vector<1x128xf32>
    %290 = arith.addf %288, %289 : vector<1x128xf32>
    %291 = vector.extract_strided_slice %281 {offsets = [5, 0], sizes = [1, 128], strides = [1, 1]} : vector<8x128xf32> to vector<1x128xf32>
    %292 = arith.addf %290, %291 : vector<1x128xf32>
    %293 = vector.extract_strided_slice %281 {offsets = [6, 0], sizes = [1, 128], strides = [1, 1]} : vector<8x128xf32> to vector<1x128xf32>
    %294 = arith.addf %292, %293 : vector<1x128xf32>
    %295 = vector.extract_strided_slice %281 {offsets = [7, 0], sizes = [1, 128], strides = [1, 1]} : vector<8x128xf32> to vector<1x128xf32>
    %296 = arith.addf %294, %295 : vector<1x128xf32>
    %297 = math.log %296 : vector<1x128xf32>
    %298 = arith.addf %278, %297 : vector<1x128xf32>
    %299 = arith.select %262, %298, %104 : vector<1x128xi1>, vector<1x128xf32>
    %300 = arith.addf %258, %7 : vector<8x128xf32>
    %301 = vector.extract_strided_slice %300 {offsets = [0, 0], sizes = [1, 128], strides = [1, 1]} : vector<8x128xf32> to vector<1x128xf32>
    %c0_i32_35 = arith.constant 0 : i32
    %302 = vector.broadcast %c0_i32_35 : i32 to vector<1x128xi32>
    %303 = vector.extract_strided_slice %300 {offsets = [1, 0], sizes = [1, 128], strides = [1, 1]} : vector<8x128xf32> to vector<1x128xf32>
    %304 = arith.cmpf ogt, %303, %301 : vector<1x128xf32>
    %305 = arith.select %304, %303, %301 : vector<1x128xi1>, vector<1x128xf32>
    %c1_i32_36 = arith.constant 1 : i32
    %306 = vector.broadcast %c1_i32_36 : i32 to vector<1x128xi32>
    %307 = arith.select %304, %306, %302 : vector<1x128xi1>, vector<1x128xi32>
    %308 = vector.extract_strided_slice %300 {offsets = [2, 0], sizes = [1, 128], strides = [1, 1]} : vector<8x128xf32> to vector<1x128xf32>
    %309 = arith.cmpf ogt, %308, %305 : vector<1x128xf32>
    %310 = arith.select %309, %308, %305 : vector<1x128xi1>, vector<1x128xf32>
    %c2_i32_37 = arith.constant 2 : i32
    %311 = vector.broadcast %c2_i32_37 : i32 to vector<1x128xi32>
    %312 = arith.select %309, %311, %307 : vector<1x128xi1>, vector<1x128xi32>
    %313 = vector.extract_strided_slice %300 {offsets = [3, 0], sizes = [1, 128], strides = [1, 1]} : vector<8x128xf32> to vector<1x128xf32>
    %314 = arith.cmpf ogt, %313, %310 : vector<1x128xf32>
    %315 = arith.select %314, %313, %310 : vector<1x128xi1>, vector<1x128xf32>
    %c3_i32_38 = arith.constant 3 : i32
    %316 = vector.broadcast %c3_i32_38 : i32 to vector<1x128xi32>
    %317 = arith.select %314, %316, %312 : vector<1x128xi1>, vector<1x128xi32>
    %318 = vector.extract_strided_slice %300 {offsets = [4, 0], sizes = [1, 128], strides = [1, 1]} : vector<8x128xf32> to vector<1x128xf32>
    %319 = arith.cmpf ogt, %318, %315 : vector<1x128xf32>
    %320 = arith.select %319, %318, %315 : vector<1x128xi1>, vector<1x128xf32>
    %c4_i32_39 = arith.constant 4 : i32
    %321 = vector.broadcast %c4_i32_39 : i32 to vector<1x128xi32>
    %322 = arith.select %319, %321, %317 : vector<1x128xi1>, vector<1x128xi32>
    %323 = vector.extract_strided_slice %300 {offsets = [5, 0], sizes = [1, 128], strides = [1, 1]} : vector<8x128xf32> to vector<1x128xf32>
    %324 = arith.cmpf ogt, %323, %320 : vector<1x128xf32>
    %325 = arith.select %324, %323, %320 : vector<1x128xi1>, vector<1x128xf32>
    %c5_i32_40 = arith.constant 5 : i32
    %326 = vector.broadcast %c5_i32_40 : i32 to vector<1x128xi32>
    %327 = arith.select %324, %326, %322 : vector<1x128xi1>, vector<1x128xi32>
    %328 = vector.extract_strided_slice %300 {offsets = [6, 0], sizes = [1, 128], strides = [1, 1]} : vector<8x128xf32> to vector<1x128xf32>
    %329 = arith.cmpf ogt, %328, %325 : vector<1x128xf32>
    %330 = arith.select %329, %328, %325 : vector<1x128xi1>, vector<1x128xf32>
    %c6_i32_41 = arith.constant 6 : i32
    %331 = vector.broadcast %c6_i32_41 : i32 to vector<1x128xi32>
    %332 = arith.select %329, %331, %327 : vector<1x128xi1>, vector<1x128xi32>
    %333 = vector.extract_strided_slice %300 {offsets = [7, 0], sizes = [1, 128], strides = [1, 1]} : vector<8x128xf32> to vector<1x128xf32>
    %334 = arith.cmpf ogt, %333, %330 : vector<1x128xf32>
    %335 = arith.select %334, %333, %330 : vector<1x128xi1>, vector<1x128xf32>
    %c7_i32_42 = arith.constant 7 : i32
    %336 = vector.broadcast %c7_i32_42 : i32 to vector<1x128xi32>
    %337 = arith.select %334, %336, %332 : vector<1x128xi1>, vector<1x128xi32>
    %338 = arith.select %262, %335, %143 : vector<1x128xi1>, vector<1x128xf32>
    %339 = arith.select %262, %337, %144 : vector<1x128xi1>, vector<1x128xi32>
    %340 = arith.index_cast %c1_i32_33 : i32 to index
    %c0_43 = arith.constant 0 : index
    %c0_44 = arith.constant 0 : index
    %341 = vector.load %arg2[%340, %c0_43, %c0_44] : memref<8x8x128xf32, #tpu.memory_space<vmem>>, vector<1x8x128xf32>
    %342 = vector.shape_cast %341 : vector<1x8x128xf32> to vector<8x128xf32>
    %343 = vector.extract_strided_slice %342 {offsets = [0, 0], sizes = [1, 128], strides = [1, 1]} : vector<8x128xf32> to vector<1x128xf32>
    %344 = vector.extract_strided_slice %342 {offsets = [1, 0], sizes = [1, 128], strides = [1, 1]} : vector<8x128xf32> to vector<1x128xf32>
    %345 = arith.maximumf %343, %344 : vector<1x128xf32>
    %346 = vector.extract_strided_slice %342 {offsets = [2, 0], sizes = [1, 128], strides = [1, 1]} : vector<8x128xf32> to vector<1x128xf32>
    %347 = arith.maximumf %345, %346 : vector<1x128xf32>
    %348 = vector.extract_strided_slice %342 {offsets = [3, 0], sizes = [1, 128], strides = [1, 1]} : vector<8x128xf32> to vector<1x128xf32>
    %349 = arith.maximumf %347, %348 : vector<1x128xf32>
    %350 = vector.extract_strided_slice %342 {offsets = [4, 0], sizes = [1, 128], strides = [1, 1]} : vector<8x128xf32> to vector<1x128xf32>
    %351 = arith.maximumf %349, %350 : vector<1x128xf32>
    %352 = vector.extract_strided_slice %342 {offsets = [5, 0], sizes = [1, 128], strides = [1, 1]} : vector<8x128xf32> to vector<1x128xf32>
    %353 = arith.maximumf %351, %352 : vector<1x128xf32>
    %354 = vector.extract_strided_slice %342 {offsets = [6, 0], sizes = [1, 128], strides = [1, 1]} : vector<8x128xf32> to vector<1x128xf32>
    %355 = arith.maximumf %353, %354 : vector<1x128xf32>
    %356 = vector.extract_strided_slice %342 {offsets = [7, 0], sizes = [1, 128], strides = [1, 1]} : vector<8x128xf32> to vector<1x128xf32>
    %357 = arith.maximumf %355, %356 : vector<1x128xf32>
    %358 = vector.broadcast %357 : vector<1x128xf32> to vector<8x128xf32>
    %359 = arith.subf %342, %358 : vector<8x128xf32>
    %360 = math.exp %359 : vector<8x128xf32>
    %361 = vector.extract_strided_slice %360 {offsets = [0, 0], sizes = [1, 128], strides = [1, 1]} : vector<8x128xf32> to vector<1x128xf32>
    %362 = vector.broadcast %361 : vector<1x128xf32> to vector<8x128xf32>
    %363 = arith.mulf %12, %362 : vector<8x128xf32>
    %364 = vector.extract_strided_slice %360 {offsets = [1, 0], sizes = [1, 128], strides = [1, 1]} : vector<8x128xf32> to vector<1x128xf32>
    %365 = vector.broadcast %364 : vector<1x128xf32> to vector<8x128xf32>
    %366 = arith.mulf %15, %365 : vector<8x128xf32>
    %367 = arith.addf %363, %366 : vector<8x128xf32>
    %368 = vector.extract_strided_slice %360 {offsets = [2, 0], sizes = [1, 128], strides = [1, 1]} : vector<8x128xf32> to vector<1x128xf32>
    %369 = vector.broadcast %368 : vector<1x128xf32> to vector<8x128xf32>
    %370 = arith.mulf %18, %369 : vector<8x128xf32>
    %371 = arith.addf %367, %370 : vector<8x128xf32>
    %372 = vector.extract_strided_slice %360 {offsets = [3, 0], sizes = [1, 128], strides = [1, 1]} : vector<8x128xf32> to vector<1x128xf32>
    %373 = vector.broadcast %372 : vector<1x128xf32> to vector<8x128xf32>
    %374 = arith.mulf %21, %373 : vector<8x128xf32>
    %375 = arith.addf %371, %374 : vector<8x128xf32>
    %376 = vector.extract_strided_slice %360 {offsets = [4, 0], sizes = [1, 128], strides = [1, 1]} : vector<8x128xf32> to vector<1x128xf32>
    %377 = vector.broadcast %376 : vector<1x128xf32> to vector<8x128xf32>
    %378 = arith.mulf %24, %377 : vector<8x128xf32>
    %379 = arith.addf %375, %378 : vector<8x128xf32>
    %380 = vector.extract_strided_slice %360 {offsets = [5, 0], sizes = [1, 128], strides = [1, 1]} : vector<8x128xf32> to vector<1x128xf32>
    %381 = vector.broadcast %380 : vector<1x128xf32> to vector<8x128xf32>
    %382 = arith.mulf %27, %381 : vector<8x128xf32>
    %383 = arith.addf %379, %382 : vector<8x128xf32>
    %384 = vector.extract_strided_slice %360 {offsets = [6, 0], sizes = [1, 128], strides = [1, 1]} : vector<8x128xf32> to vector<1x128xf32>
    %385 = vector.broadcast %384 : vector<1x128xf32> to vector<8x128xf32>
    %386 = arith.mulf %30, %385 : vector<8x128xf32>
    %387 = arith.addf %383, %386 : vector<8x128xf32>
    %388 = vector.extract_strided_slice %360 {offsets = [7, 0], sizes = [1, 128], strides = [1, 1]} : vector<8x128xf32> to vector<1x128xf32>
    %389 = vector.broadcast %388 : vector<1x128xf32> to vector<8x128xf32>
    %390 = arith.mulf %33, %389 : vector<8x128xf32>
    %391 = arith.addf %387, %390 : vector<8x128xf32>
    %392 = vector.broadcast %357 : vector<1x128xf32> to vector<8x128xf32>
    %393 = arith.addf %200, %392 : vector<8x128xf32>
    %394 = math.log %391 : vector<8x128xf32>
    %395 = arith.addf %393, %394 : vector<8x128xf32>
    %396 = vector.extract_strided_slice %258 {offsets = [0, 0], sizes = [1, 128], strides = [1, 1]} : vector<8x128xf32> to vector<1x128xf32>
    %397 = vector.broadcast %396 : vector<1x128xf32> to vector<8x128xf32>
    %398 = arith.addf %36, %397 : vector<8x128xf32>
    %c0_i32_45 = arith.constant 0 : i32
    %399 = vector.broadcast %c0_i32_45 : i32 to vector<8x128xi32>
    %400 = vector.extract_strided_slice %258 {offsets = [1, 0], sizes = [1, 128], strides = [1, 1]} : vector<8x128xf32> to vector<1x128xf32>
    %401 = vector.broadcast %400 : vector<1x128xf32> to vector<8x128xf32>
    %402 = arith.addf %39, %401 : vector<8x128xf32>
    %403 = arith.cmpf ogt, %402, %398 : vector<8x128xf32>
    %404 = arith.select %403, %402, %398 : vector<8x128xi1>, vector<8x128xf32>
    %c1_i32_46 = arith.constant 1 : i32
    %405 = vector.broadcast %c1_i32_46 : i32 to vector<8x128xi32>
    %406 = arith.select %403, %405, %399 : vector<8x128xi1>, vector<8x128xi32>
    %407 = vector.extract_strided_slice %258 {offsets = [2, 0], sizes = [1, 128], strides = [1, 1]} : vector<8x128xf32> to vector<1x128xf32>
    %408 = vector.broadcast %407 : vector<1x128xf32> to vector<8x128xf32>
    %409 = arith.addf %42, %408 : vector<8x128xf32>
    %410 = arith.cmpf ogt, %409, %404 : vector<8x128xf32>
    %411 = arith.select %410, %409, %404 : vector<8x128xi1>, vector<8x128xf32>
    %c2_i32_47 = arith.constant 2 : i32
    %412 = vector.broadcast %c2_i32_47 : i32 to vector<8x128xi32>
    %413 = arith.select %410, %412, %406 : vector<8x128xi1>, vector<8x128xi32>
    %414 = vector.extract_strided_slice %258 {offsets = [3, 0], sizes = [1, 128], strides = [1, 1]} : vector<8x128xf32> to vector<1x128xf32>
    %415 = vector.broadcast %414 : vector<1x128xf32> to vector<8x128xf32>
    %416 = arith.addf %45, %415 : vector<8x128xf32>
    %417 = arith.cmpf ogt, %416, %411 : vector<8x128xf32>
    %418 = arith.select %417, %416, %411 : vector<8x128xi1>, vector<8x128xf32>
    %c3_i32_48 = arith.constant 3 : i32
    %419 = vector.broadcast %c3_i32_48 : i32 to vector<8x128xi32>
    %420 = arith.select %417, %419, %413 : vector<8x128xi1>, vector<8x128xi32>
    %421 = vector.extract_strided_slice %258 {offsets = [4, 0], sizes = [1, 128], strides = [1, 1]} : vector<8x128xf32> to vector<1x128xf32>
    %422 = vector.broadcast %421 : vector<1x128xf32> to vector<8x128xf32>
    %423 = arith.addf %48, %422 : vector<8x128xf32>
    %424 = arith.cmpf ogt, %423, %418 : vector<8x128xf32>
    %425 = arith.select %424, %423, %418 : vector<8x128xi1>, vector<8x128xf32>
    %c4_i32_49 = arith.constant 4 : i32
    %426 = vector.broadcast %c4_i32_49 : i32 to vector<8x128xi32>
    %427 = arith.select %424, %426, %420 : vector<8x128xi1>, vector<8x128xi32>
    %428 = vector.extract_strided_slice %258 {offsets = [5, 0], sizes = [1, 128], strides = [1, 1]} : vector<8x128xf32> to vector<1x128xf32>
    %429 = vector.broadcast %428 : vector<1x128xf32> to vector<8x128xf32>
    %430 = arith.addf %51, %429 : vector<8x128xf32>
    %431 = arith.cmpf ogt, %430, %425 : vector<8x128xf32>
    %432 = arith.select %431, %430, %425 : vector<8x128xi1>, vector<8x128xf32>
    %c5_i32_50 = arith.constant 5 : i32
    %433 = vector.broadcast %c5_i32_50 : i32 to vector<8x128xi32>
    %434 = arith.select %431, %433, %427 : vector<8x128xi1>, vector<8x128xi32>
    %435 = vector.extract_strided_slice %258 {offsets = [6, 0], sizes = [1, 128], strides = [1, 1]} : vector<8x128xf32> to vector<1x128xf32>
    %436 = vector.broadcast %435 : vector<1x128xf32> to vector<8x128xf32>
    %437 = arith.addf %54, %436 : vector<8x128xf32>
    %438 = arith.cmpf ogt, %437, %432 : vector<8x128xf32>
    %439 = arith.select %438, %437, %432 : vector<8x128xi1>, vector<8x128xf32>
    %c6_i32_51 = arith.constant 6 : i32
    %440 = vector.broadcast %c6_i32_51 : i32 to vector<8x128xi32>
    %441 = arith.select %438, %440, %434 : vector<8x128xi1>, vector<8x128xi32>
    %442 = vector.extract_strided_slice %258 {offsets = [7, 0], sizes = [1, 128], strides = [1, 1]} : vector<8x128xf32> to vector<1x128xf32>
    %443 = vector.broadcast %442 : vector<1x128xf32> to vector<8x128xf32>
    %444 = arith.addf %57, %443 : vector<8x128xf32>
    %445 = arith.cmpf ogt, %444, %439 : vector<8x128xf32>
    %446 = arith.select %445, %444, %439 : vector<8x128xi1>, vector<8x128xf32>
    %c7_i32_52 = arith.constant 7 : i32
    %447 = vector.broadcast %c7_i32_52 : i32 to vector<8x128xi32>
    %448 = arith.select %445, %447, %441 : vector<8x128xi1>, vector<8x128xi32>
    %449 = arith.index_cast %c1_i32_33 : i32 to index
    %c0_53 = arith.constant 0 : index
    %c0_54 = arith.constant 0 : index
    %450 = vector.load %arg10[%449, %c0_53, %c0_54] : memref<8x8x128xi32, #tpu.memory_space<vmem>>, vector<1x8x128xi32>
    %451 = vector.shape_cast %450 : vector<1x8x128xi32> to vector<8x128xi32>
    %452 = vector.shape_cast %448 : vector<8x128xi32> to vector<1x8x128xi32>
    tpu.vector_store %arg10[%449, %c0_53, %c0_54], %452 {strides = array<i32>} : memref<8x8x128xi32, #tpu.memory_space<vmem>>, vector<1x8x128xi32>,
    %453 = arith.addf %446, %342 : vector<8x128xf32>
    %c2_i32_55 = arith.constant 2 : i32
    %454 = arith.addi %58, %c2_i32_55 : i32
    %c1_i32_56 = arith.constant 1 : i32
    %455 = arith.addi %454, %c1_i32_56 : i32
    %456 = vector.broadcast %455 : i32 to vector<1x128xi32>
    %457 = arith.cmpi eq, %4, %456 : vector<1x128xi32>
    %458 = arith.addf %395, %7 : vector<8x128xf32>
    %459 = vector.extract_strided_slice %458 {offsets = [0, 0], sizes = [1, 128], strides = [1, 1]} : vector<8x128xf32> to vector<1x128xf32>
    %460 = vector.extract_strided_slice %458 {offsets = [1, 0], sizes = [1, 128], strides = [1, 1]} : vector<8x128xf32> to vector<1x128xf32>
    %461 = arith.maximumf %459, %460 : vector<1x128xf32>
    %462 = vector.extract_strided_slice %458 {offsets = [2, 0], sizes = [1, 128], strides = [1, 1]} : vector<8x128xf32> to vector<1x128xf32>
    %463 = arith.maximumf %461, %462 : vector<1x128xf32>
    %464 = vector.extract_strided_slice %458 {offsets = [3, 0], sizes = [1, 128], strides = [1, 1]} : vector<8x128xf32> to vector<1x128xf32>
    %465 = arith.maximumf %463, %464 : vector<1x128xf32>
    %466 = vector.extract_strided_slice %458 {offsets = [4, 0], sizes = [1, 128], strides = [1, 1]} : vector<8x128xf32> to vector<1x128xf32>
    %467 = arith.maximumf %465, %466 : vector<1x128xf32>
    %468 = vector.extract_strided_slice %458 {offsets = [5, 0], sizes = [1, 128], strides = [1, 1]} : vector<8x128xf32> to vector<1x128xf32>
    %469 = arith.maximumf %467, %468 : vector<1x128xf32>
    %470 = vector.extract_strided_slice %458 {offsets = [6, 0], sizes = [1, 128], strides = [1, 1]} : vector<8x128xf32> to vector<1x128xf32>
    %471 = arith.maximumf %469, %470 : vector<1x128xf32>
    %472 = vector.extract_strided_slice %458 {offsets = [7, 0], sizes = [1, 128], strides = [1, 1]} : vector<8x128xf32> to vector<1x128xf32>
    %473 = arith.maximumf %471, %472 : vector<1x128xf32>
    %474 = vector.broadcast %473 : vector<1x128xf32> to vector<8x128xf32>
    %475 = arith.subf %458, %474 : vector<8x128xf32>
    %476 = math.exp %475 : vector<8x128xf32>
    %477 = vector.extract_strided_slice %476 {offsets = [0, 0], sizes = [1, 128], strides = [1, 1]} : vector<8x128xf32> to vector<1x128xf32>
    %478 = vector.extract_strided_slice %476 {offsets = [1, 0], sizes = [1, 128], strides = [1, 1]} : vector<8x128xf32> to vector<1x128xf32>
    %479 = arith.addf %477, %478 : vector<1x128xf32>
    %480 = vector.extract_strided_slice %476 {offsets = [2, 0], sizes = [1, 128], strides = [1, 1]} : vector<8x128xf32> to vector<1x128xf32>
    %481 = arith.addf %479, %480 : vector<1x128xf32>
    %482 = vector.extract_strided_slice %476 {offsets = [3, 0], sizes = [1, 128], strides = [1, 1]} : vector<8x128xf32> to vector<1x128xf32>
    %483 = arith.addf %481, %482 : vector<1x128xf32>
    %484 = vector.extract_strided_slice %476 {offsets = [4, 0], sizes = [1, 128], strides = [1, 1]} : vector<8x128xf32> to vector<1x128xf32>
    %485 = arith.addf %483, %484 : vector<1x128xf32>
    %486 = vector.extract_strided_slice %476 {offsets = [5, 0], sizes = [1, 128], strides = [1, 1]} : vector<8x128xf32> to vector<1x128xf32>
    %487 = arith.addf %485, %486 : vector<1x128xf32>
    %488 = vector.extract_strided_slice %476 {offsets = [6, 0], sizes = [1, 128], strides = [1, 1]} : vector<8x128xf32> to vector<1x128xf32>
    %489 = arith.addf %487, %488 : vector<1x128xf32>
    %490 = vector.extract_strided_slice %476 {offsets = [7, 0], sizes = [1, 128], strides = [1, 1]} : vector<8x128xf32> to vector<1x128xf32>
    %491 = arith.addf %489, %490 : vector<1x128xf32>
    %492 = math.log %491 : vector<1x128xf32>
    %493 = arith.addf %473, %492 : vector<1x128xf32>
    %494 = arith.select %457, %493, %299 : vector<1x128xi1>, vector<1x128xf32>
    %495 = arith.addf %453, %7 : vector<8x128xf32>
    %496 = vector.extract_strided_slice %495 {offsets = [0, 0], sizes = [1, 128], strides = [1, 1]} : vector<8x128xf32> to vector<1x128xf32>
    %c0_i32_57 = arith.constant 0 : i32
    %497 = vector.broadcast %c0_i32_57 : i32 to vector<1x128xi32>
    %498 = vector.extract_strided_slice %495 {offsets = [1, 0], sizes = [1, 128], strides = [1, 1]} : vector<8x128xf32> to vector<1x128xf32>
    %499 = arith.cmpf ogt, %498, %496 : vector<1x128xf32>
    %500 = arith.select %499, %498, %496 : vector<1x128xi1>, vector<1x128xf32>
    %c1_i32_58 = arith.constant 1 : i32
    %501 = vector.broadcast %c1_i32_58 : i32 to vector<1x128xi32>
    %502 = arith.select %499, %501, %497 : vector<1x128xi1>, vector<1x128xi32>
    %503 = vector.extract_strided_slice %495 {offsets = [2, 0], sizes = [1, 128], strides = [1, 1]} : vector<8x128xf32> to vector<1x128xf32>
    %504 = arith.cmpf ogt, %503, %500 : vector<1x128xf32>
    %505 = arith.select %504, %503, %500 : vector<1x128xi1>, vector<1x128xf32>
    %c2_i32_59 = arith.constant 2 : i32
    %506 = vector.broadcast %c2_i32_59 : i32 to vector<1x128xi32>
    %507 = arith.select %504, %506, %502 : vector<1x128xi1>, vector<1x128xi32>
    %508 = vector.extract_strided_slice %495 {offsets = [3, 0], sizes = [1, 128], strides = [1, 1]} : vector<8x128xf32> to vector<1x128xf32>
    %509 = arith.cmpf ogt, %508, %505 : vector<1x128xf32>
    %510 = arith.select %509, %508, %505 : vector<1x128xi1>, vector<1x128xf32>
    %c3_i32_60 = arith.constant 3 : i32
    %511 = vector.broadcast %c3_i32_60 : i32 to vector<1x128xi32>
    %512 = arith.select %509, %511, %507 : vector<1x128xi1>, vector<1x128xi32>
    %513 = vector.extract_strided_slice %495 {offsets = [4, 0], sizes = [1, 128], strides = [1, 1]} : vector<8x128xf32> to vector<1x128xf32>
    %514 = arith.cmpf ogt, %513, %510 : vector<1x128xf32>
    %515 = arith.select %514, %513, %510 : vector<1x128xi1>, vector<1x128xf32>
    %c4_i32_61 = arith.constant 4 : i32
    %516 = vector.broadcast %c4_i32_61 : i32 to vector<1x128xi32>
    %517 = arith.select %514, %516, %512 : vector<1x128xi1>, vector<1x128xi32>
    %518 = vector.extract_strided_slice %495 {offsets = [5, 0], sizes = [1, 128], strides = [1, 1]} : vector<8x128xf32> to vector<1x128xf32>
    %519 = arith.cmpf ogt, %518, %515 : vector<1x128xf32>
    %520 = arith.select %519, %518, %515 : vector<1x128xi1>, vector<1x128xf32>
    %c5_i32_62 = arith.constant 5 : i32
    %521 = vector.broadcast %c5_i32_62 : i32 to vector<1x128xi32>
    %522 = arith.select %519, %521, %517 : vector<1x128xi1>, vector<1x128xi32>
    %523 = vector.extract_strided_slice %495 {offsets = [6, 0], sizes = [1, 128], strides = [1, 1]} : vector<8x128xf32> to vector<1x128xf32>
    %524 = arith.cmpf ogt, %523, %520 : vector<1x128xf32>
    %525 = arith.select %524, %523, %520 : vector<1x128xi1>, vector<1x128xf32>
    %c6_i32_63 = arith.constant 6 : i32
    %526 = vector.broadcast %c6_i32_63 : i32 to vector<1x128xi32>
    %527 = arith.select %524, %526, %522 : vector<1x128xi1>, vector<1x128xi32>
    %528 = vector.extract_strided_slice %495 {offsets = [7, 0], sizes = [1, 128], strides = [1, 1]} : vector<8x128xf32> to vector<1x128xf32>
    %529 = arith.cmpf ogt, %528, %525 : vector<1x128xf32>
    %530 = arith.select %529, %528, %525 : vector<1x128xi1>, vector<1x128xf32>
    %c7_i32_64 = arith.constant 7 : i32
    %531 = vector.broadcast %c7_i32_64 : i32 to vector<1x128xi32>
    %532 = arith.select %529, %531, %527 : vector<1x128xi1>, vector<1x128xi32>
    %533 = arith.select %457, %530, %338 : vector<1x128xi1>, vector<1x128xf32>
    %534 = arith.select %457, %532, %339 : vector<1x128xi1>, vector<1x128xi32>
    %535 = arith.index_cast %c2_i32_55 : i32 to index
    %c0_65 = arith.constant 0 : index
    %c0_66 = arith.constant 0 : index
    %536 = vector.load %arg2[%535, %c0_65, %c0_66] : memref<8x8x128xf32, #tpu.memory_space<vmem>>, vector<1x8x128xf32>
    %537 = vector.shape_cast %536 : vector<1x8x128xf32> to vector<8x128xf32>
    %538 = vector.extract_strided_slice %537 {offsets = [0, 0], sizes = [1, 128], strides = [1, 1]} : vector<8x128xf32> to vector<1x128xf32>
    %539 = vector.extract_strided_slice %537 {offsets = [1, 0], sizes = [1, 128], strides = [1, 1]} : vector<8x128xf32> to vector<1x128xf32>
    %540 = arith.maximumf %538, %539 : vector<1x128xf32>
    %541 = vector.extract_strided_slice %537 {offsets = [2, 0], sizes = [1, 128], strides = [1, 1]} : vector<8x128xf32> to vector<1x128xf32>
    %542 = arith.maximumf %540, %541 : vector<1x128xf32>
    %543 = vector.extract_strided_slice %537 {offsets = [3, 0], sizes = [1, 128], strides = [1, 1]} : vector<8x128xf32> to vector<1x128xf32>
    %544 = arith.maximumf %542, %543 : vector<1x128xf32>
    %545 = vector.extract_strided_slice %537 {offsets = [4, 0], sizes = [1, 128], strides = [1, 1]} : vector<8x128xf32> to vector<1x128xf32>
    %546 = arith.maximumf %544, %545 : vector<1x128xf32>
    %547 = vector.extract_strided_slice %537 {offsets = [5, 0], sizes = [1, 128], strides = [1, 1]} : vector<8x128xf32> to vector<1x128xf32>
    %548 = arith.maximumf %546, %547 : vector<1x128xf32>
    %549 = vector.extract_strided_slice %537 {offsets = [6, 0], sizes = [1, 128], strides = [1, 1]} : vector<8x128xf32> to vector<1x128xf32>
    %550 = arith.maximumf %548, %549 : vector<1x128xf32>
    %551 = vector.extract_strided_slice %537 {offsets = [7, 0], sizes = [1, 128], strides = [1, 1]} : vector<8x128xf32> to vector<1x128xf32>
    %552 = arith.maximumf %550, %551 : vector<1x128xf32>
    %553 = vector.broadcast %552 : vector<1x128xf32> to vector<8x128xf32>
    %554 = arith.subf %537, %553 : vector<8x128xf32>
    %555 = math.exp %554 : vector<8x128xf32>
    %556 = vector.extract_strided_slice %555 {offsets = [0, 0], sizes = [1, 128], strides = [1, 1]} : vector<8x128xf32> to vector<1x128xf32>
    %557 = vector.broadcast %556 : vector<1x128xf32> to vector<8x128xf32>
    %558 = arith.mulf %12, %557 : vector<8x128xf32>
    %559 = vector.extract_strided_slice %555 {offsets = [1, 0], sizes = [1, 128], strides = [1, 1]} : vector<8x128xf32> to vector<1x128xf32>
    %560 = vector.broadcast %559 : vector<1x128xf32> to vector<8x128xf32>
    %561 = arith.mulf %15, %560 : vector<8x128xf32>
    %562 = arith.addf %558, %561 : vector<8x128xf32>
    %563 = vector.extract_strided_slice %555 {offsets = [2, 0], sizes = [1, 128], strides = [1, 1]} : vector<8x128xf32> to vector<1x128xf32>
    %564 = vector.broadcast %563 : vector<1x128xf32> to vector<8x128xf32>
    %565 = arith.mulf %18, %564 : vector<8x128xf32>
    %566 = arith.addf %562, %565 : vector<8x128xf32>
    %567 = vector.extract_strided_slice %555 {offsets = [3, 0], sizes = [1, 128], strides = [1, 1]} : vector<8x128xf32> to vector<1x128xf32>
    %568 = vector.broadcast %567 : vector<1x128xf32> to vector<8x128xf32>
    %569 = arith.mulf %21, %568 : vector<8x128xf32>
    %570 = arith.addf %566, %569 : vector<8x128xf32>
    %571 = vector.extract_strided_slice %555 {offsets = [4, 0], sizes = [1, 128], strides = [1, 1]} : vector<8x128xf32> to vector<1x128xf32>
    %572 = vector.broadcast %571 : vector<1x128xf32> to vector<8x128xf32>
    %573 = arith.mulf %24, %572 : vector<8x128xf32>
    %574 = arith.addf %570, %573 : vector<8x128xf32>
    %575 = vector.extract_strided_slice %555 {offsets = [5, 0], sizes = [1, 128], strides = [1, 1]} : vector<8x128xf32> to vector<1x128xf32>
    %576 = vector.broadcast %575 : vector<1x128xf32> to vector<8x128xf32>
    %577 = arith.mulf %27, %576 : vector<8x128xf32>
    %578 = arith.addf %574, %577 : vector<8x128xf32>
    %579 = vector.extract_strided_slice %555 {offsets = [6, 0], sizes = [1, 128], strides = [1, 1]} : vector<8x128xf32> to vector<1x128xf32>
    %580 = vector.broadcast %579 : vector<1x128xf32> to vector<8x128xf32>
    %581 = arith.mulf %30, %580 : vector<8x128xf32>
    %582 = arith.addf %578, %581 : vector<8x128xf32>
    %583 = vector.extract_strided_slice %555 {offsets = [7, 0], sizes = [1, 128], strides = [1, 1]} : vector<8x128xf32> to vector<1x128xf32>
    %584 = vector.broadcast %583 : vector<1x128xf32> to vector<8x128xf32>
    %585 = arith.mulf %33, %584 : vector<8x128xf32>
    %586 = arith.addf %582, %585 : vector<8x128xf32>
    %587 = vector.broadcast %552 : vector<1x128xf32> to vector<8x128xf32>
    %588 = arith.addf %395, %587 : vector<8x128xf32>
    %589 = math.log %586 : vector<8x128xf32>
    %590 = arith.addf %588, %589 : vector<8x128xf32>
    %591 = vector.extract_strided_slice %453 {offsets = [0, 0], sizes = [1, 128], strides = [1, 1]} : vector<8x128xf32> to vector<1x128xf32>
    %592 = vector.broadcast %591 : vector<1x128xf32> to vector<8x128xf32>
    %593 = arith.addf %36, %592 : vector<8x128xf32>
    %c0_i32_67 = arith.constant 0 : i32
    %594 = vector.broadcast %c0_i32_67 : i32 to vector<8x128xi32>
    %595 = vector.extract_strided_slice %453 {offsets = [1, 0], sizes = [1, 128], strides = [1, 1]} : vector<8x128xf32> to vector<1x128xf32>
    %596 = vector.broadcast %595 : vector<1x128xf32> to vector<8x128xf32>
    %597 = arith.addf %39, %596 : vector<8x128xf32>
    %598 = arith.cmpf ogt, %597, %593 : vector<8x128xf32>
    %599 = arith.select %598, %597, %593 : vector<8x128xi1>, vector<8x128xf32>
    %c1_i32_68 = arith.constant 1 : i32
    %600 = vector.broadcast %c1_i32_68 : i32 to vector<8x128xi32>
    %601 = arith.select %598, %600, %594 : vector<8x128xi1>, vector<8x128xi32>
    %602 = vector.extract_strided_slice %453 {offsets = [2, 0], sizes = [1, 128], strides = [1, 1]} : vector<8x128xf32> to vector<1x128xf32>
    %603 = vector.broadcast %602 : vector<1x128xf32> to vector<8x128xf32>
    %604 = arith.addf %42, %603 : vector<8x128xf32>
    %605 = arith.cmpf ogt, %604, %599 : vector<8x128xf32>
    %606 = arith.select %605, %604, %599 : vector<8x128xi1>, vector<8x128xf32>
    %c2_i32_69 = arith.constant 2 : i32
    %607 = vector.broadcast %c2_i32_69 : i32 to vector<8x128xi32>
    %608 = arith.select %605, %607, %601 : vector<8x128xi1>, vector<8x128xi32>
    %609 = vector.extract_strided_slice %453 {offsets = [3, 0], sizes = [1, 128], strides = [1, 1]} : vector<8x128xf32> to vector<1x128xf32>
    %610 = vector.broadcast %609 : vector<1x128xf32> to vector<8x128xf32>
    %611 = arith.addf %45, %610 : vector<8x128xf32>
    %612 = arith.cmpf ogt, %611, %606 : vector<8x128xf32>
    %613 = arith.select %612, %611, %606 : vector<8x128xi1>, vector<8x128xf32>
    %c3_i32_70 = arith.constant 3 : i32
    %614 = vector.broadcast %c3_i32_70 : i32 to vector<8x128xi32>
    %615 = arith.select %612, %614, %608 : vector<8x128xi1>, vector<8x128xi32>
    %616 = vector.extract_strided_slice %453 {offsets = [4, 0], sizes = [1, 128], strides = [1, 1]} : vector<8x128xf32> to vector<1x128xf32>
    %617 = vector.broadcast %616 : vector<1x128xf32> to vector<8x128xf32>
    %618 = arith.addf %48, %617 : vector<8x128xf32>
    %619 = arith.cmpf ogt, %618, %613 : vector<8x128xf32>
    %620 = arith.select %619, %618, %613 : vector<8x128xi1>, vector<8x128xf32>
    %c4_i32_71 = arith.constant 4 : i32
    %621 = vector.broadcast %c4_i32_71 : i32 to vector<8x128xi32>
    %622 = arith.select %619, %621, %615 : vector<8x128xi1>, vector<8x128xi32>
    %623 = vector.extract_strided_slice %453 {offsets = [5, 0], sizes = [1, 128], strides = [1, 1]} : vector<8x128xf32> to vector<1x128xf32>
    %624 = vector.broadcast %623 : vector<1x128xf32> to vector<8x128xf32>
    %625 = arith.addf %51, %624 : vector<8x128xf32>
    %626 = arith.cmpf ogt, %625, %620 : vector<8x128xf32>
    %627 = arith.select %626, %625, %620 : vector<8x128xi1>, vector<8x128xf32>
    %c5_i32_72 = arith.constant 5 : i32
    %628 = vector.broadcast %c5_i32_72 : i32 to vector<8x128xi32>
    %629 = arith.select %626, %628, %622 : vector<8x128xi1>, vector<8x128xi32>
    %630 = vector.extract_strided_slice %453 {offsets = [6, 0], sizes = [1, 128], strides = [1, 1]} : vector<8x128xf32> to vector<1x128xf32>
    %631 = vector.broadcast %630 : vector<1x128xf32> to vector<8x128xf32>
    %632 = arith.addf %54, %631 : vector<8x128xf32>
    %633 = arith.cmpf ogt, %632, %627 : vector<8x128xf32>
    %634 = arith.select %633, %632, %627 : vector<8x128xi1>, vector<8x128xf32>
    %c6_i32_73 = arith.constant 6 : i32
    %635 = vector.broadcast %c6_i32_73 : i32 to vector<8x128xi32>
    %636 = arith.select %633, %635, %629 : vector<8x128xi1>, vector<8x128xi32>
    %637 = vector.extract_strided_slice %453 {offsets = [7, 0], sizes = [1, 128], strides = [1, 1]} : vector<8x128xf32> to vector<1x128xf32>
    %638 = vector.broadcast %637 : vector<1x128xf32> to vector<8x128xf32>
    %639 = arith.addf %57, %638 : vector<8x128xf32>
    %640 = arith.cmpf ogt, %639, %634 : vector<8x128xf32>
    %641 = arith.select %640, %639, %634 : vector<8x128xi1>, vector<8x128xf32>
    %c7_i32_74 = arith.constant 7 : i32
    %642 = vector.broadcast %c7_i32_74 : i32 to vector<8x128xi32>
    %643 = arith.select %640, %642, %636 : vector<8x128xi1>, vector<8x128xi32>
    %644 = arith.index_cast %c2_i32_55 : i32 to index
    %c0_75 = arith.constant 0 : index
    %c0_76 = arith.constant 0 : index
    %645 = vector.load %arg10[%644, %c0_75, %c0_76] : memref<8x8x128xi32, #tpu.memory_space<vmem>>, vector<1x8x128xi32>
    %646 = vector.shape_cast %645 : vector<1x8x128xi32> to vector<8x128xi32>
    %647 = vector.shape_cast %643 : vector<8x128xi32> to vector<1x8x128xi32>
    tpu.vector_store %arg10[%644, %c0_75, %c0_76], %647 {strides = array<i32>} : memref<8x8x128xi32, #tpu.memory_space<vmem>>, vector<1x8x128xi32>,
    %648 = arith.addf %641, %537 : vector<8x128xf32>
    %c3_i32_77 = arith.constant 3 : i32
    %649 = arith.addi %58, %c3_i32_77 : i32
    %c1_i32_78 = arith.constant 1 : i32
    %650 = arith.addi %649, %c1_i32_78 : i32
    %651 = vector.broadcast %650 : i32 to vector<1x128xi32>
    %652 = arith.cmpi eq, %4, %651 : vector<1x128xi32>
    %653 = arith.addf %590, %7 : vector<8x128xf32>
    %654 = vector.extract_strided_slice %653 {offsets = [0, 0], sizes = [1, 128], strides = [1, 1]} : vector<8x128xf32> to vector<1x128xf32>
    %655 = vector.extract_strided_slice %653 {offsets = [1, 0], sizes = [1, 128], strides = [1, 1]} : vector<8x128xf32> to vector<1x128xf32>
    %656 = arith.maximumf %654, %655 : vector<1x128xf32>
    %657 = vector.extract_strided_slice %653 {offsets = [2, 0], sizes = [1, 128], strides = [1, 1]} : vector<8x128xf32> to vector<1x128xf32>
    %658 = arith.maximumf %656, %657 : vector<1x128xf32>
    %659 = vector.extract_strided_slice %653 {offsets = [3, 0], sizes = [1, 128], strides = [1, 1]} : vector<8x128xf32> to vector<1x128xf32>
    %660 = arith.maximumf %658, %659 : vector<1x128xf32>
    %661 = vector.extract_strided_slice %653 {offsets = [4, 0], sizes = [1, 128], strides = [1, 1]} : vector<8x128xf32> to vector<1x128xf32>
    %662 = arith.maximumf %660, %661 : vector<1x128xf32>
    %663 = vector.extract_strided_slice %653 {offsets = [5, 0], sizes = [1, 128], strides = [1, 1]} : vector<8x128xf32> to vector<1x128xf32>
    %664 = arith.maximumf %662, %663 : vector<1x128xf32>
    %665 = vector.extract_strided_slice %653 {offsets = [6, 0], sizes = [1, 128], strides = [1, 1]} : vector<8x128xf32> to vector<1x128xf32>
    %666 = arith.maximumf %664, %665 : vector<1x128xf32>
    %667 = vector.extract_strided_slice %653 {offsets = [7, 0], sizes = [1, 128], strides = [1, 1]} : vector<8x128xf32> to vector<1x128xf32>
    %668 = arith.maximumf %666, %667 : vector<1x128xf32>
    %669 = vector.broadcast %668 : vector<1x128xf32> to vector<8x128xf32>
    %670 = arith.subf %653, %669 : vector<8x128xf32>
    %671 = math.exp %670 : vector<8x128xf32>
    %672 = vector.extract_strided_slice %671 {offsets = [0, 0], sizes = [1, 128], strides = [1, 1]} : vector<8x128xf32> to vector<1x128xf32>
    %673 = vector.extract_strided_slice %671 {offsets = [1, 0], sizes = [1, 128], strides = [1, 1]} : vector<8x128xf32> to vector<1x128xf32>
    %674 = arith.addf %672, %673 : vector<1x128xf32>
    %675 = vector.extract_strided_slice %671 {offsets = [2, 0], sizes = [1, 128], strides = [1, 1]} : vector<8x128xf32> to vector<1x128xf32>
    %676 = arith.addf %674, %675 : vector<1x128xf32>
    %677 = vector.extract_strided_slice %671 {offsets = [3, 0], sizes = [1, 128], strides = [1, 1]} : vector<8x128xf32> to vector<1x128xf32>
    %678 = arith.addf %676, %677 : vector<1x128xf32>
    %679 = vector.extract_strided_slice %671 {offsets = [4, 0], sizes = [1, 128], strides = [1, 1]} : vector<8x128xf32> to vector<1x128xf32>
    %680 = arith.addf %678, %679 : vector<1x128xf32>
    %681 = vector.extract_strided_slice %671 {offsets = [5, 0], sizes = [1, 128], strides = [1, 1]} : vector<8x128xf32> to vector<1x128xf32>
    %682 = arith.addf %680, %681 : vector<1x128xf32>
    %683 = vector.extract_strided_slice %671 {offsets = [6, 0], sizes = [1, 128], strides = [1, 1]} : vector<8x128xf32> to vector<1x128xf32>
    %684 = arith.addf %682, %683 : vector<1x128xf32>
    %685 = vector.extract_strided_slice %671 {offsets = [7, 0], sizes = [1, 128], strides = [1, 1]} : vector<8x128xf32> to vector<1x128xf32>
    %686 = arith.addf %684, %685 : vector<1x128xf32>
    %687 = math.log %686 : vector<1x128xf32>
    %688 = arith.addf %668, %687 : vector<1x128xf32>
    %689 = arith.select %652, %688, %494 : vector<1x128xi1>, vector<1x128xf32>
    %690 = arith.addf %648, %7 : vector<8x128xf32>
    %691 = vector.extract_strided_slice %690 {offsets = [0, 0], sizes = [1, 128], strides = [1, 1]} : vector<8x128xf32> to vector<1x128xf32>
    %c0_i32_79 = arith.constant 0 : i32
    %692 = vector.broadcast %c0_i32_79 : i32 to vector<1x128xi32>
    %693 = vector.extract_strided_slice %690 {offsets = [1, 0], sizes = [1, 128], strides = [1, 1]} : vector<8x128xf32> to vector<1x128xf32>
    %694 = arith.cmpf ogt, %693, %691 : vector<1x128xf32>
    %695 = arith.select %694, %693, %691 : vector<1x128xi1>, vector<1x128xf32>
    %c1_i32_80 = arith.constant 1 : i32
    %696 = vector.broadcast %c1_i32_80 : i32 to vector<1x128xi32>
    %697 = arith.select %694, %696, %692 : vector<1x128xi1>, vector<1x128xi32>
    %698 = vector.extract_strided_slice %690 {offsets = [2, 0], sizes = [1, 128], strides = [1, 1]} : vector<8x128xf32> to vector<1x128xf32>
    %699 = arith.cmpf ogt, %698, %695 : vector<1x128xf32>
    %700 = arith.select %699, %698, %695 : vector<1x128xi1>, vector<1x128xf32>
    %c2_i32_81 = arith.constant 2 : i32
    %701 = vector.broadcast %c2_i32_81 : i32 to vector<1x128xi32>
    %702 = arith.select %699, %701, %697 : vector<1x128xi1>, vector<1x128xi32>
    %703 = vector.extract_strided_slice %690 {offsets = [3, 0], sizes = [1, 128], strides = [1, 1]} : vector<8x128xf32> to vector<1x128xf32>
    %704 = arith.cmpf ogt, %703, %700 : vector<1x128xf32>
    %705 = arith.select %704, %703, %700 : vector<1x128xi1>, vector<1x128xf32>
    %c3_i32_82 = arith.constant 3 : i32
    %706 = vector.broadcast %c3_i32_82 : i32 to vector<1x128xi32>
    %707 = arith.select %704, %706, %702 : vector<1x128xi1>, vector<1x128xi32>
    %708 = vector.extract_strided_slice %690 {offsets = [4, 0], sizes = [1, 128], strides = [1, 1]} : vector<8x128xf32> to vector<1x128xf32>
    %709 = arith.cmpf ogt, %708, %705 : vector<1x128xf32>
    %710 = arith.select %709, %708, %705 : vector<1x128xi1>, vector<1x128xf32>
    %c4_i32_83 = arith.constant 4 : i32
    %711 = vector.broadcast %c4_i32_83 : i32 to vector<1x128xi32>
    %712 = arith.select %709, %711, %707 : vector<1x128xi1>, vector<1x128xi32>
    %713 = vector.extract_strided_slice %690 {offsets = [5, 0], sizes = [1, 128], strides = [1, 1]} : vector<8x128xf32> to vector<1x128xf32>
    %714 = arith.cmpf ogt, %713, %710 : vector<1x128xf32>
    %715 = arith.select %714, %713, %710 : vector<1x128xi1>, vector<1x128xf32>
    %c5_i32_84 = arith.constant 5 : i32
    %716 = vector.broadcast %c5_i32_84 : i32 to vector<1x128xi32>
    %717 = arith.select %714, %716, %712 : vector<1x128xi1>, vector<1x128xi32>
    %718 = vector.extract_strided_slice %690 {offsets = [6, 0], sizes = [1, 128], strides = [1, 1]} : vector<8x128xf32> to vector<1x128xf32>
    %719 = arith.cmpf ogt, %718, %715 : vector<1x128xf32>
    %720 = arith.select %719, %718, %715 : vector<1x128xi1>, vector<1x128xf32>
    %c6_i32_85 = arith.constant 6 : i32
    %721 = vector.broadcast %c6_i32_85 : i32 to vector<1x128xi32>
    %722 = arith.select %719, %721, %717 : vector<1x128xi1>, vector<1x128xi32>
    %723 = vector.extract_strided_slice %690 {offsets = [7, 0], sizes = [1, 128], strides = [1, 1]} : vector<8x128xf32> to vector<1x128xf32>
    %724 = arith.cmpf ogt, %723, %720 : vector<1x128xf32>
    %725 = arith.select %724, %723, %720 : vector<1x128xi1>, vector<1x128xf32>
    %c7_i32_86 = arith.constant 7 : i32
    %726 = vector.broadcast %c7_i32_86 : i32 to vector<1x128xi32>
    %727 = arith.select %724, %726, %722 : vector<1x128xi1>, vector<1x128xi32>
    %728 = arith.select %652, %725, %533 : vector<1x128xi1>, vector<1x128xf32>
    %729 = arith.select %652, %727, %534 : vector<1x128xi1>, vector<1x128xi32>
    %730 = arith.index_cast %c3_i32_77 : i32 to index
    %c0_87 = arith.constant 0 : index
    %c0_88 = arith.constant 0 : index
    %731 = vector.load %arg2[%730, %c0_87, %c0_88] : memref<8x8x128xf32, #tpu.memory_space<vmem>>, vector<1x8x128xf32>
    %732 = vector.shape_cast %731 : vector<1x8x128xf32> to vector<8x128xf32>
    %733 = vector.extract_strided_slice %732 {offsets = [0, 0], sizes = [1, 128], strides = [1, 1]} : vector<8x128xf32> to vector<1x128xf32>
    %734 = vector.extract_strided_slice %732 {offsets = [1, 0], sizes = [1, 128], strides = [1, 1]} : vector<8x128xf32> to vector<1x128xf32>
    %735 = arith.maximumf %733, %734 : vector<1x128xf32>
    %736 = vector.extract_strided_slice %732 {offsets = [2, 0], sizes = [1, 128], strides = [1, 1]} : vector<8x128xf32> to vector<1x128xf32>
    %737 = arith.maximumf %735, %736 : vector<1x128xf32>
    %738 = vector.extract_strided_slice %732 {offsets = [3, 0], sizes = [1, 128], strides = [1, 1]} : vector<8x128xf32> to vector<1x128xf32>
    %739 = arith.maximumf %737, %738 : vector<1x128xf32>
    %740 = vector.extract_strided_slice %732 {offsets = [4, 0], sizes = [1, 128], strides = [1, 1]} : vector<8x128xf32> to vector<1x128xf32>
    %741 = arith.maximumf %739, %740 : vector<1x128xf32>
    %742 = vector.extract_strided_slice %732 {offsets = [5, 0], sizes = [1, 128], strides = [1, 1]} : vector<8x128xf32> to vector<1x128xf32>
    %743 = arith.maximumf %741, %742 : vector<1x128xf32>
    %744 = vector.extract_strided_slice %732 {offsets = [6, 0], sizes = [1, 128], strides = [1, 1]} : vector<8x128xf32> to vector<1x128xf32>
    %745 = arith.maximumf %743, %744 : vector<1x128xf32>
    %746 = vector.extract_strided_slice %732 {offsets = [7, 0], sizes = [1, 128], strides = [1, 1]} : vector<8x128xf32> to vector<1x128xf32>
    %747 = arith.maximumf %745, %746 : vector<1x128xf32>
    %748 = vector.broadcast %747 : vector<1x128xf32> to vector<8x128xf32>
    %749 = arith.subf %732, %748 : vector<8x128xf32>
    %750 = math.exp %749 : vector<8x128xf32>
    %751 = vector.extract_strided_slice %750 {offsets = [0, 0], sizes = [1, 128], strides = [1, 1]} : vector<8x128xf32> to vector<1x128xf32>
    %752 = vector.broadcast %751 : vector<1x128xf32> to vector<8x128xf32>
    %753 = arith.mulf %12, %752 : vector<8x128xf32>
    %754 = vector.extract_strided_slice %750 {offsets = [1, 0], sizes = [1, 128], strides = [1, 1]} : vector<8x128xf32> to vector<1x128xf32>
    %755 = vector.broadcast %754 : vector<1x128xf32> to vector<8x128xf32>
    %756 = arith.mulf %15, %755 : vector<8x128xf32>
    %757 = arith.addf %753, %756 : vector<8x128xf32>
    %758 = vector.extract_strided_slice %750 {offsets = [2, 0], sizes = [1, 128], strides = [1, 1]} : vector<8x128xf32> to vector<1x128xf32>
    %759 = vector.broadcast %758 : vector<1x128xf32> to vector<8x128xf32>
    %760 = arith.mulf %18, %759 : vector<8x128xf32>
    %761 = arith.addf %757, %760 : vector<8x128xf32>
    %762 = vector.extract_strided_slice %750 {offsets = [3, 0], sizes = [1, 128], strides = [1, 1]} : vector<8x128xf32> to vector<1x128xf32>
    %763 = vector.broadcast %762 : vector<1x128xf32> to vector<8x128xf32>
    %764 = arith.mulf %21, %763 : vector<8x128xf32>
    %765 = arith.addf %761, %764 : vector<8x128xf32>
    %766 = vector.extract_strided_slice %750 {offsets = [4, 0], sizes = [1, 128], strides = [1, 1]} : vector<8x128xf32> to vector<1x128xf32>
    %767 = vector.broadcast %766 : vector<1x128xf32> to vector<8x128xf32>
    %768 = arith.mulf %24, %767 : vector<8x128xf32>
    %769 = arith.addf %765, %768 : vector<8x128xf32>
    %770 = vector.extract_strided_slice %750 {offsets = [5, 0], sizes = [1, 128], strides = [1, 1]} : vector<8x128xf32> to vector<1x128xf32>
    %771 = vector.broadcast %770 : vector<1x128xf32> to vector<8x128xf32>
    %772 = arith.mulf %27, %771 : vector<8x128xf32>
    %773 = arith.addf %769, %772 : vector<8x128xf32>
    %774 = vector.extract_strided_slice %750 {offsets = [6, 0], sizes = [1, 128], strides = [1, 1]} : vector<8x128xf32> to vector<1x128xf32>
    %775 = vector.broadcast %774 : vector<1x128xf32> to vector<8x128xf32>
    %776 = arith.mulf %30, %775 : vector<8x128xf32>
    %777 = arith.addf %773, %776 : vector<8x128xf32>
    %778 = vector.extract_strided_slice %750 {offsets = [7, 0], sizes = [1, 128], strides = [1, 1]} : vector<8x128xf32> to vector<1x128xf32>
    %779 = vector.broadcast %778 : vector<1x128xf32> to vector<8x128xf32>
    %780 = arith.mulf %33, %779 : vector<8x128xf32>
    %781 = arith.addf %777, %780 : vector<8x128xf32>
    %782 = vector.broadcast %747 : vector<1x128xf32> to vector<8x128xf32>
    %783 = arith.addf %590, %782 : vector<8x128xf32>
    %784 = math.log %781 : vector<8x128xf32>
    %785 = arith.addf %783, %784 : vector<8x128xf32>
    %786 = vector.extract_strided_slice %648 {offsets = [0, 0], sizes = [1, 128], strides = [1, 1]} : vector<8x128xf32> to vector<1x128xf32>
    %787 = vector.broadcast %786 : vector<1x128xf32> to vector<8x128xf32>
    %788 = arith.addf %36, %787 : vector<8x128xf32>
    %c0_i32_89 = arith.constant 0 : i32
    %789 = vector.broadcast %c0_i32_89 : i32 to vector<8x128xi32>
    %790 = vector.extract_strided_slice %648 {offsets = [1, 0], sizes = [1, 128], strides = [1, 1]} : vector<8x128xf32> to vector<1x128xf32>
    %791 = vector.broadcast %790 : vector<1x128xf32> to vector<8x128xf32>
    %792 = arith.addf %39, %791 : vector<8x128xf32>
    %793 = arith.cmpf ogt, %792, %788 : vector<8x128xf32>
    %794 = arith.select %793, %792, %788 : vector<8x128xi1>, vector<8x128xf32>
    %c1_i32_90 = arith.constant 1 : i32
    %795 = vector.broadcast %c1_i32_90 : i32 to vector<8x128xi32>
    %796 = arith.select %793, %795, %789 : vector<8x128xi1>, vector<8x128xi32>
    %797 = vector.extract_strided_slice %648 {offsets = [2, 0], sizes = [1, 128], strides = [1, 1]} : vector<8x128xf32> to vector<1x128xf32>
    %798 = vector.broadcast %797 : vector<1x128xf32> to vector<8x128xf32>
    %799 = arith.addf %42, %798 : vector<8x128xf32>
    %800 = arith.cmpf ogt, %799, %794 : vector<8x128xf32>
    %801 = arith.select %800, %799, %794 : vector<8x128xi1>, vector<8x128xf32>
    %c2_i32_91 = arith.constant 2 : i32
    %802 = vector.broadcast %c2_i32_91 : i32 to vector<8x128xi32>
    %803 = arith.select %800, %802, %796 : vector<8x128xi1>, vector<8x128xi32>
    %804 = vector.extract_strided_slice %648 {offsets = [3, 0], sizes = [1, 128], strides = [1, 1]} : vector<8x128xf32> to vector<1x128xf32>
    %805 = vector.broadcast %804 : vector<1x128xf32> to vector<8x128xf32>
    %806 = arith.addf %45, %805 : vector<8x128xf32>
    %807 = arith.cmpf ogt, %806, %801 : vector<8x128xf32>
    %808 = arith.select %807, %806, %801 : vector<8x128xi1>, vector<8x128xf32>
    %c3_i32_92 = arith.constant 3 : i32
    %809 = vector.broadcast %c3_i32_92 : i32 to vector<8x128xi32>
    %810 = arith.select %807, %809, %803 : vector<8x128xi1>, vector<8x128xi32>
    %811 = vector.extract_strided_slice %648 {offsets = [4, 0], sizes = [1, 128], strides = [1, 1]} : vector<8x128xf32> to vector<1x128xf32>
    %812 = vector.broadcast %811 : vector<1x128xf32> to vector<8x128xf32>
    %813 = arith.addf %48, %812 : vector<8x128xf32>
    %814 = arith.cmpf ogt, %813, %808 : vector<8x128xf32>
    %815 = arith.select %814, %813, %808 : vector<8x128xi1>, vector<8x128xf32>
    %c4_i32_93 = arith.constant 4 : i32
    %816 = vector.broadcast %c4_i32_93 : i32 to vector<8x128xi32>
    %817 = arith.select %814, %816, %810 : vector<8x128xi1>, vector<8x128xi32>
    %818 = vector.extract_strided_slice %648 {offsets = [5, 0], sizes = [1, 128], strides = [1, 1]} : vector<8x128xf32> to vector<1x128xf32>
    %819 = vector.broadcast %818 : vector<1x128xf32> to vector<8x128xf32>
    %820 = arith.addf %51, %819 : vector<8x128xf32>
    %821 = arith.cmpf ogt, %820, %815 : vector<8x128xf32>
    %822 = arith.select %821, %820, %815 : vector<8x128xi1>, vector<8x128xf32>
    %c5_i32_94 = arith.constant 5 : i32
    %823 = vector.broadcast %c5_i32_94 : i32 to vector<8x128xi32>
    %824 = arith.select %821, %823, %817 : vector<8x128xi1>, vector<8x128xi32>
    %825 = vector.extract_strided_slice %648 {offsets = [6, 0], sizes = [1, 128], strides = [1, 1]} : vector<8x128xf32> to vector<1x128xf32>
    %826 = vector.broadcast %825 : vector<1x128xf32> to vector<8x128xf32>
    %827 = arith.addf %54, %826 : vector<8x128xf32>
    %828 = arith.cmpf ogt, %827, %822 : vector<8x128xf32>
    %829 = arith.select %828, %827, %822 : vector<8x128xi1>, vector<8x128xf32>
    %c6_i32_95 = arith.constant 6 : i32
    %830 = vector.broadcast %c6_i32_95 : i32 to vector<8x128xi32>
    %831 = arith.select %828, %830, %824 : vector<8x128xi1>, vector<8x128xi32>
    %832 = vector.extract_strided_slice %648 {offsets = [7, 0], sizes = [1, 128], strides = [1, 1]} : vector<8x128xf32> to vector<1x128xf32>
    %833 = vector.broadcast %832 : vector<1x128xf32> to vector<8x128xf32>
    %834 = arith.addf %57, %833 : vector<8x128xf32>
    %835 = arith.cmpf ogt, %834, %829 : vector<8x128xf32>
    %836 = arith.select %835, %834, %829 : vector<8x128xi1>, vector<8x128xf32>
    %c7_i32_96 = arith.constant 7 : i32
    %837 = vector.broadcast %c7_i32_96 : i32 to vector<8x128xi32>
    %838 = arith.select %835, %837, %831 : vector<8x128xi1>, vector<8x128xi32>
    %839 = arith.index_cast %c3_i32_77 : i32 to index
    %c0_97 = arith.constant 0 : index
    %c0_98 = arith.constant 0 : index
    %840 = vector.load %arg10[%839, %c0_97, %c0_98] : memref<8x8x128xi32, #tpu.memory_space<vmem>>, vector<1x8x128xi32>
    %841 = vector.shape_cast %840 : vector<1x8x128xi32> to vector<8x128xi32>
    %842 = vector.shape_cast %838 : vector<8x128xi32> to vector<1x8x128xi32>
    tpu.vector_store %arg10[%839, %c0_97, %c0_98], %842 {strides = array<i32>} : memref<8x8x128xi32, #tpu.memory_space<vmem>>, vector<1x8x128xi32>,
    %843 = arith.addf %836, %732 : vector<8x128xf32>
    %c4_i32_99 = arith.constant 4 : i32
    %844 = arith.addi %58, %c4_i32_99 : i32
    %c1_i32_100 = arith.constant 1 : i32
    %845 = arith.addi %844, %c1_i32_100 : i32
    %846 = vector.broadcast %845 : i32 to vector<1x128xi32>
    %847 = arith.cmpi eq, %4, %846 : vector<1x128xi32>
    %848 = arith.addf %785, %7 : vector<8x128xf32>
    %849 = vector.extract_strided_slice %848 {offsets = [0, 0], sizes = [1, 128], strides = [1, 1]} : vector<8x128xf32> to vector<1x128xf32>
    %850 = vector.extract_strided_slice %848 {offsets = [1, 0], sizes = [1, 128], strides = [1, 1]} : vector<8x128xf32> to vector<1x128xf32>
    %851 = arith.maximumf %849, %850 : vector<1x128xf32>
    %852 = vector.extract_strided_slice %848 {offsets = [2, 0], sizes = [1, 128], strides = [1, 1]} : vector<8x128xf32> to vector<1x128xf32>
    %853 = arith.maximumf %851, %852 : vector<1x128xf32>
    %854 = vector.extract_strided_slice %848 {offsets = [3, 0], sizes = [1, 128], strides = [1, 1]} : vector<8x128xf32> to vector<1x128xf32>
    %855 = arith.maximumf %853, %854 : vector<1x128xf32>
    %856 = vector.extract_strided_slice %848 {offsets = [4, 0], sizes = [1, 128], strides = [1, 1]} : vector<8x128xf32> to vector<1x128xf32>
    %857 = arith.maximumf %855, %856 : vector<1x128xf32>
    %858 = vector.extract_strided_slice %848 {offsets = [5, 0], sizes = [1, 128], strides = [1, 1]} : vector<8x128xf32> to vector<1x128xf32>
    %859 = arith.maximumf %857, %858 : vector<1x128xf32>
    %860 = vector.extract_strided_slice %848 {offsets = [6, 0], sizes = [1, 128], strides = [1, 1]} : vector<8x128xf32> to vector<1x128xf32>
    %861 = arith.maximumf %859, %860 : vector<1x128xf32>
    %862 = vector.extract_strided_slice %848 {offsets = [7, 0], sizes = [1, 128], strides = [1, 1]} : vector<8x128xf32> to vector<1x128xf32>
    %863 = arith.maximumf %861, %862 : vector<1x128xf32>
    %864 = vector.broadcast %863 : vector<1x128xf32> to vector<8x128xf32>
    %865 = arith.subf %848, %864 : vector<8x128xf32>
    %866 = math.exp %865 : vector<8x128xf32>
    %867 = vector.extract_strided_slice %866 {offsets = [0, 0], sizes = [1, 128], strides = [1, 1]} : vector<8x128xf32> to vector<1x128xf32>
    %868 = vector.extract_strided_slice %866 {offsets = [1, 0], sizes = [1, 128], strides = [1, 1]} : vector<8x128xf32> to vector<1x128xf32>
    %869 = arith.addf %867, %868 : vector<1x128xf32>
    %870 = vector.extract_strided_slice %866 {offsets = [2, 0], sizes = [1, 128], strides = [1, 1]} : vector<8x128xf32> to vector<1x128xf32>
    %871 = arith.addf %869, %870 : vector<1x128xf32>
    %872 = vector.extract_strided_slice %866 {offsets = [3, 0], sizes = [1, 128], strides = [1, 1]} : vector<8x128xf32> to vector<1x128xf32>
    %873 = arith.addf %871, %872 : vector<1x128xf32>
    %874 = vector.extract_strided_slice %866 {offsets = [4, 0], sizes = [1, 128], strides = [1, 1]} : vector<8x128xf32> to vector<1x128xf32>
    %875 = arith.addf %873, %874 : vector<1x128xf32>
    %876 = vector.extract_strided_slice %866 {offsets = [5, 0], sizes = [1, 128], strides = [1, 1]} : vector<8x128xf32> to vector<1x128xf32>
    %877 = arith.addf %875, %876 : vector<1x128xf32>
    %878 = vector.extract_strided_slice %866 {offsets = [6, 0], sizes = [1, 128], strides = [1, 1]} : vector<8x128xf32> to vector<1x128xf32>
    %879 = arith.addf %877, %878 : vector<1x128xf32>
    %880 = vector.extract_strided_slice %866 {offsets = [7, 0], sizes = [1, 128], strides = [1, 1]} : vector<8x128xf32> to vector<1x128xf32>
    %881 = arith.addf %879, %880 : vector<1x128xf32>
    %882 = math.log %881 : vector<1x128xf32>
    %883 = arith.addf %863, %882 : vector<1x128xf32>
    %884 = arith.select %847, %883, %689 : vector<1x128xi1>, vector<1x128xf32>
    %885 = arith.addf %843, %7 : vector<8x128xf32>
    %886 = vector.extract_strided_slice %885 {offsets = [0, 0], sizes = [1, 128], strides = [1, 1]} : vector<8x128xf32> to vector<1x128xf32>
    %c0_i32_101 = arith.constant 0 : i32
    %887 = vector.broadcast %c0_i32_101 : i32 to vector<1x128xi32>
    %888 = vector.extract_strided_slice %885 {offsets = [1, 0], sizes = [1, 128], strides = [1, 1]} : vector<8x128xf32> to vector<1x128xf32>
    %889 = arith.cmpf ogt, %888, %886 : vector<1x128xf32>
    %890 = arith.select %889, %888, %886 : vector<1x128xi1>, vector<1x128xf32>
    %c1_i32_102 = arith.constant 1 : i32
    %891 = vector.broadcast %c1_i32_102 : i32 to vector<1x128xi32>
    %892 = arith.select %889, %891, %887 : vector<1x128xi1>, vector<1x128xi32>
    %893 = vector.extract_strided_slice %885 {offsets = [2, 0], sizes = [1, 128], strides = [1, 1]} : vector<8x128xf32> to vector<1x128xf32>
    %894 = arith.cmpf ogt, %893, %890 : vector<1x128xf32>
    %895 = arith.select %894, %893, %890 : vector<1x128xi1>, vector<1x128xf32>
    %c2_i32_103 = arith.constant 2 : i32
    %896 = vector.broadcast %c2_i32_103 : i32 to vector<1x128xi32>
    %897 = arith.select %894, %896, %892 : vector<1x128xi1>, vector<1x128xi32>
    %898 = vector.extract_strided_slice %885 {offsets = [3, 0], sizes = [1, 128], strides = [1, 1]} : vector<8x128xf32> to vector<1x128xf32>
    %899 = arith.cmpf ogt, %898, %895 : vector<1x128xf32>
    %900 = arith.select %899, %898, %895 : vector<1x128xi1>, vector<1x128xf32>
    %c3_i32_104 = arith.constant 3 : i32
    %901 = vector.broadcast %c3_i32_104 : i32 to vector<1x128xi32>
    %902 = arith.select %899, %901, %897 : vector<1x128xi1>, vector<1x128xi32>
    %903 = vector.extract_strided_slice %885 {offsets = [4, 0], sizes = [1, 128], strides = [1, 1]} : vector<8x128xf32> to vector<1x128xf32>
    %904 = arith.cmpf ogt, %903, %900 : vector<1x128xf32>
    %905 = arith.select %904, %903, %900 : vector<1x128xi1>, vector<1x128xf32>
    %c4_i32_105 = arith.constant 4 : i32
    %906 = vector.broadcast %c4_i32_105 : i32 to vector<1x128xi32>
    %907 = arith.select %904, %906, %902 : vector<1x128xi1>, vector<1x128xi32>
    %908 = vector.extract_strided_slice %885 {offsets = [5, 0], sizes = [1, 128], strides = [1, 1]} : vector<8x128xf32> to vector<1x128xf32>
    %909 = arith.cmpf ogt, %908, %905 : vector<1x128xf32>
    %910 = arith.select %909, %908, %905 : vector<1x128xi1>, vector<1x128xf32>
    %c5_i32_106 = arith.constant 5 : i32
    %911 = vector.broadcast %c5_i32_106 : i32 to vector<1x128xi32>
    %912 = arith.select %909, %911, %907 : vector<1x128xi1>, vector<1x128xi32>
    %913 = vector.extract_strided_slice %885 {offsets = [6, 0], sizes = [1, 128], strides = [1, 1]} : vector<8x128xf32> to vector<1x128xf32>
    %914 = arith.cmpf ogt, %913, %910 : vector<1x128xf32>
    %915 = arith.select %914, %913, %910 : vector<1x128xi1>, vector<1x128xf32>
    %c6_i32_107 = arith.constant 6 : i32
    %916 = vector.broadcast %c6_i32_107 : i32 to vector<1x128xi32>
    %917 = arith.select %914, %916, %912 : vector<1x128xi1>, vector<1x128xi32>
    %918 = vector.extract_strided_slice %885 {offsets = [7, 0], sizes = [1, 128], strides = [1, 1]} : vector<8x128xf32> to vector<1x128xf32>
    %919 = arith.cmpf ogt, %918, %915 : vector<1x128xf32>
    %920 = arith.select %919, %918, %915 : vector<1x128xi1>, vector<1x128xf32>
    %c7_i32_108 = arith.constant 7 : i32
    %921 = vector.broadcast %c7_i32_108 : i32 to vector<1x128xi32>
    %922 = arith.select %919, %921, %917 : vector<1x128xi1>, vector<1x128xi32>
    %923 = arith.select %847, %920, %728 : vector<1x128xi1>, vector<1x128xf32>
    %924 = arith.select %847, %922, %729 : vector<1x128xi1>, vector<1x128xi32>
    %925 = arith.index_cast %c4_i32_99 : i32 to index
    %c0_109 = arith.constant 0 : index
    %c0_110 = arith.constant 0 : index
    %926 = vector.load %arg2[%925, %c0_109, %c0_110] : memref<8x8x128xf32, #tpu.memory_space<vmem>>, vector<1x8x128xf32>
    %927 = vector.shape_cast %926 : vector<1x8x128xf32> to vector<8x128xf32>
    %928 = vector.extract_strided_slice %927 {offsets = [0, 0], sizes = [1, 128], strides = [1, 1]} : vector<8x128xf32> to vector<1x128xf32>
    %929 = vector.extract_strided_slice %927 {offsets = [1, 0], sizes = [1, 128], strides = [1, 1]} : vector<8x128xf32> to vector<1x128xf32>
    %930 = arith.maximumf %928, %929 : vector<1x128xf32>
    %931 = vector.extract_strided_slice %927 {offsets = [2, 0], sizes = [1, 128], strides = [1, 1]} : vector<8x128xf32> to vector<1x128xf32>
    %932 = arith.maximumf %930, %931 : vector<1x128xf32>
    %933 = vector.extract_strided_slice %927 {offsets = [3, 0], sizes = [1, 128], strides = [1, 1]} : vector<8x128xf32> to vector<1x128xf32>
    %934 = arith.maximumf %932, %933 : vector<1x128xf32>
    %935 = vector.extract_strided_slice %927 {offsets = [4, 0], sizes = [1, 128], strides = [1, 1]} : vector<8x128xf32> to vector<1x128xf32>
    %936 = arith.maximumf %934, %935 : vector<1x128xf32>
    %937 = vector.extract_strided_slice %927 {offsets = [5, 0], sizes = [1, 128], strides = [1, 1]} : vector<8x128xf32> to vector<1x128xf32>
    %938 = arith.maximumf %936, %937 : vector<1x128xf32>
    %939 = vector.extract_strided_slice %927 {offsets = [6, 0], sizes = [1, 128], strides = [1, 1]} : vector<8x128xf32> to vector<1x128xf32>
    %940 = arith.maximumf %938, %939 : vector<1x128xf32>
    %941 = vector.extract_strided_slice %927 {offsets = [7, 0], sizes = [1, 128], strides = [1, 1]} : vector<8x128xf32> to vector<1x128xf32>
    %942 = arith.maximumf %940, %941 : vector<1x128xf32>
    %943 = vector.broadcast %942 : vector<1x128xf32> to vector<8x128xf32>
    %944 = arith.subf %927, %943 : vector<8x128xf32>
    %945 = math.exp %944 : vector<8x128xf32>
    %946 = vector.extract_strided_slice %945 {offsets = [0, 0], sizes = [1, 128], strides = [1, 1]} : vector<8x128xf32> to vector<1x128xf32>
    %947 = vector.broadcast %946 : vector<1x128xf32> to vector<8x128xf32>
    %948 = arith.mulf %12, %947 : vector<8x128xf32>
    %949 = vector.extract_strided_slice %945 {offsets = [1, 0], sizes = [1, 128], strides = [1, 1]} : vector<8x128xf32> to vector<1x128xf32>
    %950 = vector.broadcast %949 : vector<1x128xf32> to vector<8x128xf32>
    %951 = arith.mulf %15, %950 : vector<8x128xf32>
    %952 = arith.addf %948, %951 : vector<8x128xf32>
    %953 = vector.extract_strided_slice %945 {offsets = [2, 0], sizes = [1, 128], strides = [1, 1]} : vector<8x128xf32> to vector<1x128xf32>
    %954 = vector.broadcast %953 : vector<1x128xf32> to vector<8x128xf32>
    %955 = arith.mulf %18, %954 : vector<8x128xf32>
    %956 = arith.addf %952, %955 : vector<8x128xf32>
    %957 = vector.extract_strided_slice %945 {offsets = [3, 0], sizes = [1, 128], strides = [1, 1]} : vector<8x128xf32> to vector<1x128xf32>
    %958 = vector.broadcast %957 : vector<1x128xf32> to vector<8x128xf32>
    %959 = arith.mulf %21, %958 : vector<8x128xf32>
    %960 = arith.addf %956, %959 : vector<8x128xf32>
    %961 = vector.extract_strided_slice %945 {offsets = [4, 0], sizes = [1, 128], strides = [1, 1]} : vector<8x128xf32> to vector<1x128xf32>
    %962 = vector.broadcast %961 : vector<1x128xf32> to vector<8x128xf32>
    %963 = arith.mulf %24, %962 : vector<8x128xf32>
    %964 = arith.addf %960, %963 : vector<8x128xf32>
    %965 = vector.extract_strided_slice %945 {offsets = [5, 0], sizes = [1, 128], strides = [1, 1]} : vector<8x128xf32> to vector<1x128xf32>
    %966 = vector.broadcast %965 : vector<1x128xf32> to vector<8x128xf32>
    %967 = arith.mulf %27, %966 : vector<8x128xf32>
    %968 = arith.addf %964, %967 : vector<8x128xf32>
    %969 = vector.extract_strided_slice %945 {offsets = [6, 0], sizes = [1, 128], strides = [1, 1]} : vector<8x128xf32> to vector<1x128xf32>
    %970 = vector.broadcast %969 : vector<1x128xf32> to vector<8x128xf32>
    %971 = arith.mulf %30, %970 : vector<8x128xf32>
    %972 = arith.addf %968, %971 : vector<8x128xf32>
    %973 = vector.extract_strided_slice %945 {offsets = [7, 0], sizes = [1, 128], strides = [1, 1]} : vector<8x128xf32> to vector<1x128xf32>
    %974 = vector.broadcast %973 : vector<1x128xf32> to vector<8x128xf32>
    %975 = arith.mulf %33, %974 : vector<8x128xf32>
    %976 = arith.addf %972, %975 : vector<8x128xf32>
    %977 = vector.broadcast %942 : vector<1x128xf32> to vector<8x128xf32>
    %978 = arith.addf %785, %977 : vector<8x128xf32>
    %979 = math.log %976 : vector<8x128xf32>
    %980 = arith.addf %978, %979 : vector<8x128xf32>
    %981 = vector.extract_strided_slice %843 {offsets = [0, 0], sizes = [1, 128], strides = [1, 1]} : vector<8x128xf32> to vector<1x128xf32>
    %982 = vector.broadcast %981 : vector<1x128xf32> to vector<8x128xf32>
    %983 = arith.addf %36, %982 : vector<8x128xf32>
    %c0_i32_111 = arith.constant 0 : i32
    %984 = vector.broadcast %c0_i32_111 : i32 to vector<8x128xi32>
    %985 = vector.extract_strided_slice %843 {offsets = [1, 0], sizes = [1, 128], strides = [1, 1]} : vector<8x128xf32> to vector<1x128xf32>
    %986 = vector.broadcast %985 : vector<1x128xf32> to vector<8x128xf32>
    %987 = arith.addf %39, %986 : vector<8x128xf32>
    %988 = arith.cmpf ogt, %987, %983 : vector<8x128xf32>
    %989 = arith.select %988, %987, %983 : vector<8x128xi1>, vector<8x128xf32>
    %c1_i32_112 = arith.constant 1 : i32
    %990 = vector.broadcast %c1_i32_112 : i32 to vector<8x128xi32>
    %991 = arith.select %988, %990, %984 : vector<8x128xi1>, vector<8x128xi32>
    %992 = vector.extract_strided_slice %843 {offsets = [2, 0], sizes = [1, 128], strides = [1, 1]} : vector<8x128xf32> to vector<1x128xf32>
    %993 = vector.broadcast %992 : vector<1x128xf32> to vector<8x128xf32>
    %994 = arith.addf %42, %993 : vector<8x128xf32>
    %995 = arith.cmpf ogt, %994, %989 : vector<8x128xf32>
    %996 = arith.select %995, %994, %989 : vector<8x128xi1>, vector<8x128xf32>
    %c2_i32_113 = arith.constant 2 : i32
    %997 = vector.broadcast %c2_i32_113 : i32 to vector<8x128xi32>
    %998 = arith.select %995, %997, %991 : vector<8x128xi1>, vector<8x128xi32>
    %999 = vector.extract_strided_slice %843 {offsets = [3, 0], sizes = [1, 128], strides = [1, 1]} : vector<8x128xf32> to vector<1x128xf32>
    %1000 = vector.broadcast %999 : vector<1x128xf32> to vector<8x128xf32>
    %1001 = arith.addf %45, %1000 : vector<8x128xf32>
    %1002 = arith.cmpf ogt, %1001, %996 : vector<8x128xf32>
    %1003 = arith.select %1002, %1001, %996 : vector<8x128xi1>, vector<8x128xf32>
    %c3_i32_114 = arith.constant 3 : i32
    %1004 = vector.broadcast %c3_i32_114 : i32 to vector<8x128xi32>
    %1005 = arith.select %1002, %1004, %998 : vector<8x128xi1>, vector<8x128xi32>
    %1006 = vector.extract_strided_slice %843 {offsets = [4, 0], sizes = [1, 128], strides = [1, 1]} : vector<8x128xf32> to vector<1x128xf32>
    %1007 = vector.broadcast %1006 : vector<1x128xf32> to vector<8x128xf32>
    %1008 = arith.addf %48, %1007 : vector<8x128xf32>
    %1009 = arith.cmpf ogt, %1008, %1003 : vector<8x128xf32>
    %1010 = arith.select %1009, %1008, %1003 : vector<8x128xi1>, vector<8x128xf32>
    %c4_i32_115 = arith.constant 4 : i32
    %1011 = vector.broadcast %c4_i32_115 : i32 to vector<8x128xi32>
    %1012 = arith.select %1009, %1011, %1005 : vector<8x128xi1>, vector<8x128xi32>
    %1013 = vector.extract_strided_slice %843 {offsets = [5, 0], sizes = [1, 128], strides = [1, 1]} : vector<8x128xf32> to vector<1x128xf32>
    %1014 = vector.broadcast %1013 : vector<1x128xf32> to vector<8x128xf32>
    %1015 = arith.addf %51, %1014 : vector<8x128xf32>
    %1016 = arith.cmpf ogt, %1015, %1010 : vector<8x128xf32>
    %1017 = arith.select %1016, %1015, %1010 : vector<8x128xi1>, vector<8x128xf32>
    %c5_i32_116 = arith.constant 5 : i32
    %1018 = vector.broadcast %c5_i32_116 : i32 to vector<8x128xi32>
    %1019 = arith.select %1016, %1018, %1012 : vector<8x128xi1>, vector<8x128xi32>
    %1020 = vector.extract_strided_slice %843 {offsets = [6, 0], sizes = [1, 128], strides = [1, 1]} : vector<8x128xf32> to vector<1x128xf32>
    %1021 = vector.broadcast %1020 : vector<1x128xf32> to vector<8x128xf32>
    %1022 = arith.addf %54, %1021 : vector<8x128xf32>
    %1023 = arith.cmpf ogt, %1022, %1017 : vector<8x128xf32>
    %1024 = arith.select %1023, %1022, %1017 : vector<8x128xi1>, vector<8x128xf32>
    %c6_i32_117 = arith.constant 6 : i32
    %1025 = vector.broadcast %c6_i32_117 : i32 to vector<8x128xi32>
    %1026 = arith.select %1023, %1025, %1019 : vector<8x128xi1>, vector<8x128xi32>
    %1027 = vector.extract_strided_slice %843 {offsets = [7, 0], sizes = [1, 128], strides = [1, 1]} : vector<8x128xf32> to vector<1x128xf32>
    %1028 = vector.broadcast %1027 : vector<1x128xf32> to vector<8x128xf32>
    %1029 = arith.addf %57, %1028 : vector<8x128xf32>
    %1030 = arith.cmpf ogt, %1029, %1024 : vector<8x128xf32>
    %1031 = arith.select %1030, %1029, %1024 : vector<8x128xi1>, vector<8x128xf32>
    %c7_i32_118 = arith.constant 7 : i32
    %1032 = vector.broadcast %c7_i32_118 : i32 to vector<8x128xi32>
    %1033 = arith.select %1030, %1032, %1026 : vector<8x128xi1>, vector<8x128xi32>
    %1034 = arith.index_cast %c4_i32_99 : i32 to index
    %c0_119 = arith.constant 0 : index
    %c0_120 = arith.constant 0 : index
    %1035 = vector.load %arg10[%1034, %c0_119, %c0_120] : memref<8x8x128xi32, #tpu.memory_space<vmem>>, vector<1x8x128xi32>
    %1036 = vector.shape_cast %1035 : vector<1x8x128xi32> to vector<8x128xi32>
    %1037 = vector.shape_cast %1033 : vector<8x128xi32> to vector<1x8x128xi32>
    tpu.vector_store %arg10[%1034, %c0_119, %c0_120], %1037 {strides = array<i32>} : memref<8x8x128xi32, #tpu.memory_space<vmem>>, vector<1x8x128xi32>,
    %1038 = arith.addf %1031, %927 : vector<8x128xf32>
    %c5_i32_121 = arith.constant 5 : i32
    %1039 = arith.addi %58, %c5_i32_121 : i32
    %c1_i32_122 = arith.constant 1 : i32
    %1040 = arith.addi %1039, %c1_i32_122 : i32
    %1041 = vector.broadcast %1040 : i32 to vector<1x128xi32>
    %1042 = arith.cmpi eq, %4, %1041 : vector<1x128xi32>
    %1043 = arith.addf %980, %7 : vector<8x128xf32>
    %1044 = vector.extract_strided_slice %1043 {offsets = [0, 0], sizes = [1, 128], strides = [1, 1]} : vector<8x128xf32> to vector<1x128xf32>
    %1045 = vector.extract_strided_slice %1043 {offsets = [1, 0], sizes = [1, 128], strides = [1, 1]} : vector<8x128xf32> to vector<1x128xf32>
    %1046 = arith.maximumf %1044, %1045 : vector<1x128xf32>
    %1047 = vector.extract_strided_slice %1043 {offsets = [2, 0], sizes = [1, 128], strides = [1, 1]} : vector<8x128xf32> to vector<1x128xf32>
    %1048 = arith.maximumf %1046, %1047 : vector<1x128xf32>
    %1049 = vector.extract_strided_slice %1043 {offsets = [3, 0], sizes = [1, 128], strides = [1, 1]} : vector<8x128xf32> to vector<1x128xf32>
    %1050 = arith.maximumf %1048, %1049 : vector<1x128xf32>
    %1051 = vector.extract_strided_slice %1043 {offsets = [4, 0], sizes = [1, 128], strides = [1, 1]} : vector<8x128xf32> to vector<1x128xf32>
    %1052 = arith.maximumf %1050, %1051 : vector<1x128xf32>
    %1053 = vector.extract_strided_slice %1043 {offsets = [5, 0], sizes = [1, 128], strides = [1, 1]} : vector<8x128xf32> to vector<1x128xf32>
    %1054 = arith.maximumf %1052, %1053 : vector<1x128xf32>
    %1055 = vector.extract_strided_slice %1043 {offsets = [6, 0], sizes = [1, 128], strides = [1, 1]} : vector<8x128xf32> to vector<1x128xf32>
    %1056 = arith.maximumf %1054, %1055 : vector<1x128xf32>
    %1057 = vector.extract_strided_slice %1043 {offsets = [7, 0], sizes = [1, 128], strides = [1, 1]} : vector<8x128xf32> to vector<1x128xf32>
    %1058 = arith.maximumf %1056, %1057 : vector<1x128xf32>
    %1059 = vector.broadcast %1058 : vector<1x128xf32> to vector<8x128xf32>
    %1060 = arith.subf %1043, %1059 : vector<8x128xf32>
    %1061 = math.exp %1060 : vector<8x128xf32>
    %1062 = vector.extract_strided_slice %1061 {offsets = [0, 0], sizes = [1, 128], strides = [1, 1]} : vector<8x128xf32> to vector<1x128xf32>
    %1063 = vector.extract_strided_slice %1061 {offsets = [1, 0], sizes = [1, 128], strides = [1, 1]} : vector<8x128xf32> to vector<1x128xf32>
    %1064 = arith.addf %1062, %1063 : vector<1x128xf32>
    %1065 = vector.extract_strided_slice %1061 {offsets = [2, 0], sizes = [1, 128], strides = [1, 1]} : vector<8x128xf32> to vector<1x128xf32>
    %1066 = arith.addf %1064, %1065 : vector<1x128xf32>
    %1067 = vector.extract_strided_slice %1061 {offsets = [3, 0], sizes = [1, 128], strides = [1, 1]} : vector<8x128xf32> to vector<1x128xf32>
    %1068 = arith.addf %1066, %1067 : vector<1x128xf32>
    %1069 = vector.extract_strided_slice %1061 {offsets = [4, 0], sizes = [1, 128], strides = [1, 1]} : vector<8x128xf32> to vector<1x128xf32>
    %1070 = arith.addf %1068, %1069 : vector<1x128xf32>
    %1071 = vector.extract_strided_slice %1061 {offsets = [5, 0], sizes = [1, 128], strides = [1, 1]} : vector<8x128xf32> to vector<1x128xf32>
    %1072 = arith.addf %1070, %1071 : vector<1x128xf32>
    %1073 = vector.extract_strided_slice %1061 {offsets = [6, 0], sizes = [1, 128], strides = [1, 1]} : vector<8x128xf32> to vector<1x128xf32>
    %1074 = arith.addf %1072, %1073 : vector<1x128xf32>
    %1075 = vector.extract_strided_slice %1061 {offsets = [7, 0], sizes = [1, 128], strides = [1, 1]} : vector<8x128xf32> to vector<1x128xf32>
    %1076 = arith.addf %1074, %1075 : vector<1x128xf32>
    %1077 = math.log %1076 : vector<1x128xf32>
    %1078 = arith.addf %1058, %1077 : vector<1x128xf32>
    %1079 = arith.select %1042, %1078, %884 : vector<1x128xi1>, vector<1x128xf32>
    %1080 = arith.addf %1038, %7 : vector<8x128xf32>
    %1081 = vector.extract_strided_slice %1080 {offsets = [0, 0], sizes = [1, 128], strides = [1, 1]} : vector<8x128xf32> to vector<1x128xf32>
    %c0_i32_123 = arith.constant 0 : i32
    %1082 = vector.broadcast %c0_i32_123 : i32 to vector<1x128xi32>
    %1083 = vector.extract_strided_slice %1080 {offsets = [1, 0], sizes = [1, 128], strides = [1, 1]} : vector<8x128xf32> to vector<1x128xf32>
    %1084 = arith.cmpf ogt, %1083, %1081 : vector<1x128xf32>
    %1085 = arith.select %1084, %1083, %1081 : vector<1x128xi1>, vector<1x128xf32>
    %c1_i32_124 = arith.constant 1 : i32
    %1086 = vector.broadcast %c1_i32_124 : i32 to vector<1x128xi32>
    %1087 = arith.select %1084, %1086, %1082 : vector<1x128xi1>, vector<1x128xi32>
    %1088 = vector.extract_strided_slice %1080 {offsets = [2, 0], sizes = [1, 128], strides = [1, 1]} : vector<8x128xf32> to vector<1x128xf32>
    %1089 = arith.cmpf ogt, %1088, %1085 : vector<1x128xf32>
    %1090 = arith.select %1089, %1088, %1085 : vector<1x128xi1>, vector<1x128xf32>
    %c2_i32_125 = arith.constant 2 : i32
    %1091 = vector.broadcast %c2_i32_125 : i32 to vector<1x128xi32>
    %1092 = arith.select %1089, %1091, %1087 : vector<1x128xi1>, vector<1x128xi32>
    %1093 = vector.extract_strided_slice %1080 {offsets = [3, 0], sizes = [1, 128], strides = [1, 1]} : vector<8x128xf32> to vector<1x128xf32>
    %1094 = arith.cmpf ogt, %1093, %1090 : vector<1x128xf32>
    %1095 = arith.select %1094, %1093, %1090 : vector<1x128xi1>, vector<1x128xf32>
    %c3_i32_126 = arith.constant 3 : i32
    %1096 = vector.broadcast %c3_i32_126 : i32 to vector<1x128xi32>
    %1097 = arith.select %1094, %1096, %1092 : vector<1x128xi1>, vector<1x128xi32>
    %1098 = vector.extract_strided_slice %1080 {offsets = [4, 0], sizes = [1, 128], strides = [1, 1]} : vector<8x128xf32> to vector<1x128xf32>
    %1099 = arith.cmpf ogt, %1098, %1095 : vector<1x128xf32>
    %1100 = arith.select %1099, %1098, %1095 : vector<1x128xi1>, vector<1x128xf32>
    %c4_i32_127 = arith.constant 4 : i32
    %1101 = vector.broadcast %c4_i32_127 : i32 to vector<1x128xi32>
    %1102 = arith.select %1099, %1101, %1097 : vector<1x128xi1>, vector<1x128xi32>
    %1103 = vector.extract_strided_slice %1080 {offsets = [5, 0], sizes = [1, 128], strides = [1, 1]} : vector<8x128xf32> to vector<1x128xf32>
    %1104 = arith.cmpf ogt, %1103, %1100 : vector<1x128xf32>
    %1105 = arith.select %1104, %1103, %1100 : vector<1x128xi1>, vector<1x128xf32>
    %c5_i32_128 = arith.constant 5 : i32
    %1106 = vector.broadcast %c5_i32_128 : i32 to vector<1x128xi32>
    %1107 = arith.select %1104, %1106, %1102 : vector<1x128xi1>, vector<1x128xi32>
    %1108 = vector.extract_strided_slice %1080 {offsets = [6, 0], sizes = [1, 128], strides = [1, 1]} : vector<8x128xf32> to vector<1x128xf32>
    %1109 = arith.cmpf ogt, %1108, %1105 : vector<1x128xf32>
    %1110 = arith.select %1109, %1108, %1105 : vector<1x128xi1>, vector<1x128xf32>
    %c6_i32_129 = arith.constant 6 : i32
    %1111 = vector.broadcast %c6_i32_129 : i32 to vector<1x128xi32>
    %1112 = arith.select %1109, %1111, %1107 : vector<1x128xi1>, vector<1x128xi32>
    %1113 = vector.extract_strided_slice %1080 {offsets = [7, 0], sizes = [1, 128], strides = [1, 1]} : vector<8x128xf32> to vector<1x128xf32>
    %1114 = arith.cmpf ogt, %1113, %1110 : vector<1x128xf32>
    %1115 = arith.select %1114, %1113, %1110 : vector<1x128xi1>, vector<1x128xf32>
    %c7_i32_130 = arith.constant 7 : i32
    %1116 = vector.broadcast %c7_i32_130 : i32 to vector<1x128xi32>
    %1117 = arith.select %1114, %1116, %1112 : vector<1x128xi1>, vector<1x128xi32>
    %1118 = arith.select %1042, %1115, %923 : vector<1x128xi1>, vector<1x128xf32>
    %1119 = arith.select %1042, %1117, %924 : vector<1x128xi1>, vector<1x128xi32>
    %1120 = arith.index_cast %c5_i32_121 : i32 to index
    %c0_131 = arith.constant 0 : index
    %c0_132 = arith.constant 0 : index
    %1121 = vector.load %arg2[%1120, %c0_131, %c0_132] : memref<8x8x128xf32, #tpu.memory_space<vmem>>, vector<1x8x128xf32>
    %1122 = vector.shape_cast %1121 : vector<1x8x128xf32> to vector<8x128xf32>
    %1123 = vector.extract_strided_slice %1122 {offsets = [0, 0], sizes = [1, 128], strides = [1, 1]} : vector<8x128xf32> to vector<1x128xf32>
    %1124 = vector.extract_strided_slice %1122 {offsets = [1, 0], sizes = [1, 128], strides = [1, 1]} : vector<8x128xf32> to vector<1x128xf32>
    %1125 = arith.maximumf %1123, %1124 : vector<1x128xf32>
    %1126 = vector.extract_strided_slice %1122 {offsets = [2, 0], sizes = [1, 128], strides = [1, 1]} : vector<8x128xf32> to vector<1x128xf32>
    %1127 = arith.maximumf %1125, %1126 : vector<1x128xf32>
    %1128 = vector.extract_strided_slice %1122 {offsets = [3, 0], sizes = [1, 128], strides = [1, 1]} : vector<8x128xf32> to vector<1x128xf32>
    %1129 = arith.maximumf %1127, %1128 : vector<1x128xf32>
    %1130 = vector.extract_strided_slice %1122 {offsets = [4, 0], sizes = [1, 128], strides = [1, 1]} : vector<8x128xf32> to vector<1x128xf32>
    %1131 = arith.maximumf %1129, %1130 : vector<1x128xf32>
    %1132 = vector.extract_strided_slice %1122 {offsets = [5, 0], sizes = [1, 128], strides = [1, 1]} : vector<8x128xf32> to vector<1x128xf32>
    %1133 = arith.maximumf %1131, %1132 : vector<1x128xf32>
    %1134 = vector.extract_strided_slice %1122 {offsets = [6, 0], sizes = [1, 128], strides = [1, 1]} : vector<8x128xf32> to vector<1x128xf32>
    %1135 = arith.maximumf %1133, %1134 : vector<1x128xf32>
    %1136 = vector.extract_strided_slice %1122 {offsets = [7, 0], sizes = [1, 128], strides = [1, 1]} : vector<8x128xf32> to vector<1x128xf32>
    %1137 = arith.maximumf %1135, %1136 : vector<1x128xf32>
    %1138 = vector.broadcast %1137 : vector<1x128xf32> to vector<8x128xf32>
    %1139 = arith.subf %1122, %1138 : vector<8x128xf32>
    %1140 = math.exp %1139 : vector<8x128xf32>
    %1141 = vector.extract_strided_slice %1140 {offsets = [0, 0], sizes = [1, 128], strides = [1, 1]} : vector<8x128xf32> to vector<1x128xf32>
    %1142 = vector.broadcast %1141 : vector<1x128xf32> to vector<8x128xf32>
    %1143 = arith.mulf %12, %1142 : vector<8x128xf32>
    %1144 = vector.extract_strided_slice %1140 {offsets = [1, 0], sizes = [1, 128], strides = [1, 1]} : vector<8x128xf32> to vector<1x128xf32>
    %1145 = vector.broadcast %1144 : vector<1x128xf32> to vector<8x128xf32>
    %1146 = arith.mulf %15, %1145 : vector<8x128xf32>
    %1147 = arith.addf %1143, %1146 : vector<8x128xf32>
    %1148 = vector.extract_strided_slice %1140 {offsets = [2, 0], sizes = [1, 128], strides = [1, 1]} : vector<8x128xf32> to vector<1x128xf32>
    %1149 = vector.broadcast %1148 : vector<1x128xf32> to vector<8x128xf32>
    %1150 = arith.mulf %18, %1149 : vector<8x128xf32>
    %1151 = arith.addf %1147, %1150 : vector<8x128xf32>
    %1152 = vector.extract_strided_slice %1140 {offsets = [3, 0], sizes = [1, 128], strides = [1, 1]} : vector<8x128xf32> to vector<1x128xf32>
    %1153 = vector.broadcast %1152 : vector<1x128xf32> to vector<8x128xf32>
    %1154 = arith.mulf %21, %1153 : vector<8x128xf32>
    %1155 = arith.addf %1151, %1154 : vector<8x128xf32>
    %1156 = vector.extract_strided_slice %1140 {offsets = [4, 0], sizes = [1, 128], strides = [1, 1]} : vector<8x128xf32> to vector<1x128xf32>
    %1157 = vector.broadcast %1156 : vector<1x128xf32> to vector<8x128xf32>
    %1158 = arith.mulf %24, %1157 : vector<8x128xf32>
    %1159 = arith.addf %1155, %1158 : vector<8x128xf32>
    %1160 = vector.extract_strided_slice %1140 {offsets = [5, 0], sizes = [1, 128], strides = [1, 1]} : vector<8x128xf32> to vector<1x128xf32>
    %1161 = vector.broadcast %1160 : vector<1x128xf32> to vector<8x128xf32>
    %1162 = arith.mulf %27, %1161 : vector<8x128xf32>
    %1163 = arith.addf %1159, %1162 : vector<8x128xf32>
    %1164 = vector.extract_strided_slice %1140 {offsets = [6, 0], sizes = [1, 128], strides = [1, 1]} : vector<8x128xf32> to vector<1x128xf32>
    %1165 = vector.broadcast %1164 : vector<1x128xf32> to vector<8x128xf32>
    %1166 = arith.mulf %30, %1165 : vector<8x128xf32>
    %1167 = arith.addf %1163, %1166 : vector<8x128xf32>
    %1168 = vector.extract_strided_slice %1140 {offsets = [7, 0], sizes = [1, 128], strides = [1, 1]} : vector<8x128xf32> to vector<1x128xf32>
    %1169 = vector.broadcast %1168 : vector<1x128xf32> to vector<8x128xf32>
    %1170 = arith.mulf %33, %1169 : vector<8x128xf32>
    %1171 = arith.addf %1167, %1170 : vector<8x128xf32>
    %1172 = vector.broadcast %1137 : vector<1x128xf32> to vector<8x128xf32>
    %1173 = arith.addf %980, %1172 : vector<8x128xf32>
    %1174 = math.log %1171 : vector<8x128xf32>
    %1175 = arith.addf %1173, %1174 : vector<8x128xf32>
    %1176 = vector.extract_strided_slice %1038 {offsets = [0, 0], sizes = [1, 128], strides = [1, 1]} : vector<8x128xf32> to vector<1x128xf32>
    %1177 = vector.broadcast %1176 : vector<1x128xf32> to vector<8x128xf32>
    %1178 = arith.addf %36, %1177 : vector<8x128xf32>
    %c0_i32_133 = arith.constant 0 : i32
    %1179 = vector.broadcast %c0_i32_133 : i32 to vector<8x128xi32>
    %1180 = vector.extract_strided_slice %1038 {offsets = [1, 0], sizes = [1, 128], strides = [1, 1]} : vector<8x128xf32> to vector<1x128xf32>
    %1181 = vector.broadcast %1180 : vector<1x128xf32> to vector<8x128xf32>
    %1182 = arith.addf %39, %1181 : vector<8x128xf32>
    %1183 = arith.cmpf ogt, %1182, %1178 : vector<8x128xf32>
    %1184 = arith.select %1183, %1182, %1178 : vector<8x128xi1>, vector<8x128xf32>
    %c1_i32_134 = arith.constant 1 : i32
    %1185 = vector.broadcast %c1_i32_134 : i32 to vector<8x128xi32>
    %1186 = arith.select %1183, %1185, %1179 : vector<8x128xi1>, vector<8x128xi32>
    %1187 = vector.extract_strided_slice %1038 {offsets = [2, 0], sizes = [1, 128], strides = [1, 1]} : vector<8x128xf32> to vector<1x128xf32>
    %1188 = vector.broadcast %1187 : vector<1x128xf32> to vector<8x128xf32>
    %1189 = arith.addf %42, %1188 : vector<8x128xf32>
    %1190 = arith.cmpf ogt, %1189, %1184 : vector<8x128xf32>
    %1191 = arith.select %1190, %1189, %1184 : vector<8x128xi1>, vector<8x128xf32>
    %c2_i32_135 = arith.constant 2 : i32
    %1192 = vector.broadcast %c2_i32_135 : i32 to vector<8x128xi32>
    %1193 = arith.select %1190, %1192, %1186 : vector<8x128xi1>, vector<8x128xi32>
    %1194 = vector.extract_strided_slice %1038 {offsets = [3, 0], sizes = [1, 128], strides = [1, 1]} : vector<8x128xf32> to vector<1x128xf32>
    %1195 = vector.broadcast %1194 : vector<1x128xf32> to vector<8x128xf32>
    %1196 = arith.addf %45, %1195 : vector<8x128xf32>
    %1197 = arith.cmpf ogt, %1196, %1191 : vector<8x128xf32>
    %1198 = arith.select %1197, %1196, %1191 : vector<8x128xi1>, vector<8x128xf32>
    %c3_i32_136 = arith.constant 3 : i32
    %1199 = vector.broadcast %c3_i32_136 : i32 to vector<8x128xi32>
    %1200 = arith.select %1197, %1199, %1193 : vector<8x128xi1>, vector<8x128xi32>
    %1201 = vector.extract_strided_slice %1038 {offsets = [4, 0], sizes = [1, 128], strides = [1, 1]} : vector<8x128xf32> to vector<1x128xf32>
    %1202 = vector.broadcast %1201 : vector<1x128xf32> to vector<8x128xf32>
    %1203 = arith.addf %48, %1202 : vector<8x128xf32>
    %1204 = arith.cmpf ogt, %1203, %1198 : vector<8x128xf32>
    %1205 = arith.select %1204, %1203, %1198 : vector<8x128xi1>, vector<8x128xf32>
    %c4_i32_137 = arith.constant 4 : i32
    %1206 = vector.broadcast %c4_i32_137 : i32 to vector<8x128xi32>
    %1207 = arith.select %1204, %1206, %1200 : vector<8x128xi1>, vector<8x128xi32>
    %1208 = vector.extract_strided_slice %1038 {offsets = [5, 0], sizes = [1, 128], strides = [1, 1]} : vector<8x128xf32> to vector<1x128xf32>
    %1209 = vector.broadcast %1208 : vector<1x128xf32> to vector<8x128xf32>
    %1210 = arith.addf %51, %1209 : vector<8x128xf32>
    %1211 = arith.cmpf ogt, %1210, %1205 : vector<8x128xf32>
    %1212 = arith.select %1211, %1210, %1205 : vector<8x128xi1>, vector<8x128xf32>
    %c5_i32_138 = arith.constant 5 : i32
    %1213 = vector.broadcast %c5_i32_138 : i32 to vector<8x128xi32>
    %1214 = arith.select %1211, %1213, %1207 : vector<8x128xi1>, vector<8x128xi32>
    %1215 = vector.extract_strided_slice %1038 {offsets = [6, 0], sizes = [1, 128], strides = [1, 1]} : vector<8x128xf32> to vector<1x128xf32>
    %1216 = vector.broadcast %1215 : vector<1x128xf32> to vector<8x128xf32>
    %1217 = arith.addf %54, %1216 : vector<8x128xf32>
    %1218 = arith.cmpf ogt, %1217, %1212 : vector<8x128xf32>
    %1219 = arith.select %1218, %1217, %1212 : vector<8x128xi1>, vector<8x128xf32>
    %c6_i32_139 = arith.constant 6 : i32
    %1220 = vector.broadcast %c6_i32_139 : i32 to vector<8x128xi32>
    %1221 = arith.select %1218, %1220, %1214 : vector<8x128xi1>, vector<8x128xi32>
    %1222 = vector.extract_strided_slice %1038 {offsets = [7, 0], sizes = [1, 128], strides = [1, 1]} : vector<8x128xf32> to vector<1x128xf32>
    %1223 = vector.broadcast %1222 : vector<1x128xf32> to vector<8x128xf32>
    %1224 = arith.addf %57, %1223 : vector<8x128xf32>
    %1225 = arith.cmpf ogt, %1224, %1219 : vector<8x128xf32>
    %1226 = arith.select %1225, %1224, %1219 : vector<8x128xi1>, vector<8x128xf32>
    %c7_i32_140 = arith.constant 7 : i32
    %1227 = vector.broadcast %c7_i32_140 : i32 to vector<8x128xi32>
    %1228 = arith.select %1225, %1227, %1221 : vector<8x128xi1>, vector<8x128xi32>
    %1229 = arith.index_cast %c5_i32_121 : i32 to index
    %c0_141 = arith.constant 0 : index
    %c0_142 = arith.constant 0 : index
    %1230 = vector.load %arg10[%1229, %c0_141, %c0_142] : memref<8x8x128xi32, #tpu.memory_space<vmem>>, vector<1x8x128xi32>
    %1231 = vector.shape_cast %1230 : vector<1x8x128xi32> to vector<8x128xi32>
    %1232 = vector.shape_cast %1228 : vector<8x128xi32> to vector<1x8x128xi32>
    tpu.vector_store %arg10[%1229, %c0_141, %c0_142], %1232 {strides = array<i32>} : memref<8x8x128xi32, #tpu.memory_space<vmem>>, vector<1x8x128xi32>,
    %1233 = arith.addf %1226, %1122 : vector<8x128xf32>
    %c6_i32_143 = arith.constant 6 : i32
    %1234 = arith.addi %58, %c6_i32_143 : i32
    %c1_i32_144 = arith.constant 1 : i32
    %1235 = arith.addi %1234, %c1_i32_144 : i32
    %1236 = vector.broadcast %1235 : i32 to vector<1x128xi32>
    %1237 = arith.cmpi eq, %4, %1236 : vector<1x128xi32>
    %1238 = arith.addf %1175, %7 : vector<8x128xf32>
    %1239 = vector.extract_strided_slice %1238 {offsets = [0, 0], sizes = [1, 128], strides = [1, 1]} : vector<8x128xf32> to vector<1x128xf32>
    %1240 = vector.extract_strided_slice %1238 {offsets = [1, 0], sizes = [1, 128], strides = [1, 1]} : vector<8x128xf32> to vector<1x128xf32>
    %1241 = arith.maximumf %1239, %1240 : vector<1x128xf32>
    %1242 = vector.extract_strided_slice %1238 {offsets = [2, 0], sizes = [1, 128], strides = [1, 1]} : vector<8x128xf32> to vector<1x128xf32>
    %1243 = arith.maximumf %1241, %1242 : vector<1x128xf32>
    %1244 = vector.extract_strided_slice %1238 {offsets = [3, 0], sizes = [1, 128], strides = [1, 1]} : vector<8x128xf32> to vector<1x128xf32>
    %1245 = arith.maximumf %1243, %1244 : vector<1x128xf32>
    %1246 = vector.extract_strided_slice %1238 {offsets = [4, 0], sizes = [1, 128], strides = [1, 1]} : vector<8x128xf32> to vector<1x128xf32>
    %1247 = arith.maximumf %1245, %1246 : vector<1x128xf32>
    %1248 = vector.extract_strided_slice %1238 {offsets = [5, 0], sizes = [1, 128], strides = [1, 1]} : vector<8x128xf32> to vector<1x128xf32>
    %1249 = arith.maximumf %1247, %1248 : vector<1x128xf32>
    %1250 = vector.extract_strided_slice %1238 {offsets = [6, 0], sizes = [1, 128], strides = [1, 1]} : vector<8x128xf32> to vector<1x128xf32>
    %1251 = arith.maximumf %1249, %1250 : vector<1x128xf32>
    %1252 = vector.extract_strided_slice %1238 {offsets = [7, 0], sizes = [1, 128], strides = [1, 1]} : vector<8x128xf32> to vector<1x128xf32>
    %1253 = arith.maximumf %1251, %1252 : vector<1x128xf32>
    %1254 = vector.broadcast %1253 : vector<1x128xf32> to vector<8x128xf32>
    %1255 = arith.subf %1238, %1254 : vector<8x128xf32>
    %1256 = math.exp %1255 : vector<8x128xf32>
    %1257 = vector.extract_strided_slice %1256 {offsets = [0, 0], sizes = [1, 128], strides = [1, 1]} : vector<8x128xf32> to vector<1x128xf32>
    %1258 = vector.extract_strided_slice %1256 {offsets = [1, 0], sizes = [1, 128], strides = [1, 1]} : vector<8x128xf32> to vector<1x128xf32>
    %1259 = arith.addf %1257, %1258 : vector<1x128xf32>
    %1260 = vector.extract_strided_slice %1256 {offsets = [2, 0], sizes = [1, 128], strides = [1, 1]} : vector<8x128xf32> to vector<1x128xf32>
    %1261 = arith.addf %1259, %1260 : vector<1x128xf32>
    %1262 = vector.extract_strided_slice %1256 {offsets = [3, 0], sizes = [1, 128], strides = [1, 1]} : vector<8x128xf32> to vector<1x128xf32>
    %1263 = arith.addf %1261, %1262 : vector<1x128xf32>
    %1264 = vector.extract_strided_slice %1256 {offsets = [4, 0], sizes = [1, 128], strides = [1, 1]} : vector<8x128xf32> to vector<1x128xf32>
    %1265 = arith.addf %1263, %1264 : vector<1x128xf32>
    %1266 = vector.extract_strided_slice %1256 {offsets = [5, 0], sizes = [1, 128], strides = [1, 1]} : vector<8x128xf32> to vector<1x128xf32>
    %1267 = arith.addf %1265, %1266 : vector<1x128xf32>
    %1268 = vector.extract_strided_slice %1256 {offsets = [6, 0], sizes = [1, 128], strides = [1, 1]} : vector<8x128xf32> to vector<1x128xf32>
    %1269 = arith.addf %1267, %1268 : vector<1x128xf32>
    %1270 = vector.extract_strided_slice %1256 {offsets = [7, 0], sizes = [1, 128], strides = [1, 1]} : vector<8x128xf32> to vector<1x128xf32>
    %1271 = arith.addf %1269, %1270 : vector<1x128xf32>
    %1272 = math.log %1271 : vector<1x128xf32>
    %1273 = arith.addf %1253, %1272 : vector<1x128xf32>
    %1274 = arith.select %1237, %1273, %1079 : vector<1x128xi1>, vector<1x128xf32>
    %1275 = arith.addf %1233, %7 : vector<8x128xf32>
    %1276 = vector.extract_strided_slice %1275 {offsets = [0, 0], sizes = [1, 128], strides = [1, 1]} : vector<8x128xf32> to vector<1x128xf32>
    %c0_i32_145 = arith.constant 0 : i32
    %1277 = vector.broadcast %c0_i32_145 : i32 to vector<1x128xi32>
    %1278 = vector.extract_strided_slice %1275 {offsets = [1, 0], sizes = [1, 128], strides = [1, 1]} : vector<8x128xf32> to vector<1x128xf32>
    %1279 = arith.cmpf ogt, %1278, %1276 : vector<1x128xf32>
    %1280 = arith.select %1279, %1278, %1276 : vector<1x128xi1>, vector<1x128xf32>
    %c1_i32_146 = arith.constant 1 : i32
    %1281 = vector.broadcast %c1_i32_146 : i32 to vector<1x128xi32>
    %1282 = arith.select %1279, %1281, %1277 : vector<1x128xi1>, vector<1x128xi32>
    %1283 = vector.extract_strided_slice %1275 {offsets = [2, 0], sizes = [1, 128], strides = [1, 1]} : vector<8x128xf32> to vector<1x128xf32>
    %1284 = arith.cmpf ogt, %1283, %1280 : vector<1x128xf32>
    %1285 = arith.select %1284, %1283, %1280 : vector<1x128xi1>, vector<1x128xf32>
    %c2_i32_147 = arith.constant 2 : i32
    %1286 = vector.broadcast %c2_i32_147 : i32 to vector<1x128xi32>
    %1287 = arith.select %1284, %1286, %1282 : vector<1x128xi1>, vector<1x128xi32>
    %1288 = vector.extract_strided_slice %1275 {offsets = [3, 0], sizes = [1, 128], strides = [1, 1]} : vector<8x128xf32> to vector<1x128xf32>
    %1289 = arith.cmpf ogt, %1288, %1285 : vector<1x128xf32>
    %1290 = arith.select %1289, %1288, %1285 : vector<1x128xi1>, vector<1x128xf32>
    %c3_i32_148 = arith.constant 3 : i32
    %1291 = vector.broadcast %c3_i32_148 : i32 to vector<1x128xi32>
    %1292 = arith.select %1289, %1291, %1287 : vector<1x128xi1>, vector<1x128xi32>
    %1293 = vector.extract_strided_slice %1275 {offsets = [4, 0], sizes = [1, 128], strides = [1, 1]} : vector<8x128xf32> to vector<1x128xf32>
    %1294 = arith.cmpf ogt, %1293, %1290 : vector<1x128xf32>
    %1295 = arith.select %1294, %1293, %1290 : vector<1x128xi1>, vector<1x128xf32>
    %c4_i32_149 = arith.constant 4 : i32
    %1296 = vector.broadcast %c4_i32_149 : i32 to vector<1x128xi32>
    %1297 = arith.select %1294, %1296, %1292 : vector<1x128xi1>, vector<1x128xi32>
    %1298 = vector.extract_strided_slice %1275 {offsets = [5, 0], sizes = [1, 128], strides = [1, 1]} : vector<8x128xf32> to vector<1x128xf32>
    %1299 = arith.cmpf ogt, %1298, %1295 : vector<1x128xf32>
    %1300 = arith.select %1299, %1298, %1295 : vector<1x128xi1>, vector<1x128xf32>
    %c5_i32_150 = arith.constant 5 : i32
    %1301 = vector.broadcast %c5_i32_150 : i32 to vector<1x128xi32>
    %1302 = arith.select %1299, %1301, %1297 : vector<1x128xi1>, vector<1x128xi32>
    %1303 = vector.extract_strided_slice %1275 {offsets = [6, 0], sizes = [1, 128], strides = [1, 1]} : vector<8x128xf32> to vector<1x128xf32>
    %1304 = arith.cmpf ogt, %1303, %1300 : vector<1x128xf32>
    %1305 = arith.select %1304, %1303, %1300 : vector<1x128xi1>, vector<1x128xf32>
    %c6_i32_151 = arith.constant 6 : i32
    %1306 = vector.broadcast %c6_i32_151 : i32 to vector<1x128xi32>
    %1307 = arith.select %1304, %1306, %1302 : vector<1x128xi1>, vector<1x128xi32>
    %1308 = vector.extract_strided_slice %1275 {offsets = [7, 0], sizes = [1, 128], strides = [1, 1]} : vector<8x128xf32> to vector<1x128xf32>
    %1309 = arith.cmpf ogt, %1308, %1305 : vector<1x128xf32>
    %1310 = arith.select %1309, %1308, %1305 : vector<1x128xi1>, vector<1x128xf32>
    %c7_i32_152 = arith.constant 7 : i32
    %1311 = vector.broadcast %c7_i32_152 : i32 to vector<1x128xi32>
    %1312 = arith.select %1309, %1311, %1307 : vector<1x128xi1>, vector<1x128xi32>
    %1313 = arith.select %1237, %1310, %1118 : vector<1x128xi1>, vector<1x128xf32>
    %1314 = arith.select %1237, %1312, %1119 : vector<1x128xi1>, vector<1x128xi32>
    %1315 = arith.index_cast %c6_i32_143 : i32 to index
    %c0_153 = arith.constant 0 : index
    %c0_154 = arith.constant 0 : index
    %1316 = vector.load %arg2[%1315, %c0_153, %c0_154] : memref<8x8x128xf32, #tpu.memory_space<vmem>>, vector<1x8x128xf32>
    %1317 = vector.shape_cast %1316 : vector<1x8x128xf32> to vector<8x128xf32>
    %1318 = vector.extract_strided_slice %1317 {offsets = [0, 0], sizes = [1, 128], strides = [1, 1]} : vector<8x128xf32> to vector<1x128xf32>
    %1319 = vector.extract_strided_slice %1317 {offsets = [1, 0], sizes = [1, 128], strides = [1, 1]} : vector<8x128xf32> to vector<1x128xf32>
    %1320 = arith.maximumf %1318, %1319 : vector<1x128xf32>
    %1321 = vector.extract_strided_slice %1317 {offsets = [2, 0], sizes = [1, 128], strides = [1, 1]} : vector<8x128xf32> to vector<1x128xf32>
    %1322 = arith.maximumf %1320, %1321 : vector<1x128xf32>
    %1323 = vector.extract_strided_slice %1317 {offsets = [3, 0], sizes = [1, 128], strides = [1, 1]} : vector<8x128xf32> to vector<1x128xf32>
    %1324 = arith.maximumf %1322, %1323 : vector<1x128xf32>
    %1325 = vector.extract_strided_slice %1317 {offsets = [4, 0], sizes = [1, 128], strides = [1, 1]} : vector<8x128xf32> to vector<1x128xf32>
    %1326 = arith.maximumf %1324, %1325 : vector<1x128xf32>
    %1327 = vector.extract_strided_slice %1317 {offsets = [5, 0], sizes = [1, 128], strides = [1, 1]} : vector<8x128xf32> to vector<1x128xf32>
    %1328 = arith.maximumf %1326, %1327 : vector<1x128xf32>
    %1329 = vector.extract_strided_slice %1317 {offsets = [6, 0], sizes = [1, 128], strides = [1, 1]} : vector<8x128xf32> to vector<1x128xf32>
    %1330 = arith.maximumf %1328, %1329 : vector<1x128xf32>
    %1331 = vector.extract_strided_slice %1317 {offsets = [7, 0], sizes = [1, 128], strides = [1, 1]} : vector<8x128xf32> to vector<1x128xf32>
    %1332 = arith.maximumf %1330, %1331 : vector<1x128xf32>
    %1333 = vector.broadcast %1332 : vector<1x128xf32> to vector<8x128xf32>
    %1334 = arith.subf %1317, %1333 : vector<8x128xf32>
    %1335 = math.exp %1334 : vector<8x128xf32>
    %1336 = vector.extract_strided_slice %1335 {offsets = [0, 0], sizes = [1, 128], strides = [1, 1]} : vector<8x128xf32> to vector<1x128xf32>
    %1337 = vector.broadcast %1336 : vector<1x128xf32> to vector<8x128xf32>
    %1338 = arith.mulf %12, %1337 : vector<8x128xf32>
    %1339 = vector.extract_strided_slice %1335 {offsets = [1, 0], sizes = [1, 128], strides = [1, 1]} : vector<8x128xf32> to vector<1x128xf32>
    %1340 = vector.broadcast %1339 : vector<1x128xf32> to vector<8x128xf32>
    %1341 = arith.mulf %15, %1340 : vector<8x128xf32>
    %1342 = arith.addf %1338, %1341 : vector<8x128xf32>
    %1343 = vector.extract_strided_slice %1335 {offsets = [2, 0], sizes = [1, 128], strides = [1, 1]} : vector<8x128xf32> to vector<1x128xf32>
    %1344 = vector.broadcast %1343 : vector<1x128xf32> to vector<8x128xf32>
    %1345 = arith.mulf %18, %1344 : vector<8x128xf32>
    %1346 = arith.addf %1342, %1345 : vector<8x128xf32>
    %1347 = vector.extract_strided_slice %1335 {offsets = [3, 0], sizes = [1, 128], strides = [1, 1]} : vector<8x128xf32> to vector<1x128xf32>
    %1348 = vector.broadcast %1347 : vector<1x128xf32> to vector<8x128xf32>
    %1349 = arith.mulf %21, %1348 : vector<8x128xf32>
    %1350 = arith.addf %1346, %1349 : vector<8x128xf32>
    %1351 = vector.extract_strided_slice %1335 {offsets = [4, 0], sizes = [1, 128], strides = [1, 1]} : vector<8x128xf32> to vector<1x128xf32>
    %1352 = vector.broadcast %1351 : vector<1x128xf32> to vector<8x128xf32>
    %1353 = arith.mulf %24, %1352 : vector<8x128xf32>
    %1354 = arith.addf %1350, %1353 : vector<8x128xf32>
    %1355 = vector.extract_strided_slice %1335 {offsets = [5, 0], sizes = [1, 128], strides = [1, 1]} : vector<8x128xf32> to vector<1x128xf32>
    %1356 = vector.broadcast %1355 : vector<1x128xf32> to vector<8x128xf32>
    %1357 = arith.mulf %27, %1356 : vector<8x128xf32>
    %1358 = arith.addf %1354, %1357 : vector<8x128xf32>
    %1359 = vector.extract_strided_slice %1335 {offsets = [6, 0], sizes = [1, 128], strides = [1, 1]} : vector<8x128xf32> to vector<1x128xf32>
    %1360 = vector.broadcast %1359 : vector<1x128xf32> to vector<8x128xf32>
    %1361 = arith.mulf %30, %1360 : vector<8x128xf32>
    %1362 = arith.addf %1358, %1361 : vector<8x128xf32>
    %1363 = vector.extract_strided_slice %1335 {offsets = [7, 0], sizes = [1, 128], strides = [1, 1]} : vector<8x128xf32> to vector<1x128xf32>
    %1364 = vector.broadcast %1363 : vector<1x128xf32> to vector<8x128xf32>
    %1365 = arith.mulf %33, %1364 : vector<8x128xf32>
    %1366 = arith.addf %1362, %1365 : vector<8x128xf32>
    %1367 = vector.broadcast %1332 : vector<1x128xf32> to vector<8x128xf32>
    %1368 = arith.addf %1175, %1367 : vector<8x128xf32>
    %1369 = math.log %1366 : vector<8x128xf32>
    %1370 = arith.addf %1368, %1369 : vector<8x128xf32>
    %1371 = vector.extract_strided_slice %1233 {offsets = [0, 0], sizes = [1, 128], strides = [1, 1]} : vector<8x128xf32> to vector<1x128xf32>
    %1372 = vector.broadcast %1371 : vector<1x128xf32> to vector<8x128xf32>
    %1373 = arith.addf %36, %1372 : vector<8x128xf32>
    %c0_i32_155 = arith.constant 0 : i32
    %1374 = vector.broadcast %c0_i32_155 : i32 to vector<8x128xi32>
    %1375 = vector.extract_strided_slice %1233 {offsets = [1, 0], sizes = [1, 128], strides = [1, 1]} : vector<8x128xf32> to vector<1x128xf32>
    %1376 = vector.broadcast %1375 : vector<1x128xf32> to vector<8x128xf32>
    %1377 = arith.addf %39, %1376 : vector<8x128xf32>
    %1378 = arith.cmpf ogt, %1377, %1373 : vector<8x128xf32>
    %1379 = arith.select %1378, %1377, %1373 : vector<8x128xi1>, vector<8x128xf32>
    %c1_i32_156 = arith.constant 1 : i32
    %1380 = vector.broadcast %c1_i32_156 : i32 to vector<8x128xi32>
    %1381 = arith.select %1378, %1380, %1374 : vector<8x128xi1>, vector<8x128xi32>
    %1382 = vector.extract_strided_slice %1233 {offsets = [2, 0], sizes = [1, 128], strides = [1, 1]} : vector<8x128xf32> to vector<1x128xf32>
    %1383 = vector.broadcast %1382 : vector<1x128xf32> to vector<8x128xf32>
    %1384 = arith.addf %42, %1383 : vector<8x128xf32>
    %1385 = arith.cmpf ogt, %1384, %1379 : vector<8x128xf32>
    %1386 = arith.select %1385, %1384, %1379 : vector<8x128xi1>, vector<8x128xf32>
    %c2_i32_157 = arith.constant 2 : i32
    %1387 = vector.broadcast %c2_i32_157 : i32 to vector<8x128xi32>
    %1388 = arith.select %1385, %1387, %1381 : vector<8x128xi1>, vector<8x128xi32>
    %1389 = vector.extract_strided_slice %1233 {offsets = [3, 0], sizes = [1, 128], strides = [1, 1]} : vector<8x128xf32> to vector<1x128xf32>
    %1390 = vector.broadcast %1389 : vector<1x128xf32> to vector<8x128xf32>
    %1391 = arith.addf %45, %1390 : vector<8x128xf32>
    %1392 = arith.cmpf ogt, %1391, %1386 : vector<8x128xf32>
    %1393 = arith.select %1392, %1391, %1386 : vector<8x128xi1>, vector<8x128xf32>
    %c3_i32_158 = arith.constant 3 : i32
    %1394 = vector.broadcast %c3_i32_158 : i32 to vector<8x128xi32>
    %1395 = arith.select %1392, %1394, %1388 : vector<8x128xi1>, vector<8x128xi32>
    %1396 = vector.extract_strided_slice %1233 {offsets = [4, 0], sizes = [1, 128], strides = [1, 1]} : vector<8x128xf32> to vector<1x128xf32>
    %1397 = vector.broadcast %1396 : vector<1x128xf32> to vector<8x128xf32>
    %1398 = arith.addf %48, %1397 : vector<8x128xf32>
    %1399 = arith.cmpf ogt, %1398, %1393 : vector<8x128xf32>
    %1400 = arith.select %1399, %1398, %1393 : vector<8x128xi1>, vector<8x128xf32>
    %c4_i32_159 = arith.constant 4 : i32
    %1401 = vector.broadcast %c4_i32_159 : i32 to vector<8x128xi32>
    %1402 = arith.select %1399, %1401, %1395 : vector<8x128xi1>, vector<8x128xi32>
    %1403 = vector.extract_strided_slice %1233 {offsets = [5, 0], sizes = [1, 128], strides = [1, 1]} : vector<8x128xf32> to vector<1x128xf32>
    %1404 = vector.broadcast %1403 : vector<1x128xf32> to vector<8x128xf32>
    %1405 = arith.addf %51, %1404 : vector<8x128xf32>
    %1406 = arith.cmpf ogt, %1405, %1400 : vector<8x128xf32>
    %1407 = arith.select %1406, %1405, %1400 : vector<8x128xi1>, vector<8x128xf32>
    %c5_i32_160 = arith.constant 5 : i32
    %1408 = vector.broadcast %c5_i32_160 : i32 to vector<8x128xi32>
    %1409 = arith.select %1406, %1408, %1402 : vector<8x128xi1>, vector<8x128xi32>
    %1410 = vector.extract_strided_slice %1233 {offsets = [6, 0], sizes = [1, 128], strides = [1, 1]} : vector<8x128xf32> to vector<1x128xf32>
    %1411 = vector.broadcast %1410 : vector<1x128xf32> to vector<8x128xf32>
    %1412 = arith.addf %54, %1411 : vector<8x128xf32>
    %1413 = arith.cmpf ogt, %1412, %1407 : vector<8x128xf32>
    %1414 = arith.select %1413, %1412, %1407 : vector<8x128xi1>, vector<8x128xf32>
    %c6_i32_161 = arith.constant 6 : i32
    %1415 = vector.broadcast %c6_i32_161 : i32 to vector<8x128xi32>
    %1416 = arith.select %1413, %1415, %1409 : vector<8x128xi1>, vector<8x128xi32>
    %1417 = vector.extract_strided_slice %1233 {offsets = [7, 0], sizes = [1, 128], strides = [1, 1]} : vector<8x128xf32> to vector<1x128xf32>
    %1418 = vector.broadcast %1417 : vector<1x128xf32> to vector<8x128xf32>
    %1419 = arith.addf %57, %1418 : vector<8x128xf32>
    %1420 = arith.cmpf ogt, %1419, %1414 : vector<8x128xf32>
    %1421 = arith.select %1420, %1419, %1414 : vector<8x128xi1>, vector<8x128xf32>
    %c7_i32_162 = arith.constant 7 : i32
    %1422 = vector.broadcast %c7_i32_162 : i32 to vector<8x128xi32>
    %1423 = arith.select %1420, %1422, %1416 : vector<8x128xi1>, vector<8x128xi32>
    %1424 = arith.index_cast %c6_i32_143 : i32 to index
    %c0_163 = arith.constant 0 : index
    %c0_164 = arith.constant 0 : index
    %1425 = vector.load %arg10[%1424, %c0_163, %c0_164] : memref<8x8x128xi32, #tpu.memory_space<vmem>>, vector<1x8x128xi32>
    %1426 = vector.shape_cast %1425 : vector<1x8x128xi32> to vector<8x128xi32>
    %1427 = vector.shape_cast %1423 : vector<8x128xi32> to vector<1x8x128xi32>
    tpu.vector_store %arg10[%1424, %c0_163, %c0_164], %1427 {strides = array<i32>} : memref<8x8x128xi32, #tpu.memory_space<vmem>>, vector<1x8x128xi32>,
    %1428 = arith.addf %1421, %1317 : vector<8x128xf32>
    %c7_i32_165 = arith.constant 7 : i32
    %1429 = arith.addi %58, %c7_i32_165 : i32
    %c1_i32_166 = arith.constant 1 : i32
    %1430 = arith.addi %1429, %c1_i32_166 : i32
    %1431 = vector.broadcast %1430 : i32 to vector<1x128xi32>
    %1432 = arith.cmpi eq, %4, %1431 : vector<1x128xi32>
    %1433 = arith.addf %1370, %7 : vector<8x128xf32>
    %1434 = vector.extract_strided_slice %1433 {offsets = [0, 0], sizes = [1, 128], strides = [1, 1]} : vector<8x128xf32> to vector<1x128xf32>
    %1435 = vector.extract_strided_slice %1433 {offsets = [1, 0], sizes = [1, 128], strides = [1, 1]} : vector<8x128xf32> to vector<1x128xf32>
    %1436 = arith.maximumf %1434, %1435 : vector<1x128xf32>
    %1437 = vector.extract_strided_slice %1433 {offsets = [2, 0], sizes = [1, 128], strides = [1, 1]} : vector<8x128xf32> to vector<1x128xf32>
    %1438 = arith.maximumf %1436, %1437 : vector<1x128xf32>
    %1439 = vector.extract_strided_slice %1433 {offsets = [3, 0], sizes = [1, 128], strides = [1, 1]} : vector<8x128xf32> to vector<1x128xf32>
    %1440 = arith.maximumf %1438, %1439 : vector<1x128xf32>
    %1441 = vector.extract_strided_slice %1433 {offsets = [4, 0], sizes = [1, 128], strides = [1, 1]} : vector<8x128xf32> to vector<1x128xf32>
    %1442 = arith.maximumf %1440, %1441 : vector<1x128xf32>
    %1443 = vector.extract_strided_slice %1433 {offsets = [5, 0], sizes = [1, 128], strides = [1, 1]} : vector<8x128xf32> to vector<1x128xf32>
    %1444 = arith.maximumf %1442, %1443 : vector<1x128xf32>
    %1445 = vector.extract_strided_slice %1433 {offsets = [6, 0], sizes = [1, 128], strides = [1, 1]} : vector<8x128xf32> to vector<1x128xf32>
    %1446 = arith.maximumf %1444, %1445 : vector<1x128xf32>
    %1447 = vector.extract_strided_slice %1433 {offsets = [7, 0], sizes = [1, 128], strides = [1, 1]} : vector<8x128xf32> to vector<1x128xf32>
    %1448 = arith.maximumf %1446, %1447 : vector<1x128xf32>
    %1449 = vector.broadcast %1448 : vector<1x128xf32> to vector<8x128xf32>
    %1450 = arith.subf %1433, %1449 : vector<8x128xf32>
    %1451 = math.exp %1450 : vector<8x128xf32>
    %1452 = vector.extract_strided_slice %1451 {offsets = [0, 0], sizes = [1, 128], strides = [1, 1]} : vector<8x128xf32> to vector<1x128xf32>
    %1453 = vector.extract_strided_slice %1451 {offsets = [1, 0], sizes = [1, 128], strides = [1, 1]} : vector<8x128xf32> to vector<1x128xf32>
    %1454 = arith.addf %1452, %1453 : vector<1x128xf32>
    %1455 = vector.extract_strided_slice %1451 {offsets = [2, 0], sizes = [1, 128], strides = [1, 1]} : vector<8x128xf32> to vector<1x128xf32>
    %1456 = arith.addf %1454, %1455 : vector<1x128xf32>
    %1457 = vector.extract_strided_slice %1451 {offsets = [3, 0], sizes = [1, 128], strides = [1, 1]} : vector<8x128xf32> to vector<1x128xf32>
    %1458 = arith.addf %1456, %1457 : vector<1x128xf32>
    %1459 = vector.extract_strided_slice %1451 {offsets = [4, 0], sizes = [1, 128], strides = [1, 1]} : vector<8x128xf32> to vector<1x128xf32>
    %1460 = arith.addf %1458, %1459 : vector<1x128xf32>
    %1461 = vector.extract_strided_slice %1451 {offsets = [5, 0], sizes = [1, 128], strides = [1, 1]} : vector<8x128xf32> to vector<1x128xf32>
    %1462 = arith.addf %1460, %1461 : vector<1x128xf32>
    %1463 = vector.extract_strided_slice %1451 {offsets = [6, 0], sizes = [1, 128], strides = [1, 1]} : vector<8x128xf32> to vector<1x128xf32>
    %1464 = arith.addf %1462, %1463 : vector<1x128xf32>
    %1465 = vector.extract_strided_slice %1451 {offsets = [7, 0], sizes = [1, 128], strides = [1, 1]} : vector<8x128xf32> to vector<1x128xf32>
    %1466 = arith.addf %1464, %1465 : vector<1x128xf32>
    %1467 = math.log %1466 : vector<1x128xf32>
    %1468 = arith.addf %1448, %1467 : vector<1x128xf32>
    %1469 = arith.select %1432, %1468, %1274 : vector<1x128xi1>, vector<1x128xf32>
    %1470 = arith.addf %1428, %7 : vector<8x128xf32>
    %1471 = vector.extract_strided_slice %1470 {offsets = [0, 0], sizes = [1, 128], strides = [1, 1]} : vector<8x128xf32> to vector<1x128xf32>
    %c0_i32_167 = arith.constant 0 : i32
    %1472 = vector.broadcast %c0_i32_167 : i32 to vector<1x128xi32>
    %1473 = vector.extract_strided_slice %1470 {offsets = [1, 0], sizes = [1, 128], strides = [1, 1]} : vector<8x128xf32> to vector<1x128xf32>
    %1474 = arith.cmpf ogt, %1473, %1471 : vector<1x128xf32>
    %1475 = arith.select %1474, %1473, %1471 : vector<1x128xi1>, vector<1x128xf32>
    %c1_i32_168 = arith.constant 1 : i32
    %1476 = vector.broadcast %c1_i32_168 : i32 to vector<1x128xi32>
    %1477 = arith.select %1474, %1476, %1472 : vector<1x128xi1>, vector<1x128xi32>
    %1478 = vector.extract_strided_slice %1470 {offsets = [2, 0], sizes = [1, 128], strides = [1, 1]} : vector<8x128xf32> to vector<1x128xf32>
    %1479 = arith.cmpf ogt, %1478, %1475 : vector<1x128xf32>
    %1480 = arith.select %1479, %1478, %1475 : vector<1x128xi1>, vector<1x128xf32>
    %c2_i32_169 = arith.constant 2 : i32
    %1481 = vector.broadcast %c2_i32_169 : i32 to vector<1x128xi32>
    %1482 = arith.select %1479, %1481, %1477 : vector<1x128xi1>, vector<1x128xi32>
    %1483 = vector.extract_strided_slice %1470 {offsets = [3, 0], sizes = [1, 128], strides = [1, 1]} : vector<8x128xf32> to vector<1x128xf32>
    %1484 = arith.cmpf ogt, %1483, %1480 : vector<1x128xf32>
    %1485 = arith.select %1484, %1483, %1480 : vector<1x128xi1>, vector<1x128xf32>
    %c3_i32_170 = arith.constant 3 : i32
    %1486 = vector.broadcast %c3_i32_170 : i32 to vector<1x128xi32>
    %1487 = arith.select %1484, %1486, %1482 : vector<1x128xi1>, vector<1x128xi32>
    %1488 = vector.extract_strided_slice %1470 {offsets = [4, 0], sizes = [1, 128], strides = [1, 1]} : vector<8x128xf32> to vector<1x128xf32>
    %1489 = arith.cmpf ogt, %1488, %1485 : vector<1x128xf32>
    %1490 = arith.select %1489, %1488, %1485 : vector<1x128xi1>, vector<1x128xf32>
    %c4_i32_171 = arith.constant 4 : i32
    %1491 = vector.broadcast %c4_i32_171 : i32 to vector<1x128xi32>
    %1492 = arith.select %1489, %1491, %1487 : vector<1x128xi1>, vector<1x128xi32>
    %1493 = vector.extract_strided_slice %1470 {offsets = [5, 0], sizes = [1, 128], strides = [1, 1]} : vector<8x128xf32> to vector<1x128xf32>
    %1494 = arith.cmpf ogt, %1493, %1490 : vector<1x128xf32>
    %1495 = arith.select %1494, %1493, %1490 : vector<1x128xi1>, vector<1x128xf32>
    %c5_i32_172 = arith.constant 5 : i32
    %1496 = vector.broadcast %c5_i32_172 : i32 to vector<1x128xi32>
    %1497 = arith.select %1494, %1496, %1492 : vector<1x128xi1>, vector<1x128xi32>
    %1498 = vector.extract_strided_slice %1470 {offsets = [6, 0], sizes = [1, 128], strides = [1, 1]} : vector<8x128xf32> to vector<1x128xf32>
    %1499 = arith.cmpf ogt, %1498, %1495 : vector<1x128xf32>
    %1500 = arith.select %1499, %1498, %1495 : vector<1x128xi1>, vector<1x128xf32>
    %c6_i32_173 = arith.constant 6 : i32
    %1501 = vector.broadcast %c6_i32_173 : i32 to vector<1x128xi32>
    %1502 = arith.select %1499, %1501, %1497 : vector<1x128xi1>, vector<1x128xi32>
    %1503 = vector.extract_strided_slice %1470 {offsets = [7, 0], sizes = [1, 128], strides = [1, 1]} : vector<8x128xf32> to vector<1x128xf32>
    %1504 = arith.cmpf ogt, %1503, %1500 : vector<1x128xf32>
    %1505 = arith.select %1504, %1503, %1500 : vector<1x128xi1>, vector<1x128xf32>
    %c7_i32_174 = arith.constant 7 : i32
    %1506 = vector.broadcast %c7_i32_174 : i32 to vector<1x128xi32>
    %1507 = arith.select %1504, %1506, %1502 : vector<1x128xi1>, vector<1x128xi32>
    %1508 = arith.select %1432, %1505, %1313 : vector<1x128xi1>, vector<1x128xf32>
    %1509 = arith.select %1432, %1507, %1314 : vector<1x128xi1>, vector<1x128xi32>
    %1510 = arith.index_cast %c7_i32_165 : i32 to index
    %c0_175 = arith.constant 0 : index
    %c0_176 = arith.constant 0 : index
    %1511 = vector.load %arg2[%1510, %c0_175, %c0_176] : memref<8x8x128xf32, #tpu.memory_space<vmem>>, vector<1x8x128xf32>
    %1512 = vector.shape_cast %1511 : vector<1x8x128xf32> to vector<8x128xf32>
    %1513 = vector.extract_strided_slice %1512 {offsets = [0, 0], sizes = [1, 128], strides = [1, 1]} : vector<8x128xf32> to vector<1x128xf32>
    %1514 = vector.extract_strided_slice %1512 {offsets = [1, 0], sizes = [1, 128], strides = [1, 1]} : vector<8x128xf32> to vector<1x128xf32>
    %1515 = arith.maximumf %1513, %1514 : vector<1x128xf32>
    %1516 = vector.extract_strided_slice %1512 {offsets = [2, 0], sizes = [1, 128], strides = [1, 1]} : vector<8x128xf32> to vector<1x128xf32>
    %1517 = arith.maximumf %1515, %1516 : vector<1x128xf32>
    %1518 = vector.extract_strided_slice %1512 {offsets = [3, 0], sizes = [1, 128], strides = [1, 1]} : vector<8x128xf32> to vector<1x128xf32>
    %1519 = arith.maximumf %1517, %1518 : vector<1x128xf32>
    %1520 = vector.extract_strided_slice %1512 {offsets = [4, 0], sizes = [1, 128], strides = [1, 1]} : vector<8x128xf32> to vector<1x128xf32>
    %1521 = arith.maximumf %1519, %1520 : vector<1x128xf32>
    %1522 = vector.extract_strided_slice %1512 {offsets = [5, 0], sizes = [1, 128], strides = [1, 1]} : vector<8x128xf32> to vector<1x128xf32>
    %1523 = arith.maximumf %1521, %1522 : vector<1x128xf32>
    %1524 = vector.extract_strided_slice %1512 {offsets = [6, 0], sizes = [1, 128], strides = [1, 1]} : vector<8x128xf32> to vector<1x128xf32>
    %1525 = arith.maximumf %1523, %1524 : vector<1x128xf32>
    %1526 = vector.extract_strided_slice %1512 {offsets = [7, 0], sizes = [1, 128], strides = [1, 1]} : vector<8x128xf32> to vector<1x128xf32>
    %1527 = arith.maximumf %1525, %1526 : vector<1x128xf32>
    %1528 = vector.broadcast %1527 : vector<1x128xf32> to vector<8x128xf32>
    %1529 = arith.subf %1512, %1528 : vector<8x128xf32>
    %1530 = math.exp %1529 : vector<8x128xf32>
    %1531 = vector.extract_strided_slice %1530 {offsets = [0, 0], sizes = [1, 128], strides = [1, 1]} : vector<8x128xf32> to vector<1x128xf32>
    %1532 = vector.broadcast %1531 : vector<1x128xf32> to vector<8x128xf32>
    %1533 = arith.mulf %12, %1532 : vector<8x128xf32>
    %1534 = vector.extract_strided_slice %1530 {offsets = [1, 0], sizes = [1, 128], strides = [1, 1]} : vector<8x128xf32> to vector<1x128xf32>
    %1535 = vector.broadcast %1534 : vector<1x128xf32> to vector<8x128xf32>
    %1536 = arith.mulf %15, %1535 : vector<8x128xf32>
    %1537 = arith.addf %1533, %1536 : vector<8x128xf32>
    %1538 = vector.extract_strided_slice %1530 {offsets = [2, 0], sizes = [1, 128], strides = [1, 1]} : vector<8x128xf32> to vector<1x128xf32>
    %1539 = vector.broadcast %1538 : vector<1x128xf32> to vector<8x128xf32>
    %1540 = arith.mulf %18, %1539 : vector<8x128xf32>
    %1541 = arith.addf %1537, %1540 : vector<8x128xf32>
    %1542 = vector.extract_strided_slice %1530 {offsets = [3, 0], sizes = [1, 128], strides = [1, 1]} : vector<8x128xf32> to vector<1x128xf32>
    %1543 = vector.broadcast %1542 : vector<1x128xf32> to vector<8x128xf32>
    %1544 = arith.mulf %21, %1543 : vector<8x128xf32>
    %1545 = arith.addf %1541, %1544 : vector<8x128xf32>
    %1546 = vector.extract_strided_slice %1530 {offsets = [4, 0], sizes = [1, 128], strides = [1, 1]} : vector<8x128xf32> to vector<1x128xf32>
    %1547 = vector.broadcast %1546 : vector<1x128xf32> to vector<8x128xf32>
    %1548 = arith.mulf %24, %1547 : vector<8x128xf32>
    %1549 = arith.addf %1545, %1548 : vector<8x128xf32>
    %1550 = vector.extract_strided_slice %1530 {offsets = [5, 0], sizes = [1, 128], strides = [1, 1]} : vector<8x128xf32> to vector<1x128xf32>
    %1551 = vector.broadcast %1550 : vector<1x128xf32> to vector<8x128xf32>
    %1552 = arith.mulf %27, %1551 : vector<8x128xf32>
    %1553 = arith.addf %1549, %1552 : vector<8x128xf32>
    %1554 = vector.extract_strided_slice %1530 {offsets = [6, 0], sizes = [1, 128], strides = [1, 1]} : vector<8x128xf32> to vector<1x128xf32>
    %1555 = vector.broadcast %1554 : vector<1x128xf32> to vector<8x128xf32>
    %1556 = arith.mulf %30, %1555 : vector<8x128xf32>
    %1557 = arith.addf %1553, %1556 : vector<8x128xf32>
    %1558 = vector.extract_strided_slice %1530 {offsets = [7, 0], sizes = [1, 128], strides = [1, 1]} : vector<8x128xf32> to vector<1x128xf32>
    %1559 = vector.broadcast %1558 : vector<1x128xf32> to vector<8x128xf32>
    %1560 = arith.mulf %33, %1559 : vector<8x128xf32>
    %1561 = arith.addf %1557, %1560 : vector<8x128xf32>
    %1562 = vector.broadcast %1527 : vector<1x128xf32> to vector<8x128xf32>
    %1563 = arith.addf %1370, %1562 : vector<8x128xf32>
    %1564 = math.log %1561 : vector<8x128xf32>
    %1565 = arith.addf %1563, %1564 : vector<8x128xf32>
    %1566 = vector.extract_strided_slice %1428 {offsets = [0, 0], sizes = [1, 128], strides = [1, 1]} : vector<8x128xf32> to vector<1x128xf32>
    %1567 = vector.broadcast %1566 : vector<1x128xf32> to vector<8x128xf32>
    %1568 = arith.addf %36, %1567 : vector<8x128xf32>
    %c0_i32_177 = arith.constant 0 : i32
    %1569 = vector.broadcast %c0_i32_177 : i32 to vector<8x128xi32>
    %1570 = vector.extract_strided_slice %1428 {offsets = [1, 0], sizes = [1, 128], strides = [1, 1]} : vector<8x128xf32> to vector<1x128xf32>
    %1571 = vector.broadcast %1570 : vector<1x128xf32> to vector<8x128xf32>
    %1572 = arith.addf %39, %1571 : vector<8x128xf32>
    %1573 = arith.cmpf ogt, %1572, %1568 : vector<8x128xf32>
    %1574 = arith.select %1573, %1572, %1568 : vector<8x128xi1>, vector<8x128xf32>
    %c1_i32_178 = arith.constant 1 : i32
    %1575 = vector.broadcast %c1_i32_178 : i32 to vector<8x128xi32>
    %1576 = arith.select %1573, %1575, %1569 : vector<8x128xi1>, vector<8x128xi32>
    %1577 = vector.extract_strided_slice %1428 {offsets = [2, 0], sizes = [1, 128], strides = [1, 1]} : vector<8x128xf32> to vector<1x128xf32>
    %1578 = vector.broadcast %1577 : vector<1x128xf32> to vector<8x128xf32>
    %1579 = arith.addf %42, %1578 : vector<8x128xf32>
    %1580 = arith.cmpf ogt, %1579, %1574 : vector<8x128xf32>
    %1581 = arith.select %1580, %1579, %1574 : vector<8x128xi1>, vector<8x128xf32>
    %c2_i32_179 = arith.constant 2 : i32
    %1582 = vector.broadcast %c2_i32_179 : i32 to vector<8x128xi32>
    %1583 = arith.select %1580, %1582, %1576 : vector<8x128xi1>, vector<8x128xi32>
    %1584 = vector.extract_strided_slice %1428 {offsets = [3, 0], sizes = [1, 128], strides = [1, 1]} : vector<8x128xf32> to vector<1x128xf32>
    %1585 = vector.broadcast %1584 : vector<1x128xf32> to vector<8x128xf32>
    %1586 = arith.addf %45, %1585 : vector<8x128xf32>
    %1587 = arith.cmpf ogt, %1586, %1581 : vector<8x128xf32>
    %1588 = arith.select %1587, %1586, %1581 : vector<8x128xi1>, vector<8x128xf32>
    %c3_i32_180 = arith.constant 3 : i32
    %1589 = vector.broadcast %c3_i32_180 : i32 to vector<8x128xi32>
    %1590 = arith.select %1587, %1589, %1583 : vector<8x128xi1>, vector<8x128xi32>
    %1591 = vector.extract_strided_slice %1428 {offsets = [4, 0], sizes = [1, 128], strides = [1, 1]} : vector<8x128xf32> to vector<1x128xf32>
    %1592 = vector.broadcast %1591 : vector<1x128xf32> to vector<8x128xf32>
    %1593 = arith.addf %48, %1592 : vector<8x128xf32>
    %1594 = arith.cmpf ogt, %1593, %1588 : vector<8x128xf32>
    %1595 = arith.select %1594, %1593, %1588 : vector<8x128xi1>, vector<8x128xf32>
    %c4_i32_181 = arith.constant 4 : i32
    %1596 = vector.broadcast %c4_i32_181 : i32 to vector<8x128xi32>
    %1597 = arith.select %1594, %1596, %1590 : vector<8x128xi1>, vector<8x128xi32>
    %1598 = vector.extract_strided_slice %1428 {offsets = [5, 0], sizes = [1, 128], strides = [1, 1]} : vector<8x128xf32> to vector<1x128xf32>
    %1599 = vector.broadcast %1598 : vector<1x128xf32> to vector<8x128xf32>
    %1600 = arith.addf %51, %1599 : vector<8x128xf32>
    %1601 = arith.cmpf ogt, %1600, %1595 : vector<8x128xf32>
    %1602 = arith.select %1601, %1600, %1595 : vector<8x128xi1>, vector<8x128xf32>
    %c5_i32_182 = arith.constant 5 : i32
    %1603 = vector.broadcast %c5_i32_182 : i32 to vector<8x128xi32>
    %1604 = arith.select %1601, %1603, %1597 : vector<8x128xi1>, vector<8x128xi32>
    %1605 = vector.extract_strided_slice %1428 {offsets = [6, 0], sizes = [1, 128], strides = [1, 1]} : vector<8x128xf32> to vector<1x128xf32>
    %1606 = vector.broadcast %1605 : vector<1x128xf32> to vector<8x128xf32>
    %1607 = arith.addf %54, %1606 : vector<8x128xf32>
    %1608 = arith.cmpf ogt, %1607, %1602 : vector<8x128xf32>
    %1609 = arith.select %1608, %1607, %1602 : vector<8x128xi1>, vector<8x128xf32>
    %c6_i32_183 = arith.constant 6 : i32
    %1610 = vector.broadcast %c6_i32_183 : i32 to vector<8x128xi32>
    %1611 = arith.select %1608, %1610, %1604 : vector<8x128xi1>, vector<8x128xi32>
    %1612 = vector.extract_strided_slice %1428 {offsets = [7, 0], sizes = [1, 128], strides = [1, 1]} : vector<8x128xf32> to vector<1x128xf32>
    %1613 = vector.broadcast %1612 : vector<1x128xf32> to vector<8x128xf32>
    %1614 = arith.addf %57, %1613 : vector<8x128xf32>
    %1615 = arith.cmpf ogt, %1614, %1609 : vector<8x128xf32>
    %1616 = arith.select %1615, %1614, %1609 : vector<8x128xi1>, vector<8x128xf32>
    %c7_i32_184 = arith.constant 7 : i32
    %1617 = vector.broadcast %c7_i32_184 : i32 to vector<8x128xi32>
    %1618 = arith.select %1615, %1617, %1611 : vector<8x128xi1>, vector<8x128xi32>
    %1619 = arith.index_cast %c7_i32_165 : i32 to index
    %c0_185 = arith.constant 0 : index
    %c0_186 = arith.constant 0 : index
    %1620 = vector.load %arg10[%1619, %c0_185, %c0_186] : memref<8x8x128xi32, #tpu.memory_space<vmem>>, vector<1x8x128xi32>
    %1621 = vector.shape_cast %1620 : vector<1x8x128xi32> to vector<8x128xi32>
    %1622 = vector.shape_cast %1618 : vector<8x128xi32> to vector<1x8x128xi32>
    tpu.vector_store %arg10[%1619, %c0_185, %c0_186], %1622 {strides = array<i32>} : memref<8x8x128xi32, #tpu.memory_space<vmem>>, vector<1x8x128xi32>,
    %1623 = arith.addf %1616, %1512 : vector<8x128xf32>
    %c8_i32_187 = arith.constant 8 : i32
    %c0_188 = arith.constant 0 : index
    %c0_189 = arith.constant 0 : index
    %1624 = vector.load %arg11[%c0_188, %c0_189] : memref<8x128xf32, #tpu.memory_space<vmem>>, vector<8x128xf32>
    tpu.vector_store %arg11[%c0_188, %c0_189], %1565 {strides = array<i32>} : memref<8x128xf32, #tpu.memory_space<vmem>>, vector<8x128xf32>,
    %c0_190 = arith.constant 0 : index
    %c0_191 = arith.constant 0 : index
    %1625 = vector.load %arg12[%c0_190, %c0_191] : memref<8x128xf32, #tpu.memory_space<vmem>>, vector<8x128xf32>
    tpu.vector_store %arg12[%c0_190, %c0_191], %1623 {strides = array<i32>} : memref<8x128xf32, #tpu.memory_space<vmem>>, vector<8x128xf32>,
    %c0_192 = arith.constant 0 : index
    %c0_193 = arith.constant 0 : index
    %1626 = vector.load %arg7[%c0_192, %c0_193] : memref<1x128xf32, #tpu.memory_space<vmem>>, vector<1x128xf32>
    tpu.vector_store %arg7[%c0_192, %c0_193], %1469 {strides = array<i32>} : memref<1x128xf32, #tpu.memory_space<vmem>>, vector<1x128xf32>,
    %c0_194 = arith.constant 0 : index
    %c0_195 = arith.constant 0 : index
    %1627 = vector.load %arg9[%c0_194, %c0_195] : memref<1x128xf32, #tpu.memory_space<vmem>>, vector<1x128xf32>
    tpu.vector_store %arg9[%c0_194, %c0_195], %1508 {strides = array<i32>} : memref<1x128xf32, #tpu.memory_space<vmem>>, vector<1x128xf32>,
    %c0_196 = arith.constant 0 : index
    %c0_197 = arith.constant 0 : index
    %1628 = vector.load %arg8[%c0_196, %c0_197] : memref<1x128xi32, #tpu.memory_space<vmem>>, vector<1x128xi32>
    tpu.vector_store %arg8[%c0_196, %c0_197], %1509 {strides = array<i32>} : memref<1x128xi32, #tpu.memory_space<vmem>>, vector<1x128xi32>,
    return
  }
  func.func @transform_0(%arg0: i32, %arg1: i32) -> (i32, i32, i32) {
    %c0_i32 = arith.constant 0 : i32
    %c0_i32_0 = arith.constant 0 : i32
    return %arg1, %c0_i32, %arg0 : i32, i32, i32
  }
  func.func @transform_1(%arg0: i32, %arg1: i32) -> (i32, i32) {
    %c0_i32 = arith.constant 0 : i32
    %c0_i32_0 = arith.constant 0 : i32
    return %c0_i32, %arg0 : i32, i32
  }
  func.func @transform_2(%arg0: i32, %arg1: i32) -> (i32, i32) {
    %c0_i32 = arith.constant 0 : i32
    %c0_i32_0 = arith.constant 0 : i32
    %c0_i32_1 = arith.constant 0 : i32
    return %c0_i32, %c0_i32_0 : i32, i32
  }
  func.func @transform_3(%arg0: i32, %arg1: i32) -> (i32, i32) {
    %c0_i32 = arith.constant 0 : i32
    %c0_i32_0 = arith.constant 0 : i32
    %c0_i32_1 = arith.constant 0 : i32
    return %c0_i32, %c0_i32_0 : i32, i32
  }
  func.func @transform_4(%arg0: i32, %arg1: i32) -> (i32, i32) {
    %c0_i32 = arith.constant 0 : i32
    %c0_i32_0 = arith.constant 0 : i32
    %c0_i32_1 = arith.constant 0 : i32
    return %c0_i32, %c0_i32_0 : i32, i32
  }
  func.func @transform_5(%arg0: i32, %arg1: i32) -> (i32, i32) {
    %c0_i32 = arith.constant 0 : i32
    %c0_i32_0 = arith.constant 0 : i32
    return %c0_i32, %arg0 : i32, i32
  }
  func.func @transform_6(%arg0: i32, %arg1: i32) -> (i32, i32) {
    %c0_i32 = arith.constant 0 : i32
    %c0_i32_0 = arith.constant 0 : i32
    return %c0_i32, %arg0 : i32, i32
  }
  func.func @transform_7(%arg0: i32, %arg1: i32) -> (i32, i32) {
    %c0_i32 = arith.constant 0 : i32
    %c0_i32_0 = arith.constant 0 : i32
    return %c0_i32, %arg0 : i32, i32
  }
  func.func @transform_8(%arg0: i32, %arg1: i32) -> (i32, i32, i32) {
    %c0_i32 = arith.constant 0 : i32
    %c0_i32_0 = arith.constant 0 : i32
    return %arg1, %c0_i32, %arg0 : i32, i32, i32
  }
}

</mosaic_0001>

<llo_original>
// kernel: custom-call.12
$region0: #{custom-call.12}
  %s0 = inlined_call_operand.vmem [shape: s32[9,4], index: 0, kind: output, shape index: {}]

// kernel: custom-call.10
$region0: #{custom-call.10}
  %s0 = inlined_call_operand.vmem [shape: s32[4], index: 0, kind: output, shape index: {}]

// kernel: chain_crf_forward.3
$region0: #{chain_crf_forward.3}
  #allocation0 [shape = 'u32[]', space=smem, size = 0x4, offset = 0x4, fixed_abs, tag = 'smem constant byte address 0x4 - core index']
  #allocation1 [shape = 'u32[144,128]{1,0:T(1,128)}', space=vmem, size = 0x12000, scoped, tag = 'internal scratch']
  #allocation2 [shape = 'f32[8,128]{1,0:T(8,128)}', space=vmem, size = 0x1000, scoped, tag = 'scratch operand']
  #allocation3 [shape = 'f32[8,128]{1,0:T(8,128)}', space=vmem, size = 0x1000, scoped, tag = 'scratch operand']
  %s0 = inlined_call_operand.vmem [shape: f32[16,8,128], index: 0, kind: input, shape index: {}]
  %s1 = inlined_call_operand.vmem [shape: s32[1,128], index: 1, kind: input, shape index: {}]
  %s2 = inlined_call_operand.vmem [shape: f32[8,8], index: 2, kind: input, shape index: {}]
  %s3 = inlined_call_operand.vmem [shape: f32[8,8], index: 3, kind: input, shape index: {}]
  %s4 = inlined_call_operand.vmem [shape: f32[8,1], index: 4, kind: input, shape index: {}]
  %s5 = inlined_call_operand.vmem [shape: f32[1,128], index: 5, kind: output, shape index: {0}]
  %s6 = inlined_call_operand.vmem [shape: s32[1,128], index: 6, kind: output, shape index: {1}]
  %s7 = inlined_call_operand.vmem [shape: f32[1,128], index: 7, kind: output, shape index: {2}]
  %s8 = inlined_call_operand.vmem [shape: s32[16,8,128], index: 8, kind: output, shape index: {3}]
  %9 = xla_tuple %s5, %s6, %s7, %s8
  %s10 = sld [smem:[#allocation0]]
  $region81: #{chain_crf_forward.3} parent=0
    _
  %s12 = ssub.s32 1, %s10
  %s13 = scalar_select 0, %s12, %s10
  loop: start=0, step=1, limit=4
  $region2: #{chain_crf_forward.3} parent=0 // loop_pre_header
    _
  $region3: #{chain_crf_forward.3} parent=0 // loop_header
    %s15 = sphi 0, %s19
    %p16 = scmp.ge.s32.totalorder %s15, 4
    %s22 = sphi 0, %s34
    %s23 = sphi 0, %s30
    %s24 = sphi 0, %s22
    %s25 = sphi 0, %s23
    %s26 = sphi 0, %s24
    %s27 = sphi 0, %s25
    %s39 = sphi 0, %s41
    %s42 = sphi 0, %s39
    %s43 = sphi 0, %s42
    %s59 = sphi 0, %s43
    %s65 = sphi 0, %s67
    %s68 = sphi 0, %s65
    %s69 = sphi 0, %s68
    %s85 = sphi 0, %s69
    %s89 = sphi 0, %s89
    %s91 = sphi 0, %s89
    %s92 = sphi 0, %s91
    %s106 = sphi 0, %s92
    %s110 = sphi 0, %s110
    %s112 = sphi 0, %s110
    %s113 = sphi 0, %s112
    %s127 = sphi 0, %s113
    %s131 = sphi 0, %s131
    %s133 = sphi 0, %s131
    %s134 = sphi 0, %s133
    %s148 = sphi 0, %s134
    %s154 = sphi 0, %s156
    %s157 = sphi 0, %s154
    %s158 = sphi 0, %s157
    %s174 = sphi 0, %s158
    %s180 = sphi 0, %s182
    %s183 = sphi 0, %s180
    %s184 = sphi 0, %s183
    %s200 = sphi 0, %s184
    %s206 = sphi 0, %s208
    %s209 = sphi 0, %s206
    %s210 = sphi 0, %s209
    %s226 = sphi 0, %s210
    %s234 = sphi 0, %s236
    %s237 = sphi 0, %s234
    %s238 = sphi 0, %s237
    %s254 = sphi 0, %s238
  $region4: #{chain_crf_forward.3} parent=0 // loop_header_branch
    %18 = sbr.rel (%p16) target = $region8
  $region5: #{chain_crf_forward.3} parent=0 // loop_body
    %s20 = ssub.s32 %s15, 1
    %s21 = ssub.s32 %s15, 2
    %s28 = sadd.s32 1, %s23
    %p29 = scmp.ge.s32.totalorder %s28, 2
    %s30 = scalar_select %p29, 0, %s28
    %s31 = sadd.s32 1, %s22
    %s32 = scalar_select %p29, %s31, %s22
    %p33 = scmp.ge.s32.totalorder %s32, 1
    %s34 = scalar_select %p33, 0, %s32
    %s35 = ssub.s32 %s23, %s30
    %s36 = ssub.s32 %s22, %s34
    %s37 = sor.u32 %s35, %s36
    %p38 = scmp.eq.s32.totalorder %s37, 0
    %s40 = sadd.s32 %s39, 1
    %s41 = scalar_select %p38, %s39, %s40
    %p44 = pneg %p38
    %p45 = scmp.eq.s32.totalorder %s15, 1
    %p46 = por %p44, %p45
    %p47 = scmp.ne.s32.totalorder %s39, %s42
    %p48 = scmp.eq.s32.totalorder %s15, 0
    %p49 = por %p47, %p48
    %p50 = scmp.ne.s32.totalorder %s39, %s42
    %p51 = scmp.eq.s32.totalorder %s20, 1
    %p52 = por %p50, %p51
    %p53 = scmp.ne.s32.totalorder %s42, %s43
    %p54 = scmp.eq.s32.totalorder %s20, 0
    %p55 = por %p53, %p54
    %p56 = scmp.ne.s32.totalorder %s42, %s43
    %p57 = scmp.eq.s32.totalorder %s21, 1
    %p58 = por %p56, %p57
    %p60 = scmp.ne.s32.totalorder %s43, %s59
    %p61 = scmp.eq.s32.totalorder %s21, 0
    %p62 = por %p60, %p61
    %s63 = ssub.s32 %s22, %s34
    %p64 = scmp.eq.s32.totalorder %s63, 0
    %s66 = sadd.s32 %s65, 1
    %s67 = scalar_select %p64, %s65, %s66
    %p70 = pneg %p64
    %p71 = scmp.eq.s32.totalorder %s15, 1
    %p72 = por %p70, %p71
    %p73 = scmp.ne.s32.totalorder %s65, %s68
    %p74 = scmp.eq.s32.totalorder %s15, 0
    %p75 = por %p73, %p74
    %p76 = scmp.ne.s32.totalorder %s65, %s68
    %p77 = scmp.eq.s32.totalorder %s20, 1
    %p78 = por %p76, %p77
    %p79 = scmp.ne.s32.totalorder %s68, %s69
    %p80 = scmp.eq.s32.totalorder %s20, 0
    %p81 = por %p79, %p80
    %p82 = scmp.ne.s32.totalorder %s68, %s69
    %p83 = scmp.eq.s32.totalorder %s21, 1
    %p84 = por %p82, %p83
    %p86 = scmp.ne.s32.totalorder %s69, %s85
    %p87 = scmp.eq.s32.totalorder %s21, 0
    %p88 = por %p86, %p87
    %s90 = sadd.s32 %s89, 1
    %p93 = scmp.eq.s32.totalorder %s15, 1
    %p94 = scmp.ne.s32.totalorder %s89, %s91
    %p95 = scmp.eq.s32.totalorder %s15, 0
    %p96 = por %p94, %p95
    %p97 = scmp.ne.s32.totalorder %s89, %s91
    %p98 = scmp.eq.s32.totalorder %s20, 1
    %p99 = por %p97, %p98
    %p100 = scmp.ne.s32.totalorder %s91, %s92
    %p101 = scmp.eq.s32.totalorder %s20, 0
    %p102 = por %p100, %p101
    %p103 = scmp.ne.s32.totalorder %s91, %s92
    %p104 = scmp.eq.s32.totalorder %s21, 1
    %p105 = por %p103, %p104
    %p107 = scmp.ne.s32.totalorder %s92, %s106
    %p108 = scmp.eq.s32.totalorder %s21, 0
    %p109 = por %p107, %p108
    %s111 = sadd.s32 %s110, 1
    %p114 = scmp.eq.s32.totalorder %s15, 1
    %p115 = scmp.ne.s32.totalorder %s110, %s112
    %p116 = scmp.eq.s32.totalorder %s15, 0
    %p117 = por %p115, %p116
    %p118 = scmp.ne.s32.totalorder %s110, %s112
    %p119 = scmp.eq.s32.totalorder %s20, 1
    %p120 = por %p118, %p119
    %p121 = scmp.ne.s32.totalorder %s112, %s113
    %p122 = scmp.eq.s32.totalorder %s20, 0
    %p123 = por %p121, %p122
    %p124 = scmp.ne.s32.totalorder %s112, %s113
    %p125 = scmp.eq.s32.totalorder %s21, 1
    %p126 = por %p124, %p125
    %p128 = scmp.ne.s32.totalorder %s113, %s127
    %p129 = scmp.eq.s32.totalorder %s21, 0
    %p130 = por %p128, %p129
    %s132 = sadd.s32 %s131, 1
    %p135 = scmp.eq.s32.totalorder %s15, 1
    %p136 = scmp.ne.s32.totalorder %s131, %s133
    %p137 = scmp.eq.s32.totalorder %s15, 0
    %p138 = por %p136, %p137
    %p139 = scmp.ne.s32.totalorder %s131, %s133
    %p140 = scmp.eq.s32.totalorder %s20, 1
    %p141 = por %p139, %p140
    %p142 = scmp.ne.s32.totalorder %s133, %s134
    %p143 = scmp.eq.s32.totalorder %s20, 0
    %p144 = por %p142, %p143
    %p145 = scmp.ne.s32.totalorder %s133, %s134
    %p146 = scmp.eq.s32.totalorder %s21, 1
    %p147 = por %p145, %p146
    %p149 = scmp.ne.s32.totalorder %s134, %s148
    %p150 = scmp.eq.s32.totalorder %s21, 0
    %p151 = por %p149, %p150
    %s152 = ssub.s32 %s22, %s34
    %p153 = scmp.eq.s32.totalorder %s152, 0
    %s155 = sadd.s32 %s154, 1
    %s156 = scalar_select %p153, %s154, %s155
    %p159 = pneg %p153
    %p160 = scmp.eq.s32.totalorder %s15, 1
    %p161 = por %p159, %p160
    %p162 = scmp.ne.s32.totalorder %s154, %s157
    %p163 = scmp.eq.s32.totalorder %s15, 0
    %p164 = por %p162, %p163
    %p165 = scmp.ne.s32.totalorder %s154, %s157
    %p166 = scmp.eq.s32.totalorder %s20, 1
    %p167 = por %p165, %p166
    %p168 = scmp.ne.s32.totalorder %s157, %s158
    %p169 = scmp.eq.s32.totalorder %s20, 0
    %p170 = por %p168, %p169
    %p171 = scmp.ne.s32.totalorder %s157, %s158
    %p172 = scmp.eq.s32.totalorder %s21, 1
    %p173 = por %p171, %p172
    %p175 = scmp.ne.s32.totalorder %s158, %s174
    %p176 = scmp.eq.s32.totalorder %s21, 0
    %p177 = por %p175, %p176
    %s178 = ssub.s32 %s22, %s34
    %p179 = scmp.eq.s32.totalorder %s178, 0
    %s181 = sadd.s32 %s180, 1
    %s182 = scalar_select %p179, %s180, %s181
    %p185 = pneg %p179
    %p186 = scmp.eq.s32.totalorder %s15, 1
    %p187 = por %p185, %p186
    %p188 = scmp.ne.s32.totalorder %s180, %s183
    %p189 = scmp.eq.s32.totalorder %s15, 0
    %p190 = por %p188, %p189
    %p191 = scmp.ne.s32.totalorder %s180, %s183
    %p192 = scmp.eq.s32.totalorder %s20, 1
    %p193 = por %p191, %p192
    %p194 = scmp.ne.s32.totalorder %s183, %s184
    %p195 = scmp.eq.s32.totalorder %s20, 0
    %p196 = por %p194, %p195
    %p197 = scmp.ne.s32.totalorder %s183, %s184
    %p198 = scmp.eq.s32.totalorder %s21, 1
    %p199 = por %p197, %p198
    %p201 = scmp.ne.s32.totalorder %s184, %s200
    %p202 = scmp.eq.s32.totalorder %s21, 0
    %p203 = por %p201, %p202
    %s204 = ssub.s32 %s22, %s34
    %p205 = scmp.eq.s32.totalorder %s204, 0
    %s207 = sadd.s32 %s206, 1
    %s208 = scalar_select %p205, %s206, %s207
    %p211 = pneg %p205
    %p212 = scmp.eq.s32.totalorder %s15, 1
    %p213 = por %p211, %p212
    %p214 = scmp.ne.s32.totalorder %s206, %s209
    %p215 = scmp.eq.s32.totalorder %s15, 0
    %p216 = por %p214, %p215
    %p217 = scmp.ne.s32.totalorder %s206, %s209
    %p218 = scmp.eq.s32.totalorder %s20, 1
    %p219 = por %p217, %p218
    %p220 = scmp.ne.s32.totalorder %s209, %s210
    %p221 = scmp.eq.s32.totalorder %s20, 0
    %p222 = por %p220, %p221
    %p223 = scmp.ne.s32.totalorder %s209, %s210
    %p224 = scmp.eq.s32.totalorder %s21, 1
    %p225 = por %p223, %p224
    %p227 = scmp.ne.s32.totalorder %s210, %s226
    %p228 = scmp.eq.s32.totalorder %s21, 0
    %p229 = por %p227, %p228
    %s230 = ssub.s32 %s23, %s30
    %s231 = ssub.s32 %s22, %s34
    %s232 = sor.u32 %s230, %s231
    %p233 = scmp.eq.s32.totalorder %s232, 0
    %s235 = sadd.s32 %s234, 1
    %s236 = scalar_select %p233, %s234, %s235
    %p239 = pneg %p233
    %p240 = scmp.eq.s32.totalorder %s15, 1
    %p241 = por %p239, %p240
    %p242 = scmp.ne.s32.totalorder %s234, %s237
    %p243 = scmp.eq.s32.totalorder %s15, 0
    %p244 = por %p242, %p243
    %p245 = scmp.ne.s32.totalorder %s234, %s237
    %p246 = scmp.eq.s32.totalorder %s20, 1
    %p247 = por %p245, %p246
    %p248 = scmp.ne.s32.totalorder %s237, %s238
    %p249 = scmp.eq.s32.totalorder %s20, 0
    %p250 = por %p248, %p249
    %p251 = scmp.ne.s32.totalorder %s237, %s238
    %p252 = scmp.eq.s32.totalorder %s21, 1
    %p253 = por %p251, %p252
    %p255 = scmp.ne.s32.totalorder %s238, %s254
    %p256 = scmp.eq.s32.totalorder %s21, 0
    %p257 = por %p255, %p256
    %p258 = scmp.le.s32.totalorder 1, %s15
    %p259 = scmp.lt.s32.totalorder %s15, 3
    %p260 = pnand %p258, %p259
    %p261 = pneg %p260
    // Predicated region
    $region9: #{chain_crf_forward.3} parent=5 // pred_check
      _
    $region10: #{chain_crf_forward.3} parent=5 // pred_check_branch
      %263 = sbr.rel (%p260) target = $region12
    $region11: #{chain_crf_forward.3} parent=5 // pred_region
      %s264 = ssub.s32 %s15, 1
      // Predicated region
      $region13: #{chain_crf_forward.3} parent=11 // pred_check
        %p265 = pneg %p81
      $region14: #{chain_crf_forward.3} parent=11 // pred_check_branch
        %267 = sbr.rel (%p265) target = $region16
      $region15: #{chain_crf_forward.3} parent=11 // pred_region
        %p268 = scmp.lt.s32.totalorder %s24, 0
        %s269 = scalar_select %p268, %s24, 0
        %s270 = scalar_lea.vmem %s1, %s269
      $region16: #{chain_crf_forward.3} parent=11 // pred_fallthru
        _
      // Predicated region
      $region17: #{chain_crf_forward.3} parent=11 // pred_check
        %p271 = pneg %p102
      $region18: #{chain_crf_forward.3} parent=11 // pred_check_branch
        %273 = sbr.rel (%p271) target = $region20
      $region19: #{chain_crf_forward.3} parent=11 // pred_region
        _
      $region20: #{chain_crf_forward.3} parent=11 // pred_fallthru
        _
      // Predicated region
      $region21: #{chain_crf_forward.3} parent=11 // pred_check
        %p274 = pneg %p123
      $region22: #{chain_crf_forward.3} parent=11 // pred_check_branch
        %276 = sbr.rel (%p274) target = $region24
      $region23: #{chain_crf_forward.3} parent=11 // pred_region
        _
      $region24: #{chain_crf_forward.3} parent=11 // pred_fallthru
        _
      // Predicated region
      $region25: #{chain_crf_forward.3} parent=11 // pred_check
        %p277 = pneg %p144
      $region26: #{chain_crf_forward.3} parent=11 // pred_check_branch
        %279 = sbr.rel (%p277) target = $region28
      $region27: #{chain_crf_forward.3} parent=11 // pred_region
        _
      $region28: #{chain_crf_forward.3} parent=11 // pred_fallthru
        _
    $region12: #{chain_crf_forward.3} parent=5 // pred_fallthru
      _
    %p280 = scmp.lt.s32.totalorder %s15, 2
    // Predicated region
    $region29: #{chain_crf_forward.3} parent=5 // pred_check
      %p281 = pneg %p280
    $region30: #{chain_crf_forward.3} parent=5 // pred_check_branch
      %283 = sbr.rel (%p281) target = $region32
    $region31: #{chain_crf_forward.3} parent=5 // pred_region
      // Predicated region
      $region33: #{chain_crf_forward.3} parent=31 // pred_check
        %p284 = pneg %p49
      $region34: #{chain_crf_forward.3} parent=31 // pred_check_branch
        %286 = sbr.rel (%p284) target = $region36
      $region35: #{chain_crf_forward.3} parent=31 // pred_region
        %s287 = smul.u32 8, %s23
        %p288 = scmp.lt.s32.totalorder %s287, 15
        %s289 = scalar_select %p288, %s287, 15
        %p290 = scmp.lt.s32.totalorder %s22, 0
        %s291 = scalar_select %p290, %s22, 0
        %s292 = sadd.s32 %s291, %s289
        %s293 = smul.addr %s292, 8
        %s294 = scalar_lea.vmem %s0, %s293
        %s295 = smul.u32 8, %s23
      $region36: #{chain_crf_forward.3} parent=31 // pred_fallthru
        _
    $region32: #{chain_crf_forward.3} parent=5 // pred_fallthru
      _
    %p296 = scmp.le.s32.totalorder 1, %s15
    %p297 = scmp.lt.s32.totalorder %s15, 3
    %p298 = pnand %p296, %p297
    %p299 = pneg %p298
    // Predicated region
    $region37: #{chain_crf_forward.3} parent=5 // pred_check
      _
    $region38: #{chain_crf_forward.3} parent=5 // pred_check_branch
      %301 = sbr.rel (%p298) target = $region40
    $region39: #{chain_crf_forward.3} parent=5 // pred_region
      %s302 = ssub.s32 %s15, 1
      %s303 = smul.u32 8, %s25
      %p304 = scmp.lt.s32.totalorder %s303, 15
      %s305 = scalar_select %p304, %s303, 15
      %p306 = scmp.lt.s32.totalorder %s24, 0
      %s307 = scalar_select %p306, %s24, 0
      %s308 = sadd.s32 %s307, %s305
      %s309 = smul.addr %s308, 8
      %s310 = scalar_lea.vmem %s0, %s309
      %p311 = pneg %p55
      %p312 = pneg %p52
      %p313 = scmp.lt.s32.totalorder %s24, 0
      %s314 = scalar_select %p313, %s24, 0
      %s315 = scalar_lea.vmem %s1, %s314
      %p316 = pneg %p81
      %p317 = pneg %p78
      %p318 = pneg %p102
      %p319 = pneg %p99
      %p320 = pneg %p123
      %p321 = pneg %p120
      %p322 = pneg %p144
      %p323 = pneg %p141
      %p324 = pneg %p170
      %p325 = pneg %p167
      %p326 = scmp.lt.s32.totalorder %s24, 0
      %s327 = scalar_select %p326, %s24, 0
      %s328 = scalar_lea.vmem %s5, %s327
      %p329 = pneg %p196
      %p330 = pneg %p193
      %p331 = scmp.lt.s32.totalorder %s24, 0
      %s332 = scalar_select %p331, %s24, 0
      %s333 = scalar_lea.vmem %s6, %s332
      %p334 = pneg %p222
      %p335 = pneg %p219
      %p336 = scmp.lt.s32.totalorder %s24, 0
      %s337 = scalar_select %p336, %s24, 0
      %s338 = scalar_lea.vmem %s7, %s337
      %p339 = pneg %p250
      %p340 = pneg %p247
      %s341 = smul.u32 8, %s25
      %p342 = scmp.lt.s32.totalorder %s341, 15
      %s343 = scalar_select %p342, %s341, 15
      %p344 = scmp.lt.s32.totalorder %s24, 0
      %s345 = scalar_select %p344, %s24, 0
      %s346 = sadd.s32 %s345, %s343
      %s347 = smul.addr %s346, 8
      %s348 = scalar_lea.vmem %s8, %s347
      %s349 = smul.u32 8, %s25
      %p350 = scmp.lt.s32.totalorder %s349, 15
      %s351 = scalar_select %p350, %s349, 15
      %p352 = scmp.lt.s32.totalorder %s24, 0
      %s353 = scalar_select %p352, %s24, 0
      %s354 = sadd.s32 %s353, %s351
      %s355 = smul.addr %s354, 8
      %s356 = scalar_lea.vmem %s0, %s355
      %s357 = smul.u32 8, %s25
      %p358 = scmp.lt.s32.totalorder %s24, 0
      %s359 = scalar_select %p358, %s24, 0
      %s360 = scalar_lea.vmem %s1, %s359
      %p361 = scmp.lt.s32.totalorder %s24, 0
      %s362 = scalar_select %p361, %s24, 0
      %s363 = scalar_lea.vmem %s5, %s362
      %p364 = scmp.lt.s32.totalorder %s24, 0
      %s365 = scalar_select %p364, %s24, 0
      %s366 = scalar_lea.vmem %s6, %s365
      %p367 = scmp.lt.s32.totalorder %s24, 0
      %s368 = scalar_select %p367, %s24, 0
      %s369 = scalar_lea.vmem %s7, %s368
      %s370 = smul.u32 8, %s25
      %p371 = scmp.lt.s32.totalorder %s370, 15
      %s372 = scalar_select %p371, %s370, 15
      %p373 = scmp.lt.s32.totalorder %s24, 0
      %s374 = scalar_select %p373, %s24, 0
      %s375 = sadd.s32 %s374, %s372
      %s376 = smul.addr %s375, 8
      %s377 = scalar_lea.vmem %s8, %s376
      %s378 = smul.u32 8, %s25
      %v379 = vlaneseq
      %v380 = vshrl.u32 %v379, 7
      %p381 = scmp.eq.s32.totalorder %s25, 0
      // Predicated region
      $region41: #{chain_crf_forward.3} parent=39 // pred_check
        %p382 = pneg %p381
      $region42: #{chain_crf_forward.3} parent=39 // pred_check_branch
        %384 = sbr.rel (%p382) target = $region44
      $region43: #{chain_crf_forward.3} parent=39 // pred_region
        %vm385 = vcmp.eq.s32.totalorder %v380, 6
        %v386 = vsel %vm385, 0.0, -1000.0
        %387 = vst [vmem:[#allocation2] sm:$0xff] %v386
        %v388 = vsel %vm385, 0.0, -10000.0
        %389 = vst [vmem:[#allocation3] sm:$0xff] %v388
        %390 = vst [vmem:[%s363] sm:$0x1] 0.0
        %391 = vst [vmem:[%s366] sm:$0x1] 0
        %392 = vst [vmem:[%s369] sm:$0x1] 0.0
      $region44: #{chain_crf_forward.3} parent=39 // pred_fallthru
        _
      %v393 = vld [vmem:[%s360] sm:$0x1]
      %v394 = vld [vmem:[%s4] sm:$0xff]
      %396 = vset.pattern.permute.xlu0 0
      %397 = vperm.xlu0 %396, %v394
      %v398 = vpop.permute.xlu0 %397
      %v400 = vld [vmem:[%s2] sm:$0xff]
      %v401 = vld [vmem:[%s3] sm:$0xff]
      %403 = vset.pattern.permute.xlu0 0
      %404 = vperm.xlu0 %403, %v400
      %v405 = vpop.permute.xlu0 %404
      %407 = vset.pattern.permute.xlu0 1
      %408 = vperm.xlu0 %407, %v400
      %v409 = vpop.permute.xlu0 %408
      %411 = vset.pattern.permute.xlu0 2
      %412 = vperm.xlu0 %411, %v400
      %v413 = vpop.permute.xlu0 %412
      %415 = vset.pattern.permute.xlu0 3
      %416 = vperm.xlu0 %415, %v400
      %v417 = vpop.permute.xlu0 %416
      %419 = vset.pattern.permute.xlu0 4
      %420 = vperm.xlu0 %419, %v400
      %v421 = vpop.permute.xlu0 %420
      %423 = vset.pattern.permute.xlu0 5
      %424 = vperm.xlu0 %423, %v400
      %v425 = vpop.permute.xlu0 %424
      %427 = vset.pattern.permute.xlu0 6
      %428 = vperm.xlu0 %427, %v400
      %v429 = vpop.permute.xlu0 %428
      %431 = vset.pattern.permute.xlu0 7
      %432 = vperm.xlu0 %431, %v400
      %v433 = vpop.permute.xlu0 %432
      %436 = vset.pattern.permute.xlu0 0
      %437 = vperm.xlu0 %436, %v401
      %v438 = vpop.permute.xlu0 %437
      %440 = vset.pattern.permute.xlu0 1
      %441 = vperm.xlu0 %440, %v401
      %v442 = vpop.permute.xlu0 %441
      %444 = vset.pattern.permute.xlu0 2
      %445 = vperm.xlu0 %444, %v401
      %v446 = vpop.permute.xlu0 %445
      %448 = vset.pattern.permute.xlu0 3
      %449 = vperm.xlu0 %448, %v401
      %v450 = vpop.permute.xlu0 %449
      %452 = vset.pattern.permute.xlu0 4
      %453 = vperm.xlu0 %452, %v401
      %v454 = vpop.permute.xlu0 %453
      %456 = vset.pattern.permute.xlu0 5
      %457 = vperm.xlu0 %456, %v401
      %v458 = vpop.permute.xlu0 %457
      %460 = vset.pattern.permute.xlu0 6
      %461 = vperm.xlu0 %460, %v401
      %v462 = vpop.permute.xlu0 %461
      %464 = vset.pattern.permute.xlu0 7
      %465 = vperm.xlu0 %464, %v401
      %v466 = vpop.permute.xlu0 %465
      %s468 = smul.u32 %s25, 8
      %v469 = vld [vmem:[#allocation2] sm:$0xff]
      %v470 = vld [vmem:[#allocation3] sm:$0xff]
      %v471 = vld [vmem:[%s363] sm:$0x1]
      %v472 = vld [vmem:[%s369] sm:$0x1]
      %v473 = vld [vmem:[%s366] sm:$0x1]
      %s474 = sadd.s32 %s468, 1
      %v475 = vstv %s474
      %vm476 = vcmp.eq.s32.totalorder %v393, %v475
      %v477 = vadd.f32 %v469, %v398
      %v479 = vrot.slane %v477, 1
      %v481 = vmax.f32 %v477, %v479
      %v482 = vrot.slane %v477, 2
      %v484 = vmax.f32 %v481, %v482
      %v485 = vrot.slane %v477, 3
      %v487 = vmax.f32 %v484, %v485
      %v488 = vrot.slane %v477, 4
      %v490 = vmax.f32 %v487, %v488
      %v491 = vrot.slane %v477, 5
      %v493 = vmax.f32 %v490, %v491
      %v494 = vrot.slane %v477, 6
      %v496 = vmax.f32 %v493, %v494
      %v497 = vrot.slane %v477, 7
      %v499 = vmax.f32 %v496, %v497
      %v500 = vlaneseq
      %v501 = vshrl.u32 %v500, 7
      %v502 = vsub.s32 0, %v501
      %v503 = vrot.slane %v499, %v502
      %v504 = vsub.f32 %v477, %v503
      %v505 = vmul.f32 %v504, 1.442695
      %v506 = vpow.pop %v505
      %v508 = vrot.slane %v506, 1
      %v510 = vadd.f32 %v506, %v508
      %v511 = vrot.slane %v506, 2
      %v513 = vadd.f32 %v510, %v511
      %v514 = vrot.slane %v506, 3
      %v516 = vadd.f32 %v513, %v514
      %v517 = vrot.slane %v506, 4
      %v519 = vadd.f32 %v516, %v517
      %v520 = vrot.slane %v506, 5
      %v522 = vadd.f32 %v519, %v520
      %v523 = vrot.slane %v506, 6
      %v525 = vadd.f32 %v522, %v523
      %v526 = vrot.slane %v506, 7
      %v528 = vadd.f32 %v525, %v526
      %v529 = vlog2.pop %v528
      %v530 = vmul.f32 %v529, 0.6931472
      %v531 = vadd.f32 %v499, %v530
      %v532 = vsel %vm476, %v531, %v471
      %v533 = vadd.f32 %v470, %v398
      %v535 = vrot.slane %v533, 7
      %vm537 = vcmp.gt.f32.partialorder %v533, %v535
      %v538 = vsel %vm537, %v533, %v535
      %v539 = vsel %vm537, 1, 0
      %v541 = vrot.slane %v538, 7
      %vm543 = vcmp.gt.f32.partialorder %v533, %v541
      %v544 = vsel %vm543, %v533, %v541
      %v545 = vrot.slane %v539, 7
      %v546 = vsel %vm543, 2, %v545
      %v548 = vrot.slane %v544, 7
      %vm550 = vcmp.gt.f32.partialorder %v533, %v548
      %v551 = vsel %vm550, %v533, %v548
      %v552 = vrot.slane %v546, 7
      %v553 = vsel %vm550, 3, %v552
      %v555 = vrot.slane %v551, 7
      %vm557 = vcmp.gt.f32.partialorder %v533, %v555
      %v558 = vsel %vm557, %v533, %v555
      %v559 = vrot.slane %v553, 7
      %v560 = vsel %vm557, 4, %v559
      %v562 = vrot.slane %v558, 7
      %vm564 = vcmp.gt.f32.partialorder %v533, %v562
      %v565 = vsel %vm564, %v533, %v562
      %v566 = vrot.slane %v560, 7
      %v567 = vsel %vm564, 5, %v566
      %v569 = vrot.slane %v565, 7
      %vm571 = vcmp.gt.f32.partialorder %v533, %v569
      %v572 = vsel %vm571, %v533, %v569
      %v573 = vrot.slane %v567, 7
      %v574 = vsel %vm571, 6, %v573
      %v576 = vrot.slane %v572, 7
      %vm578 = vcmp.gt.f32.partialorder %v533, %v576
      %v579 = vsel %vm578, %v533, %v576
      %v580 = vrot.slane %v574, 7
      %v581 = vsel %vm578, 7, %v580
      %v583 = vcombine.high %v579, %v579
      %v585 = vunpack.c.l.s4 1966171168
      %v586 = vunpack.c.0.s8 %v585
      %v587 = vlaneseq
      %v588 = vshrl.u32 %v587, 7
      %v589 = vsub.s32 %v586, %v588
      %v590 = vrot.slane %v583, %v589
      %v591 = vcombine.high %v590, %v590
      %v593 = vunpack.c.l.s4 1966171168
      %v594 = vunpack.c.0.s8 %v593
      %v595 = vlaneseq
      %v596 = vshrl.u32 %v595, 7
      %v597 = vsub.s32 %v594, %v596
      %v598 = vrot.slane %v591, %v597
      %v599 = vcombine.high %v598, %v598
      %v601 = vsel %vm476, %v599, %v472
      %v602 = vcombine.high %v581, %v581
      %v604 = vunpack.c.l.s4 1966171168
      %v605 = vunpack.c.0.s8 %v604
      %v606 = vlaneseq
      %v607 = vshrl.u32 %v606, 7
      %v608 = vsub.s32 %v605, %v607
      %v609 = vrot.slane %v602, %v608
      %v610 = vcombine.high %v609, %v609
      %v612 = vunpack.c.l.s4 1966171168
      %v613 = vunpack.c.0.s8 %v612
      %v614 = vlaneseq
      %v615 = vshrl.u32 %v614, 7
      %v616 = vsub.s32 %v613, %v615
      %v617 = vrot.slane %v610, %v616
      %v618 = vcombine.high %v617, %v617
      %v619 = vsel %vm476, %v618, %v473
      %v620 = vld [vmem:[%s356] sm:$0xff]
      %v622 = vrot.slane %v620, 1
      %v624 = vmax.f32 %v620, %v622
      %v625 = vrot.slane %v620, 2
      %v627 = vmax.f32 %v624, %v625
      %v628 = vrot.slane %v620, 3
      %v630 = vmax.f32 %v627, %v628
      %v631 = vrot.slane %v620, 4
      %v633 = vmax.f32 %v630, %v631
      %v634 = vrot.slane %v620, 5
      %v636 = vmax.f32 %v633, %v634
      %v637 = vrot.slane %v620, 6
      %v639 = vmax.f32 %v636, %v637
      %v640 = vrot.slane %v620, 7
      %v642 = vmax.f32 %v639, %v640
      %v643 = vlaneseq
      %v644 = vshrl.u32 %v643, 7
      %v645 = vsub.s32 0, %v644
      %v646 = vrot.slane %v642, %v645
      %v647 = vsub.f32 %v620, %v646
      %v648 = vmul.f32 %v647, 1.442695
      %v649 = vpow.pop %v648
      %v650 = vlaneseq
      %v651 = vshrl.u32 %v650, 7
      %v652 = vsub.s32 0, %v651
      %v653 = vrot.slane %v649, %v652
      %v654 = vmul.f32 %v405, %v653
      %v655 = vlaneseq
      %v656 = vshrl.u32 %v655, 7
      %v657 = vsub.s32 1, %v656
      %v658 = vrot.slane %v649, %v657
      %v659 = vmul.f32 %v409, %v658
      %v660 = vadd.f32 %v654, %v659
      %v661 = vlaneseq
      %v662 = vshrl.u32 %v661, 7
      %v663 = vsub.s32 2, %v662
      %v664 = vrot.slane %v649, %v663
      %v665 = vmul.f32 %v413, %v664
      %v666 = vadd.f32 %v660, %v665
      %v667 = vlaneseq
      %v668 = vshrl.u32 %v667, 7
      %v669 = vsub.s32 3, %v668
      %v670 = vrot.slane %v649, %v669
      %v671 = vmul.f32 %v417, %v670
      %v672 = vadd.f32 %v666, %v671
      %v673 = vlaneseq
      %v674 = vshrl.u32 %v673, 7
      %v675 = vsub.s32 4, %v674
      %v676 = vrot.slane %v649, %v675
      %v677 = vmul.f32 %v421, %v676
      %v678 = vadd.f32 %v672, %v677
      %v679 = vlaneseq
      %v680 = vshrl.u32 %v679, 7
      %v681 = vsub.s32 5, %v680
      %v682 = vrot.slane %v649, %v681
      %v683 = vmul.f32 %v425, %v682
      %v684 = vadd.f32 %v678, %v683
      %v685 = vlaneseq
      %v686 = vshrl.u32 %v685, 7
      %v687 = vsub.s32 6, %v686
      %v688 = vrot.slane %v649, %v687
      %v689 = vmul.f32 %v429, %v688
      %v690 = vadd.f32 %v684, %v689
      %v691 = vlaneseq
      %v692 = vshrl.u32 %v691, 7
      %v693 = vsub.s32 7, %v692
      %v694 = vrot.slane %v649, %v693
      %v695 = vmul.f32 %v433, %v694
      %v696 = vadd.f32 %v690, %v695
      %v697 = vadd.f32 %v469, %v646
      %v698 = vlog2.pop %v696
      %v699 = vmul.f32 %v698, 0.6931472
      %v700 = vadd.f32 %v697, %v699
      %v701 = vlaneseq
      %v702 = vshrl.u32 %v701, 7
      %v703 = vsub.s32 0, %v702
      %v704 = vrot.slane %v470, %v703
      %v705 = vadd.f32 %v438, %v704
      %v706 = vlaneseq
      %v707 = vshrl.u32 %v706, 7
      %v708 = vsub.s32 1, %v707
      %v709 = vrot.slane %v470, %v708
      %v710 = vadd.f32 %v442, %v709
      %vm711 = vcmp.gt.f32.partialorder %v710, %v705
      %v712 = vsel %vm711, %v710, %v705
      %v713 = vsel %vm711, 1, 0
      %v714 = vlaneseq
      %v715 = vshrl.u32 %v714, 7
      %v716 = vsub.s32 2, %v715
      %v717 = vrot.slane %v470, %v716
      %v718 = vadd.f32 %v446, %v717
      %vm719 = vcmp.gt.f32.partialorder %v718, %v712
      %v720 = vsel %vm719, %v718, %v712
      %v721 = vsel %vm719, 2, %v713
      %v722 = vlaneseq
      %v723 = vshrl.u32 %v722, 7
      %v724 = vsub.s32 3, %v723
      %v725 = vrot.slane %v470, %v724
      %v726 = vadd.f32 %v450, %v725
      %vm727 = vcmp.gt.f32.partialorder %v726, %v720
      %v728 = vsel %vm727, %v726, %v720
      %v729 = vsel %vm727, 3, %v721
      %v730 = vlaneseq
      %v731 = vshrl.u32 %v730, 7
      %v732 = vsub.s32 4, %v731
      %v733 = vrot.slane %v470, %v732
      %v734 = vadd.f32 %v454, %v733
      %vm735 = vcmp.gt.f32.partialorder %v734, %v728
      %v736 = vsel %vm735, %v734, %v728
      %v737 = vsel %vm735, 4, %v729
      %v738 = vlaneseq
      %v739 = vshrl.u32 %v738, 7
      %v740 = vsub.s32 5, %v739
      %v741 = vrot.slane %v470, %v740
      %v742 = vadd.f32 %v458, %v741
      %vm743 = vcmp.gt.f32.partialorder %v742, %v736
      %v744 = vsel %vm743, %v742, %v736
      %v745 = vsel %vm743, 5, %v737
      %v746 = vlaneseq
      %v747 = vshrl.u32 %v746, 7
      %v748 = vsub.s32 6, %v747
      %v749 = vrot.slane %v470, %v748
      %v750 = vadd.f32 %v462, %v749
      %vm751 = vcmp.gt.f32.partialorder %v750, %v744
      %v752 = vsel %vm751, %v750, %v744
      %v753 = vsel %vm751, 6, %v745
      %v754 = vlaneseq
      %v755 = vshrl.u32 %v754, 7
      %v756 = vsub.s32 7, %v755
      %v757 = vrot.slane %v470, %v756
      %v758 = vadd.f32 %v466, %v757
      %vm759 = vcmp.gt.f32.partialorder %v758, %v752
      %v760 = vsel %vm759, %v758, %v752
      %v761 = vsel %vm759, 7, %v753
      %762 = vst [vmem:[%s377] sm:$0xff] %v761
      %v763 = vadd.f32 %v760, %v620
      %s764 = sadd.s32 %s468, 2
      %v765 = vstv %s764
      %vm766 = vcmp.eq.s32.totalorder %v393, %v765
      %v767 = vadd.f32 %v700, %v398
      %v769 = vrot.slane %v767, 1
      %v771 = vmax.f32 %v767, %v769
      %v772 = vrot.slane %v767, 2
      %v774 = vmax.f32 %v771, %v772
      %v775 = vrot.slane %v767, 3
      %v777 = vmax.f32 %v774, %v775
      %v778 = vrot.slane %v767, 4
      %v780 = vmax.f32 %v777, %v778
      %v781 = vrot.slane %v767, 5
      %v783 = vmax.f32 %v780, %v781
      %v784 = vrot.slane %v767, 6
      %v786 = vmax.f32 %v783, %v784
      %v787 = vrot.slane %v767, 7
      %v789 = vmax.f32 %v786, %v787
      %v790 = vlaneseq
      %v791 = vshrl.u32 %v790, 7
      %v792 = vsub.s32 0, %v791
      %v793 = vrot.slane %v789, %v792
      %v794 = vsub.f32 %v767, %v793
      %v795 = vmul.f32 %v794, 1.442695
      %v796 = vpow.pop %v795
      %v798 = vrot.slane %v796, 1
      %v800 = vadd.f32 %v796, %v798
      %v801 = vrot.slane %v796, 2
      %v803 = vadd.f32 %v800, %v801
      %v804 = vrot.slane %v796, 3
      %v806 = vadd.f32 %v803, %v804
      %v807 = vrot.slane %v796, 4
      %v809 = vadd.f32 %v806, %v807
      %v810 = vrot.slane %v796, 5
      %v812 = vadd.f32 %v809, %v810
      %v813 = vrot.slane %v796, 6
      %v815 = vadd.f32 %v812, %v813
      %v816 = vrot.slane %v796, 7
      %v818 = vadd.f32 %v815, %v816
      %v819 = vlog2.pop %v818
      %v820 = vmul.f32 %v819, 0.6931472
      %v821 = vadd.f32 %v789, %v820
      %v822 = vsel %vm766, %v821, %v532
      %v823 = vadd.f32 %v763, %v398
      %v825 = vrot.slane %v823, 7
      %vm827 = vcmp.gt.f32.partialorder %v823, %v825
      %v828 = vsel %vm827, %v823, %v825
      %v829 = vsel %vm827, 1, 0
      %v831 = vrot.slane %v828, 7
      %vm833 = vcmp.gt.f32.partialorder %v823, %v831
      %v834 = vsel %vm833, %v823, %v831
      %v835 = vrot.slane %v829, 7
      %v836 = vsel %vm833, 2, %v835
      %v838 = vrot.slane %v834, 7
      %vm840 = vcmp.gt.f32.partialorder %v823, %v838
      %v841 = vsel %vm840, %v823, %v838
      %v842 = vrot.slane %v836, 7
      %v843 = vsel %vm840, 3, %v842
      %v845 = vrot.slane %v841, 7
      %vm847 = vcmp.gt.f32.partialorder %v823, %v845
      %v848 = vsel %vm847, %v823, %v845
      %v849 = vrot.slane %v843, 7
      %v850 = vsel %vm847, 4, %v849
      %v852 = vrot.slane %v848, 7
      %vm854 = vcmp.gt.f32.partialorder %v823, %v852
      %v855 = vsel %vm854, %v823, %v852
      %v856 = vrot.slane %v850, 7
      %v857 = vsel %vm854, 5, %v856
      %v859 = vrot.slane %v855, 7
      %vm861 = vcmp.gt.f32.partialorder %v823, %v859
      %v862 = vsel %vm861, %v823, %v859
      %v863 = vrot.slane %v857, 7
      %v864 = vsel %vm861, 6, %v863
      %v866 = vrot.slane %v862, 7
      %vm868 = vcmp.gt.f32.partialorder %v823, %v866
      %v869 = vsel %vm868, %v823, %v866
      %v870 = vrot.slane %v864, 7
      %v871 = vsel %vm868, 7, %v870
      %v873 = vcombine.high %v869, %v869
      %v875 = vunpack.c.l.s4 1966171168
      %v876 = vunpack.c.0.s8 %v875
      %v877 = vlaneseq
      %v878 = vshrl.u32 %v877, 7
      %v879 = vsub.s32 %v876, %v878
      %v880 = vrot.slane %v873, %v879
      %v881 = vcombine.high %v880, %v880
      %v883 = vunpack.c.l.s4 1966171168
      %v884 = vunpack.c.0.s8 %v883
      %v885 = vlaneseq
      %v886 = vshrl.u32 %v885, 7
      %v887 = vsub.s32 %v884, %v886
      %v888 = vrot.slane %v881, %v887
      %v889 = vcombine.high %v888, %v888
      %v891 = vsel %vm766, %v889, %v601
      %v892 = vcombine.high %v871, %v871
      %v894 = vunpack.c.l.s4 1966171168
      %v895 = vunpack.c.0.s8 %v894
      %v896 = vlaneseq
      %v897 = vshrl.u32 %v896, 7
      %v898 = vsub.s32 %v895, %v897
      %v899 = vrot.slane %v892, %v898
      %v900 = vcombine.high %v899, %v899
      %v902 = vunpack.c.l.s4 1966171168
      %v903 = vunpack.c.0.s8 %v902
      %v904 = vlaneseq
      %v905 = vshrl.u32 %v904, 7
      %v906 = vsub.s32 %v903, %v905
      %v907 = vrot.slane %v900, %v906
      %v908 = vcombine.high %v907, %v907
      %v909 = vsel %vm766, %v908, %v619
      %s910 = scalar_lea.vmem %s356, 8
      %v911 = vld [vmem:[%s910] sm:$0xff]
      %v913 = vrot.slane %v911, 1
      %v915 = vmax.f32 %v911, %v913
      %v916 = vrot.slane %v911, 2
      %v918 = vmax.f32 %v915, %v916
      %v919 = vrot.slane %v911, 3
      %v921 = vmax.f32 %v918, %v919
      %v922 = vrot.slane %v911, 4
      %v924 = vmax.f32 %v921, %v922
      %v925 = vrot.slane %v911, 5
      %v927 = vmax.f32 %v924, %v925
      %v928 = vrot.slane %v911, 6
      %v930 = vmax.f32 %v927, %v928
      %v931 = vrot.slane %v911, 7
      %v933 = vmax.f32 %v930, %v931
      %v934 = vlaneseq
      %v935 = vshrl.u32 %v934, 7
      %v936 = vsub.s32 0, %v935
      %v937 = vrot.slane %v933, %v936
      %v938 = vsub.f32 %v911, %v937
      %v939 = vmul.f32 %v938, 1.442695
      %v940 = vpow.pop %v939
      %v941 = vlaneseq
      %v942 = vshrl.u32 %v941, 7
      %v943 = vsub.s32 0, %v942
      %v944 = vrot.slane %v940, %v943
      %v945 = vmul.f32 %v405, %v944
      %v946 = vlaneseq
      %v947 = vshrl.u32 %v946, 7
      %v948 = vsub.s32 1, %v947
      %v949 = vrot.slane %v940, %v948
      %v950 = vmul.f32 %v409, %v949
      %v951 = vadd.f32 %v945, %v950
      %v952 = vlaneseq
      %v953 = vshrl.u32 %v952, 7
      %v954 = vsub.s32 2, %v953
      %v955 = vrot.slane %v940, %v954
      %v956 = vmul.f32 %v413, %v955
      %v957 = vadd.f32 %v951, %v956
      %v958 = vlaneseq
      %v959 = vshrl.u32 %v958, 7
      %v960 = vsub.s32 3, %v959
      %v961 = vrot.slane %v940, %v960
      %v962 = vmul.f32 %v417, %v961
      %v963 = vadd.f32 %v957, %v962
      %v964 = vlaneseq
      %v965 = vshrl.u32 %v964, 7
      %v966 = vsub.s32 4, %v965
      %v967 = vrot.slane %v940, %v966
      %v968 = vmul.f32 %v421, %v967
      %v969 = vadd.f32 %v963, %v968
      %v970 = vlaneseq
      %v971 = vshrl.u32 %v970, 7
      %v972 = vsub.s32 5, %v971
      %v973 = vrot.slane %v940, %v972
      %v974 = vmul.f32 %v425, %v973
      %v975 = vadd.f32 %v969, %v974
      %v976 = vlaneseq
      %v977 = vshrl.u32 %v976, 7
      %v978 = vsub.s32 6, %v977
      %v979 = vrot.slane %v940, %v978
      %v980 = vmul.f32 %v429, %v979
      %v981 = vadd.f32 %v975, %v980
      %v982 = vlaneseq
      %v983 = vshrl.u32 %v982, 7
      %v984 = vsub.s32 7, %v983
      %v985 = vrot.slane %v940, %v984
      %v986 = vmul.f32 %v433, %v985
      %v987 = vadd.f32 %v981, %v986
      %v988 = vadd.f32 %v700, %v937
      %v989 = vlog2.pop %v987
      %v990 = vmul.f32 %v989, 0.6931472
      %v991 = vadd.f32 %v988, %v990
      %v992 = vlaneseq
      %v993 = vshrl.u32 %v992, 7
      %v994 = vsub.s32 0, %v993
      %v995 = vrot.slane %v763, %v994
      %v996 = vadd.f32 %v438, %v995
      %v997 = vlaneseq
      %v998 = vshrl.u32 %v997, 7
      %v999 = vsub.s32 1, %v998
      %v1000 = vrot.slane %v763, %v999
      %v1001 = vadd.f32 %v442, %v1000
      %vm1002 = vcmp.gt.f32.partialorder %v1001, %v996
      %v1003 = vsel %vm1002, %v1001, %v996
      %v1004 = vsel %vm1002, 1, 0
      %v1005 = vlaneseq
      %v1006 = vshrl.u32 %v1005, 7
      %v1007 = vsub.s32 2, %v1006
      %v1008 = vrot.slane %v763, %v1007
      %v1009 = vadd.f32 %v446, %v1008
      %vm1010 = vcmp.gt.f32.partialorder %v1009, %v1003
      %v1011 = vsel %vm1010, %v1009, %v1003
      %v1012 = vsel %vm1010, 2, %v1004
      %v1013 = vlaneseq
      %v1014 = vshrl.u32 %v1013, 7
      %v1015 = vsub.s32 3, %v1014
      %v1016 = vrot.slane %v763, %v1015
      %v1017 = vadd.f32 %v450, %v1016
      %vm1018 = vcmp.gt.f32.partialorder %v1017, %v1011
      %v1019 = vsel %vm1018, %v1017, %v1011
      %v1020 = vsel %vm1018, 3, %v1012
      %v1021 = vlaneseq
      %v1022 = vshrl.u32 %v1021, 7
      %v1023 = vsub.s32 4, %v1022
      %v1024 = vrot.slane %v763, %v1023
      %v1025 = vadd.f32 %v454, %v1024
      %vm1026 = vcmp.gt.f32.partialorder %v1025, %v1019
      %v1027 = vsel %vm1026, %v1025, %v1019
      %v1028 = vsel %vm1026, 4, %v1020
      %v1029 = vlaneseq
      %v1030 = vshrl.u32 %v1029, 7
      %v1031 = vsub.s32 5, %v1030
      %v1032 = vrot.slane %v763, %v1031
      %v1033 = vadd.f32 %v458, %v1032
      %vm1034 = vcmp.gt.f32.partialorder %v1033, %v1027
      %v1035 = vsel %vm1034, %v1033, %v1027
      %v1036 = vsel %vm1034, 5, %v1028
      %v1037 = vlaneseq
      %v1038 = vshrl.u32 %v1037, 7
      %v1039 = vsub.s32 6, %v1038
      %v1040 = vrot.slane %v763, %v1039
      %v1041 = vadd.f32 %v462, %v1040
      %vm1042 = vcmp.gt.f32.partialorder %v1041, %v1035
      %v1043 = vsel %vm1042, %v1041, %v1035
      %v1044 = vsel %vm1042, 6, %v1036
      %v1045 = vlaneseq
      %v1046 = vshrl.u32 %v1045, 7
      %v1047 = vsub.s32 7, %v1046
      %v1048 = vrot.slane %v763, %v1047
      %v1049 = vadd.f32 %v466, %v1048
      %vm1050 = vcmp.gt.f32.partialorder %v1049, %v1043
      %v1051 = vsel %vm1050, %v1049, %v1043
      %v1052 = vsel %vm1050, 7, %v1044
      %s1053 = scalar_lea.vmem %s377, 8
      %1054 = vst [vmem:[%s1053] sm:$0xff] %v1052
      %v1055 = vadd.f32 %v1051, %v911
      %s1056 = sadd.s32 %s468, 3
      %v1057 = vstv %s1056
      %vm1058 = vcmp.eq.s32.totalorder %v393, %v1057
      %v1059 = vadd.f32 %v991, %v398
      %v1061 = vrot.slane %v1059, 1
      %v1063 = vmax.f32 %v1059, %v1061
      %v1064 = vrot.slane %v1059, 2
      %v1066 = vmax.f32 %v1063, %v1064
      %v1067 = vrot.slane %v1059, 3
      %v1069 = vmax.f32 %v1066, %v1067
      %v1070 = vrot.slane %v1059, 4
      %v1072 = vmax.f32 %v1069, %v1070
      %v1073 = vrot.slane %v1059, 5
      %v1075 = vmax.f32 %v1072, %v1073
      %v1076 = vrot.slane %v1059, 6
      %v1078 = vmax.f32 %v1075, %v1076
      %v1079 = vrot.slane %v1059, 7
      %v1081 = vmax.f32 %v1078, %v1079
      %v1082 = vlaneseq
      %v1083 = vshrl.u32 %v1082, 7
      %v1084 = vsub.s32 0, %v1083
      %v1085 = vrot.slane %v1081, %v1084
      %v1086 = vsub.f32 %v1059, %v1085
      %v1087 = vmul.f32 %v1086, 1.442695
      %v1088 = vpow.pop %v1087
      %v1090 = vrot.slane %v1088, 1
      %v1092 = vadd.f32 %v1088, %v1090
      %v1093 = vrot.slane %v1088, 2
      %v1095 = vadd.f32 %v1092, %v1093
      %v1096 = vrot.slane %v1088, 3
      %v1098 = vadd.f32 %v1095, %v1096
      %v1099 = vrot.slane %v1088, 4
      %v1101 = vadd.f32 %v1098, %v1099
      %v1102 = vrot.slane %v1088, 5
      %v1104 = vadd.f32 %v1101, %v1102
      %v1105 = vrot.slane %v1088, 6
      %v1107 = vadd.f32 %v1104, %v1105
      %v1108 = vrot.slane %v1088, 7
      %v1110 = vadd.f32 %v1107, %v1108
      %v1111 = vlog2.pop %v1110
      %v1112 = vmul.f32 %v1111, 0.6931472
      %v1113 = vadd.f32 %v1081, %v1112
      %v1114 = vsel %vm1058, %v1113, %v822
      %v1115 = vadd.f32 %v1055, %v398
      %v1117 = vrot.slane %v1115, 7
      %vm1119 = vcmp.gt.f32.partialorder %v1115, %v1117
      %v1120 = vsel %vm1119, %v1115, %v1117
      %v1121 = vsel %vm1119, 1, 0
      %v1123 = vrot.slane %v1120, 7
      %vm1125 = vcmp.gt.f32.partialorder %v1115, %v1123
      %v1126 = vsel %vm1125, %v1115, %v1123
      %v1127 = vrot.slane %v1121, 7
      %v1128 = vsel %vm1125, 2, %v1127
      %v1130 = vrot.slane %v1126, 7
      %vm1132 = vcmp.gt.f32.partialorder %v1115, %v1130
      %v1133 = vsel %vm1132, %v1115, %v1130
      %v1134 = vrot.slane %v1128, 7
      %v1135 = vsel %vm1132, 3, %v1134
      %v1137 = vrot.slane %v1133, 7
      %vm1139 = vcmp.gt.f32.partialorder %v1115, %v1137
      %v1140 = vsel %vm1139, %v1115, %v1137
      %v1141 = vrot.slane %v1135, 7
      %v1142 = vsel %vm1139, 4, %v1141
      %v1144 = vrot.slane %v1140, 7
      %vm1146 = vcmp.gt.f32.partialorder %v1115, %v1144
      %v1147 = vsel %vm1146, %v1115, %v1144
      %v1148 = vrot.slane %v1142, 7
      %v1149 = vsel %vm1146, 5, %v1148
      %v1151 = vrot.slane %v1147, 7
      %vm1153 = vcmp.gt.f32.partialorder %v1115, %v1151
      %v1154 = vsel %vm1153, %v1115, %v1151
      %v1155 = vrot.slane %v1149, 7
      %v1156 = vsel %vm1153, 6, %v1155
      %v1158 = vrot.slane %v1154, 7
      %vm1160 = vcmp.gt.f32.partialorder %v1115, %v1158
      %v1161 = vsel %vm1160, %v1115, %v1158
      %v1162 = vrot.slane %v1156, 7
      %v1163 = vsel %vm1160, 7, %v1162
      %v1165 = vcombine.high %v1161, %v1161
      %v1167 = vunpack.c.l.s4 1966171168
      %v1168 = vunpack.c.0.s8 %v1167
      %v1169 = vlaneseq
      %v1170 = vshrl.u32 %v1169, 7
      %v1171 = vsub.s32 %v1168, %v1170
      %v1172 = vrot.slane %v1165, %v1171
      %v1173 = vcombine.high %v1172, %v1172
      %v1175 = vunpack.c.l.s4 1966171168
      %v1176 = vunpack.c.0.s8 %v1175
      %v1177 = vlaneseq
      %v1178 = vshrl.u32 %v1177, 7
      %v1179 = vsub.s32 %v1176, %v1178
      %v1180 = vrot.slane %v1173, %v1179
      %v1181 = vcombine.high %v1180, %v1180
      %v1183 = vsel %vm1058, %v1181, %v891
      %v1184 = vcombine.high %v1163, %v1163
      %v1186 = vunpack.c.l.s4 1966171168
      %v1187 = vunpack.c.0.s8 %v1186
      %v1188 = vlaneseq
      %v1189 = vshrl.u32 %v1188, 7
      %v1190 = vsub.s32 %v1187, %v1189
      %v1191 = vrot.slane %v1184, %v1190
      %v1192 = vcombine.high %v1191, %v1191
      %v1194 = vunpack.c.l.s4 1966171168
      %v1195 = vunpack.c.0.s8 %v1194
      %v1196 = vlaneseq
      %v1197 = vshrl.u32 %v1196, 7
      %v1198 = vsub.s32 %v1195, %v1197
      %v1199 = vrot.slane %v1192, %v1198
      %v1200 = vcombine.high %v1199, %v1199
      %v1201 = vsel %vm1058, %v1200, %v909
      %s1202 = scalar_lea.vmem %s356, 16
      %v1203 = vld [vmem:[%s1202] sm:$0xff]
      %v1205 = vrot.slane %v1203, 1
      %v1207 = vmax.f32 %v1203, %v1205
      %v1208 = vrot.slane %v1203, 2
      %v1210 = vmax.f32 %v1207, %v1208
      %v1211 = vrot.slane %v1203, 3
      %v1213 = vmax.f32 %v1210, %v1211
      %v1214 = vrot.slane %v1203, 4
      %v1216 = vmax.f32 %v1213, %v1214
      %v1217 = vrot.slane %v1203, 5
      %v1219 = vmax.f32 %v1216, %v1217
      %v1220 = vrot.slane %v1203, 6
      %v1222 = vmax.f32 %v1219, %v1220
      %v1223 = vrot.slane %v1203, 7
      %v1225 = vmax.f32 %v1222, %v1223
      %v1226 = vlaneseq
      %v1227 = vshrl.u32 %v1226, 7
      %v1228 = vsub.s32 0, %v1227
      %v1229 = vrot.slane %v1225, %v1228
      %v1230 = vsub.f32 %v1203, %v1229
      %v1231 = vmul.f32 %v1230, 1.442695
      %v1232 = vpow.pop %v1231
      %v1233 = vlaneseq
      %v1234 = vshrl.u32 %v1233, 7
      %v1235 = vsub.s32 0, %v1234
      %v1236 = vrot.slane %v1232, %v1235
      %v1237 = vmul.f32 %v405, %v1236
      %v1238 = vlaneseq
      %v1239 = vshrl.u32 %v1238, 7
      %v1240 = vsub.s32 1, %v1239
      %v1241 = vrot.slane %v1232, %v1240
      %v1242 = vmul.f32 %v409, %v1241
      %v1243 = vadd.f32 %v1237, %v1242
      %v1244 = vlaneseq
      %v1245 = vshrl.u32 %v1244, 7
      %v1246 = vsub.s32 2, %v1245
      %v1247 = vrot.slane %v1232, %v1246
      %v1248 = vmul.f32 %v413, %v1247
      %v1249 = vadd.f32 %v1243, %v1248
      %v1250 = vlaneseq
      %v1251 = vshrl.u32 %v1250, 7
      %v1252 = vsub.s32 3, %v1251
      %v1253 = vrot.slane %v1232, %v1252
      %v1254 = vmul.f32 %v417, %v1253
      %v1255 = vadd.f32 %v1249, %v1254
      %v1256 = vlaneseq
      %v1257 = vshrl.u32 %v1256, 7
      %v1258 = vsub.s32 4, %v1257
      %v1259 = vrot.slane %v1232, %v1258
      %v1260 = vmul.f32 %v421, %v1259
      %v1261 = vadd.f32 %v1255, %v1260
      %v1262 = vlaneseq
      %v1263 = vshrl.u32 %v1262, 7
      %v1264 = vsub.s32 5, %v1263
      %v1265 = vrot.slane %v1232, %v1264
      %v1266 = vmul.f32 %v425, %v1265
      %v1267 = vadd.f32 %v1261, %v1266
      %v1268 = vlaneseq
      %v1269 = vshrl.u32 %v1268, 7
      %v1270 = vsub.s32 6, %v1269
      %v1271 = vrot.slane %v1232, %v1270
      %v1272 = vmul.f32 %v429, %v1271
      %v1273 = vadd.f32 %v1267, %v1272
      %v1274 = vlaneseq
      %v1275 = vshrl.u32 %v1274, 7
      %v1276 = vsub.s32 7, %v1275
      %v1277 = vrot.slane %v1232, %v1276
      %v1278 = vmul.f32 %v433, %v1277
      %v1279 = vadd.f32 %v1273, %v1278
      %v1280 = vadd.f32 %v991, %v1229
      %v1281 = vlog2.pop %v1279
      %v1282 = vmul.f32 %v1281, 0.6931472
      %v1283 = vadd.f32 %v1280, %v1282
      %v1284 = vlaneseq
      %v1285 = vshrl.u32 %v1284, 7
      %v1286 = vsub.s32 0, %v1285
      %v1287 = vrot.slane %v1055, %v1286
      %v1288 = vadd.f32 %v438, %v1287
      %v1289 = vlaneseq
      %v1290 = vshrl.u32 %v1289, 7
      %v1291 = vsub.s32 1, %v1290
      %v1292 = vrot.slane %v1055, %v1291
      %v1293 = vadd.f32 %v442, %v1292
      %vm1294 = vcmp.gt.f32.partialorder %v1293, %v1288
      %v1295 = vsel %vm1294, %v1293, %v1288
      %v1296 = vsel %vm1294, 1, 0
      %v1297 = vlaneseq
      %v1298 = vshrl.u32 %v1297, 7
      %v1299 = vsub.s32 2, %v1298
      %v1300 = vrot.slane %v1055, %v1299
      %v1301 = vadd.f32 %v446, %v1300
      %vm1302 = vcmp.gt.f32.partialorder %v1301, %v1295
      %v1303 = vsel %vm1302, %v1301, %v1295
      %v1304 = vsel %vm1302, 2, %v1296
      %v1305 = vlaneseq
      %v1306 = vshrl.u32 %v1305, 7
      %v1307 = vsub.s32 3, %v1306
      %v1308 = vrot.slane %v1055, %v1307
      %v1309 = vadd.f32 %v450, %v1308
      %vm1310 = vcmp.gt.f32.partialorder %v1309, %v1303
      %v1311 = vsel %vm1310, %v1309, %v1303
      %v1312 = vsel %vm1310, 3, %v1304
      %v1313 = vlaneseq
      %v1314 = vshrl.u32 %v1313, 7
      %v1315 = vsub.s32 4, %v1314
      %v1316 = vrot.slane %v1055, %v1315
      %v1317 = vadd.f32 %v454, %v1316
      %vm1318 = vcmp.gt.f32.partialorder %v1317, %v1311
      %v1319 = vsel %vm1318, %v1317, %v1311
      %v1320 = vsel %vm1318, 4, %v1312
      %v1321 = vlaneseq
      %v1322 = vshrl.u32 %v1321, 7
      %v1323 = vsub.s32 5, %v1322
      %v1324 = vrot.slane %v1055, %v1323
      %v1325 = vadd.f32 %v458, %v1324
      %vm1326 = vcmp.gt.f32.partialorder %v1325, %v1319
      %v1327 = vsel %vm1326, %v1325, %v1319
      %v1328 = vsel %vm1326, 5, %v1320
      %v1329 = vlaneseq
      %v1330 = vshrl.u32 %v1329, 7
      %v1331 = vsub.s32 6, %v1330
      %v1332 = vrot.slane %v1055, %v1331
      %v1333 = vadd.f32 %v462, %v1332
      %vm1334 = vcmp.gt.f32.partialorder %v1333, %v1327
      %v1335 = vsel %vm1334, %v1333, %v1327
      %v1336 = vsel %vm1334, 6, %v1328
      %v1337 = vlaneseq
      %v1338 = vshrl.u32 %v1337, 7
      %v1339 = vsub.s32 7, %v1338
      %v1340 = vrot.slane %v1055, %v1339
      %v1341 = vadd.f32 %v466, %v1340
      %vm1342 = vcmp.gt.f32.partialorder %v1341, %v1335
      %v1343 = vsel %vm1342, %v1341, %v1335
      %v1344 = vsel %vm1342, 7, %v1336
      %s1345 = scalar_lea.vmem %s377, 16
      %1346 = vst [vmem:[%s1345] sm:$0xff] %v1344
      %v1347 = vadd.f32 %v1343, %v1203
      %s1348 = sadd.s32 %s468, 4
      %v1349 = vstv %s1348
      %vm1350 = vcmp.eq.s32.totalorder %v393, %v1349
      %v1351 = vadd.f32 %v1283, %v398
      %v1353 = vrot.slane %v1351, 1
      %v1355 = vmax.f32 %v1351, %v1353
      %v1356 = vrot.slane %v1351, 2
      %v1358 = vmax.f32 %v1355, %v1356
      %v1359 = vrot.slane %v1351, 3
      %v1361 = vmax.f32 %v1358, %v1359
      %v1362 = vrot.slane %v1351, 4
      %v1364 = vmax.f32 %v1361, %v1362
      %v1365 = vrot.slane %v1351, 5
      %v1367 = vmax.f32 %v1364, %v1365
      %v1368 = vrot.slane %v1351, 6
      %v1370 = vmax.f32 %v1367, %v1368
      %v1371 = vrot.slane %v1351, 7
      %v1373 = vmax.f32 %v1370, %v1371
      %v1374 = vlaneseq
      %v1375 = vshrl.u32 %v1374, 7
      %v1376 = vsub.s32 0, %v1375
      %v1377 = vrot.slane %v1373, %v1376
      %v1378 = vsub.f32 %v1351, %v1377
      %v1379 = vmul.f32 %v1378, 1.442695
      %v1380 = vpow.pop %v1379
      %v1382 = vrot.slane %v1380, 1
      %v1384 = vadd.f32 %v1380, %v1382
      %v1385 = vrot.slane %v1380, 2
      %v1387 = vadd.f32 %v1384, %v1385
      %v1388 = vrot.slane %v1380, 3
      %v1390 = vadd.f32 %v1387, %v1388
      %v1391 = vrot.slane %v1380, 4
      %v1393 = vadd.f32 %v1390, %v1391
      %v1394 = vrot.slane %v1380, 5
      %v1396 = vadd.f32 %v1393, %v1394
      %v1397 = vrot.slane %v1380, 6
      %v1399 = vadd.f32 %v1396, %v1397
      %v1400 = vrot.slane %v1380, 7
      %v1402 = vadd.f32 %v1399, %v1400
      %v1403 = vlog2.pop %v1402
      %v1404 = vmul.f32 %v1403, 0.6931472
      %v1405 = vadd.f32 %v1373, %v1404
      %v1406 = vsel %vm1350, %v1405, %v1114
      %v1407 = vadd.f32 %v1347, %v398
      %v1409 = vrot.slane %v1407, 7
      %vm1411 = vcmp.gt.f32.partialorder %v1407, %v1409
      %v1412 = vsel %vm1411, %v1407, %v1409
      %v1413 = vsel %vm1411, 1, 0
      %v1415 = vrot.slane %v1412, 7
      %vm1417 = vcmp.gt.f32.partialorder %v1407, %v1415
      %v1418 = vsel %vm1417, %v1407, %v1415
      %v1419 = vrot.slane %v1413, 7
      %v1420 = vsel %vm1417, 2, %v1419
      %v1422 = vrot.slane %v1418, 7
      %vm1424 = vcmp.gt.f32.partialorder %v1407, %v1422
      %v1425 = vsel %vm1424, %v1407, %v1422
      %v1426 = vrot.slane %v1420, 7
      %v1427 = vsel %vm1424, 3, %v1426
      %v1429 = vrot.slane %v1425, 7
      %vm1431 = vcmp.gt.f32.partialorder %v1407, %v1429
      %v1432 = vsel %vm1431, %v1407, %v1429
      %v1433 = vrot.slane %v1427, 7
      %v1434 = vsel %vm1431, 4, %v1433
      %v1436 = vrot.slane %v1432, 7
      %vm1438 = vcmp.gt.f32.partialorder %v1407, %v1436
      %v1439 = vsel %vm1438, %v1407, %v1436
      %v1440 = vrot.slane %v1434, 7
      %v1441 = vsel %vm1438, 5, %v1440
      %v1443 = vrot.slane %v1439, 7
      %vm1445 = vcmp.gt.f32.partialorder %v1407, %v1443
      %v1446 = vsel %vm1445, %v1407, %v1443
      %v1447 = vrot.slane %v1441, 7
      %v1448 = vsel %vm1445, 6, %v1447
      %v1450 = vrot.slane %v1446, 7
      %vm1452 = vcmp.gt.f32.partialorder %v1407, %v1450
      %v1453 = vsel %vm1452, %v1407, %v1450
      %v1454 = vrot.slane %v1448, 7
      %v1455 = vsel %vm1452, 7, %v1454
      %v1457 = vcombine.high %v1453, %v1453
      %v1459 = vunpack.c.l.s4 1966171168
      %v1460 = vunpack.c.0.s8 %v1459
      %v1461 = vlaneseq
      %v1462 = vshrl.u32 %v1461, 7
      %v1463 = vsub.s32 %v1460, %v1462
      %v1464 = vrot.slane %v1457, %v1463
      %v1465 = vcombine.high %v1464, %v1464
      %v1467 = vunpack.c.l.s4 1966171168
      %v1468 = vunpack.c.0.s8 %v1467
      %v1469 = vlaneseq
      %v1470 = vshrl.u32 %v1469, 7
      %v1471 = vsub.s32 %v1468, %v1470
      %v1472 = vrot.slane %v1465, %v1471
      %v1473 = vcombine.high %v1472, %v1472
      %v1475 = vsel %vm1350, %v1473, %v1183
      %v1476 = vcombine.high %v1455, %v1455
      %v1478 = vunpack.c.l.s4 1966171168
      %v1479 = vunpack.c.0.s8 %v1478
      %v1480 = vlaneseq
      %v1481 = vshrl.u32 %v1480, 7
      %v1482 = vsub.s32 %v1479, %v1481
      %v1483 = vrot.slane %v1476, %v1482
      %v1484 = vcombine.high %v1483, %v1483
      %v1486 = vunpack.c.l.s4 1966171168
      %v1487 = vunpack.c.0.s8 %v1486
      %v1488 = vlaneseq
      %v1489 = vshrl.u32 %v1488, 7
      %v1490 = vsub.s32 %v1487, %v1489
      %v1491 = vrot.slane %v1484, %v1490
      %v1492 = vcombine.high %v1491, %v1491
      %v1493 = vsel %vm1350, %v1492, %v1201
      %s1494 = scalar_lea.vmem %s356, 24
      %v1495 = vld [vmem:[%s1494] sm:$0xff]
      %v1497 = vrot.slane %v1495, 1
      %v1499 = vmax.f32 %v1495, %v1497
      %v1500 = vrot.slane %v1495, 2
      %v1502 = vmax.f32 %v1499, %v1500
      %v1503 = vrot.slane %v1495, 3
      %v1505 = vmax.f32 %v1502, %v1503
      %v1506 = vrot.slane %v1495, 4
      %v1508 = vmax.f32 %v1505, %v1506
      %v1509 = vrot.slane %v1495, 5
      %v1511 = vmax.f32 %v1508, %v1509
      %v1512 = vrot.slane %v1495, 6
      %v1514 = vmax.f32 %v1511, %v1512
      %v1515 = vrot.slane %v1495, 7
      %v1517 = vmax.f32 %v1514, %v1515
      %v1518 = vlaneseq
      %v1519 = vshrl.u32 %v1518, 7
      %v1520 = vsub.s32 0, %v1519
      %v1521 = vrot.slane %v1517, %v1520
      %v1522 = vsub.f32 %v1495, %v1521
      %v1523 = vmul.f32 %v1522, 1.442695
      %v1524 = vpow.pop %v1523
      %v1525 = vlaneseq
      %v1526 = vshrl.u32 %v1525, 7
      %v1527 = vsub.s32 0, %v1526
      %v1528 = vrot.slane %v1524, %v1527
      %v1529 = vmul.f32 %v405, %v1528
      %v1530 = vlaneseq
      %v1531 = vshrl.u32 %v1530, 7
      %v1532 = vsub.s32 1, %v1531
      %v1533 = vrot.slane %v1524, %v1532
      %v1534 = vmul.f32 %v409, %v1533
      %v1535 = vadd.f32 %v1529, %v1534
      %v1536 = vlaneseq
      %v1537 = vshrl.u32 %v1536, 7
      %v1538 = vsub.s32 2, %v1537
      %v1539 = vrot.slane %v1524, %v1538
      %v1540 = vmul.f32 %v413, %v1539
      %v1541 = vadd.f32 %v1535, %v1540
      %v1542 = vlaneseq
      %v1543 = vshrl.u32 %v1542, 7
      %v1544 = vsub.s32 3, %v1543
      %v1545 = vrot.slane %v1524, %v1544
      %v1546 = vmul.f32 %v417, %v1545
      %v1547 = vadd.f32 %v1541, %v1546
      %v1548 = vlaneseq
      %v1549 = vshrl.u32 %v1548, 7
      %v1550 = vsub.s32 4, %v1549
      %v1551 = vrot.slane %v1524, %v1550
      %v1552 = vmul.f32 %v421, %v1551
      %v1553 = vadd.f32 %v1547, %v1552
      %v1554 = vlaneseq
      %v1555 = vshrl.u32 %v1554, 7
      %v1556 = vsub.s32 5, %v1555
      %v1557 = vrot.slane %v1524, %v1556
      %v1558 = vmul.f32 %v425, %v1557
      %v1559 = vadd.f32 %v1553, %v1558
      %v1560 = vlaneseq
      %v1561 = vshrl.u32 %v1560, 7
      %v1562 = vsub.s32 6, %v1561
      %v1563 = vrot.slane %v1524, %v1562
      %v1564 = vmul.f32 %v429, %v1563
      %v1565 = vadd.f32 %v1559, %v1564
      %v1566 = vlaneseq
      %v1567 = vshrl.u32 %v1566, 7
      %v1568 = vsub.s32 7, %v1567
      %v1569 = vrot.slane %v1524, %v1568
      %v1570 = vmul.f32 %v433, %v1569
      %v1571 = vadd.f32 %v1565, %v1570
      %v1572 = vadd.f32 %v1283, %v1521
      %v1573 = vlog2.pop %v1571
      %v1574 = vmul.f32 %v1573, 0.6931472
      %v1575 = vadd.f32 %v1572, %v1574
      %v1576 = vlaneseq
      %v1577 = vshrl.u32 %v1576, 7
      %v1578 = vsub.s32 0, %v1577
      %v1579 = vrot.slane %v1347, %v1578
      %v1580 = vadd.f32 %v438, %v1579
      %v1581 = vlaneseq
      %v1582 = vshrl.u32 %v1581, 7
      %v1583 = vsub.s32 1, %v1582
      %v1584 = vrot.slane %v1347, %v1583
      %v1585 = vadd.f32 %v442, %v1584
      %vm1586 = vcmp.gt.f32.partialorder %v1585, %v1580
      %v1587 = vsel %vm1586, %v1585, %v1580
      %v1588 = vsel %vm1586, 1, 0
      %v1589 = vlaneseq
      %v1590 = vshrl.u32 %v1589, 7
      %v1591 = vsub.s32 2, %v1590
      %v1592 = vrot.slane %v1347, %v1591
      %v1593 = vadd.f32 %v446, %v1592
      %vm1594 = vcmp.gt.f32.partialorder %v1593, %v1587
      %v1595 = vsel %vm1594, %v1593, %v1587
      %v1596 = vsel %vm1594, 2, %v1588
      %v1597 = vlaneseq
      %v1598 = vshrl.u32 %v1597, 7
      %v1599 = vsub.s32 3, %v1598
      %v1600 = vrot.slane %v1347, %v1599
      %v1601 = vadd.f32 %v450, %v1600
      %vm1602 = vcmp.gt.f32.partialorder %v1601, %v1595
      %v1603 = vsel %vm1602, %v1601, %v1595
      %v1604 = vsel %vm1602, 3, %v1596
      %v1605 = vlaneseq
      %v1606 = vshrl.u32 %v1605, 7
      %v1607 = vsub.s32 4, %v1606
      %v1608 = vrot.slane %v1347, %v1607
      %v1609 = vadd.f32 %v454, %v1608
      %vm1610 = vcmp.gt.f32.partialorder %v1609, %v1603
      %v1611 = vsel %vm1610, %v1609, %v1603
      %v1612 = vsel %vm1610, 4, %v1604
      %v1613 = vlaneseq
      %v1614 = vshrl.u32 %v1613, 7
      %v1615 = vsub.s32 5, %v1614
      %v1616 = vrot.slane %v1347, %v1615
      %v1617 = vadd.f32 %v458, %v1616
      %vm1618 = vcmp.gt.f32.partialorder %v1617, %v1611
      %v1619 = vsel %vm1618, %v1617, %v1611
      %v1620 = vsel %vm1618, 5, %v1612
      %v1621 = vlaneseq
      %v1622 = vshrl.u32 %v1621, 7
      %v1623 = vsub.s32 6, %v1622
      %v1624 = vrot.slane %v1347, %v1623
      %v1625 = vadd.f32 %v462, %v1624
      %vm1626 = vcmp.gt.f32.partialorder %v1625, %v1619
      %v1627 = vsel %vm1626, %v1625, %v1619
      %v1628 = vsel %vm1626, 6, %v1620
      %v1629 = vlaneseq
      %v1630 = vshrl.u32 %v1629, 7
      %v1631 = vsub.s32 7, %v1630
      %v1632 = vrot.slane %v1347, %v1631
      %v1633 = vadd.f32 %v466, %v1632
      %vm1634 = vcmp.gt.f32.partialorder %v1633, %v1627
      %v1635 = vsel %vm1634, %v1633, %v1627
      %v1636 = vsel %vm1634, 7, %v1628
      %s1637 = scalar_lea.vmem %s377, 24
      %1638 = vst [vmem:[%s1637] sm:$0xff] %v1636
      %v1639 = vadd.f32 %v1635, %v1495
      %s1640 = sadd.s32 %s468, 5
      %v1641 = vstv %s1640
      %vm1642 = vcmp.eq.s32.totalorder %v393, %v1641
      %v1643 = vadd.f32 %v1575, %v398
      %v1645 = vrot.slane %v1643, 1
      %v1647 = vmax.f32 %v1643, %v1645
      %v1648 = vrot.slane %v1643, 2
      %v1650 = vmax.f32 %v1647, %v1648
      %v1651 = vrot.slane %v1643, 3
      %v1653 = vmax.f32 %v1650, %v1651
      %v1654 = vrot.slane %v1643, 4
      %v1656 = vmax.f32 %v1653, %v1654
      %v1657 = vrot.slane %v1643, 5
      %v1659 = vmax.f32 %v1656, %v1657
      %v1660 = vrot.slane %v1643, 6
      %v1662 = vmax.f32 %v1659, %v1660
      %v1663 = vrot.slane %v1643, 7
      %v1665 = vmax.f32 %v1662, %v1663
      %v1666 = vlaneseq
      %v1667 = vshrl.u32 %v1666, 7
      %v1668 = vsub.s32 0, %v1667
      %v1669 = vrot.slane %v1665, %v1668
      %v1670 = vsub.f32 %v1643, %v1669
      %v1671 = vmul.f32 %v1670, 1.442695
      %v1672 = vpow.pop %v1671
      %v1674 = vrot.slane %v1672, 1
      %v1676 = vadd.f32 %v1672, %v1674
      %v1677 = vrot.slane %v1672, 2
      %v1679 = vadd.f32 %v1676, %v1677
      %v1680 = vrot.slane %v1672, 3
      %v1682 = vadd.f32 %v1679, %v1680
      %v1683 = vrot.slane %v1672, 4
      %v1685 = vadd.f32 %v1682, %v1683
      %v1686 = vrot.slane %v1672, 5
      %v1688 = vadd.f32 %v1685, %v1686
      %v1689 = vrot.slane %v1672, 6
      %v1691 = vadd.f32 %v1688, %v1689
      %v1692 = vrot.slane %v1672, 7
      %v1694 = vadd.f32 %v1691, %v1692
      %v1695 = vlog2.pop %v1694
      %v1696 = vmul.f32 %v1695, 0.6931472
      %v1697 = vadd.f32 %v1665, %v1696
      %v1698 = vsel %vm1642, %v1697, %v1406
      %v1699 = vadd.f32 %v1639, %v398
      %v1701 = vrot.slane %v1699, 7
      %vm1703 = vcmp.gt.f32.partialorder %v1699, %v1701
      %v1704 = vsel %vm1703, %v1699, %v1701
      %v1705 = vsel %vm1703, 1, 0
      %v1707 = vrot.slane %v1704, 7
      %vm1709 = vcmp.gt.f32.partialorder %v1699, %v1707
      %v1710 = vsel %vm1709, %v1699, %v1707
      %v1711 = vrot.slane %v1705, 7
      %v1712 = vsel %vm1709, 2, %v1711
      %v1714 = vrot.slane %v1710, 7
      %vm1716 = vcmp.gt.f32.partialorder %v1699, %v1714
      %v1717 = vsel %vm1716, %v1699, %v1714
      %v1718 = vrot.slane %v1712, 7
      %v1719 = vsel %vm1716, 3, %v1718
      %v1721 = vrot.slane %v1717, 7
      %vm1723 = vcmp.gt.f32.partialorder %v1699, %v1721
      %v1724 = vsel %vm1723, %v1699, %v1721
      %v1725 = vrot.slane %v1719, 7
      %v1726 = vsel %vm1723, 4, %v1725
      %v1728 = vrot.slane %v1724, 7
      %vm1730 = vcmp.gt.f32.partialorder %v1699, %v1728
      %v1731 = vsel %vm1730, %v1699, %v1728
      %v1732 = vrot.slane %v1726, 7
      %v1733 = vsel %vm1730, 5, %v1732
      %v1735 = vrot.slane %v1731, 7
      %vm1737 = vcmp.gt.f32.partialorder %v1699, %v1735
      %v1738 = vsel %vm1737, %v1699, %v1735
      %v1739 = vrot.slane %v1733, 7
      %v1740 = vsel %vm1737, 6, %v1739
      %v1742 = vrot.slane %v1738, 7
      %vm1744 = vcmp.gt.f32.partialorder %v1699, %v1742
      %v1745 = vsel %vm1744, %v1699, %v1742
      %v1746 = vrot.slane %v1740, 7
      %v1747 = vsel %vm1744, 7, %v1746
      %v1749 = vcombine.high %v1745, %v1745
      %v1751 = vunpack.c.l.s4 1966171168
      %v1752 = vunpack.c.0.s8 %v1751
      %v1753 = vlaneseq
      %v1754 = vshrl.u32 %v1753, 7
      %v1755 = vsub.s32 %v1752, %v1754
      %v1756 = vrot.slane %v1749, %v1755
      %v1757 = vcombine.high %v1756, %v1756
      %v1759 = vunpack.c.l.s4 1966171168
      %v1760 = vunpack.c.0.s8 %v1759
      %v1761 = vlaneseq
      %v1762 = vshrl.u32 %v1761, 7
      %v1763 = vsub.s32 %v1760, %v1762
      %v1764 = vrot.slane %v1757, %v1763
      %v1765 = vcombine.high %v1764, %v1764
      %v1767 = vsel %vm1642, %v1765, %v1475
      %v1768 = vcombine.high %v1747, %v1747
      %v1770 = vunpack.c.l.s4 1966171168
      %v1771 = vunpack.c.0.s8 %v1770
      %v1772 = vlaneseq
      %v1773 = vshrl.u32 %v1772, 7
      %v1774 = vsub.s32 %v1771, %v1773
      %v1775 = vrot.slane %v1768, %v1774
      %v1776 = vcombine.high %v1775, %v1775
      %v1778 = vunpack.c.l.s4 1966171168
      %v1779 = vunpack.c.0.s8 %v1778
      %v1780 = vlaneseq
      %v1781 = vshrl.u32 %v1780, 7
      %v1782 = vsub.s32 %v1779, %v1781
      %v1783 = vrot.slane %v1776, %v1782
      %v1784 = vcombine.high %v1783, %v1783
      %v1785 = vsel %vm1642, %v1784, %v1493
      %s1786 = scalar_lea.vmem %s356, 32
      %v1787 = vld [vmem:[%s1786] sm:$0xff]
      %v1789 = vrot.slane %v1787, 1
      %v1791 = vmax.f32 %v1787, %v1789
      %v1792 = vrot.slane %v1787, 2
      %v1794 = vmax.f32 %v1791, %v1792
      %v1795 = vrot.slane %v1787, 3
      %v1797 = vmax.f32 %v1794, %v1795
      %v1798 = vrot.slane %v1787, 4
      %v1800 = vmax.f32 %v1797, %v1798
      %v1801 = vrot.slane %v1787, 5
      %v1803 = vmax.f32 %v1800, %v1801
      %v1804 = vrot.slane %v1787, 6
      %v1806 = vmax.f32 %v1803, %v1804
      %v1807 = vrot.slane %v1787, 7
      %v1809 = vmax.f32 %v1806, %v1807
      %v1810 = vlaneseq
      %v1811 = vshrl.u32 %v1810, 7
      %v1812 = vsub.s32 0, %v1811
      %v1813 = vrot.slane %v1809, %v1812
      %v1814 = vsub.f32 %v1787, %v1813
      %v1815 = vmul.f32 %v1814, 1.442695
      %v1816 = vpow.pop %v1815
      %v1817 = vlaneseq
      %v1818 = vshrl.u32 %v1817, 7
      %v1819 = vsub.s32 0, %v1818
      %v1820 = vrot.slane %v1816, %v1819
      %v1821 = vmul.f32 %v405, %v1820
      %v1822 = vlaneseq
      %v1823 = vshrl.u32 %v1822, 7
      %v1824 = vsub.s32 1, %v1823
      %v1825 = vrot.slane %v1816, %v1824
      %v1826 = vmul.f32 %v409, %v1825
      %v1827 = vadd.f32 %v1821, %v1826
      %v1828 = vlaneseq
      %v1829 = vshrl.u32 %v1828, 7
      %v1830 = vsub.s32 2, %v1829
      %v1831 = vrot.slane %v1816, %v1830
      %v1832 = vmul.f32 %v413, %v1831
      %v1833 = vadd.f32 %v1827, %v1832
      %v1834 = vlaneseq
      %v1835 = vshrl.u32 %v1834, 7
      %v1836 = vsub.s32 3, %v1835
      %v1837 = vrot.slane %v1816, %v1836
      %v1838 = vmul.f32 %v417, %v1837
      %v1839 = vadd.f32 %v1833, %v1838
      %v1840 = vlaneseq
      %v1841 = vshrl.u32 %v1840, 7
      %v1842 = vsub.s32 4, %v1841
      %v1843 = vrot.slane %v1816, %v1842
      %v1844 = vmul.f32 %v421, %v1843
      %v1845 = vadd.f32 %v1839, %v1844
      %v1846 = vlaneseq
      %v1847 = vshrl.u32 %v1846, 7
      %v1848 = vsub.s32 5, %v1847
      %v1849 = vrot.slane %v1816, %v1848
      %v1850 = vmul.f32 %v425, %v1849
      %v1851 = vadd.f32 %v1845, %v1850
      %v1852 = vlaneseq
      %v1853 = vshrl.u32 %v1852, 7
      %v1854 = vsub.s32 6, %v1853
      %v1855 = vrot.slane %v1816, %v1854
      %v1856 = vmul.f32 %v429, %v1855
      %v1857 = vadd.f32 %v1851, %v1856
      %v1858 = vlaneseq
      %v1859 = vshrl.u32 %v1858, 7
      %v1860 = vsub.s32 7, %v1859
      %v1861 = vrot.slane %v1816, %v1860
      %v1862 = vmul.f32 %v433, %v1861
      %v1863 = vadd.f32 %v1857, %v1862
      %v1864 = vadd.f32 %v1575, %v1813
      %v1865 = vlog2.pop %v1863
      %v1866 = vmul.f32 %v1865, 0.6931472
      %v1867 = vadd.f32 %v1864, %v1866
      %v1868 = vlaneseq
      %v1869 = vshrl.u32 %v1868, 7
      %v1870 = vsub.s32 0, %v1869
      %v1871 = vrot.slane %v1639, %v1870
      %v1872 = vadd.f32 %v438, %v1871
      %v1873 = vlaneseq
      %v1874 = vshrl.u32 %v1873, 7
      %v1875 = vsub.s32 1, %v1874
      %v1876 = vrot.slane %v1639, %v1875
      %v1877 = vadd.f32 %v442, %v1876
      %vm1878 = vcmp.gt.f32.partialorder %v1877, %v1872
      %v1879 = vsel %vm1878, %v1877, %v1872
      %v1880 = vsel %vm1878, 1, 0
      %v1881 = vlaneseq
      %v1882 = vshrl.u32 %v1881, 7
      %v1883 = vsub.s32 2, %v1882
      %v1884 = vrot.slane %v1639, %v1883
      %v1885 = vadd.f32 %v446, %v1884
      %vm1886 = vcmp.gt.f32.partialorder %v1885, %v1879
      %v1887 = vsel %vm1886, %v1885, %v1879
      %v1888 = vsel %vm1886, 2, %v1880
      %v1889 = vlaneseq
      %v1890 = vshrl.u32 %v1889, 7
      %v1891 = vsub.s32 3, %v1890
      %v1892 = vrot.slane %v1639, %v1891
      %v1893 = vadd.f32 %v450, %v1892
      %vm1894 = vcmp.gt.f32.partialorder %v1893, %v1887
      %v1895 = vsel %vm1894, %v1893, %v1887
      %v1896 = vsel %vm1894, 3, %v1888
      %v1897 = vlaneseq
      %v1898 = vshrl.u32 %v1897, 7
      %v1899 = vsub.s32 4, %v1898
      %v1900 = vrot.slane %v1639, %v1899
      %v1901 = vadd.f32 %v454, %v1900
      %vm1902 = vcmp.gt.f32.partialorder %v1901, %v1895
      %v1903 = vsel %vm1902, %v1901, %v1895
      %v1904 = vsel %vm1902, 4, %v1896
      %v1905 = vlaneseq
      %v1906 = vshrl.u32 %v1905, 7
      %v1907 = vsub.s32 5, %v1906
      %v1908 = vrot.slane %v1639, %v1907
      %v1909 = vadd.f32 %v458, %v1908
      %vm1910 = vcmp.gt.f32.partialorder %v1909, %v1903
      %v1911 = vsel %vm1910, %v1909, %v1903
      %v1912 = vsel %vm1910, 5, %v1904
      %v1913 = vlaneseq
      %v1914 = vshrl.u32 %v1913, 7
      %v1915 = vsub.s32 6, %v1914
      %v1916 = vrot.slane %v1639, %v1915
      %v1917 = vadd.f32 %v462, %v1916
      %vm1918 = vcmp.gt.f32.partialorder %v1917, %v1911
      %v1919 = vsel %vm1918, %v1917, %v1911
      %v1920 = vsel %vm1918, 6, %v1912
      %v1921 = vlaneseq
      %v1922 = vshrl.u32 %v1921, 7
      %v1923 = vsub.s32 7, %v1922
      %v1924 = vrot.slane %v1639, %v1923
      %v1925 = vadd.f32 %v466, %v1924
      %vm1926 = vcmp.gt.f32.partialorder %v1925, %v1919
      %v1927 = vsel %vm1926, %v1925, %v1919
      %v1928 = vsel %vm1926, 7, %v1920
      %s1929 = scalar_lea.vmem %s377, 32
      %1930 = vst [vmem:[%s1929] sm:$0xff] %v1928
      %v1931 = vadd.f32 %v1927, %v1787
      %s1932 = sadd.s32 %s468, 6
      %v1933 = vstv %s1932
      %vm1934 = vcmp.eq.s32.totalorder %v393, %v1933
      %v1935 = vadd.f32 %v1867, %v398
      %v1937 = vrot.slane %v1935, 1
      %v1939 = vmax.f32 %v1935, %v1937
      %v1940 = vrot.slane %v1935, 2
      %v1942 = vmax.f32 %v1939, %v1940
      %v1943 = vrot.slane %v1935, 3
      %v1945 = vmax.f32 %v1942, %v1943
      %v1946 = vrot.slane %v1935, 4
      %v1948 = vmax.f32 %v1945, %v1946
      %v1949 = vrot.slane %v1935, 5
      %v1951 = vmax.f32 %v1948, %v1949
      %v1952 = vrot.slane %v1935, 6
      %v1954 = vmax.f32 %v1951, %v1952
      %v1955 = vrot.slane %v1935, 7
      %v1957 = vmax.f32 %v1954, %v1955
      %v1958 = vlaneseq
      %v1959 = vshrl.u32 %v1958, 7
      %v1960 = vsub.s32 0, %v1959
      %v1961 = vrot.slane %v1957, %v1960
      %v1962 = vsub.f32 %v1935, %v1961
      %v1963 = vmul.f32 %v1962, 1.442695
      %v1964 = vpow.pop %v1963
      %v1966 = vrot.slane %v1964, 1
      %v1968 = vadd.f32 %v1964, %v1966
      %v1969 = vrot.slane %v1964, 2
      %v1971 = vadd.f32 %v1968, %v1969
      %v1972 = vrot.slane %v1964, 3
      %v1974 = vadd.f32 %v1971, %v1972
      %v1975 = vrot.slane %v1964, 4
      %v1977 = vadd.f32 %v1974, %v1975
      %v1978 = vrot.slane %v1964, 5
      %v1980 = vadd.f32 %v1977, %v1978
      %v1981 = vrot.slane %v1964, 6
      %v1983 = vadd.f32 %v1980, %v1981
      %v1984 = vrot.slane %v1964, 7
      %v1986 = vadd.f32 %v1983, %v1984
      %v1987 = vlog2.pop %v1986
      %v1988 = vmul.f32 %v1987, 0.6931472
      %v1989 = vadd.f32 %v1957, %v1988
      %v1990 = vsel %vm1934, %v1989, %v1698
      %v1991 = vadd.f32 %v1931, %v398
      %v1993 = vrot.slane %v1991, 7
      %vm1995 = vcmp.gt.f32.partialorder %v1991, %v1993
      %v1996 = vsel %vm1995, %v1991, %v1993
      %v1997 = vsel %vm1995, 1, 0
      %v1999 = vrot.slane %v1996, 7
      %vm2001 = vcmp.gt.f32.partialorder %v1991, %v1999
      %v2002 = vsel %vm2001, %v1991, %v1999
      %v2003 = vrot.slane %v1997, 7
      %v2004 = vsel %vm2001, 2, %v2003
      %v2006 = vrot.slane %v2002, 7
      %vm2008 = vcmp.gt.f32.partialorder %v1991, %v2006
      %v2009 = vsel %vm2008, %v1991, %v2006
      %v2010 = vrot.slane %v2004, 7
      %v2011 = vsel %vm2008, 3, %v2010
      %v2013 = vrot.slane %v2009, 7
      %vm2015 = vcmp.gt.f32.partialorder %v1991, %v2013
      %v2016 = vsel %vm2015, %v1991, %v2013
      %v2017 = vrot.slane %v2011, 7
      %v2018 = vsel %vm2015, 4, %v2017
      %v2020 = vrot.slane %v2016, 7
      %vm2022 = vcmp.gt.f32.partialorder %v1991, %v2020
      %v2023 = vsel %vm2022, %v1991, %v2020
      %v2024 = vrot.slane %v2018, 7
      %v2025 = vsel %vm2022, 5, %v2024
      %v2027 = vrot.slane %v2023, 7
      %vm2029 = vcmp.gt.f32.partialorder %v1991, %v2027
      %v2030 = vsel %vm2029, %v1991, %v2027
      %v2031 = vrot.slane %v2025, 7
      %v2032 = vsel %vm2029, 6, %v2031
      %v2034 = vrot.slane %v2030, 7
      %vm2036 = vcmp.gt.f32.partialorder %v1991, %v2034
      %v2037 = vsel %vm2036, %v1991, %v2034
      %v2038 = vrot.slane %v2032, 7
      %v2039 = vsel %vm2036, 7, %v2038
      %v2041 = vcombine.high %v2037, %v2037
      %v2043 = vunpack.c.l.s4 1966171168
      %v2044 = vunpack.c.0.s8 %v2043
      %v2045 = vlaneseq
      %v2046 = vshrl.u32 %v2045, 7
      %v2047 = vsub.s32 %v2044, %v2046
      %v2048 = vrot.slane %v2041, %v2047
      %v2049 = vcombine.high %v2048, %v2048
      %v2051 = vunpack.c.l.s4 1966171168
      %v2052 = vunpack.c.0.s8 %v2051
      %v2053 = vlaneseq
      %v2054 = vshrl.u32 %v2053, 7
      %v2055 = vsub.s32 %v2052, %v2054
      %v2056 = vrot.slane %v2049, %v2055
      %v2057 = vcombine.high %v2056, %v2056
      %v2059 = vsel %vm1934, %v2057, %v1767
      %v2060 = vcombine.high %v2039, %v2039
      %v2062 = vunpack.c.l.s4 1966171168
      %v2063 = vunpack.c.0.s8 %v2062
      %v2064 = vlaneseq
      %v2065 = vshrl.u32 %v2064, 7
      %v2066 = vsub.s32 %v2063, %v2065
      %v2067 = vrot.slane %v2060, %v2066
      %v2068 = vcombine.high %v2067, %v2067
      %v2070 = vunpack.c.l.s4 1966171168
      %v2071 = vunpack.c.0.s8 %v2070
      %v2072 = vlaneseq
      %v2073 = vshrl.u32 %v2072, 7
      %v2074 = vsub.s32 %v2071, %v2073
      %v2075 = vrot.slane %v2068, %v2074
      %v2076 = vcombine.high %v2075, %v2075
      %v2077 = vsel %vm1934, %v2076, %v1785
      %s2078 = scalar_lea.vmem %s356, 40
      %v2079 = vld [vmem:[%s2078] sm:$0xff]
      %v2081 = vrot.slane %v2079, 1
      %v2083 = vmax.f32 %v2079, %v2081
      %v2084 = vrot.slane %v2079, 2
      %v2086 = vmax.f32 %v2083, %v2084
      %v2087 = vrot.slane %v2079, 3
      %v2089 = vmax.f32 %v2086, %v2087
      %v2090 = vrot.slane %v2079, 4
      %v2092 = vmax.f32 %v2089, %v2090
      %v2093 = vrot.slane %v2079, 5
      %v2095 = vmax.f32 %v2092, %v2093
      %v2096 = vrot.slane %v2079, 6
      %v2098 = vmax.f32 %v2095, %v2096
      %v2099 = vrot.slane %v2079, 7
      %v2101 = vmax.f32 %v2098, %v2099
      %v2102 = vlaneseq
      %v2103 = vshrl.u32 %v2102, 7
      %v2104 = vsub.s32 0, %v2103
      %v2105 = vrot.slane %v2101, %v2104
      %v2106 = vsub.f32 %v2079, %v2105
      %v2107 = vmul.f32 %v2106, 1.442695
      %v2108 = vpow.pop %v2107
      %v2109 = vlaneseq
      %v2110 = vshrl.u32 %v2109, 7
      %v2111 = vsub.s32 0, %v2110
      %v2112 = vrot.slane %v2108, %v2111
      %v2113 = vmul.f32 %v405, %v2112
      %v2114 = vlaneseq
      %v2115 = vshrl.u32 %v2114, 7
      %v2116 = vsub.s32 1, %v2115
      %v2117 = vrot.slane %v2108, %v2116
      %v2118 = vmul.f32 %v409, %v2117
      %v2119 = vadd.f32 %v2113, %v2118
      %v2120 = vlaneseq
      %v2121 = vshrl.u32 %v2120, 7
      %v2122 = vsub.s32 2, %v2121
      %v2123 = vrot.slane %v2108, %v2122
      %v2124 = vmul.f32 %v413, %v2123
      %v2125 = vadd.f32 %v2119, %v2124
      %v2126 = vlaneseq
      %v2127 = vshrl.u32 %v2126, 7
      %v2128 = vsub.s32 3, %v2127
      %v2129 = vrot.slane %v2108, %v2128
      %v2130 = vmul.f32 %v417, %v2129
      %v2131 = vadd.f32 %v2125, %v2130
      %v2132 = vlaneseq
      %v2133 = vshrl.u32 %v2132, 7
      %v2134 = vsub.s32 4, %v2133
      %v2135 = vrot.slane %v2108, %v2134
      %v2136 = vmul.f32 %v421, %v2135
      %v2137 = vadd.f32 %v2131, %v2136
      %v2138 = vlaneseq
      %v2139 = vshrl.u32 %v2138, 7
      %v2140 = vsub.s32 5, %v2139
      %v2141 = vrot.slane %v2108, %v2140
      %v2142 = vmul.f32 %v425, %v2141
      %v2143 = vadd.f32 %v2137, %v2142
      %v2144 = vlaneseq
      %v2145 = vshrl.u32 %v2144, 7
      %v2146 = vsub.s32 6, %v2145
      %v2147 = vrot.slane %v2108, %v2146
      %v2148 = vmul.f32 %v429, %v2147
      %v2149 = vadd.f32 %v2143, %v2148
      %v2150 = vlaneseq
      %v2151 = vshrl.u32 %v2150, 7
      %v2152 = vsub.s32 7, %v2151
      %v2153 = vrot.slane %v2108, %v2152
      %v2154 = vmul.f32 %v433, %v2153
      %v2155 = vadd.f32 %v2149, %v2154
      %v2156 = vadd.f32 %v1867, %v2105
      %v2157 = vlog2.pop %v2155
      %v2158 = vmul.f32 %v2157, 0.6931472
      %v2159 = vadd.f32 %v2156, %v2158
      %v2160 = vlaneseq
      %v2161 = vshrl.u32 %v2160, 7
      %v2162 = vsub.s32 0, %v2161
      %v2163 = vrot.slane %v1931, %v2162
      %v2164 = vadd.f32 %v438, %v2163
      %v2165 = vlaneseq
      %v2166 = vshrl.u32 %v2165, 7
      %v2167 = vsub.s32 1, %v2166
      %v2168 = vrot.slane %v1931, %v2167
      %v2169 = vadd.f32 %v442, %v2168
      %vm2170 = vcmp.gt.f32.partialorder %v2169, %v2164
      %v2171 = vsel %vm2170, %v2169, %v2164
      %v2172 = vsel %vm2170, 1, 0
      %v2173 = vlaneseq
      %v2174 = vshrl.u32 %v2173, 7
      %v2175 = vsub.s32 2, %v2174
      %v2176 = vrot.slane %v1931, %v2175
      %v2177 = vadd.f32 %v446, %v2176
      %vm2178 = vcmp.gt.f32.partialorder %v2177, %v2171
      %v2179 = vsel %vm2178, %v2177, %v2171
      %v2180 = vsel %vm2178, 2, %v2172
      %v2181 = vlaneseq
      %v2182 = vshrl.u32 %v2181, 7
      %v2183 = vsub.s32 3, %v2182
      %v2184 = vrot.slane %v1931, %v2183
      %v2185 = vadd.f32 %v450, %v2184
      %vm2186 = vcmp.gt.f32.partialorder %v2185, %v2179
      %v2187 = vsel %vm2186, %v2185, %v2179
      %v2188 = vsel %vm2186, 3, %v2180
      %v2189 = vlaneseq
      %v2190 = vshrl.u32 %v2189, 7
      %v2191 = vsub.s32 4, %v2190
      %v2192 = vrot.slane %v1931, %v2191
      %v2193 = vadd.f32 %v454, %v2192
      %vm2194 = vcmp.gt.f32.partialorder %v2193, %v2187
      %v2195 = vsel %vm2194, %v2193, %v2187
      %v2196 = vsel %vm2194, 4, %v2188
      %v2197 = vlaneseq
      %v2198 = vshrl.u32 %v2197, 7
      %v2199 = vsub.s32 5, %v2198
      %v2200 = vrot.slane %v1931, %v2199
      %v2201 = vadd.f32 %v458, %v2200
      %vm2202 = vcmp.gt.f32.partialorder %v2201, %v2195
      %v2203 = vsel %vm2202, %v2201, %v2195
      %v2204 = vsel %vm2202, 5, %v2196
      %v2205 = vlaneseq
      %v2206 = vshrl.u32 %v2205, 7
      %v2207 = vsub.s32 6, %v2206
      %v2208 = vrot.slane %v1931, %v2207
      %v2209 = vadd.f32 %v462, %v2208
      %vm2210 = vcmp.gt.f32.partialorder %v2209, %v2203
      %v2211 = vsel %vm2210, %v2209, %v2203
      %v2212 = vsel %vm2210, 6, %v2204
      %v2213 = vlaneseq
      %v2214 = vshrl.u32 %v2213, 7
      %v2215 = vsub.s32 7, %v2214
      %v2216 = vrot.slane %v1931, %v2215
      %v2217 = vadd.f32 %v466, %v2216
      %vm2218 = vcmp.gt.f32.partialorder %v2217, %v2211
      %v2219 = vsel %vm2218, %v2217, %v2211
      %v2220 = vsel %vm2218, 7, %v2212
      %s2221 = scalar_lea.vmem %s377, 40
      %2222 = vst [vmem:[%s2221] sm:$0xff] %v2220
      %v2223 = vadd.f32 %v2219, %v2079
      %s2224 = sadd.s32 %s468, 7
      %v2225 = vstv %s2224
      %vm2226 = vcmp.eq.s32.totalorder %v393, %v2225
      %v2227 = vadd.f32 %v2159, %v398
      %v2229 = vrot.slane %v2227, 1
      %v2231 = vmax.f32 %v2227, %v2229
      %v2232 = vrot.slane %v2227, 2
      %v2234 = vmax.f32 %v2231, %v2232
      %v2235 = vrot.slane %v2227, 3
      %v2237 = vmax.f32 %v2234, %v2235
      %v2238 = vrot.slane %v2227, 4
      %v2240 = vmax.f32 %v2237, %v2238
      %v2241 = vrot.slane %v2227, 5
      %v2243 = vmax.f32 %v2240, %v2241
      %v2244 = vrot.slane %v2227, 6
      %v2246 = vmax.f32 %v2243, %v2244
      %v2247 = vrot.slane %v2227, 7
      %v2249 = vmax.f32 %v2246, %v2247
      %v2250 = vlaneseq
      %v2251 = vshrl.u32 %v2250, 7
      %v2252 = vsub.s32 0, %v2251
      %v2253 = vrot.slane %v2249, %v2252
      %v2254 = vsub.f32 %v2227, %v2253
      %v2255 = vmul.f32 %v2254, 1.442695
      %v2256 = vpow.pop %v2255
      %v2258 = vrot.slane %v2256, 1
      %v2260 = vadd.f32 %v2256, %v2258
      %v2261 = vrot.slane %v2256, 2
      %v2263 = vadd.f32 %v2260, %v2261
      %v2264 = vrot.slane %v2256, 3
      %v2266 = vadd.f32 %v2263, %v2264
      %v2267 = vrot.slane %v2256, 4
      %v2269 = vadd.f32 %v2266, %v2267
      %v2270 = vrot.slane %v2256, 5
      %v2272 = vadd.f32 %v2269, %v2270
      %v2273 = vrot.slane %v2256, 6
      %v2275 = vadd.f32 %v2272, %v2273
      %v2276 = vrot.slane %v2256, 7
      %v2278 = vadd.f32 %v2275, %v2276
      %v2279 = vlog2.pop %v2278
      %v2280 = vmul.f32 %v2279, 0.6931472
      %v2281 = vadd.f32 %v2249, %v2280
      %v2282 = vsel %vm2226, %v2281, %v1990
      %v2283 = vadd.f32 %v2223, %v398
      %v2285 = vrot.slane %v2283, 7
      %vm2287 = vcmp.gt.f32.partialorder %v2283, %v2285
      %v2288 = vsel %vm2287, %v2283, %v2285
      %v2289 = vsel %vm2287, 1, 0
      %v2291 = vrot.slane %v2288, 7
      %vm2293 = vcmp.gt.f32.partialorder %v2283, %v2291
      %v2294 = vsel %vm2293, %v2283, %v2291
      %v2295 = vrot.slane %v2289, 7
      %v2296 = vsel %vm2293, 2, %v2295
      %v2298 = vrot.slane %v2294, 7
      %vm2300 = vcmp.gt.f32.partialorder %v2283, %v2298
      %v2301 = vsel %vm2300, %v2283, %v2298
      %v2302 = vrot.slane %v2296, 7
      %v2303 = vsel %vm2300, 3, %v2302
      %v2305 = vrot.slane %v2301, 7
      %vm2307 = vcmp.gt.f32.partialorder %v2283, %v2305
      %v2308 = vsel %vm2307, %v2283, %v2305
      %v2309 = vrot.slane %v2303, 7
      %v2310 = vsel %vm2307, 4, %v2309
      %v2312 = vrot.slane %v2308, 7
      %vm2314 = vcmp.gt.f32.partialorder %v2283, %v2312
      %v2315 = vsel %vm2314, %v2283, %v2312
      %v2316 = vrot.slane %v2310, 7
      %v2317 = vsel %vm2314, 5, %v2316
      %v2319 = vrot.slane %v2315, 7
      %vm2321 = vcmp.gt.f32.partialorder %v2283, %v2319
      %v2322 = vsel %vm2321, %v2283, %v2319
      %v2323 = vrot.slane %v2317, 7
      %v2324 = vsel %vm2321, 6, %v2323
      %v2326 = vrot.slane %v2322, 7
      %vm2328 = vcmp.gt.f32.partialorder %v2283, %v2326
      %v2329 = vsel %vm2328, %v2283, %v2326
      %v2330 = vrot.slane %v2324, 7
      %v2331 = vsel %vm2328, 7, %v2330
      %v2333 = vcombine.high %v2329, %v2329
      %v2335 = vunpack.c.l.s4 1966171168
      %v2336 = vunpack.c.0.s8 %v2335
      %v2337 = vlaneseq
      %v2338 = vshrl.u32 %v2337, 7
      %v2339 = vsub.s32 %v2336, %v2338
      %v2340 = vrot.slane %v2333, %v2339
      %v2341 = vcombine.high %v2340, %v2340
      %v2343 = vunpack.c.l.s4 1966171168
      %v2344 = vunpack.c.0.s8 %v2343
      %v2345 = vlaneseq
      %v2346 = vshrl.u32 %v2345, 7
      %v2347 = vsub.s32 %v2344, %v2346
      %v2348 = vrot.slane %v2341, %v2347
      %v2349 = vcombine.high %v2348, %v2348
      %v2351 = vsel %vm2226, %v2349, %v2059
      %v2352 = vcombine.high %v2331, %v2331
      %v2354 = vunpack.c.l.s4 1966171168
      %v2355 = vunpack.c.0.s8 %v2354
      %v2356 = vlaneseq
      %v2357 = vshrl.u32 %v2356, 7
      %v2358 = vsub.s32 %v2355, %v2357
      %v2359 = vrot.slane %v2352, %v2358
      %v2360 = vcombine.high %v2359, %v2359
      %v2362 = vunpack.c.l.s4 1966171168
      %v2363 = vunpack.c.0.s8 %v2362
      %v2364 = vlaneseq
      %v2365 = vshrl.u32 %v2364, 7
      %v2366 = vsub.s32 %v2363, %v2365
      %v2367 = vrot.slane %v2360, %v2366
      %v2368 = vcombine.high %v2367, %v2367
      %v2369 = vsel %vm2226, %v2368, %v2077
      %s2370 = scalar_lea.vmem %s356, 48
      %v2371 = vld [vmem:[%s2370] sm:$0xff]
      %v2373 = vrot.slane %v2371, 1
      %v2375 = vmax.f32 %v2371, %v2373
      %v2376 = vrot.slane %v2371, 2
      %v2378 = vmax.f32 %v2375, %v2376
      %v2379 = vrot.slane %v2371, 3
      %v2381 = vmax.f32 %v2378, %v2379
      %v2382 = vrot.slane %v2371, 4
      %v2384 = vmax.f32 %v2381, %v2382
      %v2385 = vrot.slane %v2371, 5
      %v2387 = vmax.f32 %v2384, %v2385
      %v2388 = vrot.slane %v2371, 6
      %v2390 = vmax.f32 %v2387, %v2388
      %v2391 = vrot.slane %v2371, 7
      %v2393 = vmax.f32 %v2390, %v2391
      %v2394 = vlaneseq
      %v2395 = vshrl.u32 %v2394, 7
      %v2396 = vsub.s32 0, %v2395
      %v2397 = vrot.slane %v2393, %v2396
      %v2398 = vsub.f32 %v2371, %v2397
      %v2399 = vmul.f32 %v2398, 1.442695
      %v2400 = vpow.pop %v2399
      %v2401 = vlaneseq
      %v2402 = vshrl.u32 %v2401, 7
      %v2403 = vsub.s32 0, %v2402
      %v2404 = vrot.slane %v2400, %v2403
      %v2405 = vmul.f32 %v405, %v2404
      %v2406 = vlaneseq
      %v2407 = vshrl.u32 %v2406, 7
      %v2408 = vsub.s32 1, %v2407
      %v2409 = vrot.slane %v2400, %v2408
      %v2410 = vmul.f32 %v409, %v2409
      %v2411 = vadd.f32 %v2405, %v2410
      %v2412 = vlaneseq
      %v2413 = vshrl.u32 %v2412, 7
      %v2414 = vsub.s32 2, %v2413
      %v2415 = vrot.slane %v2400, %v2414
      %v2416 = vmul.f32 %v413, %v2415
      %v2417 = vadd.f32 %v2411, %v2416
      %v2418 = vlaneseq
      %v2419 = vshrl.u32 %v2418, 7
      %v2420 = vsub.s32 3, %v2419
      %v2421 = vrot.slane %v2400, %v2420
      %v2422 = vmul.f32 %v417, %v2421
      %v2423 = vadd.f32 %v2417, %v2422
      %v2424 = vlaneseq
      %v2425 = vshrl.u32 %v2424, 7
      %v2426 = vsub.s32 4, %v2425
      %v2427 = vrot.slane %v2400, %v2426
      %v2428 = vmul.f32 %v421, %v2427
      %v2429 = vadd.f32 %v2423, %v2428
      %v2430 = vlaneseq
      %v2431 = vshrl.u32 %v2430, 7
      %v2432 = vsub.s32 5, %v2431
      %v2433 = vrot.slane %v2400, %v2432
      %v2434 = vmul.f32 %v425, %v2433
      %v2435 = vadd.f32 %v2429, %v2434
      %v2436 = vlaneseq
      %v2437 = vshrl.u32 %v2436, 7
      %v2438 = vsub.s32 6, %v2437
      %v2439 = vrot.slane %v2400, %v2438
      %v2440 = vmul.f32 %v429, %v2439
      %v2441 = vadd.f32 %v2435, %v2440
      %v2442 = vlaneseq
      %v2443 = vshrl.u32 %v2442, 7
      %v2444 = vsub.s32 7, %v2443
      %v2445 = vrot.slane %v2400, %v2444
      %v2446 = vmul.f32 %v433, %v2445
      %v2447 = vadd.f32 %v2441, %v2446
      %v2448 = vadd.f32 %v2159, %v2397
      %v2449 = vlog2.pop %v2447
      %v2450 = vmul.f32 %v2449, 0.6931472
      %v2451 = vadd.f32 %v2448, %v2450
      %v2452 = vlaneseq
      %v2453 = vshrl.u32 %v2452, 7
      %v2454 = vsub.s32 0, %v2453
      %v2455 = vrot.slane %v2223, %v2454
      %v2456 = vadd.f32 %v438, %v2455
      %v2457 = vlaneseq
      %v2458 = vshrl.u32 %v2457, 7
      %v2459 = vsub.s32 1, %v2458
      %v2460 = vrot.slane %v2223, %v2459
      %v2461 = vadd.f32 %v442, %v2460
      %vm2462 = vcmp.gt.f32.partialorder %v2461, %v2456
      %v2463 = vsel %vm2462, %v2461, %v2456
      %v2464 = vsel %vm2462, 1, 0
      %v2465 = vlaneseq
      %v2466 = vshrl.u32 %v2465, 7
      %v2467 = vsub.s32 2, %v2466
      %v2468 = vrot.slane %v2223, %v2467
      %v2469 = vadd.f32 %v446, %v2468
      %vm2470 = vcmp.gt.f32.partialorder %v2469, %v2463
      %v2471 = vsel %vm2470, %v2469, %v2463
      %v2472 = vsel %vm2470, 2, %v2464
      %v2473 = vlaneseq
      %v2474 = vshrl.u32 %v2473, 7
      %v2475 = vsub.s32 3, %v2474
      %v2476 = vrot.slane %v2223, %v2475
      %v2477 = vadd.f32 %v450, %v2476
      %vm2478 = vcmp.gt.f32.partialorder %v2477, %v2471
      %v2479 = vsel %vm2478, %v2477, %v2471
      %v2480 = vsel %vm2478, 3, %v2472
      %v2481 = vlaneseq
      %v2482 = vshrl.u32 %v2481, 7
      %v2483 = vsub.s32 4, %v2482
      %v2484 = vrot.slane %v2223, %v2483
      %v2485 = vadd.f32 %v454, %v2484
      %vm2486 = vcmp.gt.f32.partialorder %v2485, %v2479
      %v2487 = vsel %vm2486, %v2485, %v2479
      %v2488 = vsel %vm2486, 4, %v2480
      %v2489 = vlaneseq
      %v2490 = vshrl.u32 %v2489, 7
      %v2491 = vsub.s32 5, %v2490
      %v2492 = vrot.slane %v2223, %v2491
      %v2493 = vadd.f32 %v458, %v2492
      %vm2494 = vcmp.gt.f32.partialorder %v2493, %v2487
      %v2495 = vsel %vm2494, %v2493, %v2487
      %v2496 = vsel %vm2494, 5, %v2488
      %v2497 = vlaneseq
      %v2498 = vshrl.u32 %v2497, 7
      %v2499 = vsub.s32 6, %v2498
      %v2500 = vrot.slane %v2223, %v2499
      %v2501 = vadd.f32 %v462, %v2500
      %vm2502 = vcmp.gt.f32.partialorder %v2501, %v2495
      %v2503 = vsel %vm2502, %v2501, %v2495
      %v2504 = vsel %vm2502, 6, %v2496
      %v2505 = vlaneseq
      %v2506 = vshrl.u32 %v2505, 7
      %v2507 = vsub.s32 7, %v2506
      %v2508 = vrot.slane %v2223, %v2507
      %v2509 = vadd.f32 %v466, %v2508
      %vm2510 = vcmp.gt.f32.partialorder %v2509, %v2503
      %v2511 = vsel %vm2510, %v2509, %v2503
      %v2512 = vsel %vm2510, 7, %v2504
      %s2513 = scalar_lea.vmem %s377, 48
      %2514 = vst [vmem:[%s2513] sm:$0xff] %v2512
      %v2515 = vadd.f32 %v2511, %v2371
      %s2516 = sadd.s32 %s468, 8
      %v2517 = vstv %s2516
      %vm2518 = vcmp.eq.s32.totalorder %v393, %v2517
      %v2519 = vadd.f32 %v2451, %v398
      %v2521 = vrot.slane %v2519, 1
      %v2523 = vmax.f32 %v2519, %v2521
      %v2524 = vrot.slane %v2519, 2
      %v2526 = vmax.f32 %v2523, %v2524
      %v2527 = vrot.slane %v2519, 3
      %v2529 = vmax.f32 %v2526, %v2527
      %v2530 = vrot.slane %v2519, 4
      %v2532 = vmax.f32 %v2529, %v2530
      %v2533 = vrot.slane %v2519, 5
      %v2535 = vmax.f32 %v2532, %v2533
      %v2536 = vrot.slane %v2519, 6
      %v2538 = vmax.f32 %v2535, %v2536
      %v2539 = vrot.slane %v2519, 7
      %v2541 = vmax.f32 %v2538, %v2539
      %v2542 = vlaneseq
      %v2543 = vshrl.u32 %v2542, 7
      %v2544 = vsub.s32 0, %v2543
      %v2545 = vrot.slane %v2541, %v2544
      %v2546 = vsub.f32 %v2519, %v2545
      %v2547 = vmul.f32 %v2546, 1.442695
      %v2548 = vpow.pop %v2547
      %v2550 = vrot.slane %v2548, 1
      %v2552 = vadd.f32 %v2548, %v2550
      %v2553 = vrot.slane %v2548, 2
      %v2555 = vadd.f32 %v2552, %v2553
      %v2556 = vrot.slane %v2548, 3
      %v2558 = vadd.f32 %v2555, %v2556
      %v2559 = vrot.slane %v2548, 4
      %v2561 = vadd.f32 %v2558, %v2559
      %v2562 = vrot.slane %v2548, 5
      %v2564 = vadd.f32 %v2561, %v2562
      %v2565 = vrot.slane %v2548, 6
      %v2567 = vadd.f32 %v2564, %v2565
      %v2568 = vrot.slane %v2548, 7
      %v2570 = vadd.f32 %v2567, %v2568
      %v2571 = vlog2.pop %v2570
      %v2572 = vmul.f32 %v2571, 0.6931472
      %v2573 = vadd.f32 %v2541, %v2572
      %v2574 = vsel %vm2518, %v2573, %v2282
      %v2575 = vadd.f32 %v2515, %v398
      %v2577 = vrot.slane %v2575, 7
      %vm2579 = vcmp.gt.f32.partialorder %v2575, %v2577
      %v2580 = vsel %vm2579, %v2575, %v2577
      %v2581 = vsel %vm2579, 1, 0
      %v2583 = vrot.slane %v2580, 7
      %vm2585 = vcmp.gt.f32.partialorder %v2575, %v2583
      %v2586 = vsel %vm2585, %v2575, %v2583
      %v2587 = vrot.slane %v2581, 7
      %v2588 = vsel %vm2585, 2, %v2587
      %v2590 = vrot.slane %v2586, 7
      %vm2592 = vcmp.gt.f32.partialorder %v2575, %v2590
      %v2593 = vsel %vm2592, %v2575, %v2590
      %v2594 = vrot.slane %v2588, 7
      %v2595 = vsel %vm2592, 3, %v2594
      %v2597 = vrot.slane %v2593, 7
      %vm2599 = vcmp.gt.f32.partialorder %v2575, %v2597
      %v2600 = vsel %vm2599, %v2575, %v2597
      %v2601 = vrot.slane %v2595, 7
      %v2602 = vsel %vm2599, 4, %v2601
      %v2604 = vrot.slane %v2600, 7
      %vm2606 = vcmp.gt.f32.partialorder %v2575, %v2604
      %v2607 = vsel %vm2606, %v2575, %v2604
      %v2608 = vrot.slane %v2602, 7
      %v2609 = vsel %vm2606, 5, %v2608
      %v2611 = vrot.slane %v2607, 7
      %vm2613 = vcmp.gt.f32.partialorder %v2575, %v2611
      %v2614 = vsel %vm2613, %v2575, %v2611
      %v2615 = vrot.slane %v2609, 7
      %v2616 = vsel %vm2613, 6, %v2615
      %v2618 = vrot.slane %v2614, 7
      %vm2620 = vcmp.gt.f32.partialorder %v2575, %v2618
      %v2621 = vsel %vm2620, %v2575, %v2618
      %v2622 = vrot.slane %v2616, 7
      %v2623 = vsel %vm2620, 7, %v2622
      %v2625 = vcombine.high %v2621, %v2621
      %v2627 = vunpack.c.l.s4 1966171168
      %v2628 = vunpack.c.0.s8 %v2627
      %v2629 = vlaneseq
      %v2630 = vshrl.u32 %v2629, 7
      %v2631 = vsub.s32 %v2628, %v2630
      %v2632 = vrot.slane %v2625, %v2631
      %v2633 = vcombine.high %v2632, %v2632
      %v2635 = vunpack.c.l.s4 1966171168
      %v2636 = vunpack.c.0.s8 %v2635
      %v2637 = vlaneseq
      %v2638 = vshrl.u32 %v2637, 7
      %v2639 = vsub.s32 %v2636, %v2638
      %v2640 = vrot.slane %v2633, %v2639
      %v2641 = vcombine.high %v2640, %v2640
      %v2643 = vsel %vm2518, %v2641, %v2351
      %v2644 = vcombine.high %v2623, %v2623
      %v2646 = vunpack.c.l.s4 1966171168
      %v2647 = vunpack.c.0.s8 %v2646
      %v2648 = vlaneseq
      %v2649 = vshrl.u32 %v2648, 7
      %v2650 = vsub.s32 %v2647, %v2649
      %v2651 = vrot.slane %v2644, %v2650
      %v2652 = vcombine.high %v2651, %v2651
      %v2654 = vunpack.c.l.s4 1966171168
      %v2655 = vunpack.c.0.s8 %v2654
      %v2656 = vlaneseq
      %v2657 = vshrl.u32 %v2656, 7
      %v2658 = vsub.s32 %v2655, %v2657
      %v2659 = vrot.slane %v2652, %v2658
      %v2660 = vcombine.high %v2659, %v2659
      %v2661 = vsel %vm2518, %v2660, %v2369
      %s2662 = scalar_lea.vmem %s356, 56
      %v2663 = vld [vmem:[%s2662] sm:$0xff]
      %v2665 = vrot.slane %v2663, 1
      %v2667 = vmax.f32 %v2663, %v2665
      %v2668 = vrot.slane %v2663, 2
      %v2670 = vmax.f32 %v2667, %v2668
      %v2671 = vrot.slane %v2663, 3
      %v2673 = vmax.f32 %v2670, %v2671
      %v2674 = vrot.slane %v2663, 4
      %v2676 = vmax.f32 %v2673, %v2674
      %v2677 = vrot.slane %v2663, 5
      %v2679 = vmax.f32 %v2676, %v2677
      %v2680 = vrot.slane %v2663, 6
      %v2682 = vmax.f32 %v2679, %v2680
      %v2683 = vrot.slane %v2663, 7
      %v2685 = vmax.f32 %v2682, %v2683
      %v2686 = vlaneseq
      %v2687 = vshrl.u32 %v2686, 7
      %v2688 = vsub.s32 0, %v2687
      %v2689 = vrot.slane %v2685, %v2688
      %v2690 = vsub.f32 %v2663, %v2689
      %v2691 = vmul.f32 %v2690, 1.442695
      %v2692 = vpow.pop %v2691
      %v2693 = vlaneseq
      %v2694 = vshrl.u32 %v2693, 7
      %v2695 = vsub.s32 0, %v2694
      %v2696 = vrot.slane %v2692, %v2695
      %v2697 = vmul.f32 %v405, %v2696
      %v2698 = vlaneseq
      %v2699 = vshrl.u32 %v2698, 7
      %v2700 = vsub.s32 1, %v2699
      %v2701 = vrot.slane %v2692, %v2700
      %v2702 = vmul.f32 %v409, %v2701
      %v2703 = vadd.f32 %v2697, %v2702
      %v2704 = vlaneseq
      %v2705 = vshrl.u32 %v2704, 7
      %v2706 = vsub.s32 2, %v2705
      %v2707 = vrot.slane %v2692, %v2706
      %v2708 = vmul.f32 %v413, %v2707
      %v2709 = vadd.f32 %v2703, %v2708
      %v2710 = vlaneseq
      %v2711 = vshrl.u32 %v2710, 7
      %v2712 = vsub.s32 3, %v2711
      %v2713 = vrot.slane %v2692, %v2712
      %v2714 = vmul.f32 %v417, %v2713
      %v2715 = vadd.f32 %v2709, %v2714
      %v2716 = vlaneseq
      %v2717 = vshrl.u32 %v2716, 7
      %v2718 = vsub.s32 4, %v2717
      %v2719 = vrot.slane %v2692, %v2718
      %v2720 = vmul.f32 %v421, %v2719
      %v2721 = vadd.f32 %v2715, %v2720
      %v2722 = vlaneseq
      %v2723 = vshrl.u32 %v2722, 7
      %v2724 = vsub.s32 5, %v2723
      %v2725 = vrot.slane %v2692, %v2724
      %v2726 = vmul.f32 %v425, %v2725
      %v2727 = vadd.f32 %v2721, %v2726
      %v2728 = vlaneseq
      %v2729 = vshrl.u32 %v2728, 7
      %v2730 = vsub.s32 6, %v2729
      %v2731 = vrot.slane %v2692, %v2730
      %v2732 = vmul.f32 %v429, %v2731
      %v2733 = vadd.f32 %v2727, %v2732
      %v2734 = vlaneseq
      %v2735 = vshrl.u32 %v2734, 7
      %v2736 = vsub.s32 7, %v2735
      %v2737 = vrot.slane %v2692, %v2736
      %v2738 = vmul.f32 %v433, %v2737
      %v2739 = vadd.f32 %v2733, %v2738
      %v2740 = vadd.f32 %v2451, %v2689
      %v2741 = vlog2.pop %v2739
      %v2742 = vmul.f32 %v2741, 0.6931472
      %v2743 = vadd.f32 %v2740, %v2742
      %v2744 = vlaneseq
      %v2745 = vshrl.u32 %v2744, 7
      %v2746 = vsub.s32 0, %v2745
      %v2747 = vrot.slane %v2515, %v2746
      %v2748 = vadd.f32 %v438, %v2747
      %v2749 = vlaneseq
      %v2750 = vshrl.u32 %v2749, 7
      %v2751 = vsub.s32 1, %v2750
      %v2752 = vrot.slane %v2515, %v2751
      %v2753 = vadd.f32 %v442, %v2752
      %vm2754 = vcmp.gt.f32.partialorder %v2753, %v2748
      %v2755 = vsel %vm2754, %v2753, %v2748
      %v2756 = vsel %vm2754, 1, 0
      %v2757 = vlaneseq
      %v2758 = vshrl.u32 %v2757, 7
      %v2759 = vsub.s32 2, %v2758
      %v2760 = vrot.slane %v2515, %v2759
      %v2761 = vadd.f32 %v446, %v2760
      %vm2762 = vcmp.gt.f32.partialorder %v2761, %v2755
      %v2763 = vsel %vm2762, %v2761, %v2755
      %v2764 = vsel %vm2762, 2, %v2756
      %v2765 = vlaneseq
      %v2766 = vshrl.u32 %v2765, 7
      %v2767 = vsub.s32 3, %v2766
      %v2768 = vrot.slane %v2515, %v2767
      %v2769 = vadd.f32 %v450, %v2768
      %vm2770 = vcmp.gt.f32.partialorder %v2769, %v2763
      %v2771 = vsel %vm2770, %v2769, %v2763
      %v2772 = vsel %vm2770, 3, %v2764
      %v2773 = vlaneseq
      %v2774 = vshrl.u32 %v2773, 7
      %v2775 = vsub.s32 4, %v2774
      %v2776 = vrot.slane %v2515, %v2775
      %v2777 = vadd.f32 %v454, %v2776
      %vm2778 = vcmp.gt.f32.partialorder %v2777, %v2771
      %v2779 = vsel %vm2778, %v2777, %v2771
      %v2780 = vsel %vm2778, 4, %v2772
      %v2781 = vlaneseq
      %v2782 = vshrl.u32 %v2781, 7
      %v2783 = vsub.s32 5, %v2782
      %v2784 = vrot.slane %v2515, %v2783
      %v2785 = vadd.f32 %v458, %v2784
      %vm2786 = vcmp.gt.f32.partialorder %v2785, %v2779
      %v2787 = vsel %vm2786, %v2785, %v2779
      %v2788 = vsel %vm2786, 5, %v2780
      %v2789 = vlaneseq
      %v2790 = vshrl.u32 %v2789, 7
      %v2791 = vsub.s32 6, %v2790
      %v2792 = vrot.slane %v2515, %v2791
      %v2793 = vadd.f32 %v462, %v2792
      %vm2794 = vcmp.gt.f32.partialorder %v2793, %v2787
      %v2795 = vsel %vm2794, %v2793, %v2787
      %v2796 = vsel %vm2794, 6, %v2788
      %v2797 = vlaneseq
      %v2798 = vshrl.u32 %v2797, 7
      %v2799 = vsub.s32 7, %v2798
      %v2800 = vrot.slane %v2515, %v2799
      %v2801 = vadd.f32 %v466, %v2800
      %vm2802 = vcmp.gt.f32.partialorder %v2801, %v2795
      %v2803 = vsel %vm2802, %v2801, %v2795
      %v2804 = vsel %vm2802, 7, %v2796
      %s2805 = scalar_lea.vmem %s377, 56
      %2806 = vst [vmem:[%s2805] sm:$0xff] %v2804
      %v2807 = vadd.f32 %v2803, %v2663
      %2808 = vst [vmem:[#allocation2] sm:$0xff] %v2743
      %2809 = vst [vmem:[#allocation3] sm:$0xff] %v2807
      %2810 = vst [vmem:[%s363] sm:$0x1] %v2574
      %2811 = vst [vmem:[%s369] sm:$0x1] %v2643
      %2812 = vst [vmem:[%s366] sm:$0x1] %v2661
      %p2813 = scmp.lt.s32.totalorder %s24, 0
      %s2814 = scalar_select %p2813, %s24, 0
      %s2815 = scalar_lea.vmem %s5, %s2814
      %p2816 = scmp.lt.s32.totalorder %s24, 0
      %s2817 = scalar_select %p2816, %s24, 0
      %s2818 = scalar_lea.vmem %s6, %s2817
      %p2819 = scmp.lt.s32.totalorder %s24, 0
      %s2820 = scalar_select %p2819, %s24, 0
      %s2821 = scalar_lea.vmem %s7, %s2820
      %s2822 = smul.u32 8, %s25
      %p2823 = scmp.lt.s32.totalorder %s2822, 15
      %s2824 = scalar_select %p2823, %s2822, 15
      %p2825 = scmp.lt.s32.totalorder %s24, 0
      %s2826 = scalar_select %p2825, %s24, 0
      %s2827 = sadd.s32 %s2826, %s2824
      %s2828 = smul.addr %s2827, 8
      %s2829 = scalar_lea.vmem %s8, %s2828
      // Predicated region
      $region45: #{chain_crf_forward.3} parent=39 // pred_check
        %p2830 = pneg %p167
      $region46: #{chain_crf_forward.3} parent=39 // pred_check_branch
        %2832 = sbr.rel (%p2830) target = $region48
      $region47: #{chain_crf_forward.3} parent=39 // pred_region
        _
      $region48: #{chain_crf_forward.3} parent=39 // pred_fallthru
        _
      // Predicated region
      $region49: #{chain_crf_forward.3} parent=39 // pred_check
        %p2833 = pneg %p193
      $region50: #{chain_crf_forward.3} parent=39 // pred_check_branch
        %2835 = sbr.rel (%p2833) target = $region52
      $region51: #{chain_crf_forward.3} parent=39 // pred_region
        _
      $region52: #{chain_crf_forward.3} parent=39 // pred_fallthru
        _
      // Predicated region
      $region53: #{chain_crf_forward.3} parent=39 // pred_check
        %p2836 = pneg %p219
      $region54: #{chain_crf_forward.3} parent=39 // pred_check_branch
        %2838 = sbr.rel (%p2836) target = $region56
      $region55: #{chain_crf_forward.3} parent=39 // pred_region
        _
      $region56: #{chain_crf_forward.3} parent=39 // pred_fallthru
        _
      // Predicated region
      $region57: #{chain_crf_forward.3} parent=39 // pred_check
        %p2839 = pneg %p247
      $region58: #{chain_crf_forward.3} parent=39 // pred_check_branch
        %2841 = sbr.rel (%p2839) target = $region60
      $region59: #{chain_crf_forward.3} parent=39 // pred_region
        %s2842 = smul.u32 8, %s25
      $region60: #{chain_crf_forward.3} parent=39 // pred_fallthru
        _
      // Predicated region
      $region61: #{chain_crf_forward.3} parent=39 // pred_check
        %p2843 = pneg %p167
      $region62: #{chain_crf_forward.3} parent=39 // pred_check_branch
        %2845 = sbr.rel (%p2843) target = $region64
      $region63: #{chain_crf_forward.3} parent=39 // pred_region
        %p2846 = scmp.lt.s32.totalorder %s24, 0
        %s2847 = scalar_select %p2846, %s24, 0
        %s2848 = scalar_lea.vmem %s5, %s2847
      $region64: #{chain_crf_forward.3} parent=39 // pred_fallthru
        _
      // Predicated region
      $region65: #{chain_crf_forward.3} parent=39 // pred_check
        %p2849 = pneg %p193
      $region66: #{chain_crf_forward.3} parent=39 // pred_check_branch
        %2851 = sbr.rel (%p2849) target = $region68
      $region67: #{chain_crf_forward.3} parent=39 // pred_region
        %p2852 = scmp.lt.s32.totalorder %s24, 0
        %s2853 = scalar_select %p2852, %s24, 0
        %s2854 = scalar_lea.vmem %s6, %s2853
      $region68: #{chain_crf_forward.3} parent=39 // pred_fallthru
        _
      // Predicated region
      $region69: #{chain_crf_forward.3} parent=39 // pred_check
        %p2855 = pneg %p219
      $region70: #{chain_crf_forward.3} parent=39 // pred_check_branch
        %2857 = sbr.rel (%p2855) target = $region72
      $region71: #{chain_crf_forward.3} parent=39 // pred_region
        %p2858 = scmp.lt.s32.totalorder %s24, 0
        %s2859 = scalar_select %p2858, %s24, 0
        %s2860 = scalar_lea.vmem %s7, %s2859
      $region72: #{chain_crf_forward.3} parent=39 // pred_fallthru
        _
    $region40: #{chain_crf_forward.3} parent=5 // pred_fallthru
      _
    %p2861 = scmp.le.s32.totalorder 2, %s15
    // Predicated region
    $region73: #{chain_crf_forward.3} parent=5 // pred_check
      %p2862 = pneg %p2861
    $region74: #{chain_crf_forward.3} parent=5 // pred_check_branch
      %2864 = sbr.rel (%p2862) target = $region76
    $region75: #{chain_crf_forward.3} parent=5 // pred_region
      %s2865 = ssub.s32 %s15, 2
      // Predicated region
      $region77: #{chain_crf_forward.3} parent=75 // pred_check
        %p2866 = pneg %p253
      $region78: #{chain_crf_forward.3} parent=75 // pred_check_branch
        %2868 = sbr.rel (%p2866) target = $region80
      $region79: #{chain_crf_forward.3} parent=75 // pred_region
        %s2869 = smul.u32 8, %s27
        %p2870 = scmp.lt.s32.totalorder %s2869, 15
        %s2871 = scalar_select %p2870, %s2869, 15
        %p2872 = scmp.lt.s32.totalorder %s26, 0
        %s2873 = scalar_select %p2872, %s26, 0
        %s2874 = sadd.s32 %s2873, %s2871
        %s2875 = smul.addr %s2874, 8
        %s2876 = scalar_lea.vmem %s8, %s2875
      $region80: #{chain_crf_forward.3} parent=75 // pred_fallthru
        _
    $region76: #{chain_crf_forward.3} parent=5 // pred_fallthru
      _
  $region6: #{chain_crf_forward.3} parent=0 // loop_footer
    %s19 = sadd.s32 1, %s15
  $region7: #{chain_crf_forward.3} parent=0 // loop_footer_branch
    %14 = sbr.rel target = $region3
  $region8: #{chain_crf_forward.3} parent=0 // loop_exit
    _

// kernel: chain_crf_forward.2
$region0: #{chain_crf_forward.2}
  #allocation0 [shape = 'u32[]', space=smem, size = 0x4, offset = 0x4, fixed_abs, tag = 'smem constant byte address 0x4 - core index']
  #allocation1 [shape = 'u32[144,128]{1,0:T(1,128)}', space=vmem, size = 0x12000, scoped, tag = 'internal scratch']
  %s0 = inlined_call_operand.vmem [shape: f32[128,16,32], index: 0, kind: input, shape index: {}]
  %s1 = inlined_call_operand.vmem [shape: f32[8,32], index: 1, kind: input, shape index: {}]
  %s2 = inlined_call_operand.vmem [shape: f32[8,1], index: 2, kind: input, shape index: {}]
  %s3 = inlined_call_operand.vmem [shape: f32[16,8,128], index: 3, kind: output, shape index: {}]
  %s4 = sld [smem:[#allocation0]]
  $region83: #{chain_crf_forward.2} parent=0
    _
  %s6 = ssub.s32 1, %s4
  %s7 = scalar_select 0, %s6, %s4
  $region1: #{chain_crf_forward.2} parent=0
    #allocation2 [shape = 'u8[1048576]{0}', space=vmem, size = 0x100000, scoped, tag = 'input window, operand 0']
    loop: start=0, step=1, limit=4
    $region2: #{chain_crf_forward.2} parent=1 // loop_pre_header
      _
    $region3: #{chain_crf_forward.2} parent=1 // loop_header
      %s9 = sphi 0, %s13
      %p10 = scmp.ge.s32.totalorder %s9, 4
      %s16 = sphi 0, %s28
      %s17 = sphi 0, %s24
      %s18 = sphi 0, %s16
      %s19 = sphi 0, %s17
      %s20 = sphi 0, %s18
      %s21 = sphi 0, %s19
      %s33 = sphi 0, %s35
      %s36 = sphi 0, %s33
      %s37 = sphi 0, %s36
      %s53 = sphi 0, %s37
      %s57 = sphi 0, %s57
      %s59 = sphi 0, %s57
      %s60 = sphi 0, %s59
      %s74 = sphi 0, %s60
      %s78 = sphi 0, %s78
      %s80 = sphi 0, %s78
      %s81 = sphi 0, %s80
      %s95 = sphi 0, %s81
      %s103 = sphi 0, %s105
      %s106 = sphi 0, %s103
      %s107 = sphi 0, %s106
      %s123 = sphi 0, %s107
    $region4: #{chain_crf_forward.2} parent=1 // loop_header_branch
      %12 = sbr.rel (%p10) target = $region8
    $region5: #{chain_crf_forward.2} parent=1 // loop_body
      %s14 = ssub.s32 %s9, 1
      %s15 = ssub.s32 %s9, 2
      %s22 = sadd.s32 1, %s17
      %p23 = scmp.ge.s32.totalorder %s22, 2
      %s24 = scalar_select %p23, 0, %s22
      %s25 = sadd.s32 1, %s16
      %s26 = scalar_select %p23, %s25, %s16
      %p27 = scmp.ge.s32.totalorder %s26, 1
      %s28 = scalar_select %p27, 0, %s26
      %s29 = ssub.s32 %s16, %s28
      %s30 = ssub.s32 %s17, %s24
      %s31 = sor.u32 %s29, %s30
      %p32 = scmp.eq.s32.totalorder %s31, 0
      %s34 = sadd.s32 %s33, 1
      %s35 = scalar_select %p32, %s33, %s34
      %p38 = pneg %p32
      %p39 = scmp.eq.s32.totalorder %s9, 1
      %p40 = por %p38, %p39
      %p41 = scmp.ne.s32.totalorder %s33, %s36
      %p42 = scmp.eq.s32.totalorder %s9, 0
      %p43 = por %p41, %p42
      %p44 = scmp.ne.s32.totalorder %s33, %s36
      %p45 = scmp.eq.s32.totalorder %s14, 1
      %p46 = por %p44, %p45
      %p47 = scmp.ne.s32.totalorder %s36, %s37
      %p48 = scmp.eq.s32.totalorder %s14, 0
      %p49 = por %p47, %p48
      %p50 = scmp.ne.s32.totalorder %s36, %s37
      %p51 = scmp.eq.s32.totalorder %s15, 1
      %p52 = por %p50, %p51
      %p54 = scmp.ne.s32.totalorder %s37, %s53
      %p55 = scmp.eq.s32.totalorder %s15, 0
      %p56 = por %p54, %p55
      %s58 = sadd.s32 %s57, 1
      %p61 = scmp.eq.s32.totalorder %s9, 1
      %p62 = scmp.ne.s32.totalorder %s57, %s59
      %p63 = scmp.eq.s32.totalorder %s9, 0
      %p64 = por %p62, %p63
      %p65 = scmp.ne.s32.totalorder %s57, %s59
      %p66 = scmp.eq.s32.totalorder %s14, 1
      %p67 = por %p65, %p66
      %p68 = scmp.ne.s32.totalorder %s59, %s60
      %p69 = scmp.eq.s32.totalorder %s14, 0
      %p70 = por %p68, %p69
      %p71 = scmp.ne.s32.totalorder %s59, %s60
      %p72 = scmp.eq.s32.totalorder %s15, 1
      %p73 = por %p71, %p72
      %p75 = scmp.ne.s32.totalorder %s60, %s74
      %p76 = scmp.eq.s32.totalorder %s15, 0
      %p77 = por %p75, %p76
      %s79 = sadd.s32 %s78, 1
      %p82 = scmp.eq.s32.totalorder %s9, 1
      %p83 = scmp.ne.s32.totalorder %s78, %s80
      %p84 = scmp.eq.s32.totalorder %s9, 0
      %p85 = por %p83, %p84
      %p86 = scmp.ne.s32.totalorder %s78, %s80
      %p87 = scmp.eq.s32.totalorder %s14, 1
      %p88 = por %p86, %p87
      %p89 = scmp.ne.s32.totalorder %s80, %s81
      %p90 = scmp.eq.s32.totalorder %s14, 0
      %p91 = por %p89, %p90
      %p92 = scmp.ne.s32.totalorder %s80, %s81
      %p93 = scmp.eq.s32.totalorder %s15, 1
      %p94 = por %p92, %p93
      %p96 = scmp.ne.s32.totalorder %s81, %s95
      %p97 = scmp.eq.s32.totalorder %s15, 0
      %p98 = por %p96, %p97
      %s99 = ssub.s32 %s17, %s24
      %s100 = ssub.s32 %s16, %s28
      %s101 = sor.u32 %s99, %s100
      %p102 = scmp.eq.s32.totalorder %s101, 0
      %s104 = sadd.s32 %s103, 1
      %s105 = scalar_select %p102, %s103, %s104
      %p108 = pneg %p102
      %p109 = scmp.eq.s32.totalorder %s9, 1
      %p110 = por %p108, %p109
      %p111 = scmp.ne.s32.totalorder %s103, %s106
      %p112 = scmp.eq.s32.totalorder %s9, 0
      %p113 = por %p111, %p112
      %p114 = scmp.ne.s32.totalorder %s103, %s106
      %p115 = scmp.eq.s32.totalorder %s14, 1
      %p116 = por %p114, %p115
      %p117 = scmp.ne.s32.totalorder %s106, %s107
      %p118 = scmp.eq.s32.totalorder %s14, 0
      %p119 = por %p117, %p118
      %p120 = scmp.ne.s32.totalorder %s106, %s107
      %p121 = scmp.eq.s32.totalorder %s15, 1
      %p122 = por %p120, %p121
      %p124 = scmp.ne.s32.totalorder %s107, %s123
      %p125 = scmp.eq.s32.totalorder %s15, 0
      %p126 = por %p124, %p125
      %p127 = scmp.le.s32.totalorder 1, %s9
      %p128 = scmp.lt.s32.totalorder %s9, 3
      %p129 = pnand %p127, %p128
      %p130 = pneg %p129
      // Predicated region
      $region9: #{chain_crf_forward.2} parent=5 // pred_check
        _
      $region10: #{chain_crf_forward.2} parent=5 // pred_check_branch
        %132 = sbr.rel (%p129) target = $region12
      $region11: #{chain_crf_forward.2} parent=5 // pred_region
        %s133 = ssub.s32 %s9, 1
        // Predicated region
        $region13: #{chain_crf_forward.2} parent=11 // pred_check
          %p134 = pneg %p70
        $region14: #{chain_crf_forward.2} parent=11 // pred_check_branch
          %136 = sbr.rel (%p134) target = $region16
        $region15: #{chain_crf_forward.2} parent=11 // pred_region
          _
        $region16: #{chain_crf_forward.2} parent=11 // pred_fallthru
          _
        // Predicated region
        $region17: #{chain_crf_forward.2} parent=11 // pred_check
          %p137 = pneg %p91
        $region18: #{chain_crf_forward.2} parent=11 // pred_check_branch
          %139 = sbr.rel (%p137) target = $region20
        $region19: #{chain_crf_forward.2} parent=11 // pred_region
          _
        $region20: #{chain_crf_forward.2} parent=11 // pred_fallthru
          _
      $region12: #{chain_crf_forward.2} parent=5 // pred_fallthru
        _
      %p140 = scmp.lt.s32.totalorder %s9, 2
      // Predicated region
      $region21: #{chain_crf_forward.2} parent=5 // pred_check
        %p141 = pneg %p140
      $region22: #{chain_crf_forward.2} parent=5 // pred_check_branch
        %143 = sbr.rel (%p141) target = $region24
      $region23: #{chain_crf_forward.2} parent=5 // pred_region
        // Predicated region
        $region25: #{chain_crf_forward.2} parent=23 // pred_check
          %p144 = pneg %p43
        $region26: #{chain_crf_forward.2} parent=23 // pred_check_branch
          %146 = sbr.rel (%p144) target = $region28
        $region27: #{chain_crf_forward.2} parent=23 // pred_region
          %s147 = sand.u32 %s33, 1
          %s148 = sand.u32 %s33, 1
          %s149 = smul.addr %s148, 1024
          %s150 = scalar_lea.vmem [#allocation2], %s149
          %s151 = smul.u32 128, %s16
          %s152 = smul.addr %s151, 2
          %s153 = sadd.s32 %s17, %s152
          %s154 = smul.addr %s153, 8
          %s155 = scalar_lea.vmem %s0, %s154
          // Predicated region
          $region29: #{chain_crf_forward.2} parent=27 // pred_check
            _
          $region30: #{chain_crf_forward.2} parent=27 // pred_check_branch
            %157 = sbr.rel (0) target = $region32
          $region31: #{chain_crf_forward.2} parent=27 // pred_region
            // Predicated region
            $region33: #{chain_crf_forward.2} parent=31 // pred_check
              _
            $region34: #{chain_crf_forward.2} parent=31 // pred_check_branch
              %159 = sbr.rel (0) target = $region36
            $region35: #{chain_crf_forward.2} parent=31 // pred_region
              // Predicated region
              $region48: #{chain_crf_forward.2} parent=35 // pred_check
                _
              $region49: #{chain_crf_forward.2} parent=35 // pred_check_branch
                %429 = sbr.rel (0) target = $region51
              $region50: #{chain_crf_forward.2} parent=35 // pred_region
                loop: start=0, step=1, limit=1
                $region52: #{chain_crf_forward.2} parent=50 // loop_pre_header
                  _
                $region53: #{chain_crf_forward.2} parent=50 // loop_header
                  %s431 = sphi 0, %s435
                  %p432 = scmp.ge.s32.totalorder %s431, 1
                  %s436 = sphi %s155, %s155
                  %s437 = sphi %s150, %s150
                $region54: #{chain_crf_forward.2} parent=50 // loop_header_branch
                  %434 = sbr.rel (%p432) target = $region58
                $region55: #{chain_crf_forward.2} parent=50 // loop_body
                  %v438 = vld [vmem:[%s436] sm:$0xff]
                  %439 = vst [vmem:[%s437] sm:$0xff] %v438
                  %v440 = vld [vmem:[%s436 + $0x10] sm:$0xff]
                  %441 = vst [vmem:[%s437 + $0x8] sm:$0xff] %v440
                  %v442 = vld [vmem:[%s436 + $0x20] sm:$0xff]
                  %443 = vst [vmem:[%s437 + $0x10] sm:$0xff] %v442
                  %v444 = vld [vmem:[%s436 + $0x30] sm:$0xff]
                  %445 = vst [vmem:[%s437 + $0x18] sm:$0xff] %v444
                  %v446 = vld [vmem:[%s436 + $0x40] sm:$0xff]
                  %447 = vst [vmem:[%s437 + $0x20] sm:$0xff] %v446
                  %v448 = vld [vmem:[%s436 + $0x50] sm:$0xff]
                  %449 = vst [vmem:[%s437 + $0x28] sm:$0xff] %v448
                  %v450 = vld [vmem:[%s436 + $0x60] sm:$0xff]
                  %451 = vst [vmem:[%s437 + $0x30] sm:$0xff] %v450
                  %v452 = vld [vmem:[%s436 + $0x70] sm:$0xff]
                  %453 = vst [vmem:[%s437 + $0x38] sm:$0xff] %v452
                  %v454 = vld [vmem:[%s436 + $0x80] sm:$0xff]
                  %455 = vst [vmem:[%s437 + $0x40] sm:$0xff] %v454
                  %v456 = vld [vmem:[%s436 + $0x90] sm:$0xff]
                  %457 = vst [vmem:[%s437 + $0x48] sm:$0xff] %v456
                  %v458 = vld [vmem:[%s436 + $0xa0] sm:$0xff]
                  %459 = vst [vmem:[%s437 + $0x50] sm:$0xff] %v458
                  %v460 = vld [vmem:[%s436 + $0xb0] sm:$0xff]
                  %461 = vst [vmem:[%s437 + $0x58] sm:$0xff] %v460
                  %v462 = vld [vmem:[%s436 + $0xc0] sm:$0xff]
                  %463 = vst [vmem:[%s437 + $0x60] sm:$0xff] %v462
                  %v464 = vld [vmem:[%s436 + $0xd0] sm:$0xff]
                  %465 = vst [vmem:[%s437 + $0x68] sm:$0xff] %v464
                  %v466 = vld [vmem:[%s436 + $0xe0] sm:$0xff]
                  %467 = vst [vmem:[%s437 + $0x70] sm:$0xff] %v466
                  %v468 = vld [vmem:[%s436 + $0xf0] sm:$0xff]
                  %469 = vst [vmem:[%s437 + $0x78] sm:$0xff] %v468
                  %v470 = vld [vmem:[%s436 + $0x100] sm:$0xff]
                  %471 = vst [vmem:[%s437 + $0x80] sm:$0xff] %v470
                  %v472 = vld [vmem:[%s436 + $0x110] sm:$0xff]
                  %473 = vst [vmem:[%s437 + $0x88] sm:$0xff] %v472
                  %v474 = vld [vmem:[%s436 + $0x120] sm:$0xff]
                  %475 = vst [vmem:[%s437 + $0x90] sm:$0xff] %v474
                  %v476 = vld [vmem:[%s436 + $0x130] sm:$0xff]
                  %477 = vst [vmem:[%s437 + $0x98] sm:$0xff] %v476
                  %v478 = vld [vmem:[%s436 + $0x140] sm:$0xff]
                  %479 = vst [vmem:[%s437 + $0xa0] sm:$0xff] %v478
                  %v480 = vld [vmem:[%s436 + $0x150] sm:$0xff]
                  %481 = vst [vmem:[%s437 + $0xa8] sm:$0xff] %v480
                  %v482 = vld [vmem:[%s436 + $0x160] sm:$0xff]
                  %483 = vst [vmem:[%s437 + $0xb0] sm:$0xff] %v482
                  %v484 = vld [vmem:[%s436 + $0x170] sm:$0xff]
                  %485 = vst [vmem:[%s437 + $0xb8] sm:$0xff] %v484
                  %v486 = vld [vmem:[%s436 + $0x180] sm:$0xff]
                  %487 = vst [vmem:[%s437 + $0xc0] sm:$0xff] %v486
                  %v488 = vld [vmem:[%s436 + $0x190] sm:$0xff]
                  %489 = vst [vmem:[%s437 + $0xc8] sm:$0xff] %v488
                  %v490 = vld [vmem:[%s436 + $0x1a0] sm:$0xff]
                  %491 = vst [vmem:[%s437 + $0xd0] sm:$0xff] %v490
                  %v492 = vld [vmem:[%s436 + $0x1b0] sm:$0xff]
                  %493 = vst [vmem:[%s437 + $0xd8] sm:$0xff] %v492
                  %v494 = vld [vmem:[%s436 + $0x1c0] sm:$0xff]
                  %495 = vst [vmem:[%s437 + $0xe0] sm:$0xff] %v494
                  %v496 = vld [vmem:[%s436 + $0x1d0] sm:$0xff]
                  %497 = vst [vmem:[%s437 + $0xe8] sm:$0xff] %v496
                  %v498 = vld [vmem:[%s436 + $0x1e0] sm:$0xff]
                  %499 = vst [vmem:[%s437 + $0xf0] sm:$0xff] %v498
                  %v500 = vld [vmem:[%s436 + $0x1f0] sm:$0xff]
                  %501 = vst [vmem:[%s437 + $0xf8] sm:$0xff] %v500
                  %v502 = vld [vmem:[%s436 + $0x200] sm:$0xff]
                  %503 = vst [vmem:[%s437 + $0x100] sm:$0xff] %v502
                  %v504 = vld [vmem:[%s436 + $0x210] sm:$0xff]
                  %505 = vst [vmem:[%s437 + $0x108] sm:$0xff] %v504
                  %v506 = vld [vmem:[%s436 + $0x220] sm:$0xff]
                  %507 = vst [vmem:[%s437 + $0x110] sm:$0xff] %v506
                  %v508 = vld [vmem:[%s436 + $0x230] sm:$0xff]
                  %509 = vst [vmem:[%s437 + $0x118] sm:$0xff] %v508
                  %v510 = vld [vmem:[%s436 + $0x240] sm:$0xff]
                  %511 = vst [vmem:[%s437 + $0x120] sm:$0xff] %v510
                  %v512 = vld [vmem:[%s436 + $0x250] sm:$0xff]
                  %513 = vst [vmem:[%s437 + $0x128] sm:$0xff] %v512
                  %v514 = vld [vmem:[%s436 + $0x260] sm:$0xff]
                  %515 = vst [vmem:[%s437 + $0x130] sm:$0xff] %v514
                  %v516 = vld [vmem:[%s436 + $0x270] sm:$0xff]
                  %517 = vst [vmem:[%s437 + $0x138] sm:$0xff] %v516
                  %v518 = vld [vmem:[%s436 + $0x280] sm:$0xff]
                  %519 = vst [vmem:[%s437 + $0x140] sm:$0xff] %v518
                  %v520 = vld [vmem:[%s436 + $0x290] sm:$0xff]
                  %521 = vst [vmem:[%s437 + $0x148] sm:$0xff] %v520
                  %v522 = vld [vmem:[%s436 + $0x2a0] sm:$0xff]
                  %523 = vst [vmem:[%s437 + $0x150] sm:$0xff] %v522
                  %v524 = vld [vmem:[%s436 + $0x2b0] sm:$0xff]
                  %525 = vst [vmem:[%s437 + $0x158] sm:$0xff] %v524
                  %v526 = vld [vmem:[%s436 + $0x2c0] sm:$0xff]
                  %527 = vst [vmem:[%s437 + $0x160] sm:$0xff] %v526
                  %v528 = vld [vmem:[%s436 + $0x2d0] sm:$0xff]
                  %529 = vst [vmem:[%s437 + $0x168] sm:$0xff] %v528
                  %v530 = vld [vmem:[%s436 + $0x2e0] sm:$0xff]
                  %531 = vst [vmem:[%s437 + $0x170] sm:$0xff] %v530
                  %v532 = vld [vmem:[%s436 + $0x2f0] sm:$0xff]
                  %533 = vst [vmem:[%s437 + $0x178] sm:$0xff] %v532
                  %v534 = vld [vmem:[%s436 + $0x300] sm:$0xff]
                  %535 = vst [vmem:[%s437 + $0x180] sm:$0xff] %v534
                  %v536 = vld [vmem:[%s436 + $0x310] sm:$0xff]
                  %537 = vst [vmem:[%s437 + $0x188] sm:$0xff] %v536
                  %v538 = vld [vmem:[%s436 + $0x320] sm:$0xff]
                  %539 = vst [vmem:[%s437 + $0x190] sm:$0xff] %v538
                  %v540 = vld [vmem:[%s436 + $0x330] sm:$0xff]
                  %541 = vst [vmem:[%s437 + $0x198] sm:$0xff] %v540
                  %v542 = vld [vmem:[%s436 + $0x340] sm:$0xff]
                  %543 = vst [vmem:[%s437 + $0x1a0] sm:$0xff] %v542
                  %v544 = vld [vmem:[%s436 + $0x350] sm:$0xff]
                  %545 = vst [vmem:[%s437 + $0x1a8] sm:$0xff] %v544
                  %v546 = vld [vmem:[%s436 + $0x360] sm:$0xff]
                  %547 = vst [vmem:[%s437 + $0x1b0] sm:$0xff] %v546
                  %v548 = vld [vmem:[%s436 + $0x370] sm:$0xff]
                  %549 = vst [vmem:[%s437 + $0x1b8] sm:$0xff] %v548
                  %v550 = vld [vmem:[%s436 + $0x380] sm:$0xff]
                  %551 = vst [vmem:[%s437 + $0x1c0] sm:$0xff] %v550
                  %v552 = vld [vmem:[%s436 + $0x390] sm:$0xff]
                  %553 = vst [vmem:[%s437 + $0x1c8] sm:$0xff] %v552
                  %v554 = vld [vmem:[%s436 + $0x3a0] sm:$0xff]
                  %555 = vst [vmem:[%s437 + $0x1d0] sm:$0xff] %v554
                  %v556 = vld [vmem:[%s436 + $0x3b0] sm:$0xff]
                  %557 = vst [vmem:[%s437 + $0x1d8] sm:$0xff] %v556
                  %v558 = vld [vmem:[%s436 + $0x3c0] sm:$0xff]
                  %559 = vst [vmem:[%s437 + $0x1e0] sm:$0xff] %v558
                  %v560 = vld [vmem:[%s436 + $0x3d0] sm:$0xff]
                  %561 = vst [vmem:[%s437 + $0x1e8] sm:$0xff] %v560
                  %v562 = vld [vmem:[%s436 + $0x3e0] sm:$0xff]
                  %563 = vst [vmem:[%s437 + $0x1f0] sm:$0xff] %v562
                  %v564 = vld [vmem:[%s436 + $0x3f0] sm:$0xff]
                  %565 = vst [vmem:[%s437 + $0x1f8] sm:$0xff] %v564
                  %v566 = vld [vmem:[%s436 + $0x400] sm:$0xff]
                  %567 = vst [vmem:[%s437 + $0x200] sm:$0xff] %v566
                  %v568 = vld [vmem:[%s436 + $0x410] sm:$0xff]
                  %569 = vst [vmem:[%s437 + $0x208] sm:$0xff] %v568
                  %v570 = vld [vmem:[%s436 + $0x420] sm:$0xff]
                  %571 = vst [vmem:[%s437 + $0x210] sm:$0xff] %v570
                  %v572 = vld [vmem:[%s436 + $0x430] sm:$0xff]
                  %573 = vst [vmem:[%s437 + $0x218] sm:$0xff] %v572
                  %v574 = vld [vmem:[%s436 + $0x440] sm:$0xff]
                  %575 = vst [vmem:[%s437 + $0x220] sm:$0xff] %v574
                  %v576 = vld [vmem:[%s436 + $0x450] sm:$0xff]
                  %577 = vst [vmem:[%s437 + $0x228] sm:$0xff] %v576
                  %v578 = vld [vmem:[%s436 + $0x460] sm:$0xff]
                  %579 = vst [vmem:[%s437 + $0x230] sm:$0xff] %v578
                  %v580 = vld [vmem:[%s436 + $0x470] sm:$0xff]
                  %581 = vst [vmem:[%s437 + $0x238] sm:$0xff] %v580
                  %v582 = vld [vmem:[%s436 + $0x480] sm:$0xff]
                  %583 = vst [vmem:[%s437 + $0x240] sm:$0xff] %v582
                  %v584 = vld [vmem:[%s436 + $0x490] sm:$0xff]
                  %585 = vst [vmem:[%s437 + $0x248] sm:$0xff] %v584
                  %v586 = vld [vmem:[%s436 + $0x4a0] sm:$0xff]
                  %587 = vst [vmem:[%s437 + $0x250] sm:$0xff] %v586
                  %v588 = vld [vmem:[%s436 + $0x4b0] sm:$0xff]
                  %589 = vst [vmem:[%s437 + $0x258] sm:$0xff] %v588
                  %v590 = vld [vmem:[%s436 + $0x4c0] sm:$0xff]
                  %591 = vst [vmem:[%s437 + $0x260] sm:$0xff] %v590
                  %v592 = vld [vmem:[%s436 + $0x4d0] sm:$0xff]
                  %593 = vst [vmem:[%s437 + $0x268] sm:$0xff] %v592
                  %v594 = vld [vmem:[%s436 + $0x4e0] sm:$0xff]
                  %595 = vst [vmem:[%s437 + $0x270] sm:$0xff] %v594
                  %v596 = vld [vmem:[%s436 + $0x4f0] sm:$0xff]
                  %597 = vst [vmem:[%s437 + $0x278] sm:$0xff] %v596
                  %v598 = vld [vmem:[%s436 + $0x500] sm:$0xff]
                  %599 = vst [vmem:[%s437 + $0x280] sm:$0xff] %v598
                  %v600 = vld [vmem:[%s436 + $0x510] sm:$0xff]
                  %601 = vst [vmem:[%s437 + $0x288] sm:$0xff] %v600
                  %v602 = vld [vmem:[%s436 + $0x520] sm:$0xff]
                  %603 = vst [vmem:[%s437 + $0x290] sm:$0xff] %v602
                  %v604 = vld [vmem:[%s436 + $0x530] sm:$0xff]
                  %605 = vst [vmem:[%s437 + $0x298] sm:$0xff] %v604
                  %v606 = vld [vmem:[%s436 + $0x540] sm:$0xff]
                  %607 = vst [vmem:[%s437 + $0x2a0] sm:$0xff] %v606
                  %v608 = vld [vmem:[%s436 + $0x550] sm:$0xff]
                  %609 = vst [vmem:[%s437 + $0x2a8] sm:$0xff] %v608
                  %v610 = vld [vmem:[%s436 + $0x560] sm:$0xff]
                  %611 = vst [vmem:[%s437 + $0x2b0] sm:$0xff] %v610
                  %v612 = vld [vmem:[%s436 + $0x570] sm:$0xff]
                  %613 = vst [vmem:[%s437 + $0x2b8] sm:$0xff] %v612
                  %v614 = vld [vmem:[%s436 + $0x580] sm:$0xff]
                  %615 = vst [vmem:[%s437 + $0x2c0] sm:$0xff] %v614
                  %v616 = vld [vmem:[%s436 + $0x590] sm:$0xff]
                  %617 = vst [vmem:[%s437 + $0x2c8] sm:$0xff] %v616
                  %v618 = vld [vmem:[%s436 + $0x5a0] sm:$0xff]
                  %619 = vst [vmem:[%s437 + $0x2d0] sm:$0xff] %v618
                  %v620 = vld [vmem:[%s436 + $0x5b0] sm:$0xff]
                  %621 = vst [vmem:[%s437 + $0x2d8] sm:$0xff] %v620
                  %v622 = vld [vmem:[%s436 + $0x5c0] sm:$0xff]
                  %623 = vst [vmem:[%s437 + $0x2e0] sm:$0xff] %v622
                  %v624 = vld [vmem:[%s436 + $0x5d0] sm:$0xff]
                  %625 = vst [vmem:[%s437 + $0x2e8] sm:$0xff] %v624
                  %v626 = vld [vmem:[%s436 + $0x5e0] sm:$0xff]
                  %627 = vst [vmem:[%s437 + $0x2f0] sm:$0xff] %v626
                  %v628 = vld [vmem:[%s436 + $0x5f0] sm:$0xff]
                  %629 = vst [vmem:[%s437 + $0x2f8] sm:$0xff] %v628
                  %v630 = vld [vmem:[%s436 + $0x600] sm:$0xff]
                  %631 = vst [vmem:[%s437 + $0x300] sm:$0xff] %v630
                  %v632 = vld [vmem:[%s436 + $0x610] sm:$0xff]
                  %633 = vst [vmem:[%s437 + $0x308] sm:$0xff] %v632
                  %v634 = vld [vmem:[%s436 + $0x620] sm:$0xff]
                  %635 = vst [vmem:[%s437 + $0x310] sm:$0xff] %v634
                  %v636 = vld [vmem:[%s436 + $0x630] sm:$0xff]
                  %637 = vst [vmem:[%s437 + $0x318] sm:$0xff] %v636
                  %v638 = vld [vmem:[%s436 + $0x640] sm:$0xff]
                  %639 = vst [vmem:[%s437 + $0x320] sm:$0xff] %v638
                  %v640 = vld [vmem:[%s436 + $0x650] sm:$0xff]
                  %641 = vst [vmem:[%s437 + $0x328] sm:$0xff] %v640
                  %v642 = vld [vmem:[%s436 + $0x660] sm:$0xff]
                  %643 = vst [vmem:[%s437 + $0x330] sm:$0xff] %v642
                  %v644 = vld [vmem:[%s436 + $0x670] sm:$0xff]
                  %645 = vst [vmem:[%s437 + $0x338] sm:$0xff] %v644
                  %v646 = vld [vmem:[%s436 + $0x680] sm:$0xff]
                  %647 = vst [vmem:[%s437 + $0x340] sm:$0xff] %v646
                  %v648 = vld [vmem:[%s436 + $0x690] sm:$0xff]
                  %649 = vst [vmem:[%s437 + $0x348] sm:$0xff] %v648
                  %v650 = vld [vmem:[%s436 + $0x6a0] sm:$0xff]
                  %651 = vst [vmem:[%s437 + $0x350] sm:$0xff] %v650
                  %v652 = vld [vmem:[%s436 + $0x6b0] sm:$0xff]
                  %653 = vst [vmem:[%s437 + $0x358] sm:$0xff] %v652
                  %v654 = vld [vmem:[%s436 + $0x6c0] sm:$0xff]
                  %655 = vst [vmem:[%s437 + $0x360] sm:$0xff] %v654
                  %v656 = vld [vmem:[%s436 + $0x6d0] sm:$0xff]
                  %657 = vst [vmem:[%s437 + $0x368] sm:$0xff] %v656
                  %v658 = vld [vmem:[%s436 + $0x6e0] sm:$0xff]
                  %659 = vst [vmem:[%s437 + $0x370] sm:$0xff] %v658
                  %v660 = vld [vmem:[%s436 + $0x6f0] sm:$0xff]
                  %661 = vst [vmem:[%s437 + $0x378] sm:$0xff] %v660
                  %v662 = vld [vmem:[%s436 + $0x700] sm:$0xff]
                  %663 = vst [vmem:[%s437 + $0x380] sm:$0xff] %v662
                  %v664 = vld [vmem:[%s436 + $0x710] sm:$0xff]
                  %665 = vst [vmem:[%s437 + $0x388] sm:$0xff] %v664
                  %v666 = vld [vmem:[%s436 + $0x720] sm:$0xff]
                  %667 = vst [vmem:[%s437 + $0x390] sm:$0xff] %v666
                  %v668 = vld [vmem:[%s436 + $0x730] sm:$0xff]
                  %669 = vst [vmem:[%s437 + $0x398] sm:$0xff] %v668
                  %v670 = vld [vmem:[%s436 + $0x740] sm:$0xff]
                  %671 = vst [vmem:[%s437 + $0x3a0] sm:$0xff] %v670
                  %v672 = vld [vmem:[%s436 + $0x750] sm:$0xff]
                  %673 = vst [vmem:[%s437 + $0x3a8] sm:$0xff] %v672
                  %v674 = vld [vmem:[%s436 + $0x760] sm:$0xff]
                  %675 = vst [vmem:[%s437 + $0x3b0] sm:$0xff] %v674
                  %v676 = vld [vmem:[%s436 + $0x770] sm:$0xff]
                  %677 = vst [vmem:[%s437 + $0x3b8] sm:$0xff] %v676
                  %v678 = vld [vmem:[%s436 + $0x780] sm:$0xff]
                  %679 = vst [vmem:[%s437 + $0x3c0] sm:$0xff] %v678
                  %v680 = vld [vmem:[%s436 + $0x790] sm:$0xff]
                  %681 = vst [vmem:[%s437 + $0x3c8] sm:$0xff] %v680
                  %v682 = vld [vmem:[%s436 + $0x7a0] sm:$0xff]
                  %683 = vst [vmem:[%s437 + $0x3d0] sm:$0xff] %v682
                  %v684 = vld [vmem:[%s436 + $0x7b0] sm:$0xff]
                  %685 = vst [vmem:[%s437 + $0x3d8] sm:$0xff] %v684
                  %v686 = vld [vmem:[%s436 + $0x7c0] sm:$0xff]
                  %687 = vst [vmem:[%s437 + $0x3e0] sm:$0xff] %v686
                  %v688 = vld [vmem:[%s436 + $0x7d0] sm:$0xff]
                  %689 = vst [vmem:[%s437 + $0x3e8] sm:$0xff] %v688
                  %v690 = vld [vmem:[%s436 + $0x7e0] sm:$0xff]
                  %691 = vst [vmem:[%s437 + $0x3f0] sm:$0xff] %v690
                  %v692 = vld [vmem:[%s436 + $0x7f0] sm:$0xff]
                  %693 = vst [vmem:[%s437 + $0x3f8] sm:$0xff] %v692
                $region56: #{chain_crf_forward.2} parent=50 // loop_footer
                  %s435 = sadd.s32 1, %s431
                $region57: #{chain_crf_forward.2} parent=50 // loop_footer_branch
                  %430 = sbr.rel target = $region53
                $region58: #{chain_crf_forward.2} parent=50 // loop_exit
                  _
              $region51: #{chain_crf_forward.2} parent=35 // pred_fallthru
                _
              // Predicated region
              $region59: #{chain_crf_forward.2} parent=35 // pred_check
                _
              $region60: #{chain_crf_forward.2} parent=35 // pred_check_branch
                %695 = sbr.rel target = $region62
              $region61: #{chain_crf_forward.2} parent=35 // pred_region
                _
              $region62: #{chain_crf_forward.2} parent=35 // pred_fallthru
                _
            $region36: #{chain_crf_forward.2} parent=31 // pred_fallthru
              _
            // Predicated region
            $region37: #{chain_crf_forward.2} parent=31 // pred_check
              _
            $region38: #{chain_crf_forward.2} parent=31 // pred_check_branch
              %161 = sbr.rel target = $region40
            $region39: #{chain_crf_forward.2} parent=31 // pred_region
              %s163 = ssub.s32 256, 1
              loop: start=0, step=1, limit=1
              $region41: #{chain_crf_forward.2} parent=39 // loop_pre_header
                _
              $region42: #{chain_crf_forward.2} parent=39 // loop_header
                %s165 = sphi 0, %s169
                %p166 = scmp.ge.s32.totalorder %s165, 1
                %s170 = sphi %s155, %s155
                %s171 = sphi %s150, %s150
              $region43: #{chain_crf_forward.2} parent=39 // loop_header_branch
                %168 = sbr.rel (%p166) target = $region47
              $region44: #{chain_crf_forward.2} parent=39 // loop_body
                %v172 = vld [vmem:[%s170] sm:%s163]
                %173 = vst [vmem:[%s171] sm:%s163] %v172
                %v174 = vld [vmem:[%s170 + $0x10] sm:%s163]
                %175 = vst [vmem:[%s171 + $0x8] sm:%s163] %v174
                %v176 = vld [vmem:[%s170 + $0x20] sm:%s163]
                %177 = vst [vmem:[%s171 + $0x10] sm:%s163] %v176
                %v178 = vld [vmem:[%s170 + $0x30] sm:%s163]
                %179 = vst [vmem:[%s171 + $0x18] sm:%s163] %v178
                %v180 = vld [vmem:[%s170 + $0x40] sm:%s163]
                %181 = vst [vmem:[%s171 + $0x20] sm:%s163] %v180
                %v182 = vld [vmem:[%s170 + $0x50] sm:%s163]
                %183 = vst [vmem:[%s171 + $0x28] sm:%s163] %v182
                %v184 = vld [vmem:[%s170 + $0x60] sm:%s163]
                %185 = vst [vmem:[%s171 + $0x30] sm:%s163] %v184
                %v186 = vld [vmem:[%s170 + $0x70] sm:%s163]
                %187 = vst [vmem:[%s171 + $0x38] sm:%s163] %v186
                %v188 = vld [vmem:[%s170 + $0x80] sm:%s163]
                %189 = vst [vmem:[%s171 + $0x40] sm:%s163] %v188
                %v190 = vld [vmem:[%s170 + $0x90] sm:%s163]
                %191 = vst [vmem:[%s171 + $0x48] sm:%s163] %v190
                %v192 = vld [vmem:[%s170 + $0xa0] sm:%s163]
                %193 = vst [vmem:[%s171 + $0x50] sm:%s163] %v192
                %v194 = vld [vmem:[%s170 + $0xb0] sm:%s163]
                %195 = vst [vmem:[%s171 + $0x58] sm:%s163] %v194
                %v196 = vld [vmem:[%s170 + $0xc0] sm:%s163]
                %197 = vst [vmem:[%s171 + $0x60] sm:%s163] %v196
                %v198 = vld [vmem:[%s170 + $0xd0] sm:%s163]
                %199 = vst [vmem:[%s171 + $0x68] sm:%s163] %v198
                %v200 = vld [vmem:[%s170 + $0xe0] sm:%s163]
                %201 = vst [vmem:[%s171 + $0x70] sm:%s163] %v200
                %v202 = vld [vmem:[%s170 + $0xf0] sm:%s163]
                %203 = vst [vmem:[%s171 + $0x78] sm:%s163] %v202
                %v204 = vld [vmem:[%s170 + $0x100] sm:%s163]
                %205 = vst [vmem:[%s171 + $0x80] sm:%s163] %v204
                %v206 = vld [vmem:[%s170 + $0x110] sm:%s163]
                %207 = vst [vmem:[%s171 + $0x88] sm:%s163] %v206
                %v208 = vld [vmem:[%s170 + $0x120] sm:%s163]
                %209 = vst [vmem:[%s171 + $0x90] sm:%s163] %v208
                %v210 = vld [vmem:[%s170 + $0x130] sm:%s163]
                %211 = vst [vmem:[%s171 + $0x98] sm:%s163] %v210
                %v212 = vld [vmem:[%s170 + $0x140] sm:%s163]
                %213 = vst [vmem:[%s171 + $0xa0] sm:%s163] %v212
                %v214 = vld [vmem:[%s170 + $0x150] sm:%s163]
                %215 = vst [vmem:[%s171 + $0xa8] sm:%s163] %v214
                %v216 = vld [vmem:[%s170 + $0x160] sm:%s163]
                %217 = vst [vmem:[%s171 + $0xb0] sm:%s163] %v216
                %v218 = vld [vmem:[%s170 + $0x170] sm:%s163]
                %219 = vst [vmem:[%s171 + $0xb8] sm:%s163] %v218
                %v220 = vld [vmem:[%s170 + $0x180] sm:%s163]
                %221 = vst [vmem:[%s171 + $0xc0] sm:%s163] %v220
                %v222 = vld [vmem:[%s170 + $0x190] sm:%s163]
                %223 = vst [vmem:[%s171 + $0xc8] sm:%s163] %v222
                %v224 = vld [vmem:[%s170 + $0x1a0] sm:%s163]
                %225 = vst [vmem:[%s171 + $0xd0] sm:%s163] %v224
                %v226 = vld [vmem:[%s170 + $0x1b0] sm:%s163]
                %227 = vst [vmem:[%s171 + $0xd8] sm:%s163] %v226
                %v228 = vld [vmem:[%s170 + $0x1c0] sm:%s163]
                %229 = vst [vmem:[%s171 + $0xe0] sm:%s163] %v228
                %v230 = vld [vmem:[%s170 + $0x1d0] sm:%s163]
                %231 = vst [vmem:[%s171 + $0xe8] sm:%s163] %v230
                %v232 = vld [vmem:[%s170 + $0x1e0] sm:%s163]
                %233 = vst [vmem:[%s171 + $0xf0] sm:%s163] %v232
                %v234 = vld [vmem:[%s170 + $0x1f0] sm:%s163]
                %235 = vst [vmem:[%s171 + $0xf8] sm:%s163] %v234
                %v236 = vld [vmem:[%s170 + $0x200] sm:%s163]
                %237 = vst [vmem:[%s171 + $0x100] sm:%s163] %v236
                %v238 = vld [vmem:[%s170 + $0x210] sm:%s163]
                %239 = vst [vmem:[%s171 + $0x108] sm:%s163] %v238
                %v240 = vld [vmem:[%s170 + $0x220] sm:%s163]
                %241 = vst [vmem:[%s171 + $0x110] sm:%s163] %v240
                %v242 = vld [vmem:[%s170 + $0x230] sm:%s163]
                %243 = vst [vmem:[%s171 + $0x118] sm:%s163] %v242
                %v244 = vld [vmem:[%s170 + $0x240] sm:%s163]
                %245 = vst [vmem:[%s171 + $0x120] sm:%s163] %v244
                %v246 = vld [vmem:[%s170 + $0x250] sm:%s163]
                %247 = vst [vmem:[%s171 + $0x128] sm:%s163] %v246
                %v248 = vld [vmem:[%s170 + $0x260] sm:%s163]
                %249 = vst [vmem:[%s171 + $0x130] sm:%s163] %v248
                %v250 = vld [vmem:[%s170 + $0x270] sm:%s163]
                %251 = vst [vmem:[%s171 + $0x138] sm:%s163] %v250
                %v252 = vld [vmem:[%s170 + $0x280] sm:%s163]
                %253 = vst [vmem:[%s171 + $0x140] sm:%s163] %v252
                %v254 = vld [vmem:[%s170 + $0x290] sm:%s163]
                %255 = vst [vmem:[%s171 + $0x148] sm:%s163] %v254
                %v256 = vld [vmem:[%s170 + $0x2a0] sm:%s163]
                %257 = vst [vmem:[%s171 + $0x150] sm:%s163] %v256
                %v258 = vld [vmem:[%s170 + $0x2b0] sm:%s163]
                %259 = vst [vmem:[%s171 + $0x158] sm:%s163] %v258
                %v260 = vld [vmem:[%s170 + $0x2c0] sm:%s163]
                %261 = vst [vmem:[%s171 + $0x160] sm:%s163] %v260
                %v262 = vld [vmem:[%s170 + $0x2d0] sm:%s163]
                %263 = vst [vmem:[%s171 + $0x168] sm:%s163] %v262
                %v264 = vld [vmem:[%s170 + $0x2e0] sm:%s163]
                %265 = vst [vmem:[%s171 + $0x170] sm:%s163] %v264
                %v266 = vld [vmem:[%s170 + $0x2f0] sm:%s163]
                %267 = vst [vmem:[%s171 + $0x178] sm:%s163] %v266
                %v268 = vld [vmem:[%s170 + $0x300] sm:%s163]
                %269 = vst [vmem:[%s171 + $0x180] sm:%s163] %v268
                %v270 = vld [vmem:[%s170 + $0x310] sm:%s163]
                %271 = vst [vmem:[%s171 + $0x188] sm:%s163] %v270
                %v272 = vld [vmem:[%s170 + $0x320] sm:%s163]
                %273 = vst [vmem:[%s171 + $0x190] sm:%s163] %v272
                %v274 = vld [vmem:[%s170 + $0x330] sm:%s163]
                %275 = vst [vmem:[%s171 + $0x198] sm:%s163] %v274
                %v276 = vld [vmem:[%s170 + $0x340] sm:%s163]
                %277 = vst [vmem:[%s171 + $0x1a0] sm:%s163] %v276
                %v278 = vld [vmem:[%s170 + $0x350] sm:%s163]
                %279 = vst [vmem:[%s171 + $0x1a8] sm:%s163] %v278
                %v280 = vld [vmem:[%s170 + $0x360] sm:%s163]
                %281 = vst [vmem:[%s171 + $0x1b0] sm:%s163] %v280
                %v282 = vld [vmem:[%s170 + $0x370] sm:%s163]
                %283 = vst [vmem:[%s171 + $0x1b8] sm:%s163] %v282
                %v284 = vld [vmem:[%s170 + $0x380] sm:%s163]
                %285 = vst [vmem:[%s171 + $0x1c0] sm:%s163] %v284
                %v286 = vld [vmem:[%s170 + $0x390] sm:%s163]
                %287 = vst [vmem:[%s171 + $0x1c8] sm:%s163] %v286
                %v288 = vld [vmem:[%s170 + $0x3a0] sm:%s163]
                %289 = vst [vmem:[%s171 + $0x1d0] sm:%s163] %v288
                %v290 = vld [vmem:[%s170 + $0x3b0] sm:%s163]
                %291 = vst [vmem:[%s171 + $0x1d8] sm:%s163] %v290
                %v292 = vld [vmem:[%s170 + $0x3c0] sm:%s163]
                %293 = vst [vmem:[%s171 + $0x1e0] sm:%s163] %v292
                %v294 = vld [vmem:[%s170 + $0x3d0] sm:%s163]
                %295 = vst [vmem:[%s171 + $0x1e8] sm:%s163] %v294
                %v296 = vld [vmem:[%s170 + $0x3e0] sm:%s163]
                %297 = vst [vmem:[%s171 + $0x1f0] sm:%s163] %v296
                %v298 = vld [vmem:[%s170 + $0x3f0] sm:%s163]
                %299 = vst [vmem:[%s171 + $0x1f8] sm:%s163] %v298
                %v300 = vld [vmem:[%s170 + $0x400] sm:%s163]
                %301 = vst [vmem:[%s171 + $0x200] sm:%s163] %v300
                %v302 = vld [vmem:[%s170 + $0x410] sm:%s163]
                %303 = vst [vmem:[%s171 + $0x208] sm:%s163] %v302
                %v304 = vld [vmem:[%s170 + $0x420] sm:%s163]
                %305 = vst [vmem:[%s171 + $0x210] sm:%s163] %v304
                %v306 = vld [vmem:[%s170 + $0x430] sm:%s163]
                %307 = vst [vmem:[%s171 + $0x218] sm:%s163] %v306
                %v308 = vld [vmem:[%s170 + $0x440] sm:%s163]
                %309 = vst [vmem:[%s171 + $0x220] sm:%s163] %v308
                %v310 = vld [vmem:[%s170 + $0x450] sm:%s163]
                %311 = vst [vmem:[%s171 + $0x228] sm:%s163] %v310
                %v312 = vld [vmem:[%s170 + $0x460] sm:%s163]
                %313 = vst [vmem:[%s171 + $0x230] sm:%s163] %v312
                %v314 = vld [vmem:[%s170 + $0x470] sm:%s163]
                %315 = vst [vmem:[%s171 + $0x238] sm:%s163] %v314
                %v316 = vld [vmem:[%s170 + $0x480] sm:%s163]
                %317 = vst [vmem:[%s171 + $0x240] sm:%s163] %v316
                %v318 = vld [vmem:[%s170 + $0x490] sm:%s163]
                %319 = vst [vmem:[%s171 + $0x248] sm:%s163] %v318
                %v320 = vld [vmem:[%s170 + $0x4a0] sm:%s163]
                %321 = vst [vmem:[%s171 + $0x250] sm:%s163] %v320
                %v322 = vld [vmem:[%s170 + $0x4b0] sm:%s163]
                %323 = vst [vmem:[%s171 + $0x258] sm:%s163] %v322
                %v324 = vld [vmem:[%s170 + $0x4c0] sm:%s163]
                %325 = vst [vmem:[%s171 + $0x260] sm:%s163] %v324
                %v326 = vld [vmem:[%s170 + $0x4d0] sm:%s163]
                %327 = vst [vmem:[%s171 + $0x268] sm:%s163] %v326
                %v328 = vld [vmem:[%s170 + $0x4e0] sm:%s163]
                %329 = vst [vmem:[%s171 + $0x270] sm:%s163] %v328
                %v330 = vld [vmem:[%s170 + $0x4f0] sm:%s163]
                %331 = vst [vmem:[%s171 + $0x278] sm:%s163] %v330
                %v332 = vld [vmem:[%s170 + $0x500] sm:%s163]
                %333 = vst [vmem:[%s171 + $0x280] sm:%s163] %v332
                %v334 = vld [vmem:[%s170 + $0x510] sm:%s163]
                %335 = vst [vmem:[%s171 + $0x288] sm:%s163] %v334
                %v336 = vld [vmem:[%s170 + $0x520] sm:%s163]
                %337 = vst [vmem:[%s171 + $0x290] sm:%s163] %v336
                %v338 = vld [vmem:[%s170 + $0x530] sm:%s163]
                %339 = vst [vmem:[%s171 + $0x298] sm:%s163] %v338
                %v340 = vld [vmem:[%s170 + $0x540] sm:%s163]
                %341 = vst [vmem:[%s171 + $0x2a0] sm:%s163] %v340
                %v342 = vld [vmem:[%s170 + $0x550] sm:%s163]
                %343 = vst [vmem:[%s171 + $0x2a8] sm:%s163] %v342
                %v344 = vld [vmem:[%s170 + $0x560] sm:%s163]
                %345 = vst [vmem:[%s171 + $0x2b0] sm:%s163] %v344
                %v346 = vld [vmem:[%s170 + $0x570] sm:%s163]
                %347 = vst [vmem:[%s171 + $0x2b8] sm:%s163] %v346
                %v348 = vld [vmem:[%s170 + $0x580] sm:%s163]
                %349 = vst [vmem:[%s171 + $0x2c0] sm:%s163] %v348
                %v350 = vld [vmem:[%s170 + $0x590] sm:%s163]
                %351 = vst [vmem:[%s171 + $0x2c8] sm:%s163] %v350
                %v352 = vld [vmem:[%s170 + $0x5a0] sm:%s163]
                %353 = vst [vmem:[%s171 + $0x2d0] sm:%s163] %v352
                %v354 = vld [vmem:[%s170 + $0x5b0] sm:%s163]
                %355 = vst [vmem:[%s171 + $0x2d8] sm:%s163] %v354
                %v356 = vld [vmem:[%s170 + $0x5c0] sm:%s163]
                %357 = vst [vmem:[%s171 + $0x2e0] sm:%s163] %v356
                %v358 = vld [vmem:[%s170 + $0x5d0] sm:%s163]
                %359 = vst [vmem:[%s171 + $0x2e8] sm:%s163] %v358
                %v360 = vld [vmem:[%s170 + $0x5e0] sm:%s163]
                %361 = vst [vmem:[%s171 + $0x2f0] sm:%s163] %v360
                %v362 = vld [vmem:[%s170 + $0x5f0] sm:%s163]
                %363 = vst [vmem:[%s171 + $0x2f8] sm:%s163] %v362
                %v364 = vld [vmem:[%s170 + $0x600] sm:%s163]
                %365 = vst [vmem:[%s171 + $0x300] sm:%s163] %v364
                %v366 = vld [vmem:[%s170 + $0x610] sm:%s163]
                %367 = vst [vmem:[%s171 + $0x308] sm:%s163] %v366
                %v368 = vld [vmem:[%s170 + $0x620] sm:%s163]
                %369 = vst [vmem:[%s171 + $0x310] sm:%s163] %v368
                %v370 = vld [vmem:[%s170 + $0x630] sm:%s163]
                %371 = vst [vmem:[%s171 + $0x318] sm:%s163] %v370
                %v372 = vld [vmem:[%s170 + $0x640] sm:%s163]
                %373 = vst [vmem:[%s171 + $0x320] sm:%s163] %v372
                %v374 = vld [vmem:[%s170 + $0x650] sm:%s163]
                %375 = vst [vmem:[%s171 + $0x328] sm:%s163] %v374
                %v376 = vld [vmem:[%s170 + $0x660] sm:%s163]
                %377 = vst [vmem:[%s171 + $0x330] sm:%s163] %v376
                %v378 = vld [vmem:[%s170 + $0x670] sm:%s163]
                %379 = vst [vmem:[%s171 + $0x338] sm:%s163] %v378
                %v380 = vld [vmem:[%s170 + $0x680] sm:%s163]
                %381 = vst [vmem:[%s171 + $0x340] sm:%s163] %v380
                %v382 = vld [vmem:[%s170 + $0x690] sm:%s163]
                %383 = vst [vmem:[%s171 + $0x348] sm:%s163] %v382
                %v384 = vld [vmem:[%s170 + $0x6a0] sm:%s163]
                %385 = vst [vmem:[%s171 + $0x350] sm:%s163] %v384
                %v386 = vld [vmem:[%s170 + $0x6b0] sm:%s163]
                %387 = vst [vmem:[%s171 + $0x358] sm:%s163] %v386
                %v388 = vld [vmem:[%s170 + $0x6c0] sm:%s163]
                %389 = vst [vmem:[%s171 + $0x360] sm:%s163] %v388
                %v390 = vld [vmem:[%s170 + $0x6d0] sm:%s163]
                %391 = vst [vmem:[%s171 + $0x368] sm:%s163] %v390
                %v392 = vld [vmem:[%s170 + $0x6e0] sm:%s163]
                %393 = vst [vmem:[%s171 + $0x370] sm:%s163] %v392
                %v394 = vld [vmem:[%s170 + $0x6f0] sm:%s163]
                %395 = vst [vmem:[%s171 + $0x378] sm:%s163] %v394
                %v396 = vld [vmem:[%s170 + $0x700] sm:%s163]
                %397 = vst [vmem:[%s171 + $0x380] sm:%s163] %v396
                %v398 = vld [vmem:[%s170 + $0x710] sm:%s163]
                %399 = vst [vmem:[%s171 + $0x388] sm:%s163] %v398
                %v400 = vld [vmem:[%s170 + $0x720] sm:%s163]
                %401 = vst [vmem:[%s171 + $0x390] sm:%s163] %v400
                %v402 = vld [vmem:[%s170 + $0x730] sm:%s163]
                %403 = vst [vmem:[%s171 + $0x398] sm:%s163] %v402
                %v404 = vld [vmem:[%s170 + $0x740] sm:%s163]
                %405 = vst [vmem:[%s171 + $0x3a0] sm:%s163] %v404
                %v406 = vld [vmem:[%s170 + $0x750] sm:%s163]
                %407 = vst [vmem:[%s171 + $0x3a8] sm:%s163] %v406
                %v408 = vld [vmem:[%s170 + $0x760] sm:%s163]
                %409 = vst [vmem:[%s171 + $0x3b0] sm:%s163] %v408
                %v410 = vld [vmem:[%s170 + $0x770] sm:%s163]
                %411 = vst [vmem:[%s171 + $0x3b8] sm:%s163] %v410
                %v412 = vld [vmem:[%s170 + $0x780] sm:%s163]
                %413 = vst [vmem:[%s171 + $0x3c0] sm:%s163] %v412
                %v414 = vld [vmem:[%s170 + $0x790] sm:%s163]
                %415 = vst [vmem:[%s171 + $0x3c8] sm:%s163] %v414
                %v416 = vld [vmem:[%s170 + $0x7a0] sm:%s163]
                %417 = vst [vmem:[%s171 + $0x3d0] sm:%s163] %v416
                %v418 = vld [vmem:[%s170 + $0x7b0] sm:%s163]
                %419 = vst [vmem:[%s171 + $0x3d8] sm:%s163] %v418
                %v420 = vld [vmem:[%s170 + $0x7c0] sm:%s163]
                %421 = vst [vmem:[%s171 + $0x3e0] sm:%s163] %v420
                %v422 = vld [vmem:[%s170 + $0x7d0] sm:%s163]
                %423 = vst [vmem:[%s171 + $0x3e8] sm:%s163] %v422
                %v424 = vld [vmem:[%s170 + $0x7e0] sm:%s163]
                %425 = vst [vmem:[%s171 + $0x3f0] sm:%s163] %v424
                %v426 = vld [vmem:[%s170 + $0x7f0] sm:%s163]
                %427 = vst [vmem:[%s171 + $0x3f8] sm:%s163] %v426
              $region45: #{chain_crf_forward.2} parent=39 // loop_footer
                %s169 = sadd.s32 1, %s165
              $region46: #{chain_crf_forward.2} parent=39 // loop_footer_branch
                %164 = sbr.rel target = $region42
              $region47: #{chain_crf_forward.2} parent=39 // loop_exit
                _
            $region40: #{chain_crf_forward.2} parent=31 // pred_fallthru
              _
          $region32: #{chain_crf_forward.2} parent=27 // pred_fallthru
            _
          %696 = vnop
        $region28: #{chain_crf_forward.2} parent=23 // pred_fallthru
          _
      $region24: #{chain_crf_forward.2} parent=5 // pred_fallthru
        _
      %p697 = scmp.le.s32.totalorder 1, %s9
      %p698 = scmp.lt.s32.totalorder %s9, 3
      %p699 = pnand %p697, %p698
      %p700 = pneg %p699
      // Predicated region
      $region63: #{chain_crf_forward.2} parent=5 // pred_check
        _
      $region64: #{chain_crf_forward.2} parent=5 // pred_check_branch
        %702 = sbr.rel (%p699) target = $region66
      $region65: #{chain_crf_forward.2} parent=5 // pred_region
        %s703 = ssub.s32 %s9, 1
        %s704 = sand.u32 %s36, 1
        %s705 = sand.u32 %s36, 1
        %s706 = smul.addr %s705, 1024
        %s707 = scalar_lea.vmem [#allocation2], %s706
        // Predicated region
        $region67: #{chain_crf_forward.2} parent=65 // pred_check
          %p708 = pneg %p49
        $region68: #{chain_crf_forward.2} parent=65 // pred_check_branch
          %710 = sbr.rel (%p708) target = $region70
        $region69: #{chain_crf_forward.2} parent=65 // pred_region
          _
        $region70: #{chain_crf_forward.2} parent=65 // pred_fallthru
          _
        %s711 = sand.u32 %s36, 1
        %s712 = sand.u32 %s36, 1
        %s713 = smul.addr %s712, 1024
        %s714 = scalar_lea.vmem [#allocation2], %s713
        %p715 = pneg %p49
        %p716 = pneg %p46
        %p717 = pneg %p70
        %p718 = pneg %p67
        %p719 = pneg %p91
        %p720 = pneg %p88
        %p721 = pneg %p119
        %p722 = pneg %p116
        %s723 = smul.u32 8, %s19
        %p724 = scmp.lt.s32.totalorder %s723, 15
        %s725 = scalar_select %p724, %s723, 15
        %p726 = scmp.lt.s32.totalorder %s18, 0
        %s727 = scalar_select %p726, %s18, 0
        %s728 = sadd.s32 %s727, %s725
        %s729 = smul.addr %s728, 8
        %s730 = scalar_lea.vmem %s3, %s729
        %s731 = smul.u32 128, %s18
        %s732 = smul.u32 8, %s19
        %p733 = scmp.lt.s32.totalorder %s732, 15
        %s734 = scalar_select %p733, %s732, 15
        %p735 = scmp.lt.s32.totalorder %s18, 0
        %s736 = scalar_select %p735, %s18, 0
        %s737 = sadd.s32 %s736, %s734
        %s738 = smul.addr %s737, 8
        %s739 = scalar_lea.vmem %s3, %s738
        %s740 = smul.u32 8, %s19
        %v741 = vld [vmem:[%s1] sm:$0xff]
        %v742 = vld [vmem:[%s2] sm:$0xff]
        %744 = vset.pattern.permute.xlu0 0
        %745 = vperm.xlu0 %744, %v742
        %v746 = vpop.permute.xlu0 %745
        %v748 = vld [vmem:[%s707] sm:$0x1]
        %v749 = vld [vmem:[%s707 + $0x8] sm:$0x1]
        %v750 = vld [vmem:[%s707 + $0x10] sm:$0x1]
        %v751 = vld [vmem:[%s707 + $0x18] sm:$0x1]
        %v752 = vld [vmem:[%s707 + $0x20] sm:$0x1]
        %v753 = vld [vmem:[%s707 + $0x28] sm:$0x1]
        %v754 = vld [vmem:[%s707 + $0x30] sm:$0x1]
        %v755 = vld [vmem:[%s707 + $0x38] sm:$0x1]
        %v756 = vld [vmem:[%s707 + $0x40] sm:$0x1]
        %v757 = vld [vmem:[%s707 + $0x48] sm:$0x1]
        %v758 = vld [vmem:[%s707 + $0x50] sm:$0x1]
        %v759 = vld [vmem:[%s707 + $0x58] sm:$0x1]
        %v760 = vld [vmem:[%s707 + $0x60] sm:$0x1]
        %v761 = vld [vmem:[%s707 + $0x68] sm:$0x1]
        %v762 = vld [vmem:[%s707 + $0x70] sm:$0x1]
        %v763 = vld [vmem:[%s707 + $0x78] sm:$0x1]
        %v764 = vld [vmem:[%s707 + $0x80] sm:$0x1]
        %v765 = vld [vmem:[%s707 + $0x88] sm:$0x1]
        %v766 = vld [vmem:[%s707 + $0x90] sm:$0x1]
        %v767 = vld [vmem:[%s707 + $0x98] sm:$0x1]
        %v768 = vld [vmem:[%s707 + $0xa0] sm:$0x1]
        %v769 = vld [vmem:[%s707 + $0xa8] sm:$0x1]
        %v770 = vld [vmem:[%s707 + $0xb0] sm:$0x1]
        %v771 = vld [vmem:[%s707 + $0xb8] sm:$0x1]
        %v772 = vld [vmem:[%s707 + $0xc0] sm:$0x1]
        %v773 = vld [vmem:[%s707 + $0xc8] sm:$0x1]
        %v774 = vld [vmem:[%s707 + $0xd0] sm:$0x1]
        %v775 = vld [vmem:[%s707 + $0xd8] sm:$0x1]
        %v776 = vld [vmem:[%s707 + $0xe0] sm:$0x1]
        %v777 = vld [vmem:[%s707 + $0xe8] sm:$0x1]
        %v778 = vld [vmem:[%s707 + $0xf0] sm:$0x1]
        %v779 = vld [vmem:[%s707 + $0xf8] sm:$0x1]
        %v780 = vld [vmem:[%s707 + $0x100] sm:$0x1]
        %v781 = vld [vmem:[%s707 + $0x108] sm:$0x1]
        %v782 = vld [vmem:[%s707 + $0x110] sm:$0x1]
        %v783 = vld [vmem:[%s707 + $0x118] sm:$0x1]
        %v784 = vld [vmem:[%s707 + $0x120] sm:$0x1]
        %v785 = vld [vmem:[%s707 + $0x128] sm:$0x1]
        %v786 = vld [vmem:[%s707 + $0x130] sm:$0x1]
        %v787 = vld [vmem:[%s707 + $0x138] sm:$0x1]
        %v788 = vld [vmem:[%s707 + $0x140] sm:$0x1]
        %v789 = vld [vmem:[%s707 + $0x148] sm:$0x1]
        %v790 = vld [vmem:[%s707 + $0x150] sm:$0x1]
        %v791 = vld [vmem:[%s707 + $0x158] sm:$0x1]
        %v792 = vld [vmem:[%s707 + $0x160] sm:$0x1]
        %v793 = vld [vmem:[%s707 + $0x168] sm:$0x1]
        %v794 = vld [vmem:[%s707 + $0x170] sm:$0x1]
        %v795 = vld [vmem:[%s707 + $0x178] sm:$0x1]
        %v796 = vld [vmem:[%s707 + $0x180] sm:$0x1]
        %v797 = vld [vmem:[%s707 + $0x188] sm:$0x1]
        %v798 = vld [vmem:[%s707 + $0x190] sm:$0x1]
        %v799 = vld [vmem:[%s707 + $0x198] sm:$0x1]
        %v800 = vld [vmem:[%s707 + $0x1a0] sm:$0x1]
        %v801 = vld [vmem:[%s707 + $0x1a8] sm:$0x1]
        %v802 = vld [vmem:[%s707 + $0x1b0] sm:$0x1]
        %v803 = vld [vmem:[%s707 + $0x1b8] sm:$0x1]
        %v804 = vld [vmem:[%s707 + $0x1c0] sm:$0x1]
        %v805 = vld [vmem:[%s707 + $0x1c8] sm:$0x1]
        %v806 = vld [vmem:[%s707 + $0x1d0] sm:$0x1]
        %v807 = vld [vmem:[%s707 + $0x1d8] sm:$0x1]
        %v808 = vld [vmem:[%s707 + $0x1e0] sm:$0x1]
        %v809 = vld [vmem:[%s707 + $0x1e8] sm:$0x1]
        %v810 = vld [vmem:[%s707 + $0x1f0] sm:$0x1]
        %v811 = vld [vmem:[%s707 + $0x1f8] sm:$0x1]
        %v812 = vld [vmem:[%s707 + $0x200] sm:$0x1]
        %v813 = vld [vmem:[%s707 + $0x208] sm:$0x1]
        %v814 = vld [vmem:[%s707 + $0x210] sm:$0x1]
        %v815 = vld [vmem:[%s707 + $0x218] sm:$0x1]
        %v816 = vld [vmem:[%s707 + $0x220] sm:$0x1]
        %v817 = vld [vmem:[%s707 + $0x228] sm:$0x1]
        %v818 = vld [vmem:[%s707 + $0x230] sm:$0x1]
        %v819 = vld [vmem:[%s707 + $0x238] sm:$0x1]
        %v820 = vld [vmem:[%s707 + $0x240] sm:$0x1]
        %v821 = vld [vmem:[%s707 + $0x248] sm:$0x1]
        %v822 = vld [vmem:[%s707 + $0x250] sm:$0x1]
        %v823 = vld [vmem:[%s707 + $0x258] sm:$0x1]
        %v824 = vld [vmem:[%s707 + $0x260] sm:$0x1]
        %v825 = vld [vmem:[%s707 + $0x268] sm:$0x1]
        %v826 = vld [vmem:[%s707 + $0x270] sm:$0x1]
        %v827 = vld [vmem:[%s707 + $0x278] sm:$0x1]
        %v828 = vld [vmem:[%s707 + $0x280] sm:$0x1]
        %v829 = vld [vmem:[%s707 + $0x288] sm:$0x1]
        %v830 = vld [vmem:[%s707 + $0x290] sm:$0x1]
        %v831 = vld [vmem:[%s707 + $0x298] sm:$0x1]
        %v832 = vld [vmem:[%s707 + $0x2a0] sm:$0x1]
        %v833 = vld [vmem:[%s707 + $0x2a8] sm:$0x1]
        %v834 = vld [vmem:[%s707 + $0x2b0] sm:$0x1]
        %v835 = vld [vmem:[%s707 + $0x2b8] sm:$0x1]
        %v836 = vld [vmem:[%s707 + $0x2c0] sm:$0x1]
        %v837 = vld [vmem:[%s707 + $0x2c8] sm:$0x1]
        %v838 = vld [vmem:[%s707 + $0x2d0] sm:$0x1]
        %v839 = vld [vmem:[%s707 + $0x2d8] sm:$0x1]
        %v840 = vld [vmem:[%s707 + $0x2e0] sm:$0x1]
        %v841 = vld [vmem:[%s707 + $0x2e8] sm:$0x1]
        %v842 = vld [vmem:[%s707 + $0x2f0] sm:$0x1]
        %v843 = vld [vmem:[%s707 + $0x2f8] sm:$0x1]
        %v844 = vld [vmem:[%s707 + $0x300] sm:$0x1]
        %v845 = vld [vmem:[%s707 + $0x308] sm:$0x1]
        %v846 = vld [vmem:[%s707 + $0x310] sm:$0x1]
        %v847 = vld [vmem:[%s707 + $0x318] sm:$0x1]
        %v848 = vld [vmem:[%s707 + $0x320] sm:$0x1]
        %v849 = vld [vmem:[%s707 + $0x328] sm:$0x1]
        %v850 = vld [vmem:[%s707 + $0x330] sm:$0x1]
        %v851 = vld [vmem:[%s707 + $0x338] sm:$0x1]
        %v852 = vld [vmem:[%s707 + $0x340] sm:$0x1]
        %v853 = vld [vmem:[%s707 + $0x348] sm:$0x1]
        %v854 = vld [vmem:[%s707 + $0x350] sm:$0x1]
        %v855 = vld [vmem:[%s707 + $0x358] sm:$0x1]
        %v856 = vld [vmem:[%s707 + $0x360] sm:$0x1]
        %v857 = vld [vmem:[%s707 + $0x368] sm:$0x1]
        %v858 = vld [vmem:[%s707 + $0x370] sm:$0x1]
        %v859 = vld [vmem:[%s707 + $0x378] sm:$0x1]
        %v860 = vld [vmem:[%s707 + $0x380] sm:$0x1]
        %v861 = vld [vmem:[%s707 + $0x388] sm:$0x1]
        %v862 = vld [vmem:[%s707 + $0x390] sm:$0x1]
        %v863 = vld [vmem:[%s707 + $0x398] sm:$0x1]
        %v864 = vld [vmem:[%s707 + $0x3a0] sm:$0x1]
        %v865 = vld [vmem:[%s707 + $0x3a8] sm:$0x1]
        %v866 = vld [vmem:[%s707 + $0x3b0] sm:$0x1]
        %v867 = vld [vmem:[%s707 + $0x3b8] sm:$0x1]
        %v868 = vld [vmem:[%s707 + $0x3c0] sm:$0x1]
        %v869 = vld [vmem:[%s707 + $0x3c8] sm:$0x1]
        %v870 = vld [vmem:[%s707 + $0x3d0] sm:$0x1]
        %v871 = vld [vmem:[%s707 + $0x3d8] sm:$0x1]
        %v872 = vld [vmem:[%s707 + $0x3e0] sm:$0x1]
        %v873 = vld [vmem:[%s707 + $0x3e8] sm:$0x1]
        %v874 = vld [vmem:[%s707 + $0x3f0] sm:$0x1]
        %v875 = vld [vmem:[%s707 + $0x3f8] sm:$0x1]
        %v1004 = vrot.slane %v749, 7
        %vm1005 = vcmask 1041409
        %v1006 = vsel %vm1005, %v1004, %v748
        %v1007 = vrot.slane %v750, 6
        %vm1008 = vcmask 1042434
        %v1009 = vsel %vm1008, %v1007, %v1006
        %v1010 = vrot.slane %v751, 5
        %vm1011 = vcmask 1043459
        %v1012 = vsel %vm1011, %v1010, %v1009
        %v1013 = vrot.slane %v752, 4
        %vm1014 = vcmask 1044484
        %v1015 = vsel %vm1014, %v1013, %v1012
        %v1016 = vrot.slane %v753, 3
        %vm1017 = vcmask 1045509
        %v1018 = vsel %vm1017, %v1016, %v1015
        %v1019 = vrot.slane %v754, 2
        %vm1020 = vcmask 1046534
        %v1021 = vsel %vm1020, %v1019, %v1018
        %v1022 = vrot.slane %v755, 1
        %vm1023 = vcmask 1047559
        %v1024 = vsel %vm1023, %v1022, %v1021
        %v1025 = vrot.slane %v757, 7
        %v1026 = vsel %vm1005, %v1025, %v756
        %v1027 = vrot.slane %v758, 6
        %v1028 = vsel %vm1008, %v1027, %v1026
        %v1029 = vrot.slane %v759, 5
        %v1030 = vsel %vm1011, %v1029, %v1028
        %v1031 = vrot.slane %v760, 4
        %v1032 = vsel %vm1014, %v1031, %v1030
        %v1033 = vrot.slane %v761, 3
        %v1034 = vsel %vm1017, %v1033, %v1032
        %v1035 = vrot.slane %v762, 2
        %v1036 = vsel %vm1020, %v1035, %v1034
        %v1037 = vrot.slane %v763, 1
        %v1038 = vsel %vm1023, %v1037, %v1036
        %v1039 = vrot.slane %v765, 7
        %v1040 = vsel %vm1005, %v1039, %v764
        %v1041 = vrot.slane %v766, 6
        %v1042 = vsel %vm1008, %v1041, %v1040
        %v1043 = vrot.slane %v767, 5
        %v1044 = vsel %vm1011, %v1043, %v1042
        %v1045 = vrot.slane %v768, 4
        %v1046 = vsel %vm1014, %v1045, %v1044
        %v1047 = vrot.slane %v769, 3
        %v1048 = vsel %vm1017, %v1047, %v1046
        %v1049 = vrot.slane %v770, 2
        %v1050 = vsel %vm1020, %v1049, %v1048
        %v1051 = vrot.slane %v771, 1
        %v1052 = vsel %vm1023, %v1051, %v1050
        %v1053 = vrot.slane %v773, 7
        %v1054 = vsel %vm1005, %v1053, %v772
        %v1055 = vrot.slane %v774, 6
        %v1056 = vsel %vm1008, %v1055, %v1054
        %v1057 = vrot.slane %v775, 5
        %v1058 = vsel %vm1011, %v1057, %v1056
        %v1059 = vrot.slane %v776, 4
        %v1060 = vsel %vm1014, %v1059, %v1058
        %v1061 = vrot.slane %v777, 3
        %v1062 = vsel %vm1017, %v1061, %v1060
        %v1063 = vrot.slane %v778, 2
        %v1064 = vsel %vm1020, %v1063, %v1062
        %v1065 = vrot.slane %v779, 1
        %v1066 = vsel %vm1023, %v1065, %v1064
        %v1067 = vrot.slane %v781, 7
        %v1068 = vsel %vm1005, %v1067, %v780
        %v1069 = vrot.slane %v782, 6
        %v1070 = vsel %vm1008, %v1069, %v1068
        %v1071 = vrot.slane %v783, 5
        %v1072 = vsel %vm1011, %v1071, %v1070
        %v1073 = vrot.slane %v784, 4
        %v1074 = vsel %vm1014, %v1073, %v1072
        %v1075 = vrot.slane %v785, 3
        %v1076 = vsel %vm1017, %v1075, %v1074
        %v1077 = vrot.slane %v786, 2
        %v1078 = vsel %vm1020, %v1077, %v1076
        %v1079 = vrot.slane %v787, 1
        %v1080 = vsel %vm1023, %v1079, %v1078
        %v1081 = vrot.slane %v789, 7
        %v1082 = vsel %vm1005, %v1081, %v788
        %v1083 = vrot.slane %v790, 6
        %v1084 = vsel %vm1008, %v1083, %v1082
        %v1085 = vrot.slane %v791, 5
        %v1086 = vsel %vm1011, %v1085, %v1084
        %v1087 = vrot.slane %v792, 4
        %v1088 = vsel %vm1014, %v1087, %v1086
        %v1089 = vrot.slane %v793, 3
        %v1090 = vsel %vm1017, %v1089, %v1088
        %v1091 = vrot.slane %v794, 2
        %v1092 = vsel %vm1020, %v1091, %v1090
        %v1093 = vrot.slane %v795, 1
        %v1094 = vsel %vm1023, %v1093, %v1092
        %v1095 = vrot.slane %v797, 7
        %v1096 = vsel %vm1005, %v1095, %v796
        %v1097 = vrot.slane %v798, 6
        %v1098 = vsel %vm1008, %v1097, %v1096
        %v1099 = vrot.slane %v799, 5
        %v1100 = vsel %vm1011, %v1099, %v1098
        %v1101 = vrot.slane %v800, 4
        %v1102 = vsel %vm1014, %v1101, %v1100
        %v1103 = vrot.slane %v801, 3
        %v1104 = vsel %vm1017, %v1103, %v1102
        %v1105 = vrot.slane %v802, 2
        %v1106 = vsel %vm1020, %v1105, %v1104
        %v1107 = vrot.slane %v803, 1
        %v1108 = vsel %vm1023, %v1107, %v1106
        %v1109 = vrot.slane %v805, 7
        %v1110 = vsel %vm1005, %v1109, %v804
        %v1111 = vrot.slane %v806, 6
        %v1112 = vsel %vm1008, %v1111, %v1110
        %v1113 = vrot.slane %v807, 5
        %v1114 = vsel %vm1011, %v1113, %v1112
        %v1115 = vrot.slane %v808, 4
        %v1116 = vsel %vm1014, %v1115, %v1114
        %v1117 = vrot.slane %v809, 3
        %v1118 = vsel %vm1017, %v1117, %v1116
        %v1119 = vrot.slane %v810, 2
        %v1120 = vsel %vm1020, %v1119, %v1118
        %v1121 = vrot.slane %v811, 1
        %v1122 = vsel %vm1023, %v1121, %v1120
        %v1123 = vrot.slane %v813, 7
        %v1124 = vsel %vm1005, %v1123, %v812
        %v1125 = vrot.slane %v814, 6
        %v1126 = vsel %vm1008, %v1125, %v1124
        %v1127 = vrot.slane %v815, 5
        %v1128 = vsel %vm1011, %v1127, %v1126
        %v1129 = vrot.slane %v816, 4
        %v1130 = vsel %vm1014, %v1129, %v1128
        %v1131 = vrot.slane %v817, 3
        %v1132 = vsel %vm1017, %v1131, %v1130
        %v1133 = vrot.slane %v818, 2
        %v1134 = vsel %vm1020, %v1133, %v1132
        %v1135 = vrot.slane %v819, 1
        %v1136 = vsel %vm1023, %v1135, %v1134
        %v1137 = vrot.slane %v821, 7
        %v1138 = vsel %vm1005, %v1137, %v820
        %v1139 = vrot.slane %v822, 6
        %v1140 = vsel %vm1008, %v1139, %v1138
        %v1141 = vrot.slane %v823, 5
        %v1142 = vsel %vm1011, %v1141, %v1140
        %v1143 = vrot.slane %v824, 4
        %v1144 = vsel %vm1014, %v1143, %v1142
        %v1145 = vrot.slane %v825, 3
        %v1146 = vsel %vm1017, %v1145, %v1144
        %v1147 = vrot.slane %v826, 2
        %v1148 = vsel %vm1020, %v1147, %v1146
        %v1149 = vrot.slane %v827, 1
        %v1150 = vsel %vm1023, %v1149, %v1148
        %v1151 = vrot.slane %v829, 7
        %v1152 = vsel %vm1005, %v1151, %v828
        %v1153 = vrot.slane %v830, 6
        %v1154 = vsel %vm1008, %v1153, %v1152
        %v1155 = vrot.slane %v831, 5
        %v1156 = vsel %vm1011, %v1155, %v1154
        %v1157 = vrot.slane %v832, 4
        %v1158 = vsel %vm1014, %v1157, %v1156
        %v1159 = vrot.slane %v833, 3
        %v1160 = vsel %vm1017, %v1159, %v1158
        %v1161 = vrot.slane %v834, 2
        %v1162 = vsel %vm1020, %v1161, %v1160
        %v1163 = vrot.slane %v835, 1
        %v1164 = vsel %vm1023, %v1163, %v1162
        %v1165 = vrot.slane %v837, 7
        %v1166 = vsel %vm1005, %v1165, %v836
        %v1167 = vrot.slane %v838, 6
        %v1168 = vsel %vm1008, %v1167, %v1166
        %v1169 = vrot.slane %v839, 5
        %v1170 = vsel %vm1011, %v1169, %v1168
        %v1171 = vrot.slane %v840, 4
        %v1172 = vsel %vm1014, %v1171, %v1170
        %v1173 = vrot.slane %v841, 3
        %v1174 = vsel %vm1017, %v1173, %v1172
        %v1175 = vrot.slane %v842, 2
        %v1176 = vsel %vm1020, %v1175, %v1174
        %v1177 = vrot.slane %v843, 1
        %v1178 = vsel %vm1023, %v1177, %v1176
        %v1179 = vrot.slane %v845, 7
        %v1180 = vsel %vm1005, %v1179, %v844
        %v1181 = vrot.slane %v846, 6
        %v1182 = vsel %vm1008, %v1181, %v1180
        %v1183 = vrot.slane %v847, 5
        %v1184 = vsel %vm1011, %v1183, %v1182
        %v1185 = vrot.slane %v848, 4
        %v1186 = vsel %vm1014, %v1185, %v1184
        %v1187 = vrot.slane %v849, 3
        %v1188 = vsel %vm1017, %v1187, %v1186
        %v1189 = vrot.slane %v850, 2
        %v1190 = vsel %vm1020, %v1189, %v1188
        %v1191 = vrot.slane %v851, 1
        %v1192 = vsel %vm1023, %v1191, %v1190
        %v1193 = vrot.slane %v853, 7
        %v1194 = vsel %vm1005, %v1193, %v852
        %v1195 = vrot.slane %v854, 6
        %v1196 = vsel %vm1008, %v1195, %v1194
        %v1197 = vrot.slane %v855, 5
        %v1198 = vsel %vm1011, %v1197, %v1196
        %v1199 = vrot.slane %v856, 4
        %v1200 = vsel %vm1014, %v1199, %v1198
        %v1201 = vrot.slane %v857, 3
        %v1202 = vsel %vm1017, %v1201, %v1200
        %v1203 = vrot.slane %v858, 2
        %v1204 = vsel %vm1020, %v1203, %v1202
        %v1205 = vrot.slane %v859, 1
        %v1206 = vsel %vm1023, %v1205, %v1204
        %v1207 = vrot.slane %v861, 7
        %v1208 = vsel %vm1005, %v1207, %v860
        %v1209 = vrot.slane %v862, 6
        %v1210 = vsel %vm1008, %v1209, %v1208
        %v1211 = vrot.slane %v863, 5
        %v1212 = vsel %vm1011, %v1211, %v1210
        %v1213 = vrot.slane %v864, 4
        %v1214 = vsel %vm1014, %v1213, %v1212
        %v1215 = vrot.slane %v865, 3
        %v1216 = vsel %vm1017, %v1215, %v1214
        %v1217 = vrot.slane %v866, 2
        %v1218 = vsel %vm1020, %v1217, %v1216
        %v1219 = vrot.slane %v867, 1
        %v1220 = vsel %vm1023, %v1219, %v1218
        %v1221 = vrot.slane %v869, 7
        %v1222 = vsel %vm1005, %v1221, %v868
        %v1223 = vrot.slane %v870, 6
        %v1224 = vsel %vm1008, %v1223, %v1222
        %v1225 = vrot.slane %v871, 5
        %v1226 = vsel %vm1011, %v1225, %v1224
        %v1227 = vrot.slane %v872, 4
        %v1228 = vsel %vm1014, %v1227, %v1226
        %v1229 = vrot.slane %v873, 3
        %v1230 = vsel %vm1017, %v1229, %v1228
        %v1231 = vrot.slane %v874, 2
        %v1232 = vsel %vm1020, %v1231, %v1230
        %v1233 = vrot.slane %v875, 1
        %v1234 = vsel %vm1023, %v1233, %v1232
        %vm1235 = vcmask 261120
        %v1237 = vsel %vm1235, %v741, 0
        %v1239 = vsel %vm1235, %v1024, 0
        %v1241 = vsel %vm1235, %v1038, 0
        %v1243 = vsel %vm1235, %v1052, 0
        %v1245 = vsel %vm1235, %v1066, 0
        %v1247 = vsel %vm1235, %v1080, 0
        %v1249 = vsel %vm1235, %v1094, 0
        %v1251 = vsel %vm1235, %v1108, 0
        %v1253 = vsel %vm1235, %v1122, 0
        %v1255 = vsel %vm1235, %v1136, 0
        %v1257 = vsel %vm1235, %v1150, 0
        %v1259 = vsel %vm1235, %v1164, 0
        %v1261 = vsel %vm1235, %v1178, 0
        %v1263 = vsel %vm1235, %v1192, 0
        %v1265 = vsel %vm1235, %v1206, 0
        %v1267 = vsel %vm1235, %v1220, 0
        %v1269 = vsel %vm1235, %v1234, 0
        %1271 = vmatprep.subr.mxu0 0.0
        %1272 = vmatpush1.xpose.msra.mxu0 %v1269
        %1273 = vmatprep.subr.mxu0 0.0
        %1274 = vmatpush1.xpose.msra.mxu0 %v1267
        %1275 = vmatprep.subr.mxu0 0.0
        %1276 = vmatpush1.xpose.msra.mxu0 %v1265
        %1277 = vmatprep.subr.mxu0 0.0
        %1278 = vmatpush1.xpose.msra.mxu0 %v1263
        %1279 = vmatprep.subr.mxu0 0.0
        %1280 = vmatpush1.xpose.msra.mxu0 %v1261
        %1281 = vmatprep.subr.mxu0 0.0
        %1282 = vmatpush1.xpose.msra.mxu0 %v1259
        %1283 = vmatprep.subr.mxu0 0.0
        %1284 = vmatpush1.xpose.msra.mxu0 %v1257
        %1285 = vmatprep.subr.mxu0 0.0
        %1286 = vmatpush1.xpose.msra.mxu0 %v1255
        %1287 = vmatprep.subr.mxu0 0.0
        %1288 = vmatpush1.xpose.msra.mxu0 %v1253
        %1289 = vmatprep.subr.mxu0 0.0
        %1290 = vmatpush1.xpose.msra.mxu0 %v1251
        %1291 = vmatprep.subr.mxu0 0.0
        %1292 = vmatpush1.xpose.msra.mxu0 %v1249
        %1293 = vmatprep.subr.mxu0 0.0
        %1294 = vmatpush1.xpose.msra.mxu0 %v1247
        %1295 = vmatprep.subr.mxu0 0.0
        %1296 = vmatpush1.xpose.msra.mxu0 %v1245
        %1297 = vmatprep.subr.mxu0 0.0
        %1298 = vmatpush1.xpose.msra.mxu0 %v1243
        %1299 = vmatprep.subr.mxu0 0.0
        %1300 = vmatpush1.xpose.msra.mxu0 %v1241
        %1301 = vmatprep.subr.mxu0 0.0
        %1302 = vmatpush1.xpose.msra.mxu0 %v1239
        %1303 = vmatprep.subr.mxu0 0.0
        %1304 = vmatpush2.xpose.msra.mxu0 0.0
        %1305 = vmatprep.subr.mxu0 0.0
        %1306 = vmatpush2.xpose.msra.mxu0 0.0
        %1307 = vmatprep.subr.mxu0 0.0
        %1308 = vmatpush2.xpose.msra.mxu0 0.0
        %1309 = vmatprep.subr.mxu0 0.0
        %1310 = vmatpush2.xpose.msra.mxu0 0.0
        %1311 = vmatprep.subr.mxu0 0.0
        %1312 = vmatpush2.xpose.msra.mxu0 0.0
        %1313 = vmatprep.subr.mxu0 0.0
        %1314 = vmatpush2.xpose.msra.mxu0 0.0
        %1315 = vmatprep.subr.mxu0 0.0
        %1316 = vmatpush2.xpose.msra.mxu0 0.0
        %1317 = vmatprep.subr.mxu0 0.0
        %1318 = vmatpush2.xpose.msra.mxu0 0.0
        %1319 = vmatprep.subr.mxu0 0.0
        %1320 = vmatpush2.xpose.msra.mxu0 0.0
        %1321 = vmatprep.subr.mxu0 0.0
        %1322 = vmatpush2.xpose.msra.mxu0 0.0
        %1323 = vmatprep.subr.mxu0 0.0
        %1324 = vmatpush2.xpose.msra.mxu0 0.0
        %1325 = vmatprep.subr.mxu0 0.0
        %1326 = vmatpush2.xpose.msra.mxu0 0.0
        %1327 = vmatprep.subr.mxu0 0.0
        %1328 = vmatpush2.xpose.msra.mxu0 0.0
        %1329 = vmatprep.subr.mxu0 0.0
        %1330 = vmatpush2.xpose.msra.mxu0 0.0
        %1331 = vmatprep.subr.mxu0 0.0
        %1332 = vmatpush2.xpose.msra.mxu0 0.0
        %1333 = vmatprep.subr.mxu0 0.0
        %1334 = vmatpush2.xpose.msra.mxu0 0.0
        %1335 = vmatprep.mubr.f32.mxu0 0.0
        %1336 = vmatmul.mubr.f32.gmra.mxu0 %v1237
        %v1337 = vpop.f32.mrf.mxu0
        %v1338 = vadd.f32 %v746, %v1337
        %v1339 = vpop.f32.mrf.mxu0
        %1340 = vdwg.mxu0
        %1341 = vst [vmem:[%s739] sm:$0xff] %v1338
        %v1342 = vld [vmem:[%s707 + $0x1] sm:$0x1]
        %v1343 = vld [vmem:[%s707 + $0x9] sm:$0x1]
        %v1344 = vld [vmem:[%s707 + $0x11] sm:$0x1]
        %v1345 = vld [vmem:[%s707 + $0x19] sm:$0x1]
        %v1346 = vld [vmem:[%s707 + $0x21] sm:$0x1]
        %v1347 = vld [vmem:[%s707 + $0x29] sm:$0x1]
        %v1348 = vld [vmem:[%s707 + $0x31] sm:$0x1]
        %v1349 = vld [vmem:[%s707 + $0x39] sm:$0x1]
        %v1350 = vld [vmem:[%s707 + $0x41] sm:$0x1]
        %v1351 = vld [vmem:[%s707 + $0x49] sm:$0x1]
        %v1352 = vld [vmem:[%s707 + $0x51] sm:$0x1]
        %v1353 = vld [vmem:[%s707 + $0x59] sm:$0x1]
        %v1354 = vld [vmem:[%s707 + $0x61] sm:$0x1]
        %v1355 = vld [vmem:[%s707 + $0x69] sm:$0x1]
        %v1356 = vld [vmem:[%s707 + $0x71] sm:$0x1]
        %v1357 = vld [vmem:[%s707 + $0x79] sm:$0x1]
        %v1358 = vld [vmem:[%s707 + $0x81] sm:$0x1]
        %v1359 = vld [vmem:[%s707 + $0x89] sm:$0x1]
        %v1360 = vld [vmem:[%s707 + $0x91] sm:$0x1]
        %v1361 = vld [vmem:[%s707 + $0x99] sm:$0x1]
        %v1362 = vld [vmem:[%s707 + $0xa1] sm:$0x1]
        %v1363 = vld [vmem:[%s707 + $0xa9] sm:$0x1]
        %v1364 = vld [vmem:[%s707 + $0xb1] sm:$0x1]
        %v1365 = vld [vmem:[%s707 + $0xb9] sm:$0x1]
        %v1366 = vld [vmem:[%s707 + $0xc1] sm:$0x1]
        %v1367 = vld [vmem:[%s707 + $0xc9] sm:$0x1]
        %v1368 = vld [vmem:[%s707 + $0xd1] sm:$0x1]
        %v1369 = vld [vmem:[%s707 + $0xd9] sm:$0x1]
        %v1370 = vld [vmem:[%s707 + $0xe1] sm:$0x1]
        %v1371 = vld [vmem:[%s707 + $0xe9] sm:$0x1]
        %v1372 = vld [vmem:[%s707 + $0xf1] sm:$0x1]
        %v1373 = vld [vmem:[%s707 + $0xf9] sm:$0x1]
        %v1374 = vld [vmem:[%s707 + $0x101] sm:$0x1]
        %v1375 = vld [vmem:[%s707 + $0x109] sm:$0x1]
        %v1376 = vld [vmem:[%s707 + $0x111] sm:$0x1]
        %v1377 = vld [vmem:[%s707 + $0x119] sm:$0x1]
        %v1378 = vld [vmem:[%s707 + $0x121] sm:$0x1]
        %v1379 = vld [vmem:[%s707 + $0x129] sm:$0x1]
        %v1380 = vld [vmem:[%s707 + $0x131] sm:$0x1]
        %v1381 = vld [vmem:[%s707 + $0x139] sm:$0x1]
        %v1382 = vld [vmem:[%s707 + $0x141] sm:$0x1]
        %v1383 = vld [vmem:[%s707 + $0x149] sm:$0x1]
        %v1384 = vld [vmem:[%s707 + $0x151] sm:$0x1]
        %v1385 = vld [vmem:[%s707 + $0x159] sm:$0x1]
        %v1386 = vld [vmem:[%s707 + $0x161] sm:$0x1]
        %v1387 = vld [vmem:[%s707 + $0x169] sm:$0x1]
        %v1388 = vld [vmem:[%s707 + $0x171] sm:$0x1]
        %v1389 = vld [vmem:[%s707 + $0x179] sm:$0x1]
        %v1390 = vld [vmem:[%s707 + $0x181] sm:$0x1]
        %v1391 = vld [vmem:[%s707 + $0x189] sm:$0x1]
        %v1392 = vld [vmem:[%s707 + $0x191] sm:$0x1]
        %v1393 = vld [vmem:[%s707 + $0x199] sm:$0x1]
        %v1394 = vld [vmem:[%s707 + $0x1a1] sm:$0x1]
        %v1395 = vld [vmem:[%s707 + $0x1a9] sm:$0x1]
        %v1396 = vld [vmem:[%s707 + $0x1b1] sm:$0x1]
        %v1397 = vld [vmem:[%s707 + $0x1b9] sm:$0x1]
        %v1398 = vld [vmem:[%s707 + $0x1c1] sm:$0x1]
        %v1399 = vld [vmem:[%s707 + $0x1c9] sm:$0x1]
        %v1400 = vld [vmem:[%s707 + $0x1d1] sm:$0x1]
        %v1401 = vld [vmem:[%s707 + $0x1d9] sm:$0x1]
        %v1402 = vld [vmem:[%s707 + $0x1e1] sm:$0x1]
        %v1403 = vld [vmem:[%s707 + $0x1e9] sm:$0x1]
        %v1404 = vld [vmem:[%s707 + $0x1f1] sm:$0x1]
        %v1405 = vld [vmem:[%s707 + $0x1f9] sm:$0x1]
        %v1406 = vld [vmem:[%s707 + $0x201] sm:$0x1]
        %v1407 = vld [vmem:[%s707 + $0x209] sm:$0x1]
        %v1408 = vld [vmem:[%s707 + $0x211] sm:$0x1]
        %v1409 = vld [vmem:[%s707 + $0x219] sm:$0x1]
        %v1410 = vld [vmem:[%s707 + $0x221] sm:$0x1]
        %v1411 = vld [vmem:[%s707 + $0x229] sm:$0x1]
        %v1412 = vld [vmem:[%s707 + $0x231] sm:$0x1]
        %v1413 = vld [vmem:[%s707 + $0x239] sm:$0x1]
        %v1414 = vld [vmem:[%s707 + $0x241] sm:$0x1]
        %v1415 = vld [vmem:[%s707 + $0x249] sm:$0x1]
        %v1416 = vld [vmem:[%s707 + $0x251] sm:$0x1]
        %v1417 = vld [vmem:[%s707 + $0x259] sm:$0x1]
        %v1418 = vld [vmem:[%s707 + $0x261] sm:$0x1]
        %v1419 = vld [vmem:[%s707 + $0x269] sm:$0x1]
        %v1420 = vld [vmem:[%s707 + $0x271] sm:$0x1]
        %v1421 = vld [vmem:[%s707 + $0x279] sm:$0x1]
        %v1422 = vld [vmem:[%s707 + $0x281] sm:$0x1]
        %v1423 = vld [vmem:[%s707 + $0x289] sm:$0x1]
        %v1424 = vld [vmem:[%s707 + $0x291] sm:$0x1]
        %v1425 = vld [vmem:[%s707 + $0x299] sm:$0x1]
        %v1426 = vld [vmem:[%s707 + $0x2a1] sm:$0x1]
        %v1427 = vld [vmem:[%s707 + $0x2a9] sm:$0x1]
        %v1428 = vld [vmem:[%s707 + $0x2b1] sm:$0x1]
        %v1429 = vld [vmem:[%s707 + $0x2b9] sm:$0x1]
        %v1430 = vld [vmem:[%s707 + $0x2c1] sm:$0x1]
        %v1431 = vld [vmem:[%s707 + $0x2c9] sm:$0x1]
        %v1432 = vld [vmem:[%s707 + $0x2d1] sm:$0x1]
        %v1433 = vld [vmem:[%s707 + $0x2d9] sm:$0x1]
        %v1434 = vld [vmem:[%s707 + $0x2e1] sm:$0x1]
        %v1435 = vld [vmem:[%s707 + $0x2e9] sm:$0x1]
        %v1436 = vld [vmem:[%s707 + $0x2f1] sm:$0x1]
        %v1437 = vld [vmem:[%s707 + $0x2f9] sm:$0x1]
        %v1438 = vld [vmem:[%s707 + $0x301] sm:$0x1]
        %v1439 = vld [vmem:[%s707 + $0x309] sm:$0x1]
        %v1440 = vld [vmem:[%s707 + $0x311] sm:$0x1]
        %v1441 = vld [vmem:[%s707 + $0x319] sm:$0x1]
        %v1442 = vld [vmem:[%s707 + $0x321] sm:$0x1]
        %v1443 = vld [vmem:[%s707 + $0x329] sm:$0x1]
        %v1444 = vld [vmem:[%s707 + $0x331] sm:$0x1]
        %v1445 = vld [vmem:[%s707 + $0x339] sm:$0x1]
        %v1446 = vld [vmem:[%s707 + $0x341] sm:$0x1]
        %v1447 = vld [vmem:[%s707 + $0x349] sm:$0x1]
        %v1448 = vld [vmem:[%s707 + $0x351] sm:$0x1]
        %v1449 = vld [vmem:[%s707 + $0x359] sm:$0x1]
        %v1450 = vld [vmem:[%s707 + $0x361] sm:$0x1]
        %v1451 = vld [vmem:[%s707 + $0x369] sm:$0x1]
        %v1452 = vld [vmem:[%s707 + $0x371] sm:$0x1]
        %v1453 = vld [vmem:[%s707 + $0x379] sm:$0x1]
        %v1454 = vld [vmem:[%s707 + $0x381] sm:$0x1]
        %v1455 = vld [vmem:[%s707 + $0x389] sm:$0x1]
        %v1456 = vld [vmem:[%s707 + $0x391] sm:$0x1]
        %v1457 = vld [vmem:[%s707 + $0x399] sm:$0x1]
        %v1458 = vld [vmem:[%s707 + $0x3a1] sm:$0x1]
        %v1459 = vld [vmem:[%s707 + $0x3a9] sm:$0x1]
        %v1460 = vld [vmem:[%s707 + $0x3b1] sm:$0x1]
        %v1461 = vld [vmem:[%s707 + $0x3b9] sm:$0x1]
        %v1462 = vld [vmem:[%s707 + $0x3c1] sm:$0x1]
        %v1463 = vld [vmem:[%s707 + $0x3c9] sm:$0x1]
        %v1464 = vld [vmem:[%s707 + $0x3d1] sm:$0x1]
        %v1465 = vld [vmem:[%s707 + $0x3d9] sm:$0x1]
        %v1466 = vld [vmem:[%s707 + $0x3e1] sm:$0x1]
        %v1467 = vld [vmem:[%s707 + $0x3e9] sm:$0x1]
        %v1468 = vld [vmem:[%s707 + $0x3f1] sm:$0x1]
        %v1469 = vld [vmem:[%s707 + $0x3f9] sm:$0x1]
        %v1598 = vrot.slane %v1343, 7
        %v1599 = vsel %vm1005, %v1598, %v1342
        %v1600 = vrot.slane %v1344, 6
        %v1601 = vsel %vm1008, %v1600, %v1599
        %v1602 = vrot.slane %v1345, 5
        %v1603 = vsel %vm1011, %v1602, %v1601
        %v1604 = vrot.slane %v1346, 4
        %v1605 = vsel %vm1014, %v1604, %v1603
        %v1606 = vrot.slane %v1347, 3
        %v1607 = vsel %vm1017, %v1606, %v1605
        %v1608 = vrot.slane %v1348, 2
        %v1609 = vsel %vm1020, %v1608, %v1607
        %v1610 = vrot.slane %v1349, 1
        %v1611 = vsel %vm1023, %v1610, %v1609
        %v1612 = vrot.slane %v1351, 7
        %v1613 = vsel %vm1005, %v1612, %v1350
        %v1614 = vrot.slane %v1352, 6
        %v1615 = vsel %vm1008, %v1614, %v1613
        %v1616 = vrot.slane %v1353, 5
        %v1617 = vsel %vm1011, %v1616, %v1615
        %v1618 = vrot.slane %v1354, 4
        %v1619 = vsel %vm1014, %v1618, %v1617
        %v1620 = vrot.slane %v1355, 3
        %v1621 = vsel %vm1017, %v1620, %v1619
        %v1622 = vrot.slane %v1356, 2
        %v1623 = vsel %vm1020, %v1622, %v1621
        %v1624 = vrot.slane %v1357, 1
        %v1625 = vsel %vm1023, %v1624, %v1623
        %v1626 = vrot.slane %v1359, 7
        %v1627 = vsel %vm1005, %v1626, %v1358
        %v1628 = vrot.slane %v1360, 6
        %v1629 = vsel %vm1008, %v1628, %v1627
        %v1630 = vrot.slane %v1361, 5
        %v1631 = vsel %vm1011, %v1630, %v1629
        %v1632 = vrot.slane %v1362, 4
        %v1633 = vsel %vm1014, %v1632, %v1631
        %v1634 = vrot.slane %v1363, 3
        %v1635 = vsel %vm1017, %v1634, %v1633
        %v1636 = vrot.slane %v1364, 2
        %v1637 = vsel %vm1020, %v1636, %v1635
        %v1638 = vrot.slane %v1365, 1
        %v1639 = vsel %vm1023, %v1638, %v1637
        %v1640 = vrot.slane %v1367, 7
        %v1641 = vsel %vm1005, %v1640, %v1366
        %v1642 = vrot.slane %v1368, 6
        %v1643 = vsel %vm1008, %v1642, %v1641
        %v1644 = vrot.slane %v1369, 5
        %v1645 = vsel %vm1011, %v1644, %v1643
        %v1646 = vrot.slane %v1370, 4
        %v1647 = vsel %vm1014, %v1646, %v1645
        %v1648 = vrot.slane %v1371, 3
        %v1649 = vsel %vm1017, %v1648, %v1647
        %v1650 = vrot.slane %v1372, 2
        %v1651 = vsel %vm1020, %v1650, %v1649
        %v1652 = vrot.slane %v1373, 1
        %v1653 = vsel %vm1023, %v1652, %v1651
        %v1654 = vrot.slane %v1375, 7
        %v1655 = vsel %vm1005, %v1654, %v1374
        %v1656 = vrot.slane %v1376, 6
        %v1657 = vsel %vm1008, %v1656, %v1655
        %v1658 = vrot.slane %v1377, 5
        %v1659 = vsel %vm1011, %v1658, %v1657
        %v1660 = vrot.slane %v1378, 4
        %v1661 = vsel %vm1014, %v1660, %v1659
        %v1662 = vrot.slane %v1379, 3
        %v1663 = vsel %vm1017, %v1662, %v1661
        %v1664 = vrot.slane %v1380, 2
        %v1665 = vsel %vm1020, %v1664, %v1663
        %v1666 = vrot.slane %v1381, 1
        %v1667 = vsel %vm1023, %v1666, %v1665
        %v1668 = vrot.slane %v1383, 7
        %v1669 = vsel %vm1005, %v1668, %v1382
        %v1670 = vrot.slane %v1384, 6
        %v1671 = vsel %vm1008, %v1670, %v1669
        %v1672 = vrot.slane %v1385, 5
        %v1673 = vsel %vm1011, %v1672, %v1671
        %v1674 = vrot.slane %v1386, 4
        %v1675 = vsel %vm1014, %v1674, %v1673
        %v1676 = vrot.slane %v1387, 3
        %v1677 = vsel %vm1017, %v1676, %v1675
        %v1678 = vrot.slane %v1388, 2
        %v1679 = vsel %vm1020, %v1678, %v1677
        %v1680 = vrot.slane %v1389, 1
        %v1681 = vsel %vm1023, %v1680, %v1679
        %v1682 = vrot.slane %v1391, 7
        %v1683 = vsel %vm1005, %v1682, %v1390
        %v1684 = vrot.slane %v1392, 6
        %v1685 = vsel %vm1008, %v1684, %v1683
        %v1686 = vrot.slane %v1393, 5
        %v1687 = vsel %vm1011, %v1686, %v1685
        %v1688 = vrot.slane %v1394, 4
        %v1689 = vsel %vm1014, %v1688, %v1687
        %v1690 = vrot.slane %v1395, 3
        %v1691 = vsel %vm1017, %v1690, %v1689
        %v1692 = vrot.slane %v1396, 2
        %v1693 = vsel %vm1020, %v1692, %v1691
        %v1694 = vrot.slane %v1397, 1
        %v1695 = vsel %vm1023, %v1694, %v1693
        %v1696 = vrot.slane %v1399, 7
        %v1697 = vsel %vm1005, %v1696, %v1398
        %v1698 = vrot.slane %v1400, 6
        %v1699 = vsel %vm1008, %v1698, %v1697
        %v1700 = vrot.slane %v1401, 5
        %v1701 = vsel %vm1011, %v1700, %v1699
        %v1702 = vrot.slane %v1402, 4
        %v1703 = vsel %vm1014, %v1702, %v1701
        %v1704 = vrot.slane %v1403, 3
        %v1705 = vsel %vm1017, %v1704, %v1703
        %v1706 = vrot.slane %v1404, 2
        %v1707 = vsel %vm1020, %v1706, %v1705
        %v1708 = vrot.slane %v1405, 1
        %v1709 = vsel %vm1023, %v1708, %v1707
        %v1710 = vrot.slane %v1407, 7
        %v1711 = vsel %vm1005, %v1710, %v1406
        %v1712 = vrot.slane %v1408, 6
        %v1713 = vsel %vm1008, %v1712, %v1711
        %v1714 = vrot.slane %v1409, 5
        %v1715 = vsel %vm1011, %v1714, %v1713
        %v1716 = vrot.slane %v1410, 4
        %v1717 = vsel %vm1014, %v1716, %v1715
        %v1718 = vrot.slane %v1411, 3
        %v1719 = vsel %vm1017, %v1718, %v1717
        %v1720 = vrot.slane %v1412, 2
        %v1721 = vsel %vm1020, %v1720, %v1719
        %v1722 = vrot.slane %v1413, 1
        %v1723 = vsel %vm1023, %v1722, %v1721
        %v1724 = vrot.slane %v1415, 7
        %v1725 = vsel %vm1005, %v1724, %v1414
        %v1726 = vrot.slane %v1416, 6
        %v1727 = vsel %vm1008, %v1726, %v1725
        %v1728 = vrot.slane %v1417, 5
        %v1729 = vsel %vm1011, %v1728, %v1727
        %v1730 = vrot.slane %v1418, 4
        %v1731 = vsel %vm1014, %v1730, %v1729
        %v1732 = vrot.slane %v1419, 3
        %v1733 = vsel %vm1017, %v1732, %v1731
        %v1734 = vrot.slane %v1420, 2
        %v1735 = vsel %vm1020, %v1734, %v1733
        %v1736 = vrot.slane %v1421, 1
        %v1737 = vsel %vm1023, %v1736, %v1735
        %v1738 = vrot.slane %v1423, 7
        %v1739 = vsel %vm1005, %v1738, %v1422
        %v1740 = vrot.slane %v1424, 6
        %v1741 = vsel %vm1008, %v1740, %v1739
        %v1742 = vrot.slane %v1425, 5
        %v1743 = vsel %vm1011, %v1742, %v1741
        %v1744 = vrot.slane %v1426, 4
        %v1745 = vsel %vm1014, %v1744, %v1743
        %v1746 = vrot.slane %v1427, 3
        %v1747 = vsel %vm1017, %v1746, %v1745
        %v1748 = vrot.slane %v1428, 2
        %v1749 = vsel %vm1020, %v1748, %v1747
        %v1750 = vrot.slane %v1429, 1
        %v1751 = vsel %vm1023, %v1750, %v1749
        %v1752 = vrot.slane %v1431, 7
        %v1753 = vsel %vm1005, %v1752, %v1430
        %v1754 = vrot.slane %v1432, 6
        %v1755 = vsel %vm1008, %v1754, %v1753
        %v1756 = vrot.slane %v1433, 5
        %v1757 = vsel %vm1011, %v1756, %v1755
        %v1758 = vrot.slane %v1434, 4
        %v1759 = vsel %vm1014, %v1758, %v1757
        %v1760 = vrot.slane %v1435, 3
        %v1761 = vsel %vm1017, %v1760, %v1759
        %v1762 = vrot.slane %v1436, 2
        %v1763 = vsel %vm1020, %v1762, %v1761
        %v1764 = vrot.slane %v1437, 1
        %v1765 = vsel %vm1023, %v1764, %v1763
        %v1766 = vrot.slane %v1439, 7
        %v1767 = vsel %vm1005, %v1766, %v1438
        %v1768 = vrot.slane %v1440, 6
        %v1769 = vsel %vm1008, %v1768, %v1767
        %v1770 = vrot.slane %v1441, 5
        %v1771 = vsel %vm1011, %v1770, %v1769
        %v1772 = vrot.slane %v1442, 4
        %v1773 = vsel %vm1014, %v1772, %v1771
        %v1774 = vrot.slane %v1443, 3
        %v1775 = vsel %vm1017, %v1774, %v1773
        %v1776 = vrot.slane %v1444, 2
        %v1777 = vsel %vm1020, %v1776, %v1775
        %v1778 = vrot.slane %v1445, 1
        %v1779 = vsel %vm1023, %v1778, %v1777
        %v1780 = vrot.slane %v1447, 7
        %v1781 = vsel %vm1005, %v1780, %v1446
        %v1782 = vrot.slane %v1448, 6
        %v1783 = vsel %vm1008, %v1782, %v1781
        %v1784 = vrot.slane %v1449, 5
        %v1785 = vsel %vm1011, %v1784, %v1783
        %v1786 = vrot.slane %v1450, 4
        %v1787 = vsel %vm1014, %v1786, %v1785
        %v1788 = vrot.slane %v1451, 3
        %v1789 = vsel %vm1017, %v1788, %v1787
        %v1790 = vrot.slane %v1452, 2
        %v1791 = vsel %vm1020, %v1790, %v1789
        %v1792 = vrot.slane %v1453, 1
        %v1793 = vsel %vm1023, %v1792, %v1791
        %v1794 = vrot.slane %v1455, 7
        %v1795 = vsel %vm1005, %v1794, %v1454
        %v1796 = vrot.slane %v1456, 6
        %v1797 = vsel %vm1008, %v1796, %v1795
        %v1798 = vrot.slane %v1457, 5
        %v1799 = vsel %vm1011, %v1798, %v1797
        %v1800 = vrot.slane %v1458, 4
        %v1801 = vsel %vm1014, %v1800, %v1799
        %v1802 = vrot.slane %v1459, 3
        %v1803 = vsel %vm1017, %v1802, %v1801
        %v1804 = vrot.slane %v1460, 2
        %v1805 = vsel %vm1020, %v1804, %v1803
        %v1806 = vrot.slane %v1461, 1
        %v1807 = vsel %vm1023, %v1806, %v1805
        %v1808 = vrot.slane %v1463, 7
        %v1809 = vsel %vm1005, %v1808, %v1462
        %v1810 = vrot.slane %v1464, 6
        %v1811 = vsel %vm1008, %v1810, %v1809
        %v1812 = vrot.slane %v1465, 5
        %v1813 = vsel %vm1011, %v1812, %v1811
        %v1814 = vrot.slane %v1466, 4
        %v1815 = vsel %vm1014, %v1814, %v1813
        %v1816 = vrot.slane %v1467, 3
        %v1817 = vsel %vm1017, %v1816, %v1815
        %v1818 = vrot.slane %v1468, 2
        %v1819 = vsel %vm1020, %v1818, %v1817
        %v1820 = vrot.slane %v1469, 1
        %v1821 = vsel %vm1023, %v1820, %v1819
        %v1822 = vsel %vm1235, %v1611, 0
        %v1824 = vsel %vm1235, %v1625, 0
        %v1826 = vsel %vm1235, %v1639, 0
        %v1828 = vsel %vm1235, %v1653, 0
        %v1830 = vsel %vm1235, %v1667, 0
        %v1832 = vsel %vm1235, %v1681, 0
        %v1834 = vsel %vm1235, %v1695, 0
        %v1836 = vsel %vm1235, %v1709, 0
        %v1838 = vsel %vm1235, %v1723, 0
        %v1840 = vsel %vm1235, %v1737, 0
        %v1842 = vsel %vm1235, %v1751, 0
        %v1844 = vsel %vm1235, %v1765, 0
        %v1846 = vsel %vm1235, %v1779, 0
        %v1848 = vsel %vm1235, %v1793, 0
        %v1850 = vsel %vm1235, %v1807, 0
        %v1852 = vsel %vm1235, %v1821, 0
        %1854 = vmatprep.subr.mxu0 0.0
        %1855 = vmatpush1.xpose.msra.mxu0 %v1852
        %1856 = vmatprep.subr.mxu0 0.0
        %1857 = vmatpush1.xpose.msra.mxu0 %v1850
        %1858 = vmatprep.subr.mxu0 0.0
        %1859 = vmatpush1.xpose.msra.mxu0 %v1848
        %1860 = vmatprep.subr.mxu0 0.0
        %1861 = vmatpush1.xpose.msra.mxu0 %v1846
        %1862 = vmatprep.subr.mxu0 0.0
        %1863 = vmatpush1.xpose.msra.mxu0 %v1844
        %1864 = vmatprep.subr.mxu0 0.0
        %1865 = vmatpush1.xpose.msra.mxu0 %v1842
        %1866 = vmatprep.subr.mxu0 0.0
        %1867 = vmatpush1.xpose.msra.mxu0 %v1840
        %1868 = vmatprep.subr.mxu0 0.0
        %1869 = vmatpush1.xpose.msra.mxu0 %v1838
        %1870 = vmatprep.subr.mxu0 0.0
        %1871 = vmatpush1.xpose.msra.mxu0 %v1836
        %1872 = vmatprep.subr.mxu0 0.0
        %1873 = vmatpush1.xpose.msra.mxu0 %v1834
        %1874 = vmatprep.subr.mxu0 0.0
        %1875 = vmatpush1.xpose.msra.mxu0 %v1832
        %1876 = vmatprep.subr.mxu0 0.0
        %1877 = vmatpush1.xpose.msra.mxu0 %v1830
        %1878 = vmatprep.subr.mxu0 0.0
        %1879 = vmatpush1.xpose.msra.mxu0 %v1828
        %1880 = vmatprep.subr.mxu0 0.0
        %1881 = vmatpush1.xpose.msra.mxu0 %v1826
        %1882 = vmatprep.subr.mxu0 0.0
        %1883 = vmatpush1.xpose.msra.mxu0 %v1824
        %1884 = vmatprep.subr.mxu0 0.0
        %1885 = vmatpush1.xpose.msra.mxu0 %v1822
        %1886 = vmatprep.subr.mxu0 0.0
        %1887 = vmatpush2.xpose.msra.mxu0 0.0
        %1888 = vmatprep.subr.mxu0 0.0
        %1889 = vmatpush2.xpose.msra.mxu0 0.0
        %1890 = vmatprep.subr.mxu0 0.0
        %1891 = vmatpush2.xpose.msra.mxu0 0.0
        %1892 = vmatprep.subr.mxu0 0.0
        %1893 = vmatpush2.xpose.msra.mxu0 0.0
        %1894 = vmatprep.subr.mxu0 0.0
        %1895 = vmatpush2.xpose.msra.mxu0 0.0
        %1896 = vmatprep.subr.mxu0 0.0
        %1897 = vmatpush2.xpose.msra.mxu0 0.0
        %1898 = vmatprep.subr.mxu0 0.0
        %1899 = vmatpush2.xpose.msra.mxu0 0.0
        %1900 = vmatprep.subr.mxu0 0.0
        %1901 = vmatpush2.xpose.msra.mxu0 0.0
        %1902 = vmatprep.subr.mxu0 0.0
        %1903 = vmatpush2.xpose.msra.mxu0 0.0
        %1904 = vmatprep.subr.mxu0 0.0
        %1905 = vmatpush2.xpose.msra.mxu0 0.0
        %1906 = vmatprep.subr.mxu0 0.0
        %1907 = vmatpush2.xpose.msra.mxu0 0.0
        %1908 = vmatprep.subr.mxu0 0.0
        %1909 = vmatpush2.xpose.msra.mxu0 0.0
        %1910 = vmatprep.subr.mxu0 0.0
        %1911 = vmatpush2.xpose.msra.mxu0 0.0
        %1912 = vmatprep.subr.mxu0 0.0
        %1913 = vmatpush2.xpose.msra.mxu0 0.0
        %1914 = vmatprep.subr.mxu0 0.0
        %1915 = vmatpush2.xpose.msra.mxu0 0.0
        %1916 = vmatprep.subr.mxu0 0.0
        %1917 = vmatpush2.xpose.msra.mxu0 0.0
        %1918 = vmatprep.mubr.f32.mxu0 0.0
        %1919 = vmatmul.mubr.f32.gmra.mxu0 %v1237
        %v1920 = vpop.f32.mrf.mxu0
        %v1921 = vadd.f32 %v746, %v1920
        %v1922 = vpop.f32.mrf.mxu0
        %1923 = vdwg.mxu0
        %s1924 = scalar_lea.vmem %s739, 8
        %1925 = vst [vmem:[%s1924] sm:$0xff] %v1921
        %v1926 = vld [vmem:[%s707 + $0x2] sm:$0x1]
        %v1927 = vld [vmem:[%s707 + $0xa] sm:$0x1]
        %v1928 = vld [vmem:[%s707 + $0x12] sm:$0x1]
        %v1929 = vld [vmem:[%s707 + $0x1a] sm:$0x1]
        %v1930 = vld [vmem:[%s707 + $0x22] sm:$0x1]
        %v1931 = vld [vmem:[%s707 + $0x2a] sm:$0x1]
        %v1932 = vld [vmem:[%s707 + $0x32] sm:$0x1]
        %v1933 = vld [vmem:[%s707 + $0x3a] sm:$0x1]
        %v1934 = vld [vmem:[%s707 + $0x42] sm:$0x1]
        %v1935 = vld [vmem:[%s707 + $0x4a] sm:$0x1]
        %v1936 = vld [vmem:[%s707 + $0x52] sm:$0x1]
        %v1937 = vld [vmem:[%s707 + $0x5a] sm:$0x1]
        %v1938 = vld [vmem:[%s707 + $0x62] sm:$0x1]
        %v1939 = vld [vmem:[%s707 + $0x6a] sm:$0x1]
        %v1940 = vld [vmem:[%s707 + $0x72] sm:$0x1]
        %v1941 = vld [vmem:[%s707 + $0x7a] sm:$0x1]
        %v1942 = vld [vmem:[%s707 + $0x82] sm:$0x1]
        %v1943 = vld [vmem:[%s707 + $0x8a] sm:$0x1]
        %v1944 = vld [vmem:[%s707 + $0x92] sm:$0x1]
        %v1945 = vld [vmem:[%s707 + $0x9a] sm:$0x1]
        %v1946 = vld [vmem:[%s707 + $0xa2] sm:$0x1]
        %v1947 = vld [vmem:[%s707 + $0xaa] sm:$0x1]
        %v1948 = vld [vmem:[%s707 + $0xb2] sm:$0x1]
        %v1949 = vld [vmem:[%s707 + $0xba] sm:$0x1]
        %v1950 = vld [vmem:[%s707 + $0xc2] sm:$0x1]
        %v1951 = vld [vmem:[%s707 + $0xca] sm:$0x1]
        %v1952 = vld [vmem:[%s707 + $0xd2] sm:$0x1]
        %v1953 = vld [vmem:[%s707 + $0xda] sm:$0x1]
        %v1954 = vld [vmem:[%s707 + $0xe2] sm:$0x1]
        %v1955 = vld [vmem:[%s707 + $0xea] sm:$0x1]
        %v1956 = vld [vmem:[%s707 + $0xf2] sm:$0x1]
        %v1957 = vld [vmem:[%s707 + $0xfa] sm:$0x1]
        %v1958 = vld [vmem:[%s707 + $0x102] sm:$0x1]
        %v1959 = vld [vmem:[%s707 + $0x10a] sm:$0x1]
        %v1960 = vld [vmem:[%s707 + $0x112] sm:$0x1]
        %v1961 = vld [vmem:[%s707 + $0x11a] sm:$0x1]
        %v1962 = vld [vmem:[%s707 + $0x122] sm:$0x1]
        %v1963 = vld [vmem:[%s707 + $0x12a] sm:$0x1]
        %v1964 = vld [vmem:[%s707 + $0x132] sm:$0x1]
        %v1965 = vld [vmem:[%s707 + $0x13a] sm:$0x1]
        %v1966 = vld [vmem:[%s707 + $0x142] sm:$0x1]
        %v1967 = vld [vmem:[%s707 + $0x14a] sm:$0x1]
        %v1968 = vld [vmem:[%s707 + $0x152] sm:$0x1]
        %v1969 = vld [vmem:[%s707 + $0x15a] sm:$0x1]
        %v1970 = vld [vmem:[%s707 + $0x162] sm:$0x1]
        %v1971 = vld [vmem:[%s707 + $0x16a] sm:$0x1]
        %v1972 = vld [vmem:[%s707 + $0x172] sm:$0x1]
        %v1973 = vld [vmem:[%s707 + $0x17a] sm:$0x1]
        %v1974 = vld [vmem:[%s707 + $0x182] sm:$0x1]
        %v1975 = vld [vmem:[%s707 + $0x18a] sm:$0x1]
        %v1976 = vld [vmem:[%s707 + $0x192] sm:$0x1]
        %v1977 = vld [vmem:[%s707 + $0x19a] sm:$0x1]
        %v1978 = vld [vmem:[%s707 + $0x1a2] sm:$0x1]
        %v1979 = vld [vmem:[%s707 + $0x1aa] sm:$0x1]
        %v1980 = vld [vmem:[%s707 + $0x1b2] sm:$0x1]
        %v1981 = vld [vmem:[%s707 + $0x1ba] sm:$0x1]
        %v1982 = vld [vmem:[%s707 + $0x1c2] sm:$0x1]
        %v1983 = vld [vmem:[%s707 + $0x1ca] sm:$0x1]
        %v1984 = vld [vmem:[%s707 + $0x1d2] sm:$0x1]
        %v1985 = vld [vmem:[%s707 + $0x1da] sm:$0x1]
        %v1986 = vld [vmem:[%s707 + $0x1e2] sm:$0x1]
        %v1987 = vld [vmem:[%s707 + $0x1ea] sm:$0x1]
        %v1988 = vld [vmem:[%s707 + $0x1f2] sm:$0x1]
        %v1989 = vld [vmem:[%s707 + $0x1fa] sm:$0x1]
        %v1990 = vld [vmem:[%s707 + $0x202] sm:$0x1]
        %v1991 = vld [vmem:[%s707 + $0x20a] sm:$0x1]
        %v1992 = vld [vmem:[%s707 + $0x212] sm:$0x1]
        %v1993 = vld [vmem:[%s707 + $0x21a] sm:$0x1]
        %v1994 = vld [vmem:[%s707 + $0x222] sm:$0x1]
        %v1995 = vld [vmem:[%s707 + $0x22a] sm:$0x1]
        %v1996 = vld [vmem:[%s707 + $0x232] sm:$0x1]
        %v1997 = vld [vmem:[%s707 + $0x23a] sm:$0x1]
        %v1998 = vld [vmem:[%s707 + $0x242] sm:$0x1]
        %v1999 = vld [vmem:[%s707 + $0x24a] sm:$0x1]
        %v2000 = vld [vmem:[%s707 + $0x252] sm:$0x1]
        %v2001 = vld [vmem:[%s707 + $0x25a] sm:$0x1]
        %v2002 = vld [vmem:[%s707 + $0x262] sm:$0x1]
        %v2003 = vld [vmem:[%s707 + $0x26a] sm:$0x1]
        %v2004 = vld [vmem:[%s707 + $0x272] sm:$0x1]
        %v2005 = vld [vmem:[%s707 + $0x27a] sm:$0x1]
        %v2006 = vld [vmem:[%s707 + $0x282] sm:$0x1]
        %v2007 = vld [vmem:[%s707 + $0x28a] sm:$0x1]
        %v2008 = vld [vmem:[%s707 + $0x292] sm:$0x1]
        %v2009 = vld [vmem:[%s707 + $0x29a] sm:$0x1]
        %v2010 = vld [vmem:[%s707 + $0x2a2] sm:$0x1]
        %v2011 = vld [vmem:[%s707 + $0x2aa] sm:$0x1]
        %v2012 = vld [vmem:[%s707 + $0x2b2] sm:$0x1]
        %v2013 = vld [vmem:[%s707 + $0x2ba] sm:$0x1]
        %v2014 = vld [vmem:[%s707 + $0x2c2] sm:$0x1]
        %v2015 = vld [vmem:[%s707 + $0x2ca] sm:$0x1]
        %v2016 = vld [vmem:[%s707 + $0x2d2] sm:$0x1]
        %v2017 = vld [vmem:[%s707 + $0x2da] sm:$0x1]
        %v2018 = vld [vmem:[%s707 + $0x2e2] sm:$0x1]
        %v2019 = vld [vmem:[%s707 + $0x2ea] sm:$0x1]
        %v2020 = vld [vmem:[%s707 + $0x2f2] sm:$0x1]
        %v2021 = vld [vmem:[%s707 + $0x2fa] sm:$0x1]
        %v2022 = vld [vmem:[%s707 + $0x302] sm:$0x1]
        %v2023 = vld [vmem:[%s707 + $0x30a] sm:$0x1]
        %v2024 = vld [vmem:[%s707 + $0x312] sm:$0x1]
        %v2025 = vld [vmem:[%s707 + $0x31a] sm:$0x1]
        %v2026 = vld [vmem:[%s707 + $0x322] sm:$0x1]
        %v2027 = vld [vmem:[%s707 + $0x32a] sm:$0x1]
        %v2028 = vld [vmem:[%s707 + $0x332] sm:$0x1]
        %v2029 = vld [vmem:[%s707 + $0x33a] sm:$0x1]
        %v2030 = vld [vmem:[%s707 + $0x342] sm:$0x1]
        %v2031 = vld [vmem:[%s707 + $0x34a] sm:$0x1]
        %v2032 = vld [vmem:[%s707 + $0x352] sm:$0x1]
        %v2033 = vld [vmem:[%s707 + $0x35a] sm:$0x1]
        %v2034 = vld [vmem:[%s707 + $0x362] sm:$0x1]
        %v2035 = vld [vmem:[%s707 + $0x36a] sm:$0x1]
        %v2036 = vld [vmem:[%s707 + $0x372] sm:$0x1]
        %v2037 = vld [vmem:[%s707 + $0x37a] sm:$0x1]
        %v2038 = vld [vmem:[%s707 + $0x382] sm:$0x1]
        %v2039 = vld [vmem:[%s707 + $0x38a] sm:$0x1]
        %v2040 = vld [vmem:[%s707 + $0x392] sm:$0x1]
        %v2041 = vld [vmem:[%s707 + $0x39a] sm:$0x1]
        %v2042 = vld [vmem:[%s707 + $0x3a2] sm:$0x1]
        %v2043 = vld [vmem:[%s707 + $0x3aa] sm:$0x1]
        %v2044 = vld [vmem:[%s707 + $0x3b2] sm:$0x1]
        %v2045 = vld [vmem:[%s707 + $0x3ba] sm:$0x1]
        %v2046 = vld [vmem:[%s707 + $0x3c2] sm:$0x1]
        %v2047 = vld [vmem:[%s707 + $0x3ca] sm:$0x1]
        %v2048 = vld [vmem:[%s707 + $0x3d2] sm:$0x1]
        %v2049 = vld [vmem:[%s707 + $0x3da] sm:$0x1]
        %v2050 = vld [vmem:[%s707 + $0x3e2] sm:$0x1]
        %v2051 = vld [vmem:[%s707 + $0x3ea] sm:$0x1]
        %v2052 = vld [vmem:[%s707 + $0x3f2] sm:$0x1]
        %v2053 = vld [vmem:[%s707 + $0x3fa] sm:$0x1]
        %v2182 = vrot.slane %v1927, 7
        %v2183 = vsel %vm1005, %v2182, %v1926
        %v2184 = vrot.slane %v1928, 6
        %v2185 = vsel %vm1008, %v2184, %v2183
        %v2186 = vrot.slane %v1929, 5
        %v2187 = vsel %vm1011, %v2186, %v2185
        %v2188 = vrot.slane %v1930, 4
        %v2189 = vsel %vm1014, %v2188, %v2187
        %v2190 = vrot.slane %v1931, 3
        %v2191 = vsel %vm1017, %v2190, %v2189
        %v2192 = vrot.slane %v1932, 2
        %v2193 = vsel %vm1020, %v2192, %v2191
        %v2194 = vrot.slane %v1933, 1
        %v2195 = vsel %vm1023, %v2194, %v2193
        %v2196 = vrot.slane %v1935, 7
        %v2197 = vsel %vm1005, %v2196, %v1934
        %v2198 = vrot.slane %v1936, 6
        %v2199 = vsel %vm1008, %v2198, %v2197
        %v2200 = vrot.slane %v1937, 5
        %v2201 = vsel %vm1011, %v2200, %v2199
        %v2202 = vrot.slane %v1938, 4
        %v2203 = vsel %vm1014, %v2202, %v2201
        %v2204 = vrot.slane %v1939, 3
        %v2205 = vsel %vm1017, %v2204, %v2203
        %v2206 = vrot.slane %v1940, 2
        %v2207 = vsel %vm1020, %v2206, %v2205
        %v2208 = vrot.slane %v1941, 1
        %v2209 = vsel %vm1023, %v2208, %v2207
        %v2210 = vrot.slane %v1943, 7
        %v2211 = vsel %vm1005, %v2210, %v1942
        %v2212 = vrot.slane %v1944, 6
        %v2213 = vsel %vm1008, %v2212, %v2211
        %v2214 = vrot.slane %v1945, 5
        %v2215 = vsel %vm1011, %v2214, %v2213
        %v2216 = vrot.slane %v1946, 4
        %v2217 = vsel %vm1014, %v2216, %v2215
        %v2218 = vrot.slane %v1947, 3
        %v2219 = vsel %vm1017, %v2218, %v2217
        %v2220 = vrot.slane %v1948, 2
        %v2221 = vsel %vm1020, %v2220, %v2219
        %v2222 = vrot.slane %v1949, 1
        %v2223 = vsel %vm1023, %v2222, %v2221
        %v2224 = vrot.slane %v1951, 7
        %v2225 = vsel %vm1005, %v2224, %v1950
        %v2226 = vrot.slane %v1952, 6
        %v2227 = vsel %vm1008, %v2226, %v2225
        %v2228 = vrot.slane %v1953, 5
        %v2229 = vsel %vm1011, %v2228, %v2227
        %v2230 = vrot.slane %v1954, 4
        %v2231 = vsel %vm1014, %v2230, %v2229
        %v2232 = vrot.slane %v1955, 3
        %v2233 = vsel %vm1017, %v2232, %v2231
        %v2234 = vrot.slane %v1956, 2
        %v2235 = vsel %vm1020, %v2234, %v2233
        %v2236 = vrot.slane %v1957, 1
        %v2237 = vsel %vm1023, %v2236, %v2235
        %v2238 = vrot.slane %v1959, 7
        %v2239 = vsel %vm1005, %v2238, %v1958
        %v2240 = vrot.slane %v1960, 6
        %v2241 = vsel %vm1008, %v2240, %v2239
        %v2242 = vrot.slane %v1961, 5
        %v2243 = vsel %vm1011, %v2242, %v2241
        %v2244 = vrot.slane %v1962, 4
        %v2245 = vsel %vm1014, %v2244, %v2243
        %v2246 = vrot.slane %v1963, 3
        %v2247 = vsel %vm1017, %v2246, %v2245
        %v2248 = vrot.slane %v1964, 2
        %v2249 = vsel %vm1020, %v2248, %v2247
        %v2250 = vrot.slane %v1965, 1
        %v2251 = vsel %vm1023, %v2250, %v2249
        %v2252 = vrot.slane %v1967, 7
        %v2253 = vsel %vm1005, %v2252, %v1966
        %v2254 = vrot.slane %v1968, 6
        %v2255 = vsel %vm1008, %v2254, %v2253
        %v2256 = vrot.slane %v1969, 5
        %v2257 = vsel %vm1011, %v2256, %v2255
        %v2258 = vrot.slane %v1970, 4
        %v2259 = vsel %vm1014, %v2258, %v2257
        %v2260 = vrot.slane %v1971, 3
        %v2261 = vsel %vm1017, %v2260, %v2259
        %v2262 = vrot.slane %v1972, 2
        %v2263 = vsel %vm1020, %v2262, %v2261
        %v2264 = vrot.slane %v1973, 1
        %v2265 = vsel %vm1023, %v2264, %v2263
        %v2266 = vrot.slane %v1975, 7
        %v2267 = vsel %vm1005, %v2266, %v1974
        %v2268 = vrot.slane %v1976, 6
        %v2269 = vsel %vm1008, %v2268, %v2267
        %v2270 = vrot.slane %v1977, 5
        %v2271 = vsel %vm1011, %v2270, %v2269
        %v2272 = vrot.slane %v1978, 4
        %v2273 = vsel %vm1014, %v2272, %v2271
        %v2274 = vrot.slane %v1979, 3
        %v2275 = vsel %vm1017, %v2274, %v2273
        %v2276 = vrot.slane %v1980, 2
        %v2277 = vsel %vm1020, %v2276, %v2275
        %v2278 = vrot.slane %v1981, 1
        %v2279 = vsel %vm1023, %v2278, %v2277
        %v2280 = vrot.slane %v1983, 7
        %v2281 = vsel %vm1005, %v2280, %v1982
        %v2282 = vrot.slane %v1984, 6
        %v2283 = vsel %vm1008, %v2282, %v2281
        %v2284 = vrot.slane %v1985, 5
        %v2285 = vsel %vm1011, %v2284, %v2283
        %v2286 = vrot.slane %v1986, 4
        %v2287 = vsel %vm1014, %v2286, %v2285
        %v2288 = vrot.slane %v1987, 3
        %v2289 = vsel %vm1017, %v2288, %v2287
        %v2290 = vrot.slane %v1988, 2
        %v2291 = vsel %vm1020, %v2290, %v2289
        %v2292 = vrot.slane %v1989, 1
        %v2293 = vsel %vm1023, %v2292, %v2291
        %v2294 = vrot.slane %v1991, 7
        %v2295 = vsel %vm1005, %v2294, %v1990
        %v2296 = vrot.slane %v1992, 6
        %v2297 = vsel %vm1008, %v2296, %v2295
        %v2298 = vrot.slane %v1993, 5
        %v2299 = vsel %vm1011, %v2298, %v2297
        %v2300 = vrot.slane %v1994, 4
        %v2301 = vsel %vm1014, %v2300, %v2299
        %v2302 = vrot.slane %v1995, 3
        %v2303 = vsel %vm1017, %v2302, %v2301
        %v2304 = vrot.slane %v1996, 2
        %v2305 = vsel %vm1020, %v2304, %v2303
        %v2306 = vrot.slane %v1997, 1
        %v2307 = vsel %vm1023, %v2306, %v2305
        %v2308 = vrot.slane %v1999, 7
        %v2309 = vsel %vm1005, %v2308, %v1998
        %v2310 = vrot.slane %v2000, 6
        %v2311 = vsel %vm1008, %v2310, %v2309
        %v2312 = vrot.slane %v2001, 5
        %v2313 = vsel %vm1011, %v2312, %v2311
        %v2314 = vrot.slane %v2002, 4
        %v2315 = vsel %vm1014, %v2314, %v2313
        %v2316 = vrot.slane %v2003, 3
        %v2317 = vsel %vm1017, %v2316, %v2315
        %v2318 = vrot.slane %v2004, 2
        %v2319 = vsel %vm1020, %v2318, %v2317
        %v2320 = vrot.slane %v2005, 1
        %v2321 = vsel %vm1023, %v2320, %v2319
        %v2322 = vrot.slane %v2007, 7
        %v2323 = vsel %vm1005, %v2322, %v2006
        %v2324 = vrot.slane %v2008, 6
        %v2325 = vsel %vm1008, %v2324, %v2323
        %v2326 = vrot.slane %v2009, 5
        %v2327 = vsel %vm1011, %v2326, %v2325
        %v2328 = vrot.slane %v2010, 4
        %v2329 = vsel %vm1014, %v2328, %v2327
        %v2330 = vrot.slane %v2011, 3
        %v2331 = vsel %vm1017, %v2330, %v2329
        %v2332 = vrot.slane %v2012, 2
        %v2333 = vsel %vm1020, %v2332, %v2331
        %v2334 = vrot.slane %v2013, 1
        %v2335 = vsel %vm1023, %v2334, %v2333
        %v2336 = vrot.slane %v2015, 7
        %v2337 = vsel %vm1005, %v2336, %v2014
        %v2338 = vrot.slane %v2016, 6
        %v2339 = vsel %vm1008, %v2338, %v2337
        %v2340 = vrot.slane %v2017, 5
        %v2341 = vsel %vm1011, %v2340, %v2339
        %v2342 = vrot.slane %v2018, 4
        %v2343 = vsel %vm1014, %v2342, %v2341
        %v2344 = vrot.slane %v2019, 3
        %v2345 = vsel %vm1017, %v2344, %v2343
        %v2346 = vrot.slane %v2020, 2
        %v2347 = vsel %vm1020, %v2346, %v2345
        %v2348 = vrot.slane %v2021, 1
        %v2349 = vsel %vm1023, %v2348, %v2347
        %v2350 = vrot.slane %v2023, 7
        %v2351 = vsel %vm1005, %v2350, %v2022
        %v2352 = vrot.slane %v2024, 6
        %v2353 = vsel %vm1008, %v2352, %v2351
        %v2354 = vrot.slane %v2025, 5
        %v2355 = vsel %vm1011, %v2354, %v2353
        %v2356 = vrot.slane %v2026, 4
        %v2357 = vsel %vm1014, %v2356, %v2355
        %v2358 = vrot.slane %v2027, 3
        %v2359 = vsel %vm1017, %v2358, %v2357
        %v2360 = vrot.slane %v2028, 2
        %v2361 = vsel %vm1020, %v2360, %v2359
        %v2362 = vrot.slane %v2029, 1
        %v2363 = vsel %vm1023, %v2362, %v2361
        %v2364 = vrot.slane %v2031, 7
        %v2365 = vsel %vm1005, %v2364, %v2030
        %v2366 = vrot.slane %v2032, 6
        %v2367 = vsel %vm1008, %v2366, %v2365
        %v2368 = vrot.slane %v2033, 5
        %v2369 = vsel %vm1011, %v2368, %v2367
        %v2370 = vrot.slane %v2034, 4
        %v2371 = vsel %vm1014, %v2370, %v2369
        %v2372 = vrot.slane %v2035, 3
        %v2373 = vsel %vm1017, %v2372, %v2371
        %v2374 = vrot.slane %v2036, 2
        %v2375 = vsel %vm1020, %v2374, %v2373
        %v2376 = vrot.slane %v2037, 1
        %v2377 = vsel %vm1023, %v2376, %v2375
        %v2378 = vrot.slane %v2039, 7
        %v2379 = vsel %vm1005, %v2378, %v2038
        %v2380 = vrot.slane %v2040, 6
        %v2381 = vsel %vm1008, %v2380, %v2379
        %v2382 = vrot.slane %v2041, 5
        %v2383 = vsel %vm1011, %v2382, %v2381
        %v2384 = vrot.slane %v2042, 4
        %v2385 = vsel %vm1014, %v2384, %v2383
        %v2386 = vrot.slane %v2043, 3
        %v2387 = vsel %vm1017, %v2386, %v2385
        %v2388 = vrot.slane %v2044, 2
        %v2389 = vsel %vm1020, %v2388, %v2387
        %v2390 = vrot.slane %v2045, 1
        %v2391 = vsel %vm1023, %v2390, %v2389
        %v2392 = vrot.slane %v2047, 7
        %v2393 = vsel %vm1005, %v2392, %v2046
        %v2394 = vrot.slane %v2048, 6
        %v2395 = vsel %vm1008, %v2394, %v2393
        %v2396 = vrot.slane %v2049, 5
        %v2397 = vsel %vm1011, %v2396, %v2395
        %v2398 = vrot.slane %v2050, 4
        %v2399 = vsel %vm1014, %v2398, %v2397
        %v2400 = vrot.slane %v2051, 3
        %v2401 = vsel %vm1017, %v2400, %v2399
        %v2402 = vrot.slane %v2052, 2
        %v2403 = vsel %vm1020, %v2402, %v2401
        %v2404 = vrot.slane %v2053, 1
        %v2405 = vsel %vm1023, %v2404, %v2403
        %v2406 = vsel %vm1235, %v2195, 0
        %v2408 = vsel %vm1235, %v2209, 0
        %v2410 = vsel %vm1235, %v2223, 0
        %v2412 = vsel %vm1235, %v2237, 0
        %v2414 = vsel %vm1235, %v2251, 0
        %v2416 = vsel %vm1235, %v2265, 0
        %v2418 = vsel %vm1235, %v2279, 0
        %v2420 = vsel %vm1235, %v2293, 0
        %v2422 = vsel %vm1235, %v2307, 0
        %v2424 = vsel %vm1235, %v2321, 0
        %v2426 = vsel %vm1235, %v2335, 0
        %v2428 = vsel %vm1235, %v2349, 0
        %v2430 = vsel %vm1235, %v2363, 0
        %v2432 = vsel %vm1235, %v2377, 0
        %v2434 = vsel %vm1235, %v2391, 0
        %v2436 = vsel %vm1235, %v2405, 0
        %2438 = vmatprep.subr.mxu0 0.0
        %2439 = vmatpush1.xpose.msra.mxu0 %v2436
        %2440 = vmatprep.subr.mxu0 0.0
        %2441 = vmatpush1.xpose.msra.mxu0 %v2434
        %2442 = vmatprep.subr.mxu0 0.0
        %2443 = vmatpush1.xpose.msra.mxu0 %v2432
        %2444 = vmatprep.subr.mxu0 0.0
        %2445 = vmatpush1.xpose.msra.mxu0 %v2430
        %2446 = vmatprep.subr.mxu0 0.0
        %2447 = vmatpush1.xpose.msra.mxu0 %v2428
        %2448 = vmatprep.subr.mxu0 0.0
        %2449 = vmatpush1.xpose.msra.mxu0 %v2426
        %2450 = vmatprep.subr.mxu0 0.0
        %2451 = vmatpush1.xpose.msra.mxu0 %v2424
        %2452 = vmatprep.subr.mxu0 0.0
        %2453 = vmatpush1.xpose.msra.mxu0 %v2422
        %2454 = vmatprep.subr.mxu0 0.0
        %2455 = vmatpush1.xpose.msra.mxu0 %v2420
        %2456 = vmatprep.subr.mxu0 0.0
        %2457 = vmatpush1.xpose.msra.mxu0 %v2418
        %2458 = vmatprep.subr.mxu0 0.0
        %2459 = vmatpush1.xpose.msra.mxu0 %v2416
        %2460 = vmatprep.subr.mxu0 0.0
        %2461 = vmatpush1.xpose.msra.mxu0 %v2414
        %2462 = vmatprep.subr.mxu0 0.0
        %2463 = vmatpush1.xpose.msra.mxu0 %v2412
        %2464 = vmatprep.subr.mxu0 0.0
        %2465 = vmatpush1.xpose.msra.mxu0 %v2410
        %2466 = vmatprep.subr.mxu0 0.0
        %2467 = vmatpush1.xpose.msra.mxu0 %v2408
        %2468 = vmatprep.subr.mxu0 0.0
        %2469 = vmatpush1.xpose.msra.mxu0 %v2406
        %2470 = vmatprep.subr.mxu0 0.0
        %2471 = vmatpush2.xpose.msra.mxu0 0.0
        %2472 = vmatprep.subr.mxu0 0.0
        %2473 = vmatpush2.xpose.msra.mxu0 0.0
        %2474 = vmatprep.subr.mxu0 0.0
        %2475 = vmatpush2.xpose.msra.mxu0 0.0
        %2476 = vmatprep.subr.mxu0 0.0
        %2477 = vmatpush2.xpose.msra.mxu0 0.0
        %2478 = vmatprep.subr.mxu0 0.0
        %2479 = vmatpush2.xpose.msra.mxu0 0.0
        %2480 = vmatprep.subr.mxu0 0.0
        %2481 = vmatpush2.xpose.msra.mxu0 0.0
        %2482 = vmatprep.subr.mxu0 0.0
        %2483 = vmatpush2.xpose.msra.mxu0 0.0
        %2484 = vmatprep.subr.mxu0 0.0
        %2485 = vmatpush2.xpose.msra.mxu0 0.0
        %2486 = vmatprep.subr.mxu0 0.0
        %2487 = vmatpush2.xpose.msra.mxu0 0.0
        %2488 = vmatprep.subr.mxu0 0.0
        %2489 = vmatpush2.xpose.msra.mxu0 0.0
        %2490 = vmatprep.subr.mxu0 0.0
        %2491 = vmatpush2.xpose.msra.mxu0 0.0
        %2492 = vmatprep.subr.mxu0 0.0
        %2493 = vmatpush2.xpose.msra.mxu0 0.0
        %2494 = vmatprep.subr.mxu0 0.0
        %2495 = vmatpush2.xpose.msra.mxu0 0.0
        %2496 = vmatprep.subr.mxu0 0.0
        %2497 = vmatpush2.xpose.msra.mxu0 0.0
        %2498 = vmatprep.subr.mxu0 0.0
        %2499 = vmatpush2.xpose.msra.mxu0 0.0
        %2500 = vmatprep.subr.mxu0 0.0
        %2501 = vmatpush2.xpose.msra.mxu0 0.0
        %2502 = vmatprep.mubr.f32.mxu0 0.0
        %2503 = vmatmul.mubr.f32.gmra.mxu0 %v1237
        %v2504 = vpop.f32.mrf.mxu0
        %v2505 = vadd.f32 %v746, %v2504
        %v2506 = vpop.f32.mrf.mxu0
        %2507 = vdwg.mxu0
        %s2508 = scalar_lea.vmem %s739, 16
        %2509 = vst [vmem:[%s2508] sm:$0xff] %v2505
        %v2510 = vld [vmem:[%s707 + $0x3] sm:$0x1]
        %v2511 = vld [vmem:[%s707 + $0xb] sm:$0x1]
        %v2512 = vld [vmem:[%s707 + $0x13] sm:$0x1]
        %v2513 = vld [vmem:[%s707 + $0x1b] sm:$0x1]
        %v2514 = vld [vmem:[%s707 + $0x23] sm:$0x1]
        %v2515 = vld [vmem:[%s707 + $0x2b] sm:$0x1]
        %v2516 = vld [vmem:[%s707 + $0x33] sm:$0x1]
        %v2517 = vld [vmem:[%s707 + $0x3b] sm:$0x1]
        %v2518 = vld [vmem:[%s707 + $0x43] sm:$0x1]
        %v2519 = vld [vmem:[%s707 + $0x4b] sm:$0x1]
        %v2520 = vld [vmem:[%s707 + $0x53] sm:$0x1]
        %v2521 = vld [vmem:[%s707 + $0x5b] sm:$0x1]
        %v2522 = vld [vmem:[%s707 + $0x63] sm:$0x1]
        %v2523 = vld [vmem:[%s707 + $0x6b] sm:$0x1]
        %v2524 = vld [vmem:[%s707 + $0x73] sm:$0x1]
        %v2525 = vld [vmem:[%s707 + $0x7b] sm:$0x1]
        %v2526 = vld [vmem:[%s707 + $0x83] sm:$0x1]
        %v2527 = vld [vmem:[%s707 + $0x8b] sm:$0x1]
        %v2528 = vld [vmem:[%s707 + $0x93] sm:$0x1]
        %v2529 = vld [vmem:[%s707 + $0x9b] sm:$0x1]
        %v2530 = vld [vmem:[%s707 + $0xa3] sm:$0x1]
        %v2531 = vld [vmem:[%s707 + $0xab] sm:$0x1]
        %v2532 = vld [vmem:[%s707 + $0xb3] sm:$0x1]
        %v2533 = vld [vmem:[%s707 + $0xbb] sm:$0x1]
        %v2534 = vld [vmem:[%s707 + $0xc3] sm:$0x1]
        %v2535 = vld [vmem:[%s707 + $0xcb] sm:$0x1]
        %v2536 = vld [vmem:[%s707 + $0xd3] sm:$0x1]
        %v2537 = vld [vmem:[%s707 + $0xdb] sm:$0x1]
        %v2538 = vld [vmem:[%s707 + $0xe3] sm:$0x1]
        %v2539 = vld [vmem:[%s707 + $0xeb] sm:$0x1]
        %v2540 = vld [vmem:[%s707 + $0xf3] sm:$0x1]
        %v2541 = vld [vmem:[%s707 + $0xfb] sm:$0x1]
        %v2542 = vld [vmem:[%s707 + $0x103] sm:$0x1]
        %v2543 = vld [vmem:[%s707 + $0x10b] sm:$0x1]
        %v2544 = vld [vmem:[%s707 + $0x113] sm:$0x1]
        %v2545 = vld [vmem:[%s707 + $0x11b] sm:$0x1]
        %v2546 = vld [vmem:[%s707 + $0x123] sm:$0x1]
        %v2547 = vld [vmem:[%s707 + $0x12b] sm:$0x1]
        %v2548 = vld [vmem:[%s707 + $0x133] sm:$0x1]
        %v2549 = vld [vmem:[%s707 + $0x13b] sm:$0x1]
        %v2550 = vld [vmem:[%s707 + $0x143] sm:$0x1]
        %v2551 = vld [vmem:[%s707 + $0x14b] sm:$0x1]
        %v2552 = vld [vmem:[%s707 + $0x153] sm:$0x1]
        %v2553 = vld [vmem:[%s707 + $0x15b] sm:$0x1]
        %v2554 = vld [vmem:[%s707 + $0x163] sm:$0x1]
        %v2555 = vld [vmem:[%s707 + $0x16b] sm:$0x1]
        %v2556 = vld [vmem:[%s707 + $0x173] sm:$0x1]
        %v2557 = vld [vmem:[%s707 + $0x17b] sm:$0x1]
        %v2558 = vld [vmem:[%s707 + $0x183] sm:$0x1]
        %v2559 = vld [vmem:[%s707 + $0x18b] sm:$0x1]
        %v2560 = vld [vmem:[%s707 + $0x193] sm:$0x1]
        %v2561 = vld [vmem:[%s707 + $0x19b] sm:$0x1]
        %v2562 = vld [vmem:[%s707 + $0x1a3] sm:$0x1]
        %v2563 = vld [vmem:[%s707 + $0x1ab] sm:$0x1]
        %v2564 = vld [vmem:[%s707 + $0x1b3] sm:$0x1]
        %v2565 = vld [vmem:[%s707 + $0x1bb] sm:$0x1]
        %v2566 = vld [vmem:[%s707 + $0x1c3] sm:$0x1]
        %v2567 = vld [vmem:[%s707 + $0x1cb] sm:$0x1]
        %v2568 = vld [vmem:[%s707 + $0x1d3] sm:$0x1]
        %v2569 = vld [vmem:[%s707 + $0x1db] sm:$0x1]
        %v2570 = vld [vmem:[%s707 + $0x1e3] sm:$0x1]
        %v2571 = vld [vmem:[%s707 + $0x1eb] sm:$0x1]
        %v2572 = vld [vmem:[%s707 + $0x1f3] sm:$0x1]
        %v2573 = vld [vmem:[%s707 + $0x1fb] sm:$0x1]
        %v2574 = vld [vmem:[%s707 + $0x203] sm:$0x1]
        %v2575 = vld [vmem:[%s707 + $0x20b] sm:$0x1]
        %v2576 = vld [vmem:[%s707 + $0x213] sm:$0x1]
        %v2577 = vld [vmem:[%s707 + $0x21b] sm:$0x1]
        %v2578 = vld [vmem:[%s707 + $0x223] sm:$0x1]
        %v2579 = vld [vmem:[%s707 + $0x22b] sm:$0x1]
        %v2580 = vld [vmem:[%s707 + $0x233] sm:$0x1]
        %v2581 = vld [vmem:[%s707 + $0x23b] sm:$0x1]
        %v2582 = vld [vmem:[%s707 + $0x243] sm:$0x1]
        %v2583 = vld [vmem:[%s707 + $0x24b] sm:$0x1]
        %v2584 = vld [vmem:[%s707 + $0x253] sm:$0x1]
        %v2585 = vld [vmem:[%s707 + $0x25b] sm:$0x1]
        %v2586 = vld [vmem:[%s707 + $0x263] sm:$0x1]
        %v2587 = vld [vmem:[%s707 + $0x26b] sm:$0x1]
        %v2588 = vld [vmem:[%s707 + $0x273] sm:$0x1]
        %v2589 = vld [vmem:[%s707 + $0x27b] sm:$0x1]
        %v2590 = vld [vmem:[%s707 + $0x283] sm:$0x1]
        %v2591 = vld [vmem:[%s707 + $0x28b] sm:$0x1]
        %v2592 = vld [vmem:[%s707 + $0x293] sm:$0x1]
        %v2593 = vld [vmem:[%s707 + $0x29b] sm:$0x1]
        %v2594 = vld [vmem:[%s707 + $0x2a3] sm:$0x1]
        %v2595 = vld [vmem:[%s707 + $0x2ab] sm:$0x1]
        %v2596 = vld [vmem:[%s707 + $0x2b3] sm:$0x1]
        %v2597 = vld [vmem:[%s707 + $0x2bb] sm:$0x1]
        %v2598 = vld [vmem:[%s707 + $0x2c3] sm:$0x1]
        %v2599 = vld [vmem:[%s707 + $0x2cb] sm:$0x1]
        %v2600 = vld [vmem:[%s707 + $0x2d3] sm:$0x1]
        %v2601 = vld [vmem:[%s707 + $0x2db] sm:$0x1]
        %v2602 = vld [vmem:[%s707 + $0x2e3] sm:$0x1]
        %v2603 = vld [vmem:[%s707 + $0x2eb] sm:$0x1]
        %v2604 = vld [vmem:[%s707 + $0x2f3] sm:$0x1]
        %v2605 = vld [vmem:[%s707 + $0x2fb] sm:$0x1]
        %v2606 = vld [vmem:[%s707 + $0x303] sm:$0x1]
        %v2607 = vld [vmem:[%s707 + $0x30b] sm:$0x1]
        %v2608 = vld [vmem:[%s707 + $0x313] sm:$0x1]
        %v2609 = vld [vmem:[%s707 + $0x31b] sm:$0x1]
        %v2610 = vld [vmem:[%s707 + $0x323] sm:$0x1]
        %v2611 = vld [vmem:[%s707 + $0x32b] sm:$0x1]
        %v2612 = vld [vmem:[%s707 + $0x333] sm:$0x1]
        %v2613 = vld [vmem:[%s707 + $0x33b] sm:$0x1]
        %v2614 = vld [vmem:[%s707 + $0x343] sm:$0x1]
        %v2615 = vld [vmem:[%s707 + $0x34b] sm:$0x1]
        %v2616 = vld [vmem:[%s707 + $0x353] sm:$0x1]
        %v2617 = vld [vmem:[%s707 + $0x35b] sm:$0x1]
        %v2618 = vld [vmem:[%s707 + $0x363] sm:$0x1]
        %v2619 = vld [vmem:[%s707 + $0x36b] sm:$0x1]
        %v2620 = vld [vmem:[%s707 + $0x373] sm:$0x1]
        %v2621 = vld [vmem:[%s707 + $0x37b] sm:$0x1]
        %v2622 = vld [vmem:[%s707 + $0x383] sm:$0x1]
        %v2623 = vld [vmem:[%s707 + $0x38b] sm:$0x1]
        %v2624 = vld [vmem:[%s707 + $0x393] sm:$0x1]
        %v2625 = vld [vmem:[%s707 + $0x39b] sm:$0x1]
        %v2626 = vld [vmem:[%s707 + $0x3a3] sm:$0x1]
        %v2627 = vld [vmem:[%s707 + $0x3ab] sm:$0x1]
        %v2628 = vld [vmem:[%s707 + $0x3b3] sm:$0x1]
        %v2629 = vld [vmem:[%s707 + $0x3bb] sm:$0x1]
        %v2630 = vld [vmem:[%s707 + $0x3c3] sm:$0x1]
        %v2631 = vld [vmem:[%s707 + $0x3cb] sm:$0x1]
        %v2632 = vld [vmem:[%s707 + $0x3d3] sm:$0x1]
        %v2633 = vld [vmem:[%s707 + $0x3db] sm:$0x1]
        %v2634 = vld [vmem:[%s707 + $0x3e3] sm:$0x1]
        %v2635 = vld [vmem:[%s707 + $0x3eb] sm:$0x1]
        %v2636 = vld [vmem:[%s707 + $0x3f3] sm:$0x1]
        %v2637 = vld [vmem:[%s707 + $0x3fb] sm:$0x1]
        %v2766 = vrot.slane %v2511, 7
        %v2767 = vsel %vm1005, %v2766, %v2510
        %v2768 = vrot.slane %v2512, 6
        %v2769 = vsel %vm1008, %v2768, %v2767
        %v2770 = vrot.slane %v2513, 5
        %v2771 = vsel %vm1011, %v2770, %v2769
        %v2772 = vrot.slane %v2514, 4
        %v2773 = vsel %vm1014, %v2772, %v2771
        %v2774 = vrot.slane %v2515, 3
        %v2775 = vsel %vm1017, %v2774, %v2773
        %v2776 = vrot.slane %v2516, 2
        %v2777 = vsel %vm1020, %v2776, %v2775
        %v2778 = vrot.slane %v2517, 1
        %v2779 = vsel %vm1023, %v2778, %v2777
        %v2780 = vrot.slane %v2519, 7
        %v2781 = vsel %vm1005, %v2780, %v2518
        %v2782 = vrot.slane %v2520, 6
        %v2783 = vsel %vm1008, %v2782, %v2781
        %v2784 = vrot.slane %v2521, 5
        %v2785 = vsel %vm1011, %v2784, %v2783
        %v2786 = vrot.slane %v2522, 4
        %v2787 = vsel %vm1014, %v2786, %v2785
        %v2788 = vrot.slane %v2523, 3
        %v2789 = vsel %vm1017, %v2788, %v2787
        %v2790 = vrot.slane %v2524, 2
        %v2791 = vsel %vm1020, %v2790, %v2789
        %v2792 = vrot.slane %v2525, 1
        %v2793 = vsel %vm1023, %v2792, %v2791
        %v2794 = vrot.slane %v2527, 7
        %v2795 = vsel %vm1005, %v2794, %v2526
        %v2796 = vrot.slane %v2528, 6
        %v2797 = vsel %vm1008, %v2796, %v2795
        %v2798 = vrot.slane %v2529, 5
        %v2799 = vsel %vm1011, %v2798, %v2797
        %v2800 = vrot.slane %v2530, 4
        %v2801 = vsel %vm1014, %v2800, %v2799
        %v2802 = vrot.slane %v2531, 3
        %v2803 = vsel %vm1017, %v2802, %v2801
        %v2804 = vrot.slane %v2532, 2
        %v2805 = vsel %vm1020, %v2804, %v2803
        %v2806 = vrot.slane %v2533, 1
        %v2807 = vsel %vm1023, %v2806, %v2805
        %v2808 = vrot.slane %v2535, 7
        %v2809 = vsel %vm1005, %v2808, %v2534
        %v2810 = vrot.slane %v2536, 6
        %v2811 = vsel %vm1008, %v2810, %v2809
        %v2812 = vrot.slane %v2537, 5
        %v2813 = vsel %vm1011, %v2812, %v2811
        %v2814 = vrot.slane %v2538, 4
        %v2815 = vsel %vm1014, %v2814, %v2813
        %v2816 = vrot.slane %v2539, 3
        %v2817 = vsel %vm1017, %v2816, %v2815
        %v2818 = vrot.slane %v2540, 2
        %v2819 = vsel %vm1020, %v2818, %v2817
        %v2820 = vrot.slane %v2541, 1
        %v2821 = vsel %vm1023, %v2820, %v2819
        %v2822 = vrot.slane %v2543, 7
        %v2823 = vsel %vm1005, %v2822, %v2542
        %v2824 = vrot.slane %v2544, 6
        %v2825 = vsel %vm1008, %v2824, %v2823
        %v2826 = vrot.slane %v2545, 5
        %v2827 = vsel %vm1011, %v2826, %v2825
        %v2828 = vrot.slane %v2546, 4
        %v2829 = vsel %vm1014, %v2828, %v2827
        %v2830 = vrot.slane %v2547, 3
        %v2831 = vsel %vm1017, %v2830, %v2829
        %v2832 = vrot.slane %v2548, 2
        %v2833 = vsel %vm1020, %v2832, %v2831
        %v2834 = vrot.slane %v2549, 1
        %v2835 = vsel %vm1023, %v2834, %v2833
        %v2836 = vrot.slane %v2551, 7
        %v2837 = vsel %vm1005, %v2836, %v2550
        %v2838 = vrot.slane %v2552, 6
        %v2839 = vsel %vm1008, %v2838, %v2837
        %v2840 = vrot.slane %v2553, 5
        %v2841 = vsel %vm1011, %v2840, %v2839
        %v2842 = vrot.slane %v2554, 4
        %v2843 = vsel %vm1014, %v2842, %v2841
        %v2844 = vrot.slane %v2555, 3
        %v2845 = vsel %vm1017, %v2844, %v2843
        %v2846 = vrot.slane %v2556, 2
        %v2847 = vsel %vm1020, %v2846, %v2845
        %v2848 = vrot.slane %v2557, 1
        %v2849 = vsel %vm1023, %v2848, %v2847
        %v2850 = vrot.slane %v2559, 7
        %v2851 = vsel %vm1005, %v2850, %v2558
        %v2852 = vrot.slane %v2560, 6
        %v2853 = vsel %vm1008, %v2852, %v2851
        %v2854 = vrot.slane %v2561, 5
        %v2855 = vsel %vm1011, %v2854, %v2853
        %v2856 = vrot.slane %v2562, 4
        %v2857 = vsel %vm1014, %v2856, %v2855
        %v2858 = vrot.slane %v2563, 3
        %v2859 = vsel %vm1017, %v2858, %v2857
        %v2860 = vrot.slane %v2564, 2
        %v2861 = vsel %vm1020, %v2860, %v2859
        %v2862 = vrot.slane %v2565, 1
        %v2863 = vsel %vm1023, %v2862, %v2861
        %v2864 = vrot.slane %v2567, 7
        %v2865 = vsel %vm1005, %v2864, %v2566
        %v2866 = vrot.slane %v2568, 6
        %v2867 = vsel %vm1008, %v2866, %v2865
        %v2868 = vrot.slane %v2569, 5
        %v2869 = vsel %vm1011, %v2868, %v2867
        %v2870 = vrot.slane %v2570, 4
        %v2871 = vsel %vm1014, %v2870, %v2869
        %v2872 = vrot.slane %v2571, 3
        %v2873 = vsel %vm1017, %v2872, %v2871
        %v2874 = vrot.slane %v2572, 2
        %v2875 = vsel %vm1020, %v2874, %v2873
        %v2876 = vrot.slane %v2573, 1
        %v2877 = vsel %vm1023, %v2876, %v2875
        %v2878 = vrot.slane %v2575, 7
        %v2879 = vsel %vm1005, %v2878, %v2574
        %v2880 = vrot.slane %v2576, 6
        %v2881 = vsel %vm1008, %v2880, %v2879
        %v2882 = vrot.slane %v2577, 5
        %v2883 = vsel %vm1011, %v2882, %v2881
        %v2884 = vrot.slane %v2578, 4
        %v2885 = vsel %vm1014, %v2884, %v2883
        %v2886 = vrot.slane %v2579, 3
        %v2887 = vsel %vm1017, %v2886, %v2885
        %v2888 = vrot.slane %v2580, 2
        %v2889 = vsel %vm1020, %v2888, %v2887
        %v2890 = vrot.slane %v2581, 1
        %v2891 = vsel %vm1023, %v2890, %v2889
        %v2892 = vrot.slane %v2583, 7
        %v2893 = vsel %vm1005, %v2892, %v2582
        %v2894 = vrot.slane %v2584, 6
        %v2895 = vsel %vm1008, %v2894, %v2893
        %v2896 = vrot.slane %v2585, 5
        %v2897 = vsel %vm1011, %v2896, %v2895
        %v2898 = vrot.slane %v2586, 4
        %v2899 = vsel %vm1014, %v2898, %v2897
        %v2900 = vrot.slane %v2587, 3
        %v2901 = vsel %vm1017, %v2900, %v2899
        %v2902 = vrot.slane %v2588, 2
        %v2903 = vsel %vm1020, %v2902, %v2901
        %v2904 = vrot.slane %v2589, 1
        %v2905 = vsel %vm1023, %v2904, %v2903
        %v2906 = vrot.slane %v2591, 7
        %v2907 = vsel %vm1005, %v2906, %v2590
        %v2908 = vrot.slane %v2592, 6
        %v2909 = vsel %vm1008, %v2908, %v2907
        %v2910 = vrot.slane %v2593, 5
        %v2911 = vsel %vm1011, %v2910, %v2909
        %v2912 = vrot.slane %v2594, 4
        %v2913 = vsel %vm1014, %v2912, %v2911
        %v2914 = vrot.slane %v2595, 3
        %v2915 = vsel %vm1017, %v2914, %v2913
        %v2916 = vrot.slane %v2596, 2
        %v2917 = vsel %vm1020, %v2916, %v2915
        %v2918 = vrot.slane %v2597, 1
        %v2919 = vsel %vm1023, %v2918, %v2917
        %v2920 = vrot.slane %v2599, 7
        %v2921 = vsel %vm1005, %v2920, %v2598
        %v2922 = vrot.slane %v2600, 6
        %v2923 = vsel %vm1008, %v2922, %v2921
        %v2924 = vrot.slane %v2601, 5
        %v2925 = vsel %vm1011, %v2924, %v2923
        %v2926 = vrot.slane %v2602, 4
        %v2927 = vsel %vm1014, %v2926, %v2925
        %v2928 = vrot.slane %v2603, 3
        %v2929 = vsel %vm1017, %v2928, %v2927
        %v2930 = vrot.slane %v2604, 2
        %v2931 = vsel %vm1020, %v2930, %v2929
        %v2932 = vrot.slane %v2605, 1
        %v2933 = vsel %vm1023, %v2932, %v2931
        %v2934 = vrot.slane %v2607, 7
        %v2935 = vsel %vm1005, %v2934, %v2606
        %v2936 = vrot.slane %v2608, 6
        %v2937 = vsel %vm1008, %v2936, %v2935
        %v2938 = vrot.slane %v2609, 5
        %v2939 = vsel %vm1011, %v2938, %v2937
        %v2940 = vrot.slane %v2610, 4
        %v2941 = vsel %vm1014, %v2940, %v2939
        %v2942 = vrot.slane %v2611, 3
        %v2943 = vsel %vm1017, %v2942, %v2941
        %v2944 = vrot.slane %v2612, 2
        %v2945 = vsel %vm1020, %v2944, %v2943
        %v2946 = vrot.slane %v2613, 1
        %v2947 = vsel %vm1023, %v2946, %v2945
        %v2948 = vrot.slane %v2615, 7
        %v2949 = vsel %vm1005, %v2948, %v2614
        %v2950 = vrot.slane %v2616, 6
        %v2951 = vsel %vm1008, %v2950, %v2949
        %v2952 = vrot.slane %v2617, 5
        %v2953 = vsel %vm1011, %v2952, %v2951
        %v2954 = vrot.slane %v2618, 4
        %v2955 = vsel %vm1014, %v2954, %v2953
        %v2956 = vrot.slane %v2619, 3
        %v2957 = vsel %vm1017, %v2956, %v2955
        %v2958 = vrot.slane %v2620, 2
        %v2959 = vsel %vm1020, %v2958, %v2957
        %v2960 = vrot.slane %v2621, 1
        %v2961 = vsel %vm1023, %v2960, %v2959
        %v2962 = vrot.slane %v2623, 7
        %v2963 = vsel %vm1005, %v2962, %v2622
        %v2964 = vrot.slane %v2624, 6
        %v2965 = vsel %vm1008, %v2964, %v2963
        %v2966 = vrot.slane %v2625, 5
        %v2967 = vsel %vm1011, %v2966, %v2965
        %v2968 = vrot.slane %v2626, 4
        %v2969 = vsel %vm1014, %v2968, %v2967
        %v2970 = vrot.slane %v2627, 3
        %v2971 = vsel %vm1017, %v2970, %v2969
        %v2972 = vrot.slane %v2628, 2
        %v2973 = vsel %vm1020, %v2972, %v2971
        %v2974 = vrot.slane %v2629, 1
        %v2975 = vsel %vm1023, %v2974, %v2973
        %v2976 = vrot.slane %v2631, 7
        %v2977 = vsel %vm1005, %v2976, %v2630
        %v2978 = vrot.slane %v2632, 6
        %v2979 = vsel %vm1008, %v2978, %v2977
        %v2980 = vrot.slane %v2633, 5
        %v2981 = vsel %vm1011, %v2980, %v2979
        %v2982 = vrot.slane %v2634, 4
        %v2983 = vsel %vm1014, %v2982, %v2981
        %v2984 = vrot.slane %v2635, 3
        %v2985 = vsel %vm1017, %v2984, %v2983
        %v2986 = vrot.slane %v2636, 2
        %v2987 = vsel %vm1020, %v2986, %v2985
        %v2988 = vrot.slane %v2637, 1
        %v2989 = vsel %vm1023, %v2988, %v2987
        %v2990 = vsel %vm1235, %v2779, 0
        %v2992 = vsel %vm1235, %v2793, 0
        %v2994 = vsel %vm1235, %v2807, 0
        %v2996 = vsel %vm1235, %v2821, 0
        %v2998 = vsel %vm1235, %v2835, 0
        %v3000 = vsel %vm1235, %v2849, 0
        %v3002 = vsel %vm1235, %v2863, 0
        %v3004 = vsel %vm1235, %v2877, 0
        %v3006 = vsel %vm1235, %v2891, 0
        %v3008 = vsel %vm1235, %v2905, 0
        %v3010 = vsel %vm1235, %v2919, 0
        %v3012 = vsel %vm1235, %v2933, 0
        %v3014 = vsel %vm1235, %v2947, 0
        %v3016 = vsel %vm1235, %v2961, 0
        %v3018 = vsel %vm1235, %v2975, 0
        %v3020 = vsel %vm1235, %v2989, 0
        %3022 = vmatprep.subr.mxu0 0.0
        %3023 = vmatpush1.xpose.msra.mxu0 %v3020
        %3024 = vmatprep.subr.mxu0 0.0
        %3025 = vmatpush1.xpose.msra.mxu0 %v3018
        %3026 = vmatprep.subr.mxu0 0.0
        %3027 = vmatpush1.xpose.msra.mxu0 %v3016
        %3028 = vmatprep.subr.mxu0 0.0
        %3029 = vmatpush1.xpose.msra.mxu0 %v3014
        %3030 = vmatprep.subr.mxu0 0.0
        %3031 = vmatpush1.xpose.msra.mxu0 %v3012
        %3032 = vmatprep.subr.mxu0 0.0
        %3033 = vmatpush1.xpose.msra.mxu0 %v3010
        %3034 = vmatprep.subr.mxu0 0.0
        %3035 = vmatpush1.xpose.msra.mxu0 %v3008
        %3036 = vmatprep.subr.mxu0 0.0
        %3037 = vmatpush1.xpose.msra.mxu0 %v3006
        %3038 = vmatprep.subr.mxu0 0.0
        %3039 = vmatpush1.xpose.msra.mxu0 %v3004
        %3040 = vmatprep.subr.mxu0 0.0
        %3041 = vmatpush1.xpose.msra.mxu0 %v3002
        %3042 = vmatprep.subr.mxu0 0.0
        %3043 = vmatpush1.xpose.msra.mxu0 %v3000
        %3044 = vmatprep.subr.mxu0 0.0
        %3045 = vmatpush1.xpose.msra.mxu0 %v2998
        %3046 = vmatprep.subr.mxu0 0.0
        %3047 = vmatpush1.xpose.msra.mxu0 %v2996
        %3048 = vmatprep.subr.mxu0 0.0
        %3049 = vmatpush1.xpose.msra.mxu0 %v2994
        %3050 = vmatprep.subr.mxu0 0.0
        %3051 = vmatpush1.xpose.msra.mxu0 %v2992
        %3052 = vmatprep.subr.mxu0 0.0
        %3053 = vmatpush1.xpose.msra.mxu0 %v2990
        %3054 = vmatprep.subr.mxu0 0.0
        %3055 = vmatpush2.xpose.msra.mxu0 0.0
        %3056 = vmatprep.subr.mxu0 0.0
        %3057 = vmatpush2.xpose.msra.mxu0 0.0
        %3058 = vmatprep.subr.mxu0 0.0
        %3059 = vmatpush2.xpose.msra.mxu0 0.0
        %3060 = vmatprep.subr.mxu0 0.0
        %3061 = vmatpush2.xpose.msra.mxu0 0.0
        %3062 = vmatprep.subr.mxu0 0.0
        %3063 = vmatpush2.xpose.msra.mxu0 0.0
        %3064 = vmatprep.subr.mxu0 0.0
        %3065 = vmatpush2.xpose.msra.mxu0 0.0
        %3066 = vmatprep.subr.mxu0 0.0
        %3067 = vmatpush2.xpose.msra.mxu0 0.0
        %3068 = vmatprep.subr.mxu0 0.0
        %3069 = vmatpush2.xpose.msra.mxu0 0.0
        %3070 = vmatprep.subr.mxu0 0.0
        %3071 = vmatpush2.xpose.msra.mxu0 0.0
        %3072 = vmatprep.subr.mxu0 0.0
        %3073 = vmatpush2.xpose.msra.mxu0 0.0
        %3074 = vmatprep.subr.mxu0 0.0
        %3075 = vmatpush2.xpose.msra.mxu0 0.0
        %3076 = vmatprep.subr.mxu0 0.0
        %3077 = vmatpush2.xpose.msra.mxu0 0.0
        %3078 = vmatprep.subr.mxu0 0.0
        %3079 = vmatpush2.xpose.msra.mxu0 0.0
        %3080 = vmatprep.subr.mxu0 0.0
        %3081 = vmatpush2.xpose.msra.mxu0 0.0
        %3082 = vmatprep.subr.mxu0 0.0
        %3083 = vmatpush2.xpose.msra.mxu0 0.0
        %3084 = vmatprep.subr.mxu0 0.0
        %3085 = vmatpush2.xpose.msra.mxu0 0.0
        %3086 = vmatprep.mubr.f32.mxu0 0.0
        %3087 = vmatmul.mubr.f32.gmra.mxu0 %v1237
        %v3088 = vpop.f32.mrf.mxu0
        %v3089 = vadd.f32 %v746, %v3088
        %v3090 = vpop.f32.mrf.mxu0
        %3091 = vdwg.mxu0
        %s3092 = scalar_lea.vmem %s739, 24
        %3093 = vst [vmem:[%s3092] sm:$0xff] %v3089
        %v3094 = vld [vmem:[%s707 + $0x4] sm:$0x1]
        %v3095 = vld [vmem:[%s707 + $0xc] sm:$0x1]
        %v3096 = vld [vmem:[%s707 + $0x14] sm:$0x1]
        %v3097 = vld [vmem:[%s707 + $0x1c] sm:$0x1]
        %v3098 = vld [vmem:[%s707 + $0x24] sm:$0x1]
        %v3099 = vld [vmem:[%s707 + $0x2c] sm:$0x1]
        %v3100 = vld [vmem:[%s707 + $0x34] sm:$0x1]
        %v3101 = vld [vmem:[%s707 + $0x3c] sm:$0x1]
        %v3102 = vld [vmem:[%s707 + $0x44] sm:$0x1]
        %v3103 = vld [vmem:[%s707 + $0x4c] sm:$0x1]
        %v3104 = vld [vmem:[%s707 + $0x54] sm:$0x1]
        %v3105 = vld [vmem:[%s707 + $0x5c] sm:$0x1]
        %v3106 = vld [vmem:[%s707 + $0x64] sm:$0x1]
        %v3107 = vld [vmem:[%s707 + $0x6c] sm:$0x1]
        %v3108 = vld [vmem:[%s707 + $0x74] sm:$0x1]
        %v3109 = vld [vmem:[%s707 + $0x7c] sm:$0x1]
        %v3110 = vld [vmem:[%s707 + $0x84] sm:$0x1]
        %v3111 = vld [vmem:[%s707 + $0x8c] sm:$0x1]
        %v3112 = vld [vmem:[%s707 + $0x94] sm:$0x1]
        %v3113 = vld [vmem:[%s707 + $0x9c] sm:$0x1]
        %v3114 = vld [vmem:[%s707 + $0xa4] sm:$0x1]
        %v3115 = vld [vmem:[%s707 + $0xac] sm:$0x1]
        %v3116 = vld [vmem:[%s707 + $0xb4] sm:$0x1]
        %v3117 = vld [vmem:[%s707 + $0xbc] sm:$0x1]
        %v3118 = vld [vmem:[%s707 + $0xc4] sm:$0x1]
        %v3119 = vld [vmem:[%s707 + $0xcc] sm:$0x1]
        %v3120 = vld [vmem:[%s707 + $0xd4] sm:$0x1]
        %v3121 = vld [vmem:[%s707 + $0xdc] sm:$0x1]
        %v3122 = vld [vmem:[%s707 + $0xe4] sm:$0x1]
        %v3123 = vld [vmem:[%s707 + $0xec] sm:$0x1]
        %v3124 = vld [vmem:[%s707 + $0xf4] sm:$0x1]
        %v3125 = vld [vmem:[%s707 + $0xfc] sm:$0x1]
        %v3126 = vld [vmem:[%s707 + $0x104] sm:$0x1]
        %v3127 = vld [vmem:[%s707 + $0x10c] sm:$0x1]
        %v3128 = vld [vmem:[%s707 + $0x114] sm:$0x1]
        %v3129 = vld [vmem:[%s707 + $0x11c] sm:$0x1]
        %v3130 = vld [vmem:[%s707 + $0x124] sm:$0x1]
        %v3131 = vld [vmem:[%s707 + $0x12c] sm:$0x1]
        %v3132 = vld [vmem:[%s707 + $0x134] sm:$0x1]
        %v3133 = vld [vmem:[%s707 + $0x13c] sm:$0x1]
        %v3134 = vld [vmem:[%s707 + $0x144] sm:$0x1]
        %v3135 = vld [vmem:[%s707 + $0x14c] sm:$0x1]
        %v3136 = vld [vmem:[%s707 + $0x154] sm:$0x1]
        %v3137 = vld [vmem:[%s707 + $0x15c] sm:$0x1]
        %v3138 = vld [vmem:[%s707 + $0x164] sm:$0x1]
        %v3139 = vld [vmem:[%s707 + $0x16c] sm:$0x1]
        %v3140 = vld [vmem:[%s707 + $0x174] sm:$0x1]
        %v3141 = vld [vmem:[%s707 + $0x17c] sm:$0x1]
        %v3142 = vld [vmem:[%s707 + $0x184] sm:$0x1]
        %v3143 = vld [vmem:[%s707 + $0x18c] sm:$0x1]
        %v3144 = vld [vmem:[%s707 + $0x194] sm:$0x1]
        %v3145 = vld [vmem:[%s707 + $0x19c] sm:$0x1]
        %v3146 = vld [vmem:[%s707 + $0x1a4] sm:$0x1]
        %v3147 = vld [vmem:[%s707 + $0x1ac] sm:$0x1]
        %v3148 = vld [vmem:[%s707 + $0x1b4] sm:$0x1]
        %v3149 = vld [vmem:[%s707 + $0x1bc] sm:$0x1]
        %v3150 = vld [vmem:[%s707 + $0x1c4] sm:$0x1]
        %v3151 = vld [vmem:[%s707 + $0x1cc] sm:$0x1]
        %v3152 = vld [vmem:[%s707 + $0x1d4] sm:$0x1]
        %v3153 = vld [vmem:[%s707 + $0x1dc] sm:$0x1]
        %v3154 = vld [vmem:[%s707 + $0x1e4] sm:$0x1]
        %v3155 = vld [vmem:[%s707 + $0x1ec] sm:$0x1]
        %v3156 = vld [vmem:[%s707 + $0x1f4] sm:$0x1]
        %v3157 = vld [vmem:[%s707 + $0x1fc] sm:$0x1]
        %v3158 = vld [vmem:[%s707 + $0x204] sm:$0x1]
        %v3159 = vld [vmem:[%s707 + $0x20c] sm:$0x1]
        %v3160 = vld [vmem:[%s707 + $0x214] sm:$0x1]
        %v3161 = vld [vmem:[%s707 + $0x21c] sm:$0x1]
        %v3162 = vld [vmem:[%s707 + $0x224] sm:$0x1]
        %v3163 = vld [vmem:[%s707 + $0x22c] sm:$0x1]
        %v3164 = vld [vmem:[%s707 + $0x234] sm:$0x1]
        %v3165 = vld [vmem:[%s707 + $0x23c] sm:$0x1]
        %v3166 = vld [vmem:[%s707 + $0x244] sm:$0x1]
        %v3167 = vld [vmem:[%s707 + $0x24c] sm:$0x1]
        %v3168 = vld [vmem:[%s707 + $0x254] sm:$0x1]
        %v3169 = vld [vmem:[%s707 + $0x25c] sm:$0x1]
        %v3170 = vld [vmem:[%s707 + $0x264] sm:$0x1]
        %v3171 = vld [vmem:[%s707 + $0x26c] sm:$0x1]
        %v3172 = vld [vmem:[%s707 + $0x274] sm:$0x1]
        %v3173 = vld [vmem:[%s707 + $0x27c] sm:$0x1]
        %v3174 = vld [vmem:[%s707 + $0x284] sm:$0x1]
        %v3175 = vld [vmem:[%s707 + $0x28c] sm:$0x1]
        %v3176 = vld [vmem:[%s707 + $0x294] sm:$0x1]
        %v3177 = vld [vmem:[%s707 + $0x29c] sm:$0x1]
        %v3178 = vld [vmem:[%s707 + $0x2a4] sm:$0x1]
        %v3179 = vld [vmem:[%s707 + $0x2ac] sm:$0x1]
        %v3180 = vld [vmem:[%s707 + $0x2b4] sm:$0x1]
        %v3181 = vld [vmem:[%s707 + $0x2bc] sm:$0x1]
        %v3182 = vld [vmem:[%s707 + $0x2c4] sm:$0x1]
        %v3183 = vld [vmem:[%s707 + $0x2cc] sm:$0x1]
        %v3184 = vld [vmem:[%s707 + $0x2d4] sm:$0x1]
        %v3185 = vld [vmem:[%s707 + $0x2dc] sm:$0x1]
        %v3186 = vld [vmem:[%s707 + $0x2e4] sm:$0x1]
        %v3187 = vld [vmem:[%s707 + $0x2ec] sm:$0x1]
        %v3188 = vld [vmem:[%s707 + $0x2f4] sm:$0x1]
        %v3189 = vld [vmem:[%s707 + $0x2fc] sm:$0x1]
        %v3190 = vld [vmem:[%s707 + $0x304] sm:$0x1]
        %v3191 = vld [vmem:[%s707 + $0x30c] sm:$0x1]
        %v3192 = vld [vmem:[%s707 + $0x314] sm:$0x1]
        %v3193 = vld [vmem:[%s707 + $0x31c] sm:$0x1]
        %v3194 = vld [vmem:[%s707 + $0x324] sm:$0x1]
        %v3195 = vld [vmem:[%s707 + $0x32c] sm:$0x1]
        %v3196 = vld [vmem:[%s707 + $0x334] sm:$0x1]
        %v3197 = vld [vmem:[%s707 + $0x33c] sm:$0x1]
        %v3198 = vld [vmem:[%s707 + $0x344] sm:$0x1]
        %v3199 = vld [vmem:[%s707 + $0x34c] sm:$0x1]
        %v3200 = vld [vmem:[%s707 + $0x354] sm:$0x1]
        %v3201 = vld [vmem:[%s707 + $0x35c] sm:$0x1]
        %v3202 = vld [vmem:[%s707 + $0x364] sm:$0x1]
        %v3203 = vld [vmem:[%s707 + $0x36c] sm:$0x1]
        %v3204 = vld [vmem:[%s707 + $0x374] sm:$0x1]
        %v3205 = vld [vmem:[%s707 + $0x37c] sm:$0x1]
        %v3206 = vld [vmem:[%s707 + $0x384] sm:$0x1]
        %v3207 = vld [vmem:[%s707 + $0x38c] sm:$0x1]
        %v3208 = vld [vmem:[%s707 + $0x394] sm:$0x1]
        %v3209 = vld [vmem:[%s707 + $0x39c] sm:$0x1]
        %v3210 = vld [vmem:[%s707 + $0x3a4] sm:$0x1]
        %v3211 = vld [vmem:[%s707 + $0x3ac] sm:$0x1]
        %v3212 = vld [vmem:[%s707 + $0x3b4] sm:$0x1]
        %v3213 = vld [vmem:[%s707 + $0x3bc] sm:$0x1]
        %v3214 = vld [vmem:[%s707 + $0x3c4] sm:$0x1]
        %v3215 = vld [vmem:[%s707 + $0x3cc] sm:$0x1]
        %v3216 = vld [vmem:[%s707 + $0x3d4] sm:$0x1]
        %v3217 = vld [vmem:[%s707 + $0x3dc] sm:$0x1]
        %v3218 = vld [vmem:[%s707 + $0x3e4] sm:$0x1]
        %v3219 = vld [vmem:[%s707 + $0x3ec] sm:$0x1]
        %v3220 = vld [vmem:[%s707 + $0x3f4] sm:$0x1]
        %v3221 = vld [vmem:[%s707 + $0x3fc] sm:$0x1]
        %v3350 = vrot.slane %v3095, 7
        %v3351 = vsel %vm1005, %v3350, %v3094
        %v3352 = vrot.slane %v3096, 6
        %v3353 = vsel %vm1008, %v3352, %v3351
        %v3354 = vrot.slane %v3097, 5
        %v3355 = vsel %vm1011, %v3354, %v3353
        %v3356 = vrot.slane %v3098, 4
        %v3357 = vsel %vm1014, %v3356, %v3355
        %v3358 = vrot.slane %v3099, 3
        %v3359 = vsel %vm1017, %v3358, %v3357
        %v3360 = vrot.slane %v3100, 2
        %v3361 = vsel %vm1020, %v3360, %v3359
        %v3362 = vrot.slane %v3101, 1
        %v3363 = vsel %vm1023, %v3362, %v3361
        %v3364 = vrot.slane %v3103, 7
        %v3365 = vsel %vm1005, %v3364, %v3102
        %v3366 = vrot.slane %v3104, 6
        %v3367 = vsel %vm1008, %v3366, %v3365
        %v3368 = vrot.slane %v3105, 5
        %v3369 = vsel %vm1011, %v3368, %v3367
        %v3370 = vrot.slane %v3106, 4
        %v3371 = vsel %vm1014, %v3370, %v3369
        %v3372 = vrot.slane %v3107, 3
        %v3373 = vsel %vm1017, %v3372, %v3371
        %v3374 = vrot.slane %v3108, 2
        %v3375 = vsel %vm1020, %v3374, %v3373
        %v3376 = vrot.slane %v3109, 1
        %v3377 = vsel %vm1023, %v3376, %v3375
        %v3378 = vrot.slane %v3111, 7
        %v3379 = vsel %vm1005, %v3378, %v3110
        %v3380 = vrot.slane %v3112, 6
        %v3381 = vsel %vm1008, %v3380, %v3379
        %v3382 = vrot.slane %v3113, 5
        %v3383 = vsel %vm1011, %v3382, %v3381
        %v3384 = vrot.slane %v3114, 4
        %v3385 = vsel %vm1014, %v3384, %v3383
        %v3386 = vrot.slane %v3115, 3
        %v3387 = vsel %vm1017, %v3386, %v3385
        %v3388 = vrot.slane %v3116, 2
        %v3389 = vsel %vm1020, %v3388, %v3387
        %v3390 = vrot.slane %v3117, 1
        %v3391 = vsel %vm1023, %v3390, %v3389
        %v3392 = vrot.slane %v3119, 7
        %v3393 = vsel %vm1005, %v3392, %v3118
        %v3394 = vrot.slane %v3120, 6
        %v3395 = vsel %vm1008, %v3394, %v3393
        %v3396 = vrot.slane %v3121, 5
        %v3397 = vsel %vm1011, %v3396, %v3395
        %v3398 = vrot.slane %v3122, 4
        %v3399 = vsel %vm1014, %v3398, %v3397
        %v3400 = vrot.slane %v3123, 3
        %v3401 = vsel %vm1017, %v3400, %v3399
        %v3402 = vrot.slane %v3124, 2
        %v3403 = vsel %vm1020, %v3402, %v3401
        %v3404 = vrot.slane %v3125, 1
        %v3405 = vsel %vm1023, %v3404, %v3403
        %v3406 = vrot.slane %v3127, 7
        %v3407 = vsel %vm1005, %v3406, %v3126
        %v3408 = vrot.slane %v3128, 6
        %v3409 = vsel %vm1008, %v3408, %v3407
        %v3410 = vrot.slane %v3129, 5
        %v3411 = vsel %vm1011, %v3410, %v3409
        %v3412 = vrot.slane %v3130, 4
        %v3413 = vsel %vm1014, %v3412, %v3411
        %v3414 = vrot.slane %v3131, 3
        %v3415 = vsel %vm1017, %v3414, %v3413
        %v3416 = vrot.slane %v3132, 2
        %v3417 = vsel %vm1020, %v3416, %v3415
        %v3418 = vrot.slane %v3133, 1
        %v3419 = vsel %vm1023, %v3418, %v3417
        %v3420 = vrot.slane %v3135, 7
        %v3421 = vsel %vm1005, %v3420, %v3134
        %v3422 = vrot.slane %v3136, 6
        %v3423 = vsel %vm1008, %v3422, %v3421
        %v3424 = vrot.slane %v3137, 5
        %v3425 = vsel %vm1011, %v3424, %v3423
        %v3426 = vrot.slane %v3138, 4
        %v3427 = vsel %vm1014, %v3426, %v3425
        %v3428 = vrot.slane %v3139, 3
        %v3429 = vsel %vm1017, %v3428, %v3427
        %v3430 = vrot.slane %v3140, 2
        %v3431 = vsel %vm1020, %v3430, %v3429
        %v3432 = vrot.slane %v3141, 1
        %v3433 = vsel %vm1023, %v3432, %v3431
        %v3434 = vrot.slane %v3143, 7
        %v3435 = vsel %vm1005, %v3434, %v3142
        %v3436 = vrot.slane %v3144, 6
        %v3437 = vsel %vm1008, %v3436, %v3435
        %v3438 = vrot.slane %v3145, 5
        %v3439 = vsel %vm1011, %v3438, %v3437
        %v3440 = vrot.slane %v3146, 4
        %v3441 = vsel %vm1014, %v3440, %v3439
        %v3442 = vrot.slane %v3147, 3
        %v3443 = vsel %vm1017, %v3442, %v3441
        %v3444 = vrot.slane %v3148, 2
        %v3445 = vsel %vm1020, %v3444, %v3443
        %v3446 = vrot.slane %v3149, 1
        %v3447 = vsel %vm1023, %v3446, %v3445
        %v3448 = vrot.slane %v3151, 7
        %v3449 = vsel %vm1005, %v3448, %v3150
        %v3450 = vrot.slane %v3152, 6
        %v3451 = vsel %vm1008, %v3450, %v3449
        %v3452 = vrot.slane %v3153, 5
        %v3453 = vsel %vm1011, %v3452, %v3451
        %v3454 = vrot.slane %v3154, 4
        %v3455 = vsel %vm1014, %v3454, %v3453
        %v3456 = vrot.slane %v3155, 3
        %v3457 = vsel %vm1017, %v3456, %v3455
        %v3458 = vrot.slane %v3156, 2
        %v3459 = vsel %vm1020, %v3458, %v3457
        %v3460 = vrot.slane %v3157, 1
        %v3461 = vsel %vm1023, %v3460, %v3459
        %v3462 = vrot.slane %v3159, 7
        %v3463 = vsel %vm1005, %v3462, %v3158
        %v3464 = vrot.slane %v3160, 6
        %v3465 = vsel %vm1008, %v3464, %v3463
        %v3466 = vrot.slane %v3161, 5
        %v3467 = vsel %vm1011, %v3466, %v3465
        %v3468 = vrot.slane %v3162, 4
        %v3469 = vsel %vm1014, %v3468, %v3467
        %v3470 = vrot.slane %v3163, 3
        %v3471 = vsel %vm1017, %v3470, %v3469
        %v3472 = vrot.slane %v3164, 2
        %v3473 = vsel %vm1020, %v3472, %v3471
        %v3474 = vrot.slane %v3165, 1
        %v3475 = vsel %vm1023, %v3474, %v3473
        %v3476 = vrot.slane %v3167, 7
        %v3477 = vsel %vm1005, %v3476, %v3166
        %v3478 = vrot.slane %v3168, 6
        %v3479 = vsel %vm1008, %v3478, %v3477
        %v3480 = vrot.slane %v3169, 5
        %v3481 = vsel %vm1011, %v3480, %v3479
        %v3482 = vrot.slane %v3170, 4
        %v3483 = vsel %vm1014, %v3482, %v3481
        %v3484 = vrot.slane %v3171, 3
        %v3485 = vsel %vm1017, %v3484, %v3483
        %v3486 = vrot.slane %v3172, 2
        %v3487 = vsel %vm1020, %v3486, %v3485
        %v3488 = vrot.slane %v3173, 1
        %v3489 = vsel %vm1023, %v3488, %v3487
        %v3490 = vrot.slane %v3175, 7
        %v3491 = vsel %vm1005, %v3490, %v3174
        %v3492 = vrot.slane %v3176, 6
        %v3493 = vsel %vm1008, %v3492, %v3491
        %v3494 = vrot.slane %v3177, 5
        %v3495 = vsel %vm1011, %v3494, %v3493
        %v3496 = vrot.slane %v3178, 4
        %v3497 = vsel %vm1014, %v3496, %v3495
        %v3498 = vrot.slane %v3179, 3
        %v3499 = vsel %vm1017, %v3498, %v3497
        %v3500 = vrot.slane %v3180, 2
        %v3501 = vsel %vm1020, %v3500, %v3499
        %v3502 = vrot.slane %v3181, 1
        %v3503 = vsel %vm1023, %v3502, %v3501
        %v3504 = vrot.slane %v3183, 7
        %v3505 = vsel %vm1005, %v3504, %v3182
        %v3506 = vrot.slane %v3184, 6
        %v3507 = vsel %vm1008, %v3506, %v3505
        %v3508 = vrot.slane %v3185, 5
        %v3509 = vsel %vm1011, %v3508, %v3507
        %v3510 = vrot.slane %v3186, 4
        %v3511 = vsel %vm1014, %v3510, %v3509
        %v3512 = vrot.slane %v3187, 3
        %v3513 = vsel %vm1017, %v3512, %v3511
        %v3514 = vrot.slane %v3188, 2
        %v3515 = vsel %vm1020, %v3514, %v3513
        %v3516 = vrot.slane %v3189, 1
        %v3517 = vsel %vm1023, %v3516, %v3515
        %v3518 = vrot.slane %v3191, 7
        %v3519 = vsel %vm1005, %v3518, %v3190
        %v3520 = vrot.slane %v3192, 6
        %v3521 = vsel %vm1008, %v3520, %v3519
        %v3522 = vrot.slane %v3193, 5
        %v3523 = vsel %vm1011, %v3522, %v3521
        %v3524 = vrot.slane %v3194, 4
        %v3525 = vsel %vm1014, %v3524, %v3523
        %v3526 = vrot.slane %v3195, 3
        %v3527 = vsel %vm1017, %v3526, %v3525
        %v3528 = vrot.slane %v3196, 2
        %v3529 = vsel %vm1020, %v3528, %v3527
        %v3530 = vrot.slane %v3197, 1
        %v3531 = vsel %vm1023, %v3530, %v3529
        %v3532 = vrot.slane %v3199, 7
        %v3533 = vsel %vm1005, %v3532, %v3198
        %v3534 = vrot.slane %v3200, 6
        %v3535 = vsel %vm1008, %v3534, %v3533
        %v3536 = vrot.slane %v3201, 5
        %v3537 = vsel %vm1011, %v3536, %v3535
        %v3538 = vrot.slane %v3202, 4
        %v3539 = vsel %vm1014, %v3538, %v3537
        %v3540 = vrot.slane %v3203, 3
        %v3541 = vsel %vm1017, %v3540, %v3539
        %v3542 = vrot.slane %v3204, 2
        %v3543 = vsel %vm1020, %v3542, %v3541
        %v3544 = vrot.slane %v3205, 1
        %v3545 = vsel %vm1023, %v3544, %v3543
        %v3546 = vrot.slane %v3207, 7
        %v3547 = vsel %vm1005, %v3546, %v3206
        %v3548 = vrot.slane %v3208, 6
        %v3549 = vsel %vm1008, %v3548, %v3547
        %v3550 = vrot.slane %v3209, 5
        %v3551 = vsel %vm1011, %v3550, %v3549
        %v3552 = vrot.slane %v3210, 4
        %v3553 = vsel %vm1014, %v3552, %v3551
        %v3554 = vrot.slane %v3211, 3
        %v3555 = vsel %vm1017, %v3554, %v3553
        %v3556 = vrot.slane %v3212, 2
        %v3557 = vsel %vm1020, %v3556, %v3555
        %v3558 = vrot.slane %v3213, 1
        %v3559 = vsel %vm1023, %v3558, %v3557
        %v3560 = vrot.slane %v3215, 7
        %v3561 = vsel %vm1005, %v3560, %v3214
        %v3562 = vrot.slane %v3216, 6
        %v3563 = vsel %vm1008, %v3562, %v3561
        %v3564 = vrot.slane %v3217, 5
        %v3565 = vsel %vm1011, %v3564, %v3563
        %v3566 = vrot.slane %v3218, 4
        %v3567 = vsel %vm1014, %v3566, %v3565
        %v3568 = vrot.slane %v3219, 3
        %v3569 = vsel %vm1017, %v3568, %v3567
        %v3570 = vrot.slane %v3220, 2
        %v3571 = vsel %vm1020, %v3570, %v3569
        %v3572 = vrot.slane %v3221, 1
        %v3573 = vsel %vm1023, %v3572, %v3571
        %v3574 = vsel %vm1235, %v3363, 0
        %v3576 = vsel %vm1235, %v3377, 0
        %v3578 = vsel %vm1235, %v3391, 0
        %v3580 = vsel %vm1235, %v3405, 0
        %v3582 = vsel %vm1235, %v3419, 0
        %v3584 = vsel %vm1235, %v3433, 0
        %v3586 = vsel %vm1235, %v3447, 0
        %v3588 = vsel %vm1235, %v3461, 0
        %v3590 = vsel %vm1235, %v3475, 0
        %v3592 = vsel %vm1235, %v3489, 0
        %v3594 = vsel %vm1235, %v3503, 0
        %v3596 = vsel %vm1235, %v3517, 0
        %v3598 = vsel %vm1235, %v3531, 0
        %v3600 = vsel %vm1235, %v3545, 0
        %v3602 = vsel %vm1235, %v3559, 0
        %v3604 = vsel %vm1235, %v3573, 0
        %3606 = vmatprep.subr.mxu0 0.0
        %3607 = vmatpush1.xpose.msra.mxu0 %v3604
        %3608 = vmatprep.subr.mxu0 0.0
        %3609 = vmatpush1.xpose.msra.mxu0 %v3602
        %3610 = vmatprep.subr.mxu0 0.0
        %3611 = vmatpush1.xpose.msra.mxu0 %v3600
        %3612 = vmatprep.subr.mxu0 0.0
        %3613 = vmatpush1.xpose.msra.mxu0 %v3598
        %3614 = vmatprep.subr.mxu0 0.0
        %3615 = vmatpush1.xpose.msra.mxu0 %v3596
        %3616 = vmatprep.subr.mxu0 0.0
        %3617 = vmatpush1.xpose.msra.mxu0 %v3594
        %3618 = vmatprep.subr.mxu0 0.0
        %3619 = vmatpush1.xpose.msra.mxu0 %v3592
        %3620 = vmatprep.subr.mxu0 0.0
        %3621 = vmatpush1.xpose.msra.mxu0 %v3590
        %3622 = vmatprep.subr.mxu0 0.0
        %3623 = vmatpush1.xpose.msra.mxu0 %v3588
        %3624 = vmatprep.subr.mxu0 0.0
        %3625 = vmatpush1.xpose.msra.mxu0 %v3586
        %3626 = vmatprep.subr.mxu0 0.0
        %3627 = vmatpush1.xpose.msra.mxu0 %v3584
        %3628 = vmatprep.subr.mxu0 0.0
        %3629 = vmatpush1.xpose.msra.mxu0 %v3582
        %3630 = vmatprep.subr.mxu0 0.0
        %3631 = vmatpush1.xpose.msra.mxu0 %v3580
        %3632 = vmatprep.subr.mxu0 0.0
        %3633 = vmatpush1.xpose.msra.mxu0 %v3578
        %3634 = vmatprep.subr.mxu0 0.0
        %3635 = vmatpush1.xpose.msra.mxu0 %v3576
        %3636 = vmatprep.subr.mxu0 0.0
        %3637 = vmatpush1.xpose.msra.mxu0 %v3574
        %3638 = vmatprep.subr.mxu0 0.0
        %3639 = vmatpush2.xpose.msra.mxu0 0.0
        %3640 = vmatprep.subr.mxu0 0.0
        %3641 = vmatpush2.xpose.msra.mxu0 0.0
        %3642 = vmatprep.subr.mxu0 0.0
        %3643 = vmatpush2.xpose.msra.mxu0 0.0
        %3644 = vmatprep.subr.mxu0 0.0
        %3645 = vmatpush2.xpose.msra.mxu0 0.0
        %3646 = vmatprep.subr.mxu0 0.0
        %3647 = vmatpush2.xpose.msra.mxu0 0.0
        %3648 = vmatprep.subr.mxu0 0.0
        %3649 = vmatpush2.xpose.msra.mxu0 0.0
        %3650 = vmatprep.subr.mxu0 0.0
        %3651 = vmatpush2.xpose.msra.mxu0 0.0
        %3652 = vmatprep.subr.mxu0 0.0
        %3653 = vmatpush2.xpose.msra.mxu0 0.0
        %3654 = vmatprep.subr.mxu0 0.0
        %3655 = vmatpush2.xpose.msra.mxu0 0.0
        %3656 = vmatprep.subr.mxu0 0.0
        %3657 = vmatpush2.xpose.msra.mxu0 0.0
        %3658 = vmatprep.subr.mxu0 0.0
        %3659 = vmatpush2.xpose.msra.mxu0 0.0
        %3660 = vmatprep.subr.mxu0 0.0
        %3661 = vmatpush2.xpose.msra.mxu0 0.0
        %3662 = vmatprep.subr.mxu0 0.0
        %3663 = vmatpush2.xpose.msra.mxu0 0.0
        %3664 = vmatprep.subr.mxu0 0.0
        %3665 = vmatpush2.xpose.msra.mxu0 0.0
        %3666 = vmatprep.subr.mxu0 0.0
        %3667 = vmatpush2.xpose.msra.mxu0 0.0
        %3668 = vmatprep.subr.mxu0 0.0
        %3669 = vmatpush2.xpose.msra.mxu0 0.0
        %3670 = vmatprep.mubr.f32.mxu0 0.0
        %3671 = vmatmul.mubr.f32.gmra.mxu0 %v1237
        %v3672 = vpop.f32.mrf.mxu0
        %v3673 = vadd.f32 %v746, %v3672
        %v3674 = vpop.f32.mrf.mxu0
        %3675 = vdwg.mxu0
        %s3676 = scalar_lea.vmem %s739, 32
        %3677 = vst [vmem:[%s3676] sm:$0xff] %v3673
        %v3678 = vld [vmem:[%s707 + $0x5] sm:$0x1]
        %v3679 = vld [vmem:[%s707 + $0xd] sm:$0x1]
        %v3680 = vld [vmem:[%s707 + $0x15] sm:$0x1]
        %v3681 = vld [vmem:[%s707 + $0x1d] sm:$0x1]
        %v3682 = vld [vmem:[%s707 + $0x25] sm:$0x1]
        %v3683 = vld [vmem:[%s707 + $0x2d] sm:$0x1]
        %v3684 = vld [vmem:[%s707 + $0x35] sm:$0x1]
        %v3685 = vld [vmem:[%s707 + $0x3d] sm:$0x1]
        %v3686 = vld [vmem:[%s707 + $0x45] sm:$0x1]
        %v3687 = vld [vmem:[%s707 + $0x4d] sm:$0x1]
        %v3688 = vld [vmem:[%s707 + $0x55] sm:$0x1]
        %v3689 = vld [vmem:[%s707 + $0x5d] sm:$0x1]
        %v3690 = vld [vmem:[%s707 + $0x65] sm:$0x1]
        %v3691 = vld [vmem:[%s707 + $0x6d] sm:$0x1]
        %v3692 = vld [vmem:[%s707 + $0x75] sm:$0x1]
        %v3693 = vld [vmem:[%s707 + $0x7d] sm:$0x1]
        %v3694 = vld [vmem:[%s707 + $0x85] sm:$0x1]
        %v3695 = vld [vmem:[%s707 + $0x8d] sm:$0x1]
        %v3696 = vld [vmem:[%s707 + $0x95] sm:$0x1]
        %v3697 = vld [vmem:[%s707 + $0x9d] sm:$0x1]
        %v3698 = vld [vmem:[%s707 + $0xa5] sm:$0x1]
        %v3699 = vld [vmem:[%s707 + $0xad] sm:$0x1]
        %v3700 = vld [vmem:[%s707 + $0xb5] sm:$0x1]
        %v3701 = vld [vmem:[%s707 + $0xbd] sm:$0x1]
        %v3702 = vld [vmem:[%s707 + $0xc5] sm:$0x1]
        %v3703 = vld [vmem:[%s707 + $0xcd] sm:$0x1]
        %v3704 = vld [vmem:[%s707 + $0xd5] sm:$0x1]
        %v3705 = vld [vmem:[%s707 + $0xdd] sm:$0x1]
        %v3706 = vld [vmem:[%s707 + $0xe5] sm:$0x1]
        %v3707 = vld [vmem:[%s707 + $0xed] sm:$0x1]
        %v3708 = vld [vmem:[%s707 + $0xf5] sm:$0x1]
        %v3709 = vld [vmem:[%s707 + $0xfd] sm:$0x1]
        %v3710 = vld [vmem:[%s707 + $0x105] sm:$0x1]
        %v3711 = vld [vmem:[%s707 + $0x10d] sm:$0x1]
        %v3712 = vld [vmem:[%s707 + $0x115] sm:$0x1]
        %v3713 = vld [vmem:[%s707 + $0x11d] sm:$0x1]
        %v3714 = vld [vmem:[%s707 + $0x125] sm:$0x1]
        %v3715 = vld [vmem:[%s707 + $0x12d] sm:$0x1]
        %v3716 = vld [vmem:[%s707 + $0x135] sm:$0x1]
        %v3717 = vld [vmem:[%s707 + $0x13d] sm:$0x1]
        %v3718 = vld [vmem:[%s707 + $0x145] sm:$0x1]
        %v3719 = vld [vmem:[%s707 + $0x14d] sm:$0x1]
        %v3720 = vld [vmem:[%s707 + $0x155] sm:$0x1]
        %v3721 = vld [vmem:[%s707 + $0x15d] sm:$0x1]
        %v3722 = vld [vmem:[%s707 + $0x165] sm:$0x1]
        %v3723 = vld [vmem:[%s707 + $0x16d] sm:$0x1]
        %v3724 = vld [vmem:[%s707 + $0x175] sm:$0x1]
        %v3725 = vld [vmem:[%s707 + $0x17d] sm:$0x1]
        %v3726 = vld [vmem:[%s707 + $0x185] sm:$0x1]
        %v3727 = vld [vmem:[%s707 + $0x18d] sm:$0x1]
        %v3728 = vld [vmem:[%s707 + $0x195] sm:$0x1]
        %v3729 = vld [vmem:[%s707 + $0x19d] sm:$0x1]
        %v3730 = vld [vmem:[%s707 + $0x1a5] sm:$0x1]
        %v3731 = vld [vmem:[%s707 + $0x1ad] sm:$0x1]
        %v3732 = vld [vmem:[%s707 + $0x1b5] sm:$0x1]
        %v3733 = vld [vmem:[%s707 + $0x1bd] sm:$0x1]
        %v3734 = vld [vmem:[%s707 + $0x1c5] sm:$0x1]
        %v3735 = vld [vmem:[%s707 + $0x1cd] sm:$0x1]
        %v3736 = vld [vmem:[%s707 + $0x1d5] sm:$0x1]
        %v3737 = vld [vmem:[%s707 + $0x1dd] sm:$0x1]
        %v3738 = vld [vmem:[%s707 + $0x1e5] sm:$0x1]
        %v3739 = vld [vmem:[%s707 + $0x1ed] sm:$0x1]
        %v3740 = vld [vmem:[%s707 + $0x1f5] sm:$0x1]
        %v3741 = vld [vmem:[%s707 + $0x1fd] sm:$0x1]
        %v3742 = vld [vmem:[%s707 + $0x205] sm:$0x1]
        %v3743 = vld [vmem:[%s707 + $0x20d] sm:$0x1]
        %v3744 = vld [vmem:[%s707 + $0x215] sm:$0x1]
        %v3745 = vld [vmem:[%s707 + $0x21d] sm:$0x1]
        %v3746 = vld [vmem:[%s707 + $0x225] sm:$0x1]
        %v3747 = vld [vmem:[%s707 + $0x22d] sm:$0x1]
        %v3748 = vld [vmem:[%s707 + $0x235] sm:$0x1]
        %v3749 = vld [vmem:[%s707 + $0x23d] sm:$0x1]
        %v3750 = vld [vmem:[%s707 + $0x245] sm:$0x1]
        %v3751 = vld [vmem:[%s707 + $0x24d] sm:$0x1]
        %v3752 = vld [vmem:[%s707 + $0x255] sm:$0x1]
        %v3753 = vld [vmem:[%s707 + $0x25d] sm:$0x1]
        %v3754 = vld [vmem:[%s707 + $0x265] sm:$0x1]
        %v3755 = vld [vmem:[%s707 + $0x26d] sm:$0x1]
        %v3756 = vld [vmem:[%s707 + $0x275] sm:$0x1]
        %v3757 = vld [vmem:[%s707 + $0x27d] sm:$0x1]
        %v3758 = vld [vmem:[%s707 + $0x285] sm:$0x1]
        %v3759 = vld [vmem:[%s707 + $0x28d] sm:$0x1]
        %v3760 = vld [vmem:[%s707 + $0x295] sm:$0x1]
        %v3761 = vld [vmem:[%s707 + $0x29d] sm:$0x1]
        %v3762 = vld [vmem:[%s707 + $0x2a5] sm:$0x1]
        %v3763 = vld [vmem:[%s707 + $0x2ad] sm:$0x1]
        %v3764 = vld [vmem:[%s707 + $0x2b5] sm:$0x1]
        %v3765 = vld [vmem:[%s707 + $0x2bd] sm:$0x1]
        %v3766 = vld [vmem:[%s707 + $0x2c5] sm:$0x1]
        %v3767 = vld [vmem:[%s707 + $0x2cd] sm:$0x1]
        %v3768 = vld [vmem:[%s707 + $0x2d5] sm:$0x1]
        %v3769 = vld [vmem:[%s707 + $0x2dd] sm:$0x1]
        %v3770 = vld [vmem:[%s707 + $0x2e5] sm:$0x1]
        %v3771 = vld [vmem:[%s707 + $0x2ed] sm:$0x1]
        %v3772 = vld [vmem:[%s707 + $0x2f5] sm:$0x1]
        %v3773 = vld [vmem:[%s707 + $0x2fd] sm:$0x1]
        %v3774 = vld [vmem:[%s707 + $0x305] sm:$0x1]
        %v3775 = vld [vmem:[%s707 + $0x30d] sm:$0x1]
        %v3776 = vld [vmem:[%s707 + $0x315] sm:$0x1]
        %v3777 = vld [vmem:[%s707 + $0x31d] sm:$0x1]
        %v3778 = vld [vmem:[%s707 + $0x325] sm:$0x1]
        %v3779 = vld [vmem:[%s707 + $0x32d] sm:$0x1]
        %v3780 = vld [vmem:[%s707 + $0x335] sm:$0x1]
        %v3781 = vld [vmem:[%s707 + $0x33d] sm:$0x1]
        %v3782 = vld [vmem:[%s707 + $0x345] sm:$0x1]
        %v3783 = vld [vmem:[%s707 + $0x34d] sm:$0x1]
        %v3784 = vld [vmem:[%s707 + $0x355] sm:$0x1]
        %v3785 = vld [vmem:[%s707 + $0x35d] sm:$0x1]
        %v3786 = vld [vmem:[%s707 + $0x365] sm:$0x1]
        %v3787 = vld [vmem:[%s707 + $0x36d] sm:$0x1]
        %v3788 = vld [vmem:[%s707 + $0x375] sm:$0x1]
        %v3789 = vld [vmem:[%s707 + $0x37d] sm:$0x1]
        %v3790 = vld [vmem:[%s707 + $0x385] sm:$0x1]
        %v3791 = vld [vmem:[%s707 + $0x38d] sm:$0x1]
        %v3792 = vld [vmem:[%s707 + $0x395] sm:$0x1]
        %v3793 = vld [vmem:[%s707 + $0x39d] sm:$0x1]
        %v3794 = vld [vmem:[%s707 + $0x3a5] sm:$0x1]
        %v3795 = vld [vmem:[%s707 + $0x3ad] sm:$0x1]
        %v3796 = vld [vmem:[%s707 + $0x3b5] sm:$0x1]
        %v3797 = vld [vmem:[%s707 + $0x3bd] sm:$0x1]
        %v3798 = vld [vmem:[%s707 + $0x3c5] sm:$0x1]
        %v3799 = vld [vmem:[%s707 + $0x3cd] sm:$0x1]
        %v3800 = vld [vmem:[%s707 + $0x3d5] sm:$0x1]
        %v3801 = vld [vmem:[%s707 + $0x3dd] sm:$0x1]
        %v3802 = vld [vmem:[%s707 + $0x3e5] sm:$0x1]
        %v3803 = vld [vmem:[%s707 + $0x3ed] sm:$0x1]
        %v3804 = vld [vmem:[%s707 + $0x3f5] sm:$0x1]
        %v3805 = vld [vmem:[%s707 + $0x3fd] sm:$0x1]
        %v3934 = vrot.slane %v3679, 7
        %v3935 = vsel %vm1005, %v3934, %v3678
        %v3936 = vrot.slane %v3680, 6
        %v3937 = vsel %vm1008, %v3936, %v3935
        %v3938 = vrot.slane %v3681, 5
        %v3939 = vsel %vm1011, %v3938, %v3937
        %v3940 = vrot.slane %v3682, 4
        %v3941 = vsel %vm1014, %v3940, %v3939
        %v3942 = vrot.slane %v3683, 3
        %v3943 = vsel %vm1017, %v3942, %v3941
        %v3944 = vrot.slane %v3684, 2
        %v3945 = vsel %vm1020, %v3944, %v3943
        %v3946 = vrot.slane %v3685, 1
        %v3947 = vsel %vm1023, %v3946, %v3945
        %v3948 = vrot.slane %v3687, 7
        %v3949 = vsel %vm1005, %v3948, %v3686
        %v3950 = vrot.slane %v3688, 6
        %v3951 = vsel %vm1008, %v3950, %v3949
        %v3952 = vrot.slane %v3689, 5
        %v3953 = vsel %vm1011, %v3952, %v3951
        %v3954 = vrot.slane %v3690, 4
        %v3955 = vsel %vm1014, %v3954, %v3953
        %v3956 = vrot.slane %v3691, 3
        %v3957 = vsel %vm1017, %v3956, %v3955
        %v3958 = vrot.slane %v3692, 2
        %v3959 = vsel %vm1020, %v3958, %v3957
        %v3960 = vrot.slane %v3693, 1
        %v3961 = vsel %vm1023, %v3960, %v3959
        %v3962 = vrot.slane %v3695, 7
        %v3963 = vsel %vm1005, %v3962, %v3694
        %v3964 = vrot.slane %v3696, 6
        %v3965 = vsel %vm1008, %v3964, %v3963
        %v3966 = vrot.slane %v3697, 5
        %v3967 = vsel %vm1011, %v3966, %v3965
        %v3968 = vrot.slane %v3698, 4
        %v3969 = vsel %vm1014, %v3968, %v3967
        %v3970 = vrot.slane %v3699, 3
        %v3971 = vsel %vm1017, %v3970, %v3969
        %v3972 = vrot.slane %v3700, 2
        %v3973 = vsel %vm1020, %v3972, %v3971
        %v3974 = vrot.slane %v3701, 1
        %v3975 = vsel %vm1023, %v3974, %v3973
        %v3976 = vrot.slane %v3703, 7
        %v3977 = vsel %vm1005, %v3976, %v3702
        %v3978 = vrot.slane %v3704, 6
        %v3979 = vsel %vm1008, %v3978, %v3977
        %v3980 = vrot.slane %v3705, 5
        %v3981 = vsel %vm1011, %v3980, %v3979
        %v3982 = vrot.slane %v3706, 4
        %v3983 = vsel %vm1014, %v3982, %v3981
        %v3984 = vrot.slane %v3707, 3
        %v3985 = vsel %vm1017, %v3984, %v3983
        %v3986 = vrot.slane %v3708, 2
        %v3987 = vsel %vm1020, %v3986, %v3985
        %v3988 = vrot.slane %v3709, 1
        %v3989 = vsel %vm1023, %v3988, %v3987
        %v3990 = vrot.slane %v3711, 7
        %v3991 = vsel %vm1005, %v3990, %v3710
        %v3992 = vrot.slane %v3712, 6
        %v3993 = vsel %vm1008, %v3992, %v3991
        %v3994 = vrot.slane %v3713, 5
        %v3995 = vsel %vm1011, %v3994, %v3993
        %v3996 = vrot.slane %v3714, 4
        %v3997 = vsel %vm1014, %v3996, %v3995
        %v3998 = vrot.slane %v3715, 3
        %v3999 = vsel %vm1017, %v3998, %v3997
        %v4000 = vrot.slane %v3716, 2
        %v4001 = vsel %vm1020, %v4000, %v3999
        %v4002 = vrot.slane %v3717, 1
        %v4003 = vsel %vm1023, %v4002, %v4001
        %v4004 = vrot.slane %v3719, 7
        %v4005 = vsel %vm1005, %v4004, %v3718
        %v4006 = vrot.slane %v3720, 6
        %v4007 = vsel %vm1008, %v4006, %v4005
        %v4008 = vrot.slane %v3721, 5
        %v4009 = vsel %vm1011, %v4008, %v4007
        %v4010 = vrot.slane %v3722, 4
        %v4011 = vsel %vm1014, %v4010, %v4009
        %v4012 = vrot.slane %v3723, 3
        %v4013 = vsel %vm1017, %v4012, %v4011
        %v4014 = vrot.slane %v3724, 2
        %v4015 = vsel %vm1020, %v4014, %v4013
        %v4016 = vrot.slane %v3725, 1
        %v4017 = vsel %vm1023, %v4016, %v4015
        %v4018 = vrot.slane %v3727, 7
        %v4019 = vsel %vm1005, %v4018, %v3726
        %v4020 = vrot.slane %v3728, 6
        %v4021 = vsel %vm1008, %v4020, %v4019
        %v4022 = vrot.slane %v3729, 5
        %v4023 = vsel %vm1011, %v4022, %v4021
        %v4024 = vrot.slane %v3730, 4
        %v4025 = vsel %vm1014, %v4024, %v4023
        %v4026 = vrot.slane %v3731, 3
        %v4027 = vsel %vm1017, %v4026, %v4025
        %v4028 = vrot.slane %v3732, 2
        %v4029 = vsel %vm1020, %v4028, %v4027
        %v4030 = vrot.slane %v3733, 1
        %v4031 = vsel %vm1023, %v4030, %v4029
        %v4032 = vrot.slane %v3735, 7
        %v4033 = vsel %vm1005, %v4032, %v3734
        %v4034 = vrot.slane %v3736, 6
        %v4035 = vsel %vm1008, %v4034, %v4033
        %v4036 = vrot.slane %v3737, 5
        %v4037 = vsel %vm1011, %v4036, %v4035
        %v4038 = vrot.slane %v3738, 4
        %v4039 = vsel %vm1014, %v4038, %v4037
        %v4040 = vrot.slane %v3739, 3
        %v4041 = vsel %vm1017, %v4040, %v4039
        %v4042 = vrot.slane %v3740, 2
        %v4043 = vsel %vm1020, %v4042, %v4041
        %v4044 = vrot.slane %v3741, 1
        %v4045 = vsel %vm1023, %v4044, %v4043
        %v4046 = vrot.slane %v3743, 7
        %v4047 = vsel %vm1005, %v4046, %v3742
        %v4048 = vrot.slane %v3744, 6
        %v4049 = vsel %vm1008, %v4048, %v4047
        %v4050 = vrot.slane %v3745, 5
        %v4051 = vsel %vm1011, %v4050, %v4049
        %v4052 = vrot.slane %v3746, 4
        %v4053 = vsel %vm1014, %v4052, %v4051
        %v4054 = vrot.slane %v3747, 3
        %v4055 = vsel %vm1017, %v4054, %v4053
        %v4056 = vrot.slane %v3748, 2
        %v4057 = vsel %vm1020, %v4056, %v4055
        %v4058 = vrot.slane %v3749, 1
        %v4059 = vsel %vm1023, %v4058, %v4057
        %v4060 = vrot.slane %v3751, 7
        %v4061 = vsel %vm1005, %v4060, %v3750
        %v4062 = vrot.slane %v3752, 6
        %v4063 = vsel %vm1008, %v4062, %v4061
        %v4064 = vrot.slane %v3753, 5
        %v4065 = vsel %vm1011, %v4064, %v4063
        %v4066 = vrot.slane %v3754, 4
        %v4067 = vsel %vm1014, %v4066, %v4065
        %v4068 = vrot.slane %v3755, 3
        %v4069 = vsel %vm1017, %v4068, %v4067
        %v4070 = vrot.slane %v3756, 2
        %v4071 = vsel %vm1020, %v4070, %v4069
        %v4072 = vrot.slane %v3757, 1
        %v4073 = vsel %vm1023, %v4072, %v4071
        %v4074 = vrot.slane %v3759, 7
        %v4075 = vsel %vm1005, %v4074, %v3758
        %v4076 = vrot.slane %v3760, 6
        %v4077 = vsel %vm1008, %v4076, %v4075
        %v4078 = vrot.slane %v3761, 5
        %v4079 = vsel %vm1011, %v4078, %v4077
        %v4080 = vrot.slane %v3762, 4
        %v4081 = vsel %vm1014, %v4080, %v4079
        %v4082 = vrot.slane %v3763, 3
        %v4083 = vsel %vm1017, %v4082, %v4081
        %v4084 = vrot.slane %v3764, 2
        %v4085 = vsel %vm1020, %v4084, %v4083
        %v4086 = vrot.slane %v3765, 1
        %v4087 = vsel %vm1023, %v4086, %v4085
        %v4088 = vrot.slane %v3767, 7
        %v4089 = vsel %vm1005, %v4088, %v3766
        %v4090 = vrot.slane %v3768, 6
        %v4091 = vsel %vm1008, %v4090, %v4089
        %v4092 = vrot.slane %v3769, 5
        %v4093 = vsel %vm1011, %v4092, %v4091
        %v4094 = vrot.slane %v3770, 4
        %v4095 = vsel %vm1014, %v4094, %v4093
        %v4096 = vrot.slane %v3771, 3
        %v4097 = vsel %vm1017, %v4096, %v4095
        %v4098 = vrot.slane %v3772, 2
        %v4099 = vsel %vm1020, %v4098, %v4097
        %v4100 = vrot.slane %v3773, 1
        %v4101 = vsel %vm1023, %v4100, %v4099
        %v4102 = vrot.slane %v3775, 7
        %v4103 = vsel %vm1005, %v4102, %v3774
        %v4104 = vrot.slane %v3776, 6
        %v4105 = vsel %vm1008, %v4104, %v4103
        %v4106 = vrot.slane %v3777, 5
        %v4107 = vsel %vm1011, %v4106, %v4105
        %v4108 = vrot.slane %v3778, 4
        %v4109 = vsel %vm1014, %v4108, %v4107
        %v4110 = vrot.slane %v3779, 3
        %v4111 = vsel %vm1017, %v4110, %v4109
        %v4112 = vrot.slane %v3780, 2
        %v4113 = vsel %vm1020, %v4112, %v4111
        %v4114 = vrot.slane %v3781, 1
        %v4115 = vsel %vm1023, %v4114, %v4113
        %v4116 = vrot.slane %v3783, 7
        %v4117 = vsel %vm1005, %v4116, %v3782
        %v4118 = vrot.slane %v3784, 6
        %v4119 = vsel %vm1008, %v4118, %v4117
        %v4120 = vrot.slane %v3785, 5
        %v4121 = vsel %vm1011, %v4120, %v4119
        %v4122 = vrot.slane %v3786, 4
        %v4123 = vsel %vm1014, %v4122, %v4121
        %v4124 = vrot.slane %v3787, 3
        %v4125 = vsel %vm1017, %v4124, %v4123
        %v4126 = vrot.slane %v3788, 2
        %v4127 = vsel %vm1020, %v4126, %v4125
        %v4128 = vrot.slane %v3789, 1
        %v4129 = vsel %vm1023, %v4128, %v4127
        %v4130 = vrot.slane %v3791, 7
        %v4131 = vsel %vm1005, %v4130, %v3790
        %v4132 = vrot.slane %v3792, 6
        %v4133 = vsel %vm1008, %v4132, %v4131
        %v4134 = vrot.slane %v3793, 5
        %v4135 = vsel %vm1011, %v4134, %v4133
        %v4136 = vrot.slane %v3794, 4
        %v4137 = vsel %vm1014, %v4136, %v4135
        %v4138 = vrot.slane %v3795, 3
        %v4139 = vsel %vm1017, %v4138, %v4137
        %v4140 = vrot.slane %v3796, 2
        %v4141 = vsel %vm1020, %v4140, %v4139
        %v4142 = vrot.slane %v3797, 1
        %v4143 = vsel %vm1023, %v4142, %v4141
        %v4144 = vrot.slane %v3799, 7
        %v4145 = vsel %vm1005, %v4144, %v3798
        %v4146 = vrot.slane %v3800, 6
        %v4147 = vsel %vm1008, %v4146, %v4145
        %v4148 = vrot.slane %v3801, 5
        %v4149 = vsel %vm1011, %v4148, %v4147
        %v4150 = vrot.slane %v3802, 4
        %v4151 = vsel %vm1014, %v4150, %v4149
        %v4152 = vrot.slane %v3803, 3
        %v4153 = vsel %vm1017, %v4152, %v4151
        %v4154 = vrot.slane %v3804, 2
        %v4155 = vsel %vm1020, %v4154, %v4153
        %v4156 = vrot.slane %v3805, 1
        %v4157 = vsel %vm1023, %v4156, %v4155
        %v4158 = vsel %vm1235, %v3947, 0
        %v4160 = vsel %vm1235, %v3961, 0
        %v4162 = vsel %vm1235, %v3975, 0
        %v4164 = vsel %vm1235, %v3989, 0
        %v4166 = vsel %vm1235, %v4003, 0
        %v4168 = vsel %vm1235, %v4017, 0
        %v4170 = vsel %vm1235, %v4031, 0
        %v4172 = vsel %vm1235, %v4045, 0
        %v4174 = vsel %vm1235, %v4059, 0
        %v4176 = vsel %vm1235, %v4073, 0
        %v4178 = vsel %vm1235, %v4087, 0
        %v4180 = vsel %vm1235, %v4101, 0
        %v4182 = vsel %vm1235, %v4115, 0
        %v4184 = vsel %vm1235, %v4129, 0
        %v4186 = vsel %vm1235, %v4143, 0
        %v4188 = vsel %vm1235, %v4157, 0
        %4190 = vmatprep.subr.mxu0 0.0
        %4191 = vmatpush1.xpose.msra.mxu0 %v4188
        %4192 = vmatprep.subr.mxu0 0.0
        %4193 = vmatpush1.xpose.msra.mxu0 %v4186
        %4194 = vmatprep.subr.mxu0 0.0
        %4195 = vmatpush1.xpose.msra.mxu0 %v4184
        %4196 = vmatprep.subr.mxu0 0.0
        %4197 = vmatpush1.xpose.msra.mxu0 %v4182
        %4198 = vmatprep.subr.mxu0 0.0
        %4199 = vmatpush1.xpose.msra.mxu0 %v4180
        %4200 = vmatprep.subr.mxu0 0.0
        %4201 = vmatpush1.xpose.msra.mxu0 %v4178
        %4202 = vmatprep.subr.mxu0 0.0
        %4203 = vmatpush1.xpose.msra.mxu0 %v4176
        %4204 = vmatprep.subr.mxu0 0.0
        %4205 = vmatpush1.xpose.msra.mxu0 %v4174
        %4206 = vmatprep.subr.mxu0 0.0
        %4207 = vmatpush1.xpose.msra.mxu0 %v4172
        %4208 = vmatprep.subr.mxu0 0.0
        %4209 = vmatpush1.xpose.msra.mxu0 %v4170
        %4210 = vmatprep.subr.mxu0 0.0
        %4211 = vmatpush1.xpose.msra.mxu0 %v4168
        %4212 = vmatprep.subr.mxu0 0.0
        %4213 = vmatpush1.xpose.msra.mxu0 %v4166
        %4214 = vmatprep.subr.mxu0 0.0
        %4215 = vmatpush1.xpose.msra.mxu0 %v4164
        %4216 = vmatprep.subr.mxu0 0.0
        %4217 = vmatpush1.xpose.msra.mxu0 %v4162
        %4218 = vmatprep.subr.mxu0 0.0
        %4219 = vmatpush1.xpose.msra.mxu0 %v4160
        %4220 = vmatprep.subr.mxu0 0.0
        %4221 = vmatpush1.xpose.msra.mxu0 %v4158
        %4222 = vmatprep.subr.mxu0 0.0
        %4223 = vmatpush2.xpose.msra.mxu0 0.0
        %4224 = vmatprep.subr.mxu0 0.0
        %4225 = vmatpush2.xpose.msra.mxu0 0.0
        %4226 = vmatprep.subr.mxu0 0.0
        %4227 = vmatpush2.xpose.msra.mxu0 0.0
        %4228 = vmatprep.subr.mxu0 0.0
        %4229 = vmatpush2.xpose.msra.mxu0 0.0
        %4230 = vmatprep.subr.mxu0 0.0
        %4231 = vmatpush2.xpose.msra.mxu0 0.0
        %4232 = vmatprep.subr.mxu0 0.0
        %4233 = vmatpush2.xpose.msra.mxu0 0.0
        %4234 = vmatprep.subr.mxu0 0.0
        %4235 = vmatpush2.xpose.msra.mxu0 0.0
        %4236 = vmatprep.subr.mxu0 0.0
        %4237 = vmatpush2.xpose.msra.mxu0 0.0
        %4238 = vmatprep.subr.mxu0 0.0
        %4239 = vmatpush2.xpose.msra.mxu0 0.0
        %4240 = vmatprep.subr.mxu0 0.0
        %4241 = vmatpush2.xpose.msra.mxu0 0.0
        %4242 = vmatprep.subr.mxu0 0.0
        %4243 = vmatpush2.xpose.msra.mxu0 0.0
        %4244 = vmatprep.subr.mxu0 0.0
        %4245 = vmatpush2.xpose.msra.mxu0 0.0
        %4246 = vmatprep.subr.mxu0 0.0
        %4247 = vmatpush2.xpose.msra.mxu0 0.0
        %4248 = vmatprep.subr.mxu0 0.0
        %4249 = vmatpush2.xpose.msra.mxu0 0.0
        %4250 = vmatprep.subr.mxu0 0.0
        %4251 = vmatpush2.xpose.msra.mxu0 0.0
        %4252 = vmatprep.subr.mxu0 0.0
        %4253 = vmatpush2.xpose.msra.mxu0 0.0
        %4254 = vmatprep.mubr.f32.mxu0 0.0
        %4255 = vmatmul.mubr.f32.gmra.mxu0 %v1237
        %v4256 = vpop.f32.mrf.mxu0
        %v4257 = vadd.f32 %v746, %v4256
        %v4258 = vpop.f32.mrf.mxu0
        %4259 = vdwg.mxu0
        %s4260 = scalar_lea.vmem %s739, 40
        %4261 = vst [vmem:[%s4260] sm:$0xff] %v4257
        %v4262 = vld [vmem:[%s707 + $0x6] sm:$0x1]
        %v4263 = vld [vmem:[%s707 + $0xe] sm:$0x1]
        %v4264 = vld [vmem:[%s707 + $0x16] sm:$0x1]
        %v4265 = vld [vmem:[%s707 + $0x1e] sm:$0x1]
        %v4266 = vld [vmem:[%s707 + $0x26] sm:$0x1]
        %v4267 = vld [vmem:[%s707 + $0x2e] sm:$0x1]
        %v4268 = vld [vmem:[%s707 + $0x36] sm:$0x1]
        %v4269 = vld [vmem:[%s707 + $0x3e] sm:$0x1]
        %v4270 = vld [vmem:[%s707 + $0x46] sm:$0x1]
        %v4271 = vld [vmem:[%s707 + $0x4e] sm:$0x1]
        %v4272 = vld [vmem:[%s707 + $0x56] sm:$0x1]
        %v4273 = vld [vmem:[%s707 + $0x5e] sm:$0x1]
        %v4274 = vld [vmem:[%s707 + $0x66] sm:$0x1]
        %v4275 = vld [vmem:[%s707 + $0x6e] sm:$0x1]
        %v4276 = vld [vmem:[%s707 + $0x76] sm:$0x1]
        %v4277 = vld [vmem:[%s707 + $0x7e] sm:$0x1]
        %v4278 = vld [vmem:[%s707 + $0x86] sm:$0x1]
        %v4279 = vld [vmem:[%s707 + $0x8e] sm:$0x1]
        %v4280 = vld [vmem:[%s707 + $0x96] sm:$0x1]
        %v4281 = vld [vmem:[%s707 + $0x9e] sm:$0x1]
        %v4282 = vld [vmem:[%s707 + $0xa6] sm:$0x1]
        %v4283 = vld [vmem:[%s707 + $0xae] sm:$0x1]
        %v4284 = vld [vmem:[%s707 + $0xb6] sm:$0x1]
        %v4285 = vld [vmem:[%s707 + $0xbe] sm:$0x1]
        %v4286 = vld [vmem:[%s707 + $0xc6] sm:$0x1]
        %v4287 = vld [vmem:[%s707 + $0xce] sm:$0x1]
        %v4288 = vld [vmem:[%s707 + $0xd6] sm:$0x1]
        %v4289 = vld [vmem:[%s707 + $0xde] sm:$0x1]
        %v4290 = vld [vmem:[%s707 + $0xe6] sm:$0x1]
        %v4291 = vld [vmem:[%s707 + $0xee] sm:$0x1]
        %v4292 = vld [vmem:[%s707 + $0xf6] sm:$0x1]
        %v4293 = vld [vmem:[%s707 + $0xfe] sm:$0x1]
        %v4294 = vld [vmem:[%s707 + $0x106] sm:$0x1]
        %v4295 = vld [vmem:[%s707 + $0x10e] sm:$0x1]
        %v4296 = vld [vmem:[%s707 + $0x116] sm:$0x1]
        %v4297 = vld [vmem:[%s707 + $0x11e] sm:$0x1]
        %v4298 = vld [vmem:[%s707 + $0x126] sm:$0x1]
        %v4299 = vld [vmem:[%s707 + $0x12e] sm:$0x1]
        %v4300 = vld [vmem:[%s707 + $0x136] sm:$0x1]
        %v4301 = vld [vmem:[%s707 + $0x13e] sm:$0x1]
        %v4302 = vld [vmem:[%s707 + $0x146] sm:$0x1]
        %v4303 = vld [vmem:[%s707 + $0x14e] sm:$0x1]
        %v4304 = vld [vmem:[%s707 + $0x156] sm:$0x1]
        %v4305 = vld [vmem:[%s707 + $0x15e] sm:$0x1]
        %v4306 = vld [vmem:[%s707 + $0x166] sm:$0x1]
        %v4307 = vld [vmem:[%s707 + $0x16e] sm:$0x1]
        %v4308 = vld [vmem:[%s707 + $0x176] sm:$0x1]
        %v4309 = vld [vmem:[%s707 + $0x17e] sm:$0x1]
        %v4310 = vld [vmem:[%s707 + $0x186] sm:$0x1]
        %v4311 = vld [vmem:[%s707 + $0x18e] sm:$0x1]
        %v4312 = vld [vmem:[%s707 + $0x196] sm:$0x1]
        %v4313 = vld [vmem:[%s707 + $0x19e] sm:$0x1]
        %v4314 = vld [vmem:[%s707 + $0x1a6] sm:$0x1]
        %v4315 = vld [vmem:[%s707 + $0x1ae] sm:$0x1]
        %v4316 = vld [vmem:[%s707 + $0x1b6] sm:$0x1]
        %v4317 = vld [vmem:[%s707 + $0x1be] sm:$0x1]
        %v4318 = vld [vmem:[%s707 + $0x1c6] sm:$0x1]
        %v4319 = vld [vmem:[%s707 + $0x1ce] sm:$0x1]
        %v4320 = vld [vmem:[%s707 + $0x1d6] sm:$0x1]
        %v4321 = vld [vmem:[%s707 + $0x1de] sm:$0x1]
        %v4322 = vld [vmem:[%s707 + $0x1e6] sm:$0x1]
        %v4323 = vld [vmem:[%s707 + $0x1ee] sm:$0x1]
        %v4324 = vld [vmem:[%s707 + $0x1f6] sm:$0x1]
        %v4325 = vld [vmem:[%s707 + $0x1fe] sm:$0x1]
        %v4326 = vld [vmem:[%s707 + $0x206] sm:$0x1]
        %v4327 = vld [vmem:[%s707 + $0x20e] sm:$0x1]
        %v4328 = vld [vmem:[%s707 + $0x216] sm:$0x1]
        %v4329 = vld [vmem:[%s707 + $0x21e] sm:$0x1]
        %v4330 = vld [vmem:[%s707 + $0x226] sm:$0x1]
        %v4331 = vld [vmem:[%s707 + $0x22e] sm:$0x1]
        %v4332 = vld [vmem:[%s707 + $0x236] sm:$0x1]
        %v4333 = vld [vmem:[%s707 + $0x23e] sm:$0x1]
        %v4334 = vld [vmem:[%s707 + $0x246] sm:$0x1]
        %v4335 = vld [vmem:[%s707 + $0x24e] sm:$0x1]
        %v4336 = vld [vmem:[%s707 + $0x256] sm:$0x1]
        %v4337 = vld [vmem:[%s707 + $0x25e] sm:$0x1]
        %v4338 = vld [vmem:[%s707 + $0x266] sm:$0x1]
        %v4339 = vld [vmem:[%s707 + $0x26e] sm:$0x1]
        %v4340 = vld [vmem:[%s707 + $0x276] sm:$0x1]
        %v4341 = vld [vmem:[%s707 + $0x27e] sm:$0x1]
        %v4342 = vld [vmem:[%s707 + $0x286] sm:$0x1]
        %v4343 = vld [vmem:[%s707 + $0x28e] sm:$0x1]
        %v4344 = vld [vmem:[%s707 + $0x296] sm:$0x1]
        %v4345 = vld [vmem:[%s707 + $0x29e] sm:$0x1]
        %v4346 = vld [vmem:[%s707 + $0x2a6] sm:$0x1]
        %v4347 = vld [vmem:[%s707 + $0x2ae] sm:$0x1]
        %v4348 = vld [vmem:[%s707 + $0x2b6] sm:$0x1]
        %v4349 = vld [vmem:[%s707 + $0x2be] sm:$0x1]
        %v4350 = vld [vmem:[%s707 + $0x2c6] sm:$0x1]
        %v4351 = vld [vmem:[%s707 + $0x2ce] sm:$0x1]
        %v4352 = vld [vmem:[%s707 + $0x2d6] sm:$0x1]
        %v4353 = vld [vmem:[%s707 + $0x2de] sm:$0x1]
        %v4354 = vld [vmem:[%s707 + $0x2e6] sm:$0x1]
        %v4355 = vld [vmem:[%s707 + $0x2ee] sm:$0x1]
        %v4356 = vld [vmem:[%s707 + $0x2f6] sm:$0x1]
        %v4357 = vld [vmem:[%s707 + $0x2fe] sm:$0x1]
        %v4358 = vld [vmem:[%s707 + $0x306] sm:$0x1]
        %v4359 = vld [vmem:[%s707 + $0x30e] sm:$0x1]
        %v4360 = vld [vmem:[%s707 + $0x316] sm:$0x1]
        %v4361 = vld [vmem:[%s707 + $0x31e] sm:$0x1]
        %v4362 = vld [vmem:[%s707 + $0x326] sm:$0x1]
        %v4363 = vld [vmem:[%s707 + $0x32e] sm:$0x1]
        %v4364 = vld [vmem:[%s707 + $0x336] sm:$0x1]
        %v4365 = vld [vmem:[%s707 + $0x33e] sm:$0x1]
        %v4366 = vld [vmem:[%s707 + $0x346] sm:$0x1]
        %v4367 = vld [vmem:[%s707 + $0x34e] sm:$0x1]
        %v4368 = vld [vmem:[%s707 + $0x356] sm:$0x1]
        %v4369 = vld [vmem:[%s707 + $0x35e] sm:$0x1]
        %v4370 = vld [vmem:[%s707 + $0x366] sm:$0x1]
        %v4371 = vld [vmem:[%s707 + $0x36e] sm:$0x1]
        %v4372 = vld [vmem:[%s707 + $0x376] sm:$0x1]
        %v4373 = vld [vmem:[%s707 + $0x37e] sm:$0x1]
        %v4374 = vld [vmem:[%s707 + $0x386] sm:$0x1]
        %v4375 = vld [vmem:[%s707 + $0x38e] sm:$0x1]
        %v4376 = vld [vmem:[%s707 + $0x396] sm:$0x1]
        %v4377 = vld [vmem:[%s707 + $0x39e] sm:$0x1]
        %v4378 = vld [vmem:[%s707 + $0x3a6] sm:$0x1]
        %v4379 = vld [vmem:[%s707 + $0x3ae] sm:$0x1]
        %v4380 = vld [vmem:[%s707 + $0x3b6] sm:$0x1]
        %v4381 = vld [vmem:[%s707 + $0x3be] sm:$0x1]
        %v4382 = vld [vmem:[%s707 + $0x3c6] sm:$0x1]
        %v4383 = vld [vmem:[%s707 + $0x3ce] sm:$0x1]
        %v4384 = vld [vmem:[%s707 + $0x3d6] sm:$0x1]
        %v4385 = vld [vmem:[%s707 + $0x3de] sm:$0x1]
        %v4386 = vld [vmem:[%s707 + $0x3e6] sm:$0x1]
        %v4387 = vld [vmem:[%s707 + $0x3ee] sm:$0x1]
        %v4388 = vld [vmem:[%s707 + $0x3f6] sm:$0x1]
        %v4389 = vld [vmem:[%s707 + $0x3fe] sm:$0x1]
        %v4518 = vrot.slane %v4263, 7
        %v4519 = vsel %vm1005, %v4518, %v4262
        %v4520 = vrot.slane %v4264, 6
        %v4521 = vsel %vm1008, %v4520, %v4519
        %v4522 = vrot.slane %v4265, 5
        %v4523 = vsel %vm1011, %v4522, %v4521
        %v4524 = vrot.slane %v4266, 4
        %v4525 = vsel %vm1014, %v4524, %v4523
        %v4526 = vrot.slane %v4267, 3
        %v4527 = vsel %vm1017, %v4526, %v4525
        %v4528 = vrot.slane %v4268, 2
        %v4529 = vsel %vm1020, %v4528, %v4527
        %v4530 = vrot.slane %v4269, 1
        %v4531 = vsel %vm1023, %v4530, %v4529
        %v4532 = vrot.slane %v4271, 7
        %v4533 = vsel %vm1005, %v4532, %v4270
        %v4534 = vrot.slane %v4272, 6
        %v4535 = vsel %vm1008, %v4534, %v4533
        %v4536 = vrot.slane %v4273, 5
        %v4537 = vsel %vm1011, %v4536, %v4535
        %v4538 = vrot.slane %v4274, 4
        %v4539 = vsel %vm1014, %v4538, %v4537
        %v4540 = vrot.slane %v4275, 3
        %v4541 = vsel %vm1017, %v4540, %v4539
        %v4542 = vrot.slane %v4276, 2
        %v4543 = vsel %vm1020, %v4542, %v4541
        %v4544 = vrot.slane %v4277, 1
        %v4545 = vsel %vm1023, %v4544, %v4543
        %v4546 = vrot.slane %v4279, 7
        %v4547 = vsel %vm1005, %v4546, %v4278
        %v4548 = vrot.slane %v4280, 6
        %v4549 = vsel %vm1008, %v4548, %v4547
        %v4550 = vrot.slane %v4281, 5
        %v4551 = vsel %vm1011, %v4550, %v4549
        %v4552 = vrot.slane %v4282, 4
        %v4553 = vsel %vm1014, %v4552, %v4551
        %v4554 = vrot.slane %v4283, 3
        %v4555 = vsel %vm1017, %v4554, %v4553
        %v4556 = vrot.slane %v4284, 2
        %v4557 = vsel %vm1020, %v4556, %v4555
        %v4558 = vrot.slane %v4285, 1
        %v4559 = vsel %vm1023, %v4558, %v4557
        %v4560 = vrot.slane %v4287, 7
        %v4561 = vsel %vm1005, %v4560, %v4286
        %v4562 = vrot.slane %v4288, 6
        %v4563 = vsel %vm1008, %v4562, %v4561
        %v4564 = vrot.slane %v4289, 5
        %v4565 = vsel %vm1011, %v4564, %v4563
        %v4566 = vrot.slane %v4290, 4
        %v4567 = vsel %vm1014, %v4566, %v4565
        %v4568 = vrot.slane %v4291, 3
        %v4569 = vsel %vm1017, %v4568, %v4567
        %v4570 = vrot.slane %v4292, 2
        %v4571 = vsel %vm1020, %v4570, %v4569
        %v4572 = vrot.slane %v4293, 1
        %v4573 = vsel %vm1023, %v4572, %v4571
        %v4574 = vrot.slane %v4295, 7
        %v4575 = vsel %vm1005, %v4574, %v4294
        %v4576 = vrot.slane %v4296, 6
        %v4577 = vsel %vm1008, %v4576, %v4575
        %v4578 = vrot.slane %v4297, 5
        %v4579 = vsel %vm1011, %v4578, %v4577
        %v4580 = vrot.slane %v4298, 4
        %v4581 = vsel %vm1014, %v4580, %v4579
        %v4582 = vrot.slane %v4299, 3
        %v4583 = vsel %vm1017, %v4582, %v4581
        %v4584 = vrot.slane %v4300, 2
        %v4585 = vsel %vm1020, %v4584, %v4583
        %v4586 = vrot.slane %v4301, 1
        %v4587 = vsel %vm1023, %v4586, %v4585
        %v4588 = vrot.slane %v4303, 7
        %v4589 = vsel %vm1005, %v4588, %v4302
        %v4590 = vrot.slane %v4304, 6
        %v4591 = vsel %vm1008, %v4590, %v4589
        %v4592 = vrot.slane %v4305, 5
        %v4593 = vsel %vm1011, %v4592, %v4591
        %v4594 = vrot.slane %v4306, 4
        %v4595 = vsel %vm1014, %v4594, %v4593
        %v4596 = vrot.slane %v4307, 3
        %v4597 = vsel %vm1017, %v4596, %v4595
        %v4598 = vrot.slane %v4308, 2
        %v4599 = vsel %vm1020, %v4598, %v4597
        %v4600 = vrot.slane %v4309, 1
        %v4601 = vsel %vm1023, %v4600, %v4599
        %v4602 = vrot.slane %v4311, 7
        %v4603 = vsel %vm1005, %v4602, %v4310
        %v4604 = vrot.slane %v4312, 6
        %v4605 = vsel %vm1008, %v4604, %v4603
        %v4606 = vrot.slane %v4313, 5
        %v4607 = vsel %vm1011, %v4606, %v4605
        %v4608 = vrot.slane %v4314, 4
        %v4609 = vsel %vm1014, %v4608, %v4607
        %v4610 = vrot.slane %v4315, 3
        %v4611 = vsel %vm1017, %v4610, %v4609
        %v4612 = vrot.slane %v4316, 2
        %v4613 = vsel %vm1020, %v4612, %v4611
        %v4614 = vrot.slane %v4317, 1
        %v4615 = vsel %vm1023, %v4614, %v4613
        %v4616 = vrot.slane %v4319, 7
        %v4617 = vsel %vm1005, %v4616, %v4318
        %v4618 = vrot.slane %v4320, 6
        %v4619 = vsel %vm1008, %v4618, %v4617
        %v4620 = vrot.slane %v4321, 5
        %v4621 = vsel %vm1011, %v4620, %v4619
        %v4622 = vrot.slane %v4322, 4
        %v4623 = vsel %vm1014, %v4622, %v4621
        %v4624 = vrot.slane %v4323, 3
        %v4625 = vsel %vm1017, %v4624, %v4623
        %v4626 = vrot.slane %v4324, 2
        %v4627 = vsel %vm1020, %v4626, %v4625
        %v4628 = vrot.slane %v4325, 1
        %v4629 = vsel %vm1023, %v4628, %v4627
        %v4630 = vrot.slane %v4327, 7
        %v4631 = vsel %vm1005, %v4630, %v4326
        %v4632 = vrot.slane %v4328, 6
        %v4633 = vsel %vm1008, %v4632, %v4631
        %v4634 = vrot.slane %v4329, 5
        %v4635 = vsel %vm1011, %v4634, %v4633
        %v4636 = vrot.slane %v4330, 4
        %v4637 = vsel %vm1014, %v4636, %v4635
        %v4638 = vrot.slane %v4331, 3
        %v4639 = vsel %vm1017, %v4638, %v4637
        %v4640 = vrot.slane %v4332, 2
        %v4641 = vsel %vm1020, %v4640, %v4639
        %v4642 = vrot.slane %v4333, 1
        %v4643 = vsel %vm1023, %v4642, %v4641
        %v4644 = vrot.slane %v4335, 7
        %v4645 = vsel %vm1005, %v4644, %v4334
        %v4646 = vrot.slane %v4336, 6
        %v4647 = vsel %vm1008, %v4646, %v4645
        %v4648 = vrot.slane %v4337, 5
        %v4649 = vsel %vm1011, %v4648, %v4647
        %v4650 = vrot.slane %v4338, 4
        %v4651 = vsel %vm1014, %v4650, %v4649
        %v4652 = vrot.slane %v4339, 3
        %v4653 = vsel %vm1017, %v4652, %v4651
        %v4654 = vrot.slane %v4340, 2
        %v4655 = vsel %vm1020, %v4654, %v4653
        %v4656 = vrot.slane %v4341, 1
        %v4657 = vsel %vm1023, %v4656, %v4655
        %v4658 = vrot.slane %v4343, 7
        %v4659 = vsel %vm1005, %v4658, %v4342
        %v4660 = vrot.slane %v4344, 6
        %v4661 = vsel %vm1008, %v4660, %v4659
        %v4662 = vrot.slane %v4345, 5
        %v4663 = vsel %vm1011, %v4662, %v4661
        %v4664 = vrot.slane %v4346, 4
        %v4665 = vsel %vm1014, %v4664, %v4663
        %v4666 = vrot.slane %v4347, 3
        %v4667 = vsel %vm1017, %v4666, %v4665
        %v4668 = vrot.slane %v4348, 2
        %v4669 = vsel %vm1020, %v4668, %v4667
        %v4670 = vrot.slane %v4349, 1
        %v4671 = vsel %vm1023, %v4670, %v4669
        %v4672 = vrot.slane %v4351, 7
        %v4673 = vsel %vm1005, %v4672, %v4350
        %v4674 = vrot.slane %v4352, 6
        %v4675 = vsel %vm1008, %v4674, %v4673
        %v4676 = vrot.slane %v4353, 5
        %v4677 = vsel %vm1011, %v4676, %v4675
        %v4678 = vrot.slane %v4354, 4
        %v4679 = vsel %vm1014, %v4678, %v4677
        %v4680 = vrot.slane %v4355, 3
        %v4681 = vsel %vm1017, %v4680, %v4679
        %v4682 = vrot.slane %v4356, 2
        %v4683 = vsel %vm1020, %v4682, %v4681
        %v4684 = vrot.slane %v4357, 1
        %v4685 = vsel %vm1023, %v4684, %v4683
        %v4686 = vrot.slane %v4359, 7
        %v4687 = vsel %vm1005, %v4686, %v4358
        %v4688 = vrot.slane %v4360, 6
        %v4689 = vsel %vm1008, %v4688, %v4687
        %v4690 = vrot.slane %v4361, 5
        %v4691 = vsel %vm1011, %v4690, %v4689
        %v4692 = vrot.slane %v4362, 4
        %v4693 = vsel %vm1014, %v4692, %v4691
        %v4694 = vrot.slane %v4363, 3
        %v4695 = vsel %vm1017, %v4694, %v4693
        %v4696 = vrot.slane %v4364, 2
        %v4697 = vsel %vm1020, %v4696, %v4695
        %v4698 = vrot.slane %v4365, 1
        %v4699 = vsel %vm1023, %v4698, %v4697
        %v4700 = vrot.slane %v4367, 7
        %v4701 = vsel %vm1005, %v4700, %v4366
        %v4702 = vrot.slane %v4368, 6
        %v4703 = vsel %vm1008, %v4702, %v4701
        %v4704 = vrot.slane %v4369, 5
        %v4705 = vsel %vm1011, %v4704, %v4703
        %v4706 = vrot.slane %v4370, 4
        %v4707 = vsel %vm1014, %v4706, %v4705
        %v4708 = vrot.slane %v4371, 3
        %v4709 = vsel %vm1017, %v4708, %v4707
        %v4710 = vrot.slane %v4372, 2
        %v4711 = vsel %vm1020, %v4710, %v4709
        %v4712 = vrot.slane %v4373, 1
        %v4713 = vsel %vm1023, %v4712, %v4711
        %v4714 = vrot.slane %v4375, 7
        %v4715 = vsel %vm1005, %v4714, %v4374
        %v4716 = vrot.slane %v4376, 6
        %v4717 = vsel %vm1008, %v4716, %v4715
        %v4718 = vrot.slane %v4377, 5
        %v4719 = vsel %vm1011, %v4718, %v4717
        %v4720 = vrot.slane %v4378, 4
        %v4721 = vsel %vm1014, %v4720, %v4719
        %v4722 = vrot.slane %v4379, 3
        %v4723 = vsel %vm1017, %v4722, %v4721
        %v4724 = vrot.slane %v4380, 2
        %v4725 = vsel %vm1020, %v4724, %v4723
        %v4726 = vrot.slane %v4381, 1
        %v4727 = vsel %vm1023, %v4726, %v4725
        %v4728 = vrot.slane %v4383, 7
        %v4729 = vsel %vm1005, %v4728, %v4382
        %v4730 = vrot.slane %v4384, 6
        %v4731 = vsel %vm1008, %v4730, %v4729
        %v4732 = vrot.slane %v4385, 5
        %v4733 = vsel %vm1011, %v4732, %v4731
        %v4734 = vrot.slane %v4386, 4
        %v4735 = vsel %vm1014, %v4734, %v4733
        %v4736 = vrot.slane %v4387, 3
        %v4737 = vsel %vm1017, %v4736, %v4735
        %v4738 = vrot.slane %v4388, 2
        %v4739 = vsel %vm1020, %v4738, %v4737
        %v4740 = vrot.slane %v4389, 1
        %v4741 = vsel %vm1023, %v4740, %v4739
        %v4742 = vsel %vm1235, %v4531, 0
        %v4744 = vsel %vm1235, %v4545, 0
        %v4746 = vsel %vm1235, %v4559, 0
        %v4748 = vsel %vm1235, %v4573, 0
        %v4750 = vsel %vm1235, %v4587, 0
        %v4752 = vsel %vm1235, %v4601, 0
        %v4754 = vsel %vm1235, %v4615, 0
        %v4756 = vsel %vm1235, %v4629, 0
        %v4758 = vsel %vm1235, %v4643, 0
        %v4760 = vsel %vm1235, %v4657, 0
        %v4762 = vsel %vm1235, %v4671, 0
        %v4764 = vsel %vm1235, %v4685, 0
        %v4766 = vsel %vm1235, %v4699, 0
        %v4768 = vsel %vm1235, %v4713, 0
        %v4770 = vsel %vm1235, %v4727, 0
        %v4772 = vsel %vm1235, %v4741, 0
        %4774 = vmatprep.subr.mxu0 0.0
        %4775 = vmatpush1.xpose.msra.mxu0 %v4772
        %4776 = vmatprep.subr.mxu0 0.0
        %4777 = vmatpush1.xpose.msra.mxu0 %v4770
        %4778 = vmatprep.subr.mxu0 0.0
        %4779 = vmatpush1.xpose.msra.mxu0 %v4768
        %4780 = vmatprep.subr.mxu0 0.0
        %4781 = vmatpush1.xpose.msra.mxu0 %v4766
        %4782 = vmatprep.subr.mxu0 0.0
        %4783 = vmatpush1.xpose.msra.mxu0 %v4764
        %4784 = vmatprep.subr.mxu0 0.0
        %4785 = vmatpush1.xpose.msra.mxu0 %v4762
        %4786 = vmatprep.subr.mxu0 0.0
        %4787 = vmatpush1.xpose.msra.mxu0 %v4760
        %4788 = vmatprep.subr.mxu0 0.0
        %4789 = vmatpush1.xpose.msra.mxu0 %v4758
        %4790 = vmatprep.subr.mxu0 0.0
        %4791 = vmatpush1.xpose.msra.mxu0 %v4756
        %4792 = vmatprep.subr.mxu0 0.0
        %4793 = vmatpush1.xpose.msra.mxu0 %v4754
        %4794 = vmatprep.subr.mxu0 0.0
        %4795 = vmatpush1.xpose.msra.mxu0 %v4752
        %4796 = vmatprep.subr.mxu0 0.0
        %4797 = vmatpush1.xpose.msra.mxu0 %v4750
        %4798 = vmatprep.subr.mxu0 0.0
        %4799 = vmatpush1.xpose.msra.mxu0 %v4748
        %4800 = vmatprep.subr.mxu0 0.0
        %4801 = vmatpush1.xpose.msra.mxu0 %v4746
        %4802 = vmatprep.subr.mxu0 0.0
        %4803 = vmatpush1.xpose.msra.mxu0 %v4744
        %4804 = vmatprep.subr.mxu0 0.0
        %4805 = vmatpush1.xpose.msra.mxu0 %v4742
        %4806 = vmatprep.subr.mxu0 0.0
        %4807 = vmatpush2.xpose.msra.mxu0 0.0
        %4808 = vmatprep.subr.mxu0 0.0
        %4809 = vmatpush2.xpose.msra.mxu0 0.0
        %4810 = vmatprep.subr.mxu0 0.0
        %4811 = vmatpush2.xpose.msra.mxu0 0.0
        %4812 = vmatprep.subr.mxu0 0.0
        %4813 = vmatpush2.xpose.msra.mxu0 0.0
        %4814 = vmatprep.subr.mxu0 0.0
        %4815 = vmatpush2.xpose.msra.mxu0 0.0
        %4816 = vmatprep.subr.mxu0 0.0
        %4817 = vmatpush2.xpose.msra.mxu0 0.0
        %4818 = vmatprep.subr.mxu0 0.0
        %4819 = vmatpush2.xpose.msra.mxu0 0.0
        %4820 = vmatprep.subr.mxu0 0.0
        %4821 = vmatpush2.xpose.msra.mxu0 0.0
        %4822 = vmatprep.subr.mxu0 0.0
        %4823 = vmatpush2.xpose.msra.mxu0 0.0
        %4824 = vmatprep.subr.mxu0 0.0
        %4825 = vmatpush2.xpose.msra.mxu0 0.0
        %4826 = vmatprep.subr.mxu0 0.0
        %4827 = vmatpush2.xpose.msra.mxu0 0.0
        %4828 = vmatprep.subr.mxu0 0.0
        %4829 = vmatpush2.xpose.msra.mxu0 0.0
        %4830 = vmatprep.subr.mxu0 0.0
        %4831 = vmatpush2.xpose.msra.mxu0 0.0
        %4832 = vmatprep.subr.mxu0 0.0
        %4833 = vmatpush2.xpose.msra.mxu0 0.0
        %4834 = vmatprep.subr.mxu0 0.0
        %4835 = vmatpush2.xpose.msra.mxu0 0.0
        %4836 = vmatprep.subr.mxu0 0.0
        %4837 = vmatpush2.xpose.msra.mxu0 0.0
        %4838 = vmatprep.mubr.f32.mxu0 0.0
        %4839 = vmatmul.mubr.f32.gmra.mxu0 %v1237
        %v4840 = vpop.f32.mrf.mxu0
        %v4841 = vadd.f32 %v746, %v4840
        %v4842 = vpop.f32.mrf.mxu0
        %4843 = vdwg.mxu0
        %s4844 = scalar_lea.vmem %s739, 48
        %4845 = vst [vmem:[%s4844] sm:$0xff] %v4841
        %v4846 = vld [vmem:[%s707 + $0x7] sm:$0x1]
        %v4847 = vld [vmem:[%s707 + $0xf] sm:$0x1]
        %v4848 = vld [vmem:[%s707 + $0x17] sm:$0x1]
        %v4849 = vld [vmem:[%s707 + $0x1f] sm:$0x1]
        %v4850 = vld [vmem:[%s707 + $0x27] sm:$0x1]
        %v4851 = vld [vmem:[%s707 + $0x2f] sm:$0x1]
        %v4852 = vld [vmem:[%s707 + $0x37] sm:$0x1]
        %v4853 = vld [vmem:[%s707 + $0x3f] sm:$0x1]
        %v4854 = vld [vmem:[%s707 + $0x47] sm:$0x1]
        %v4855 = vld [vmem:[%s707 + $0x4f] sm:$0x1]
        %v4856 = vld [vmem:[%s707 + $0x57] sm:$0x1]
        %v4857 = vld [vmem:[%s707 + $0x5f] sm:$0x1]
        %v4858 = vld [vmem:[%s707 + $0x67] sm:$0x1]
        %v4859 = vld [vmem:[%s707 + $0x6f] sm:$0x1]
        %v4860 = vld [vmem:[%s707 + $0x77] sm:$0x1]
        %v4861 = vld [vmem:[%s707 + $0x7f] sm:$0x1]
        %v4862 = vld [vmem:[%s707 + $0x87] sm:$0x1]
        %v4863 = vld [vmem:[%s707 + $0x8f] sm:$0x1]
        %v4864 = vld [vmem:[%s707 + $0x97] sm:$0x1]
        %v4865 = vld [vmem:[%s707 + $0x9f] sm:$0x1]
        %v4866 = vld [vmem:[%s707 + $0xa7] sm:$0x1]
        %v4867 = vld [vmem:[%s707 + $0xaf] sm:$0x1]
        %v4868 = vld [vmem:[%s707 + $0xb7] sm:$0x1]
        %v4869 = vld [vmem:[%s707 + $0xbf] sm:$0x1]
        %v4870 = vld [vmem:[%s707 + $0xc7] sm:$0x1]
        %v4871 = vld [vmem:[%s707 + $0xcf] sm:$0x1]
        %v4872 = vld [vmem:[%s707 + $0xd7] sm:$0x1]
        %v4873 = vld [vmem:[%s707 + $0xdf] sm:$0x1]
        %v4874 = vld [vmem:[%s707 + $0xe7] sm:$0x1]
        %v4875 = vld [vmem:[%s707 + $0xef] sm:$0x1]
        %v4876 = vld [vmem:[%s707 + $0xf7] sm:$0x1]
        %v4877 = vld [vmem:[%s707 + $0xff] sm:$0x1]
        %v4878 = vld [vmem:[%s707 + $0x107] sm:$0x1]
        %v4879 = vld [vmem:[%s707 + $0x10f] sm:$0x1]
        %v4880 = vld [vmem:[%s707 + $0x117] sm:$0x1]
        %v4881 = vld [vmem:[%s707 + $0x11f] sm:$0x1]
        %v4882 = vld [vmem:[%s707 + $0x127] sm:$0x1]
        %v4883 = vld [vmem:[%s707 + $0x12f] sm:$0x1]
        %v4884 = vld [vmem:[%s707 + $0x137] sm:$0x1]
        %v4885 = vld [vmem:[%s707 + $0x13f] sm:$0x1]
        %v4886 = vld [vmem:[%s707 + $0x147] sm:$0x1]
        %v4887 = vld [vmem:[%s707 + $0x14f] sm:$0x1]
        %v4888 = vld [vmem:[%s707 + $0x157] sm:$0x1]
        %v4889 = vld [vmem:[%s707 + $0x15f] sm:$0x1]
        %v4890 = vld [vmem:[%s707 + $0x167] sm:$0x1]
        %v4891 = vld [vmem:[%s707 + $0x16f] sm:$0x1]
        %v4892 = vld [vmem:[%s707 + $0x177] sm:$0x1]
        %v4893 = vld [vmem:[%s707 + $0x17f] sm:$0x1]
        %v4894 = vld [vmem:[%s707 + $0x187] sm:$0x1]
        %v4895 = vld [vmem:[%s707 + $0x18f] sm:$0x1]
        %v4896 = vld [vmem:[%s707 + $0x197] sm:$0x1]
        %v4897 = vld [vmem:[%s707 + $0x19f] sm:$0x1]
        %v4898 = vld [vmem:[%s707 + $0x1a7] sm:$0x1]
        %v4899 = vld [vmem:[%s707 + $0x1af] sm:$0x1]
        %v4900 = vld [vmem:[%s707 + $0x1b7] sm:$0x1]
        %v4901 = vld [vmem:[%s707 + $0x1bf] sm:$0x1]
        %v4902 = vld [vmem:[%s707 + $0x1c7] sm:$0x1]
        %v4903 = vld [vmem:[%s707 + $0x1cf] sm:$0x1]
        %v4904 = vld [vmem:[%s707 + $0x1d7] sm:$0x1]
        %v4905 = vld [vmem:[%s707 + $0x1df] sm:$0x1]
        %v4906 = vld [vmem:[%s707 + $0x1e7] sm:$0x1]
        %v4907 = vld [vmem:[%s707 + $0x1ef] sm:$0x1]
        %v4908 = vld [vmem:[%s707 + $0x1f7] sm:$0x1]
        %v4909 = vld [vmem:[%s707 + $0x1ff] sm:$0x1]
        %v4910 = vld [vmem:[%s707 + $0x207] sm:$0x1]
        %v4911 = vld [vmem:[%s707 + $0x20f] sm:$0x1]
        %v4912 = vld [vmem:[%s707 + $0x217] sm:$0x1]
        %v4913 = vld [vmem:[%s707 + $0x21f] sm:$0x1]
        %v4914 = vld [vmem:[%s707 + $0x227] sm:$0x1]
        %v4915 = vld [vmem:[%s707 + $0x22f] sm:$0x1]
        %v4916 = vld [vmem:[%s707 + $0x237] sm:$0x1]
        %v4917 = vld [vmem:[%s707 + $0x23f] sm:$0x1]
        %v4918 = vld [vmem:[%s707 + $0x247] sm:$0x1]
        %v4919 = vld [vmem:[%s707 + $0x24f] sm:$0x1]
        %v4920 = vld [vmem:[%s707 + $0x257] sm:$0x1]
        %v4921 = vld [vmem:[%s707 + $0x25f] sm:$0x1]
        %v4922 = vld [vmem:[%s707 + $0x267] sm:$0x1]
        %v4923 = vld [vmem:[%s707 + $0x26f] sm:$0x1]
        %v4924 = vld [vmem:[%s707 + $0x277] sm:$0x1]
        %v4925 = vld [vmem:[%s707 + $0x27f] sm:$0x1]
        %v4926 = vld [vmem:[%s707 + $0x287] sm:$0x1]
        %v4927 = vld [vmem:[%s707 + $0x28f] sm:$0x1]
        %v4928 = vld [vmem:[%s707 + $0x297] sm:$0x1]
        %v4929 = vld [vmem:[%s707 + $0x29f] sm:$0x1]
        %v4930 = vld [vmem:[%s707 + $0x2a7] sm:$0x1]
        %v4931 = vld [vmem:[%s707 + $0x2af] sm:$0x1]
        %v4932 = vld [vmem:[%s707 + $0x2b7] sm:$0x1]
        %v4933 = vld [vmem:[%s707 + $0x2bf] sm:$0x1]
        %v4934 = vld [vmem:[%s707 + $0x2c7] sm:$0x1]
        %v4935 = vld [vmem:[%s707 + $0x2cf] sm:$0x1]
        %v4936 = vld [vmem:[%s707 + $0x2d7] sm:$0x1]
        %v4937 = vld [vmem:[%s707 + $0x2df] sm:$0x1]
        %v4938 = vld [vmem:[%s707 + $0x2e7] sm:$0x1]
        %v4939 = vld [vmem:[%s707 + $0x2ef] sm:$0x1]
        %v4940 = vld [vmem:[%s707 + $0x2f7] sm:$0x1]
        %v4941 = vld [vmem:[%s707 + $0x2ff] sm:$0x1]
        %v4942 = vld [vmem:[%s707 + $0x307] sm:$0x1]
        %v4943 = vld [vmem:[%s707 + $0x30f] sm:$0x1]
        %v4944 = vld [vmem:[%s707 + $0x317] sm:$0x1]
        %v4945 = vld [vmem:[%s707 + $0x31f] sm:$0x1]
        %v4946 = vld [vmem:[%s707 + $0x327] sm:$0x1]
        %v4947 = vld [vmem:[%s707 + $0x32f] sm:$0x1]
        %v4948 = vld [vmem:[%s707 + $0x337] sm:$0x1]
        %v4949 = vld [vmem:[%s707 + $0x33f] sm:$0x1]
        %v4950 = vld [vmem:[%s707 + $0x347] sm:$0x1]
        %v4951 = vld [vmem:[%s707 + $0x34f] sm:$0x1]
        %v4952 = vld [vmem:[%s707 + $0x357] sm:$0x1]
        %v4953 = vld [vmem:[%s707 + $0x35f] sm:$0x1]
        %v4954 = vld [vmem:[%s707 + $0x367] sm:$0x1]
        %v4955 = vld [vmem:[%s707 + $0x36f] sm:$0x1]
        %v4956 = vld [vmem:[%s707 + $0x377] sm:$0x1]
        %v4957 = vld [vmem:[%s707 + $0x37f] sm:$0x1]
        %v4958 = vld [vmem:[%s707 + $0x387] sm:$0x1]
        %v4959 = vld [vmem:[%s707 + $0x38f] sm:$0x1]
        %v4960 = vld [vmem:[%s707 + $0x397] sm:$0x1]
        %v4961 = vld [vmem:[%s707 + $0x39f] sm:$0x1]
        %v4962 = vld [vmem:[%s707 + $0x3a7] sm:$0x1]
        %v4963 = vld [vmem:[%s707 + $0x3af] sm:$0x1]
        %v4964 = vld [vmem:[%s707 + $0x3b7] sm:$0x1]
        %v4965 = vld [vmem:[%s707 + $0x3bf] sm:$0x1]
        %v4966 = vld [vmem:[%s707 + $0x3c7] sm:$0x1]
        %v4967 = vld [vmem:[%s707 + $0x3cf] sm:$0x1]
        %v4968 = vld [vmem:[%s707 + $0x3d7] sm:$0x1]
        %v4969 = vld [vmem:[%s707 + $0x3df] sm:$0x1]
        %v4970 = vld [vmem:[%s707 + $0x3e7] sm:$0x1]
        %v4971 = vld [vmem:[%s707 + $0x3ef] sm:$0x1]
        %v4972 = vld [vmem:[%s707 + $0x3f7] sm:$0x1]
        %v4973 = vld [vmem:[%s707 + $0x3ff] sm:$0x1]
        %v5102 = vrot.slane %v4847, 7
        %v5103 = vsel %vm1005, %v5102, %v4846
        %v5104 = vrot.slane %v4848, 6
        %v5105 = vsel %vm1008, %v5104, %v5103
        %v5106 = vrot.slane %v4849, 5
        %v5107 = vsel %vm1011, %v5106, %v5105
        %v5108 = vrot.slane %v4850, 4
        %v5109 = vsel %vm1014, %v5108, %v5107
        %v5110 = vrot.slane %v4851, 3
        %v5111 = vsel %vm1017, %v5110, %v5109
        %v5112 = vrot.slane %v4852, 2
        %v5113 = vsel %vm1020, %v5112, %v5111
        %v5114 = vrot.slane %v4853, 1
        %v5115 = vsel %vm1023, %v5114, %v5113
        %v5116 = vrot.slane %v4855, 7
        %v5117 = vsel %vm1005, %v5116, %v4854
        %v5118 = vrot.slane %v4856, 6
        %v5119 = vsel %vm1008, %v5118, %v5117
        %v5120 = vrot.slane %v4857, 5
        %v5121 = vsel %vm1011, %v5120, %v5119
        %v5122 = vrot.slane %v4858, 4
        %v5123 = vsel %vm1014, %v5122, %v5121
        %v5124 = vrot.slane %v4859, 3
        %v5125 = vsel %vm1017, %v5124, %v5123
        %v5126 = vrot.slane %v4860, 2
        %v5127 = vsel %vm1020, %v5126, %v5125
        %v5128 = vrot.slane %v4861, 1
        %v5129 = vsel %vm1023, %v5128, %v5127
        %v5130 = vrot.slane %v4863, 7
        %v5131 = vsel %vm1005, %v5130, %v4862
        %v5132 = vrot.slane %v4864, 6
        %v5133 = vsel %vm1008, %v5132, %v5131
        %v5134 = vrot.slane %v4865, 5
        %v5135 = vsel %vm1011, %v5134, %v5133
        %v5136 = vrot.slane %v4866, 4
        %v5137 = vsel %vm1014, %v5136, %v5135
        %v5138 = vrot.slane %v4867, 3
        %v5139 = vsel %vm1017, %v5138, %v5137
        %v5140 = vrot.slane %v4868, 2
        %v5141 = vsel %vm1020, %v5140, %v5139
        %v5142 = vrot.slane %v4869, 1
        %v5143 = vsel %vm1023, %v5142, %v5141
        %v5144 = vrot.slane %v4871, 7
        %v5145 = vsel %vm1005, %v5144, %v4870
        %v5146 = vrot.slane %v4872, 6
        %v5147 = vsel %vm1008, %v5146, %v5145
        %v5148 = vrot.slane %v4873, 5
        %v5149 = vsel %vm1011, %v5148, %v5147
        %v5150 = vrot.slane %v4874, 4
        %v5151 = vsel %vm1014, %v5150, %v5149
        %v5152 = vrot.slane %v4875, 3
        %v5153 = vsel %vm1017, %v5152, %v5151
        %v5154 = vrot.slane %v4876, 2
        %v5155 = vsel %vm1020, %v5154, %v5153
        %v5156 = vrot.slane %v4877, 1
        %v5157 = vsel %vm1023, %v5156, %v5155
        %v5158 = vrot.slane %v4879, 7
        %v5159 = vsel %vm1005, %v5158, %v4878
        %v5160 = vrot.slane %v4880, 6
        %v5161 = vsel %vm1008, %v5160, %v5159
        %v5162 = vrot.slane %v4881, 5
        %v5163 = vsel %vm1011, %v5162, %v5161
        %v5164 = vrot.slane %v4882, 4
        %v5165 = vsel %vm1014, %v5164, %v5163
        %v5166 = vrot.slane %v4883, 3
        %v5167 = vsel %vm1017, %v5166, %v5165
        %v5168 = vrot.slane %v4884, 2
        %v5169 = vsel %vm1020, %v5168, %v5167
        %v5170 = vrot.slane %v4885, 1
        %v5171 = vsel %vm1023, %v5170, %v5169
        %v5172 = vrot.slane %v4887, 7
        %v5173 = vsel %vm1005, %v5172, %v4886
        %v5174 = vrot.slane %v4888, 6
        %v5175 = vsel %vm1008, %v5174, %v5173
        %v5176 = vrot.slane %v4889, 5
        %v5177 = vsel %vm1011, %v5176, %v5175
        %v5178 = vrot.slane %v4890, 4
        %v5179 = vsel %vm1014, %v5178, %v5177
        %v5180 = vrot.slane %v4891, 3
        %v5181 = vsel %vm1017, %v5180, %v5179
        %v5182 = vrot.slane %v4892, 2
        %v5183 = vsel %vm1020, %v5182, %v5181
        %v5184 = vrot.slane %v4893, 1
        %v5185 = vsel %vm1023, %v5184, %v5183
        %v5186 = vrot.slane %v4895, 7
        %v5187 = vsel %vm1005, %v5186, %v4894
        %v5188 = vrot.slane %v4896, 6
        %v5189 = vsel %vm1008, %v5188, %v5187
        %v5190 = vrot.slane %v4897, 5
        %v5191 = vsel %vm1011, %v5190, %v5189
        %v5192 = vrot.slane %v4898, 4
        %v5193 = vsel %vm1014, %v5192, %v5191
        %v5194 = vrot.slane %v4899, 3
        %v5195 = vsel %vm1017, %v5194, %v5193
        %v5196 = vrot.slane %v4900, 2
        %v5197 = vsel %vm1020, %v5196, %v5195
        %v5198 = vrot.slane %v4901, 1
        %v5199 = vsel %vm1023, %v5198, %v5197
        %v5200 = vrot.slane %v4903, 7
        %v5201 = vsel %vm1005, %v5200, %v4902
        %v5202 = vrot.slane %v4904, 6
        %v5203 = vsel %vm1008, %v5202, %v5201
        %v5204 = vrot.slane %v4905, 5
        %v5205 = vsel %vm1011, %v5204, %v5203
        %v5206 = vrot.slane %v4906, 4
        %v5207 = vsel %vm1014, %v5206, %v5205
        %v5208 = vrot.slane %v4907, 3
        %v5209 = vsel %vm1017, %v5208, %v5207
        %v5210 = vrot.slane %v4908, 2
        %v5211 = vsel %vm1020, %v5210, %v5209
        %v5212 = vrot.slane %v4909, 1
        %v5213 = vsel %vm1023, %v5212, %v5211
        %v5214 = vrot.slane %v4911, 7
        %v5215 = vsel %vm1005, %v5214, %v4910
        %v5216 = vrot.slane %v4912, 6
        %v5217 = vsel %vm1008, %v5216, %v5215
        %v5218 = vrot.slane %v4913, 5
        %v5219 = vsel %vm1011, %v5218, %v5217
        %v5220 = vrot.slane %v4914, 4
        %v5221 = vsel %vm1014, %v5220, %v5219
        %v5222 = vrot.slane %v4915, 3
        %v5223 = vsel %vm1017, %v5222, %v5221
        %v5224 = vrot.slane %v4916, 2
        %v5225 = vsel %vm1020, %v5224, %v5223
        %v5226 = vrot.slane %v4917, 1
        %v5227 = vsel %vm1023, %v5226, %v5225
        %v5228 = vrot.slane %v4919, 7
        %v5229 = vsel %vm1005, %v5228, %v4918
        %v5230 = vrot.slane %v4920, 6
        %v5231 = vsel %vm1008, %v5230, %v5229
        %v5232 = vrot.slane %v4921, 5
        %v5233 = vsel %vm1011, %v5232, %v5231
        %v5234 = vrot.slane %v4922, 4
        %v5235 = vsel %vm1014, %v5234, %v5233
        %v5236 = vrot.slane %v4923, 3
        %v5237 = vsel %vm1017, %v5236, %v5235
        %v5238 = vrot.slane %v4924, 2
        %v5239 = vsel %vm1020, %v5238, %v5237
        %v5240 = vrot.slane %v4925, 1
        %v5241 = vsel %vm1023, %v5240, %v5239
        %v5242 = vrot.slane %v4927, 7
        %v5243 = vsel %vm1005, %v5242, %v4926
        %v5244 = vrot.slane %v4928, 6
        %v5245 = vsel %vm1008, %v5244, %v5243
        %v5246 = vrot.slane %v4929, 5
        %v5247 = vsel %vm1011, %v5246, %v5245
        %v5248 = vrot.slane %v4930, 4
        %v5249 = vsel %vm1014, %v5248, %v5247
        %v5250 = vrot.slane %v4931, 3
        %v5251 = vsel %vm1017, %v5250, %v5249
        %v5252 = vrot.slane %v4932, 2
        %v5253 = vsel %vm1020, %v5252, %v5251
        %v5254 = vrot.slane %v4933, 1
        %v5255 = vsel %vm1023, %v5254, %v5253
        %v5256 = vrot.slane %v4935, 7
        %v5257 = vsel %vm1005, %v5256, %v4934
        %v5258 = vrot.slane %v4936, 6
        %v5259 = vsel %vm1008, %v5258, %v5257
        %v5260 = vrot.slane %v4937, 5
        %v5261 = vsel %vm1011, %v5260, %v5259
        %v5262 = vrot.slane %v4938, 4
        %v5263 = vsel %vm1014, %v5262, %v5261
        %v5264 = vrot.slane %v4939, 3
        %v5265 = vsel %vm1017, %v5264, %v5263
        %v5266 = vrot.slane %v4940, 2
        %v5267 = vsel %vm1020, %v5266, %v5265
        %v5268 = vrot.slane %v4941, 1
        %v5269 = vsel %vm1023, %v5268, %v5267
        %v5270 = vrot.slane %v4943, 7
        %v5271 = vsel %vm1005, %v5270, %v4942
        %v5272 = vrot.slane %v4944, 6
        %v5273 = vsel %vm1008, %v5272, %v5271
        %v5274 = vrot.slane %v4945, 5
        %v5275 = vsel %vm1011, %v5274, %v5273
        %v5276 = vrot.slane %v4946, 4
        %v5277 = vsel %vm1014, %v5276, %v5275
        %v5278 = vrot.slane %v4947, 3
        %v5279 = vsel %vm1017, %v5278, %v5277
        %v5280 = vrot.slane %v4948, 2
        %v5281 = vsel %vm1020, %v5280, %v5279
        %v5282 = vrot.slane %v4949, 1
        %v5283 = vsel %vm1023, %v5282, %v5281
        %v5284 = vrot.slane %v4951, 7
        %v5285 = vsel %vm1005, %v5284, %v4950
        %v5286 = vrot.slane %v4952, 6
        %v5287 = vsel %vm1008, %v5286, %v5285
        %v5288 = vrot.slane %v4953, 5
        %v5289 = vsel %vm1011, %v5288, %v5287
        %v5290 = vrot.slane %v4954, 4
        %v5291 = vsel %vm1014, %v5290, %v5289
        %v5292 = vrot.slane %v4955, 3
        %v5293 = vsel %vm1017, %v5292, %v5291
        %v5294 = vrot.slane %v4956, 2
        %v5295 = vsel %vm1020, %v5294, %v5293
        %v5296 = vrot.slane %v4957, 1
        %v5297 = vsel %vm1023, %v5296, %v5295
        %v5298 = vrot.slane %v4959, 7
        %v5299 = vsel %vm1005, %v5298, %v4958
        %v5300 = vrot.slane %v4960, 6
        %v5301 = vsel %vm1008, %v5300, %v5299
        %v5302 = vrot.slane %v4961, 5
        %v5303 = vsel %vm1011, %v5302, %v5301
        %v5304 = vrot.slane %v4962, 4
        %v5305 = vsel %vm1014, %v5304, %v5303
        %v5306 = vrot.slane %v4963, 3
        %v5307 = vsel %vm1017, %v5306, %v5305
        %v5308 = vrot.slane %v4964, 2
        %v5309 = vsel %vm1020, %v5308, %v5307
        %v5310 = vrot.slane %v4965, 1
        %v5311 = vsel %vm1023, %v5310, %v5309
        %v5312 = vrot.slane %v4967, 7
        %v5313 = vsel %vm1005, %v5312, %v4966
        %v5314 = vrot.slane %v4968, 6
        %v5315 = vsel %vm1008, %v5314, %v5313
        %v5316 = vrot.slane %v4969, 5
        %v5317 = vsel %vm1011, %v5316, %v5315
        %v5318 = vrot.slane %v4970, 4
        %v5319 = vsel %vm1014, %v5318, %v5317
        %v5320 = vrot.slane %v4971, 3
        %v5321 = vsel %vm1017, %v5320, %v5319
        %v5322 = vrot.slane %v4972, 2
        %v5323 = vsel %vm1020, %v5322, %v5321
        %v5324 = vrot.slane %v4973, 1
        %v5325 = vsel %vm1023, %v5324, %v5323
        %v5326 = vsel %vm1235, %v5115, 0
        %v5328 = vsel %vm1235, %v5129, 0
        %v5330 = vsel %vm1235, %v5143, 0
        %v5332 = vsel %vm1235, %v5157, 0
        %v5334 = vsel %vm1235, %v5171, 0
        %v5336 = vsel %vm1235, %v5185, 0
        %v5338 = vsel %vm1235, %v5199, 0
        %v5340 = vsel %vm1235, %v5213, 0
        %v5342 = vsel %vm1235, %v5227, 0
        %v5344 = vsel %vm1235, %v5241, 0
        %v5346 = vsel %vm1235, %v5255, 0
        %v5348 = vsel %vm1235, %v5269, 0
        %v5350 = vsel %vm1235, %v5283, 0
        %v5352 = vsel %vm1235, %v5297, 0
        %v5354 = vsel %vm1235, %v5311, 0
        %v5356 = vsel %vm1235, %v5325, 0
        %5358 = vmatprep.subr.mxu0 0.0
        %5359 = vmatpush1.xpose.msra.mxu0 %v5356
        %5360 = vmatprep.subr.mxu0 0.0
        %5361 = vmatpush1.xpose.msra.mxu0 %v5354
        %5362 = vmatprep.subr.mxu0 0.0
        %5363 = vmatpush1.xpose.msra.mxu0 %v5352
        %5364 = vmatprep.subr.mxu0 0.0
        %5365 = vmatpush1.xpose.msra.mxu0 %v5350
        %5366 = vmatprep.subr.mxu0 0.0
        %5367 = vmatpush1.xpose.msra.mxu0 %v5348
        %5368 = vmatprep.subr.mxu0 0.0
        %5369 = vmatpush1.xpose.msra.mxu0 %v5346
        %5370 = vmatprep.subr.mxu0 0.0
        %5371 = vmatpush1.xpose.msra.mxu0 %v5344
        %5372 = vmatprep.subr.mxu0 0.0
        %5373 = vmatpush1.xpose.msra.mxu0 %v5342
        %5374 = vmatprep.subr.mxu0 0.0
        %5375 = vmatpush1.xpose.msra.mxu0 %v5340
        %5376 = vmatprep.subr.mxu0 0.0
        %5377 = vmatpush1.xpose.msra.mxu0 %v5338
        %5378 = vmatprep.subr.mxu0 0.0
        %5379 = vmatpush1.xpose.msra.mxu0 %v5336
        %5380 = vmatprep.subr.mxu0 0.0
        %5381 = vmatpush1.xpose.msra.mxu0 %v5334
        %5382 = vmatprep.subr.mxu0 0.0
        %5383 = vmatpush1.xpose.msra.mxu0 %v5332
        %5384 = vmatprep.subr.mxu0 0.0
        %5385 = vmatpush1.xpose.msra.mxu0 %v5330
        %5386 = vmatprep.subr.mxu0 0.0
        %5387 = vmatpush1.xpose.msra.mxu0 %v5328
        %5388 = vmatprep.subr.mxu0 0.0
        %5389 = vmatpush1.xpose.msra.mxu0 %v5326
        %5390 = vmatprep.subr.mxu0 0.0
        %5391 = vmatpush2.xpose.msra.mxu0 0.0
        %5392 = vmatprep.subr.mxu0 0.0
        %5393 = vmatpush2.xpose.msra.mxu0 0.0
        %5394 = vmatprep.subr.mxu0 0.0
        %5395 = vmatpush2.xpose.msra.mxu0 0.0
        %5396 = vmatprep.subr.mxu0 0.0
        %5397 = vmatpush2.xpose.msra.mxu0 0.0
        %5398 = vmatprep.subr.mxu0 0.0
        %5399 = vmatpush2.xpose.msra.mxu0 0.0
        %5400 = vmatprep.subr.mxu0 0.0
        %5401 = vmatpush2.xpose.msra.mxu0 0.0
        %5402 = vmatprep.subr.mxu0 0.0
        %5403 = vmatpush2.xpose.msra.mxu0 0.0
        %5404 = vmatprep.subr.mxu0 0.0
        %5405 = vmatpush2.xpose.msra.mxu0 0.0
        %5406 = vmatprep.subr.mxu0 0.0
        %5407 = vmatpush2.xpose.msra.mxu0 0.0
        %5408 = vmatprep.subr.mxu0 0.0
        %5409 = vmatpush2.xpose.msra.mxu0 0.0
        %5410 = vmatprep.subr.mxu0 0.0
        %5411 = vmatpush2.xpose.msra.mxu0 0.0
        %5412 = vmatprep.subr.mxu0 0.0
        %5413 = vmatpush2.xpose.msra.mxu0 0.0
        %5414 = vmatprep.subr.mxu0 0.0
        %5415 = vmatpush2.xpose.msra.mxu0 0.0
        %5416 = vmatprep.subr.mxu0 0.0
        %5417 = vmatpush2.xpose.msra.mxu0 0.0
        %5418 = vmatprep.subr.mxu0 0.0
        %5419 = vmatpush2.xpose.msra.mxu0 0.0
        %5420 = vmatprep.subr.mxu0 0.0
        %5421 = vmatpush2.xpose.msra.mxu0 0.0
        %5422 = vmatprep.mubr.f32.mxu0 0.0
        %5423 = vmatmul.mubr.f32.gmra.mxu0 %v1237
        %v5424 = vpop.f32.mrf.mxu0
        %v5425 = vadd.f32 %v746, %v5424
        %v5426 = vpop.f32.mrf.mxu0
        %5427 = vdwg.mxu0
        %s5428 = scalar_lea.vmem %s739, 56
        %5429 = vst [vmem:[%s5428] sm:$0xff] %v5425
        %s5430 = smul.u32 8, %s19
        %p5431 = scmp.lt.s32.totalorder %s5430, 15
        %s5432 = scalar_select %p5431, %s5430, 15
        %p5433 = scmp.lt.s32.totalorder %s18, 0
        %s5434 = scalar_select %p5433, %s18, 0
        %s5435 = sadd.s32 %s5434, %s5432
        %s5436 = smul.addr %s5435, 8
        %s5437 = scalar_lea.vmem %s3, %s5436
        // Predicated region
        $region71: #{chain_crf_forward.2} parent=65 // pred_check
          %p5438 = pneg %p116
        $region72: #{chain_crf_forward.2} parent=65 // pred_check_branch
          %5440 = sbr.rel (%p5438) target = $region74
        $region73: #{chain_crf_forward.2} parent=65 // pred_region
          %s5441 = smul.u32 8, %s19
        $region74: #{chain_crf_forward.2} parent=65 // pred_fallthru
          _
      $region66: #{chain_crf_forward.2} parent=5 // pred_fallthru
        _
      %p5442 = scmp.le.s32.totalorder 2, %s9
      // Predicated region
      $region75: #{chain_crf_forward.2} parent=5 // pred_check
        %p5443 = pneg %p5442
      $region76: #{chain_crf_forward.2} parent=5 // pred_check_branch
        %5445 = sbr.rel (%p5443) target = $region78
      $region77: #{chain_crf_forward.2} parent=5 // pred_region
        %s5446 = ssub.s32 %s9, 2
        // Predicated region
        $region79: #{chain_crf_forward.2} parent=77 // pred_check
          %p5447 = pneg %p122
        $region80: #{chain_crf_forward.2} parent=77 // pred_check_branch
          %5449 = sbr.rel (%p5447) target = $region82
        $region81: #{chain_crf_forward.2} parent=77 // pred_region
          %s5450 = smul.u32 8, %s21
          %p5451 = scmp.lt.s32.totalorder %s5450, 15
          %s5452 = scalar_select %p5451, %s5450, 15
          %p5453 = scmp.lt.s32.totalorder %s20, 0
          %s5454 = scalar_select %p5453, %s20, 0
          %s5455 = sadd.s32 %s5454, %s5452
          %s5456 = smul.addr %s5455, 8
          %s5457 = scalar_lea.vmem %s3, %s5456
        $region82: #{chain_crf_forward.2} parent=77 // pred_fallthru
          _
      $region78: #{chain_crf_forward.2} parent=5 // pred_fallthru
        _
    $region6: #{chain_crf_forward.2} parent=1 // loop_footer
      %s13 = sadd.s32 1, %s9
    $region7: #{chain_crf_forward.2} parent=1 // loop_footer_branch
      %8 = sbr.rel target = $region3
    $region8: #{chain_crf_forward.2} parent=1 // loop_exit
      _

</llo_original>
